<compile_context>
chip_gen: v7x
topology: tpu7x:2x2x1
jax: 0.10.0
libtpu: 0.0.40
codegen_flags: <defaults>
</compile_context>

<pallas_src>
import numpy as np
import jax
import jax.numpy as jnp
from jax.experimental import pallas as pl
from jax.experimental.pallas import tpu as pltpu


def _round_up(x, m):
    return ((x + m - 1) // m) * m


# ---------------------------------------------------------------------------
# Pallas kernel: time-chunked 2-layer GRU recurrence + running time-sum.
# On the last time chunk: l2-normalize the time-sum and apply the fc layer.
# All gate widths are Hp-padded (Hp multiple of 128) => lane-aligned slices.
# ---------------------------------------------------------------------------
def _encoder_kernel(gi0_ref,      # (T, Bb, 3Hp) bf16 : x @ W_ih0^T (no bias)
                    bias0_ref,    # (1, 3Hp) f32      : b_ih0 + (r/z of b_hh0)
                    whh0_ref,     # (Hp, 3Hp) f32
                    bhh0n_ref,    # (1, Hp)   f32     : n-gate part of b_hh0
                    wih1_ref,     # (Hp, 3Hp) f32
                    whh1_ref,     # (Hp, 3Hp) f32
                    b1rz_ref,     # (1, 2Hp)  f32
                    b1in_ref,     # (1, Hp)   f32
                    b1hn_ref,     # (1, Hp)   f32
                    wfc_ref,      # (Hp, Hp)  f32
                    bfc_ref,      # (1, Hp)   f32
                    raw_ref,      # (Bb, T, Hp) f32 out (batch-major)
                    out_ref,      # (Bb, Hp)    f32 out
                    h0_sc, h1_sc, sum_sc):      # (Bb, Hp) f32 scratch
    t = pl.program_id(1)
    Hp = h0_sc.shape[1]
    T = gi0_ref.shape[0]

    @pl.when(t == 0)
    def _():
        h0_sc[...] = jnp.zeros_like(h0_sc)
        h1_sc[...] = jnp.zeros_like(h1_sc)
        sum_sc[...] = jnp.zeros_like(sum_sc)

    bias0 = bias0_ref[...]
    whh0 = whh0_ref[...]
    bhh0n = bhh0n_ref[...]
    wih1 = wih1_ref[...]
    whh1 = whh1_ref[...]
    b1rz = b1rz_ref[...]
    b1in = b1in_ref[...]
    b1hn = b1hn_ref[...]

    h0 = h0_sc[...]
    h1 = h1_sc[...]
    acc = sum_sc[...]
    hs = []

    # Statically unrolled loop over the T timesteps of this chunk.
    for s in range(T):
        # Layer-1 hidden projection depends only on h1_{s-1}: issue it first so
        # its MXU push can overlap the dependent layer-0 chain of this step.
        gh1 = jnp.dot(h1, whh1, preferred_element_type=jnp.float32)       # (Bb,3Hp)

        gi0 = gi0_ref[s].astype(jnp.float32) + bias0                       # (Bb,3Hp)
        gh0 = jnp.dot(h0, whh0, preferred_element_type=jnp.float32)       # (Bb,3Hp)
        r0 = jax.nn.sigmoid(gi0[:, 0:Hp] + gh0[:, 0:Hp])
        z0 = jax.nn.sigmoid(gi0[:, Hp:2 * Hp] + gh0[:, Hp:2 * Hp])
        n0 = jnp.tanh(gi0[:, 2 * Hp:] + r0 * (gh0[:, 2 * Hp:] + bhh0n))
        h0 = (1.0 - z0) * n0 + z0 * h0

        gi1 = jnp.dot(h0, wih1, preferred_element_type=jnp.float32)       # (Bb,3Hp)
        rz1 = jax.nn.sigmoid(gi1[:, 0:2 * Hp] + gh1[:, 0:2 * Hp] + b1rz)
        r1 = rz1[:, 0:Hp]
        z1 = rz1[:, Hp:]
        n1 = jnp.tanh(gi1[:, 2 * Hp:] + b1in + r1 * (gh1[:, 2 * Hp:] + b1hn))
        h1 = (1.0 - z1) * n1 + z1 * h1

        acc = acc + h1
        hs.append(h1)

    h0_sc[...] = h0
    h1_sc[...] = h1
    sum_sc[...] = acc

    # One dense store per chunk (no sublane-masked per-step stores).
    raw_ref[...] = jnp.stack(hs, axis=1).astype(raw_ref.dtype)

    @pl.when(t == pl.num_programs(1) - 1)
    def _():
        feats = sum_sc[...]
        # l2norm over embedding dim (no epsilon, matching the PyTorch ref;
        # padded columns are exactly zero and do not affect the norm).
        inv = jax.lax.rsqrt(jnp.sum(feats * feats, axis=1, keepdims=True))
        feats = feats * inv
        out = jnp.dot(feats, wfc_ref[...],
                      preferred_element_type=jnp.float32) + bfc_ref[...]
        out_ref[...] = out.astype(out_ref.dtype)


# ---------------------------------------------------------------------------
# Weight padding helpers (gate-blocked padding of the hidden dim H -> Hp)
# ---------------------------------------------------------------------------
def _pad_gate_cols(wT, H, Hp):
    # (K, 3H) -> (K, 3Hp), each gate block [r|z|n] zero-padded to Hp columns.
    parts = [jnp.pad(wT[:, g * H:(g + 1) * H], ((0, 0), (0, Hp - H)))
             for g in range(3)]
    return jnp.concatenate(parts, axis=1)


def _pad_gate_vec(b, H, Hp):
    parts = [jnp.pad(b[g * H:(g + 1) * H], (0, Hp - H)) for g in range(3)]
    return jnp.concatenate(parts, axis=0)


def _vmem_bytes(T, Bb, Hp):
    gi0 = 2 * T * Bb * 3 * Hp * 2            # bf16 input block, double-buffered
    raw = 2 * Bb * T * Hp * 4                # f32 raw output block, double-buffered
    outb = 2 * Bb * Hp * 4
    wts = 2 * (3 * (Hp * 3 * Hp) + Hp * Hp + 9 * Hp) * 4   # weights + biases
    scr = 3 * Bb * Hp * 4
    return gi0 + raw + outb + wts + scr


# ---------------------------------------------------------------------------
# Wrapper
# ---------------------------------------------------------------------------
def encoder_video_c3d_forward(images, params, *, time_block=16, batch_block=None):
    """images: (B, L, img_dim) or (L, img_dim).  Returns (out, raw_features)."""
    if images.ndim != 3:
        images = images[None]                          # B X L X H
    B, L, D = images.shape
    H = int(params["b_fc"].shape[0])
    Hp = _round_up(H, 128)                             # lane-aligned gate width
    f32, bf16 = jnp.float32, jnp.bfloat16

    # ---- batch block (sublane-padded; split for v7x megacore when large) ----
    Bp = _round_up(B, 8)
    if batch_block is not None and Bp % batch_block == 0 and batch_block % 8 == 0:
        Bb = batch_block
    elif Bp >= 256 and (Bp // 2) % 8 == 0:
        Bb = Bp // 2                                   # engage both v7x TensorCores
    else:
        Bb = Bp
    nb = Bp // Bb

    # ---- time chunk: multiple-of-8 divisor of L, under a ~40 MiB VMEM budget ----
    budget = 40 * 1024 * 1024                          # headroom under v7x's 64 MiB
    cands = [d for d in range(8, L + 1, 8) if L % d == 0]
    T = None
    for d in sorted(cands, reverse=True):
        if d <= max(8, time_block) and _vmem_bytes(d, Bb, Hp) <= budget:
            T = d
            break
    if T is None and cands:
        T = min(cands)
    if T is None:
        # TODO(synk): L with no multiple-of-8 divisor falls back to a single
        # full-length chunk; very long such sequences would need pad-and-mask.
        T = L
    nt = L // T

    # ---- weight prep (all gate-block padded to Hp; kept f32) ----
    bih0 = params["b_ih_l0"].astype(f32)
    bhh0 = params["b_hh_l0"].astype(f32)
    bih1 = params["b_ih_l1"].astype(f32)
    bhh1 = params["b_hh_l1"].astype(f32)

    wih0p = _pad_gate_cols(params["w_ih_l0"].astype(f32).T, H, Hp)   # (D, 3Hp)
    whh0p = jnp.pad(_pad_gate_cols(params["w_hh_l0"].astype(f32).T, H, Hp),
                    ((0, Hp - H), (0, 0)))                            # (Hp, 3Hp)
    wih1p = jnp.pad(_pad_gate_cols(params["w_ih_l1"].astype(f32).T, H, Hp),
                    ((0, Hp - H), (0, 0)))                            # (Hp, 3Hp)
    whh1p = jnp.pad(_pad_gate_cols(params["w_hh_l1"].astype(f32).T, H, Hp),
                    ((0, Hp - H), (0, 0)))                            # (Hp, 3Hp)
    wfcp = jnp.pad(params["w_fc"].astype(f32).T,
                   ((0, Hp - H), (0, Hp - H)))                        # (Hp, Hp)

    # Layer-0 biases: fold b_ih0 fully and the r/z parts of b_hh0 (n part must
    # stay separate because r multiplies (h_n + b_hn)).
    bias0 = _pad_gate_vec(
        bih0 + jnp.concatenate([bhh0[:2 * H], jnp.zeros((H,), f32)]), H, Hp)[None, :]
    bhh0n = jnp.pad(bhh0[2 * H:], (0, Hp - H))[None, :]               # (1, Hp)
    b1rz = jnp.concatenate([jnp.pad(bih1[:H] + bhh1[:H], (0, Hp - H)),
                            jnp.pad(bih1[H:2 * H] + bhh1[H:2 * H], (0, Hp - H))]
                           )[None, :]                                  # (1, 2Hp)
    b1in = jnp.pad(bih1[2 * H:], (0, Hp - H))[None, :]                # (1, Hp)
    b1hn = jnp.pad(bhh1[2 * H:], (0, Hp - H))[None, :]                # (1, Hp)
    bfc = jnp.pad(params["b_fc"].astype(f32), (0, Hp - H))[None, :]   # (1, Hp)

    # Hoisted layer-0 input projection: one big f32 matmul over all L*Bp rows,
    # stored as bf16 (halves the dominant HBM stream); bias added in-kernel.
    x = images.astype(f32)
    if Bp != B:
        x = jnp.pad(x, ((0, Bp - B), (0, 0), (0, 0)))
    gi0 = jnp.einsum("bld,dg->lbg", x, wih0p).astype(bf16)            # (L, Bp, 3Hp)

    need = _vmem_bytes(T, Bb, Hp)
    vmem_limit = int(min(max(need + (6 << 20), 16 << 20), 112 << 20))

    full = lambda shape: pl.BlockSpec(shape, lambda b, t: (0,) * len(shape))

    raw_pad, out_pad = pl.pallas_call(
        _encoder_kernel,
        out_shape=(jax.ShapeDtypeStruct((Bp, L, Hp), jnp.float32),
                   jax.ShapeDtypeStruct((Bp, Hp), jnp.float32)),
        grid_spec=pltpu.PrefetchScalarGridSpec(
            num_scalar_prefetch=0,
            grid=(nb, nt),
            in_specs=[
                pl.BlockSpec((T, Bb, 3 * Hp), lambda b, t: (t, b, 0)),  # gi0 (bf16)
                full((1, 3 * Hp)),       # bias0
                full((Hp, 3 * Hp)),      # whh0
                full((1, Hp)),           # b_hh0 n-part
                full((Hp, 3 * Hp)),      # wih1
                full((Hp, 3 * Hp)),      # whh1
                full((1, 2 * Hp)),       # b1 r/z
                full((1, Hp)),           # b1 i_n
                full((1, Hp)),           # b1 h_n
                full((Hp, Hp)),          # fc weight
                full((1, Hp)),           # fc bias
            ],
            out_specs=[
                pl.BlockSpec((Bb, T, Hp), lambda b, t: (b, t, 0)),  # raw, batch-major
                pl.BlockSpec((Bb, Hp), lambda b, t: (b, 0)),        # final out
            ],
            scratch_shapes=[pltpu.VMEM((Bb, Hp), jnp.float32),      # h layer 0
                            pltpu.VMEM((Bb, Hp), jnp.float32),      # h layer 1
                            pltpu.VMEM((Bb, Hp), jnp.float32)],     # sum over time
        ),
        compiler_params=pltpu.CompilerParams(
            dimension_semantics=("parallel", "arbitrary"),
            vmem_limit_bytes=vmem_limit),
    )(gi0, bias0, whh0p, bhh0n, wih1p, whh1p, b1rz, b1in, b1hn, wfcp, bfc)

    return out_pad[:B, :H], raw_pad[:B, :, :H]


# ---------------------------------------------------------------------------
# Deterministic parameter init (matches shapes / init schemes of the module)
# ---------------------------------------------------------------------------
def init_params(key, img_dim, embed_size):
    H = embed_size
    stdv = 1.0 / np.sqrt(H)                            # PyTorch GRU default init
    ks = jax.random.split(key, 9)
    u = lambda k, shape, r: jax.random.uniform(k, shape, jnp.float32, -r, r)
    r_fc = np.sqrt(6.0) / np.sqrt(H + H)               # Xavier for fc
    return {
        "w_ih_l0": u(ks[0], (3 * H, img_dim), stdv),
        "w_hh_l0": u(ks[1], (3 * H, H), stdv),
        "b_ih_l0": u(ks[2], (3 * H,), stdv),
        "b_hh_l0": u(ks[3], (3 * H,), stdv),
        "w_ih_l1": u(ks[4], (3 * H, H), stdv),
        "w_hh_l1": u(ks[5], (3 * H, H), stdv),
        "b_ih_l1": u(ks[6], (3 * H,), stdv),
        "b_hh_l1": u(ks[7], (3 * H,), stdv),
        "w_fc":    u(ks[8], (H, H), r_fc),
        "b_fc":    jnp.zeros((H,), jnp.float32),
    }


# ---------------------------------------------------------------------------
# Pure-JAX reference (full f32, matches the PyTorch module semantics)
# ---------------------------------------------------------------------------
def _ref_gru_cell(x, h, w_ih, w_hh, b_ih, b_hh):
    H = h.shape[1]
    gi = x @ w_ih.T + b_ih
    gh = h @ w_hh.T + b_hh
    r = jax.nn.sigmoid(gi[:, :H] + gh[:, :H])
    z = jax.nn.sigmoid(gi[:, H:2 * H] + gh[:, H:2 * H])
    n = jnp.tanh(gi[:, 2 * H:] + r * gh[:, 2 * H:])
    return (1.0 - z) * n + z * h


def ref_forward(images, params):
    B, L, D = images.shape
    H = params["b_fc"].shape[0]
    h0 = jnp.zeros((B, H), jnp.float32)
    h1 = jnp.zeros((B, H), jnp.float32)

    def step(carry, x_t):
        h0, h1 = carry
        h0 = _ref_gru_cell(x_t, h0, params["w_ih_l0"], params["w_hh_l0"],
                           params["b_ih_l0"], params["b_hh_l0"])
        h1 = _ref_gru_cell(h0, h1, params["w_ih_l1"], params["w_hh_l1"],
                           params["b_ih_l1"], params["b_hh_l1"])
        return (h0, h1), h1

    _, raw_t = jax.lax.scan(step, (h0, h1), jnp.transpose(images, (1, 0, 2)))
    raw = jnp.transpose(raw_t, (1, 0, 2))
    feats = jnp.sum(raw, axis=1)
    feats = feats / jnp.sqrt(jnp.sum(feats ** 2, axis=1, keepdims=True))
    out = feats @ params["w_fc"].T + params["b_fc"]
    return out, raw


# ---------------------------------------------------------------------------
if __name__ == "__main__":
    B, L, img_dim, embed_size = 2, 16, 16, 32

    key = jax.random.PRNGKey(0)
    k_img, k_par = jax.random.split(key)
    images = jax.random.normal(k_img, (B, L, img_dim), jnp.float32)
    params = init_params(k_par, img_dim, embed_size)

    out, raw = encoder_video_c3d_forward(images, params, time_block=8)
    out = jax.block_until_ready(out)
    raw = jax.block_until_ready(raw)

    out_ref, raw_ref = ref_forward(images, params)
    np.testing.assert_allclose(np.asarray(raw), np.asarray(raw_ref),
                               rtol=2e-2, atol=2e-2)
    np.testing.assert_allclose(np.asarray(out), np.asarray(out_ref),
                               rtol=2e-2, atol=2e-2)

    assert out.shape == (B, embed_size)
    assert raw.shape == (B, L, embed_size)
    print("KERNEL_OK")
</pallas_src>

<mosaic_0001>
module attributes {stable_mosaic.version = 11 : i64} {
  func.func @_encoder_kernel(%arg0: i32, %arg1: i32, %arg2: memref<8x8x384xbf16, #tpu.memory_space<vmem>>, %arg3: memref<1x384xf32, #tpu.memory_space<vmem>>, %arg4: memref<128x384xf32, #tpu.memory_space<vmem>>, %arg5: memref<1x128xf32, #tpu.memory_space<vmem>>, %arg6: memref<128x384xf32, #tpu.memory_space<vmem>>, %arg7: memref<128x384xf32, #tpu.memory_space<vmem>>, %arg8: memref<1x256xf32, #tpu.memory_space<vmem>>, %arg9: memref<1x128xf32, #tpu.memory_space<vmem>>, %arg10: memref<1x128xf32, #tpu.memory_space<vmem>>, %arg11: memref<128x128xf32, #tpu.memory_space<vmem>>, %arg12: memref<1x128xf32, #tpu.memory_space<vmem>>, %arg13: memref<8x8x128xf32, #tpu.memory_space<vmem>>, %arg14: memref<8x128xf32, #tpu.memory_space<vmem>>, %arg15: memref<8x128xf32, #tpu.memory_space<vmem>>, %arg16: memref<8x128xf32, #tpu.memory_space<vmem>>, %arg17: memref<8x128xf32, #tpu.memory_space<vmem>>) attributes {dimension_semantics = [#tpu.dimension_semantics<parallel>, #tpu.dimension_semantics<arbitrary>], iteration_bounds = array<i64: 1, 2>, scalar_prefetch = 0 : i64, scratch_operands = 3 : i64, tpu.core_type = #tpu.core_type<tc>, window_params = [{transform_indices = @transform_0, window_bounds = array<i64: 8, 8, 384>}, {pipeline_mode = #tpu.pipeline_mode<synchronous>, transform_indices = @transform_1, window_bounds = array<i64: 1, 384>}, {pipeline_mode = #tpu.pipeline_mode<synchronous>, transform_indices = @transform_2, window_bounds = array<i64: 128, 384>}, {pipeline_mode = #tpu.pipeline_mode<synchronous>, transform_indices = @transform_3, window_bounds = array<i64: 1, 128>}, {pipeline_mode = #tpu.pipeline_mode<synchronous>, transform_indices = @transform_4, window_bounds = array<i64: 128, 384>}, {pipeline_mode = #tpu.pipeline_mode<synchronous>, transform_indices = @transform_5, window_bounds = array<i64: 128, 384>}, {pipeline_mode = #tpu.pipeline_mode<synchronous>, transform_indices = @transform_6, window_bounds = array<i64: 1, 256>}, {pipeline_mode = #tpu.pipeline_mode<synchronous>, transform_indices = @transform_7, window_bounds = array<i64: 1, 128>}, {pipeline_mode = #tpu.pipeline_mode<synchronous>, transform_indices = @transform_8, window_bounds = array<i64: 1, 128>}, {pipeline_mode = #tpu.pipeline_mode<synchronous>, transform_indices = @transform_9, window_bounds = array<i64: 128, 128>}, {pipeline_mode = #tpu.pipeline_mode<synchronous>, transform_indices = @transform_10, window_bounds = array<i64: 1, 128>}, {transform_indices = @transform_11, window_bounds = array<i64: 8, 8, 128>}, {transform_indices = @transform_12, window_bounds = array<i64: 8, 128>}]} {
    %c0_i32 = arith.constant 0 : i32
    %0 = arith.cmpi eq, %arg1, %c0_i32 : i32
    %1 = arith.extui %0 : i1 to i32
    %c0_i32_0 = arith.constant 0 : i32
    %2 = arith.cmpi ne, %1, %c0_i32_0 : i32
    scf.if %2 {
      %cst_112 = arith.constant 0.000000e+00 : f32
      %534 = vector.broadcast %cst_112 : f32 to vector<8x128xf32>
      %c0_113 = arith.constant 0 : index
      %c0_114 = arith.constant 0 : index
      %535 = vector.load %arg15[%c0_113, %c0_114] : memref<8x128xf32, #tpu.memory_space<vmem>>, vector<8x128xf32>
      tpu.vector_store %arg15[%c0_113, %c0_114], %534 {strides = array<i32>} : memref<8x128xf32, #tpu.memory_space<vmem>>, vector<8x128xf32>,
      %cst_115 = arith.constant 0.000000e+00 : f32
      %536 = vector.broadcast %cst_115 : f32 to vector<8x128xf32>
      %c0_116 = arith.constant 0 : index
      %c0_117 = arith.constant 0 : index
      %537 = vector.load %arg16[%c0_116, %c0_117] : memref<8x128xf32, #tpu.memory_space<vmem>>, vector<8x128xf32>
      tpu.vector_store %arg16[%c0_116, %c0_117], %536 {strides = array<i32>} : memref<8x128xf32, #tpu.memory_space<vmem>>, vector<8x128xf32>,
      %cst_118 = arith.constant 0.000000e+00 : f32
      %538 = vector.broadcast %cst_118 : f32 to vector<8x128xf32>
      %c0_119 = arith.constant 0 : index
      %c0_120 = arith.constant 0 : index
      %539 = vector.load %arg17[%c0_119, %c0_120] : memref<8x128xf32, #tpu.memory_space<vmem>>, vector<8x128xf32>
      tpu.vector_store %arg17[%c0_119, %c0_120], %538 {strides = array<i32>} : memref<8x128xf32, #tpu.memory_space<vmem>>, vector<8x128xf32>,
    } else {
    }
    %c0 = arith.constant 0 : index
    %c0_1 = arith.constant 0 : index
    %3 = vector.load %arg3[%c0, %c0_1] : memref<1x384xf32, #tpu.memory_space<vmem>>, vector<1x384xf32>
    %c0_2 = arith.constant 0 : index
    %c0_3 = arith.constant 0 : index
    %4 = vector.load %arg4[%c0_2, %c0_3] : memref<128x384xf32, #tpu.memory_space<vmem>>, vector<128x384xf32>
    %c0_4 = arith.constant 0 : index
    %c0_5 = arith.constant 0 : index
    %5 = vector.load %arg5[%c0_4, %c0_5] : memref<1x128xf32, #tpu.memory_space<vmem>>, vector<1x128xf32>
    %c0_6 = arith.constant 0 : index
    %c0_7 = arith.constant 0 : index
    %6 = vector.load %arg6[%c0_6, %c0_7] : memref<128x384xf32, #tpu.memory_space<vmem>>, vector<128x384xf32>
    %c0_8 = arith.constant 0 : index
    %c0_9 = arith.constant 0 : index
    %7 = vector.load %arg7[%c0_8, %c0_9] : memref<128x384xf32, #tpu.memory_space<vmem>>, vector<128x384xf32>
    %c0_10 = arith.constant 0 : index
    %c0_11 = arith.constant 0 : index
    %8 = vector.load %arg8[%c0_10, %c0_11] : memref<1x256xf32, #tpu.memory_space<vmem>>, vector<1x256xf32>
    %c0_12 = arith.constant 0 : index
    %c0_13 = arith.constant 0 : index
    %9 = vector.load %arg9[%c0_12, %c0_13] : memref<1x128xf32, #tpu.memory_space<vmem>>, vector<1x128xf32>
    %c0_14 = arith.constant 0 : index
    %c0_15 = arith.constant 0 : index
    %10 = vector.load %arg10[%c0_14, %c0_15] : memref<1x128xf32, #tpu.memory_space<vmem>>, vector<1x128xf32>
    %c0_16 = arith.constant 0 : index
    %c0_17 = arith.constant 0 : index
    %11 = vector.load %arg15[%c0_16, %c0_17] : memref<8x128xf32, #tpu.memory_space<vmem>>, vector<8x128xf32>
    %c0_18 = arith.constant 0 : index
    %c0_19 = arith.constant 0 : index
    %12 = vector.load %arg16[%c0_18, %c0_19] : memref<8x128xf32, #tpu.memory_space<vmem>>, vector<8x128xf32>
    %c0_20 = arith.constant 0 : index
    %c0_21 = arith.constant 0 : index
    %13 = vector.load %arg17[%c0_20, %c0_21] : memref<8x128xf32, #tpu.memory_space<vmem>>, vector<8x128xf32>
    %cst = arith.constant dense<0.000000e+00> : vector<8x384xf32>
    %14 = tpu.matmul %12, %7, %cst {dimension_numbers = #tpu.dot_dimension_numbers<[1], [0], [0], [1], [0, 0, 1, 1], [], []>} : vector<8x128xf32>, vector<128x384xf32>, vector<8x384xf32> -> vector<8x384xf32>
    %c0_22 = arith.constant 0 : index
    %c0_23 = arith.constant 0 : index
    %c0_24 = arith.constant 0 : index
    %15 = vector.load %arg2[%c0_22, %c0_23, %c0_24] : memref<8x8x384xbf16, #tpu.memory_space<vmem>>, vector<1x8x384xbf16>
    %16 = vector.shape_cast %15 : vector<1x8x384xbf16> to vector<8x384xbf16>
    %17 = arith.extf %16 : vector<8x384xbf16> to vector<8x384xf32>
    %18 = vector.broadcast %3 : vector<1x384xf32> to vector<8x384xf32>
    %19 = arith.addf %17, %18 : vector<8x384xf32>
    %cst_25 = arith.constant dense<0.000000e+00> : vector<8x384xf32>
    %20 = tpu.matmul %11, %4, %cst_25 {dimension_numbers = #tpu.dot_dimension_numbers<[1], [0], [0], [1], [0, 0, 1, 1], [], []>} : vector<8x128xf32>, vector<128x384xf32>, vector<8x384xf32> -> vector<8x384xf32>
    %21 = vector.extract_strided_slice %19 {offsets = [0, 0], sizes = [8, 128], strides = [1, 1]} : vector<8x384xf32> to vector<8x128xf32>
    %22 = vector.extract_strided_slice %20 {offsets = [0, 0], sizes = [8, 128], strides = [1, 1]} : vector<8x384xf32> to vector<8x128xf32>
    %23 = arith.addf %21, %22 : vector<8x128xf32>
    %24 = arith.negf %23 : vector<8x128xf32>
    %25 = math.exp %24 : vector<8x128xf32>
    %cst_26 = arith.constant 1.000000e+00 : f32
    %26 = vector.broadcast %cst_26 : f32 to vector<8x128xf32>
    %27 = arith.addf %26, %25 : vector<8x128xf32>
    %28 = arith.divf %26, %27 : vector<8x128xf32>
    %29 = vector.extract_strided_slice %19 {offsets = [0, 128], sizes = [8, 128], strides = [1, 1]} : vector<8x384xf32> to vector<8x128xf32>
    %30 = vector.extract_strided_slice %20 {offsets = [0, 128], sizes = [8, 128], strides = [1, 1]} : vector<8x384xf32> to vector<8x128xf32>
    %31 = arith.addf %29, %30 : vector<8x128xf32>
    %32 = arith.negf %31 : vector<8x128xf32>
    %33 = math.exp %32 : vector<8x128xf32>
    %cst_27 = arith.constant 1.000000e+00 : f32
    %34 = vector.broadcast %cst_27 : f32 to vector<8x128xf32>
    %35 = arith.addf %34, %33 : vector<8x128xf32>
    %36 = arith.divf %34, %35 : vector<8x128xf32>
    %37 = vector.extract_strided_slice %19 {offsets = [0, 256], sizes = [8, 128], strides = [1, 1]} : vector<8x384xf32> to vector<8x128xf32>
    %38 = vector.extract_strided_slice %20 {offsets = [0, 256], sizes = [8, 128], strides = [1, 1]} : vector<8x384xf32> to vector<8x128xf32>
    %39 = vector.broadcast %5 : vector<1x128xf32> to vector<8x128xf32>
    %40 = arith.addf %38, %39 : vector<8x128xf32>
    %41 = arith.mulf %28, %40 : vector<8x128xf32>
    %42 = arith.addf %37, %41 : vector<8x128xf32>
    %43 = math.tanh %42 : vector<8x128xf32>
    %cst_28 = arith.constant 1.000000e+00 : f32
    %44 = vector.broadcast %cst_28 : f32 to vector<8x128xf32>
    %45 = arith.subf %44, %36 : vector<8x128xf32>
    %46 = arith.mulf %45, %43 : vector<8x128xf32>
    %47 = arith.mulf %36, %11 : vector<8x128xf32>
    %48 = arith.addf %46, %47 : vector<8x128xf32>
    %cst_29 = arith.constant dense<0.000000e+00> : vector<8x384xf32>
    %49 = tpu.matmul %48, %6, %cst_29 {dimension_numbers = #tpu.dot_dimension_numbers<[1], [0], [0], [1], [0, 0, 1, 1], [], []>} : vector<8x128xf32>, vector<128x384xf32>, vector<8x384xf32> -> vector<8x384xf32>
    %50 = vector.extract_strided_slice %49 {offsets = [0, 0], sizes = [8, 256], strides = [1, 1]} : vector<8x384xf32> to vector<8x256xf32>
    %51 = vector.extract_strided_slice %14 {offsets = [0, 0], sizes = [8, 256], strides = [1, 1]} : vector<8x384xf32> to vector<8x256xf32>
    %52 = arith.addf %50, %51 : vector<8x256xf32>
    %53 = vector.broadcast %8 : vector<1x256xf32> to vector<8x256xf32>
    %54 = arith.addf %52, %53 : vector<8x256xf32>
    %55 = arith.negf %54 : vector<8x256xf32>
    %56 = math.exp %55 : vector<8x256xf32>
    %cst_30 = arith.constant 1.000000e+00 : f32
    %57 = vector.broadcast %cst_30 : f32 to vector<8x256xf32>
    %58 = arith.addf %57, %56 : vector<8x256xf32>
    %59 = arith.divf %57, %58 : vector<8x256xf32>
    %60 = vector.extract_strided_slice %59 {offsets = [0, 0], sizes = [8, 128], strides = [1, 1]} : vector<8x256xf32> to vector<8x128xf32>
    %61 = vector.extract_strided_slice %59 {offsets = [0, 128], sizes = [8, 128], strides = [1, 1]} : vector<8x256xf32> to vector<8x128xf32>
    %62 = vector.extract_strided_slice %49 {offsets = [0, 256], sizes = [8, 128], strides = [1, 1]} : vector<8x384xf32> to vector<8x128xf32>
    %63 = vector.broadcast %9 : vector<1x128xf32> to vector<8x128xf32>
    %64 = arith.addf %62, %63 : vector<8x128xf32>
    %65 = vector.extract_strided_slice %14 {offsets = [0, 256], sizes = [8, 128], strides = [1, 1]} : vector<8x384xf32> to vector<8x128xf32>
    %66 = vector.broadcast %10 : vector<1x128xf32> to vector<8x128xf32>
    %67 = arith.addf %65, %66 : vector<8x128xf32>
    %68 = arith.mulf %60, %67 : vector<8x128xf32>
    %69 = arith.addf %64, %68 : vector<8x128xf32>
    %70 = math.tanh %69 : vector<8x128xf32>
    %cst_31 = arith.constant 1.000000e+00 : f32
    %71 = vector.broadcast %cst_31 : f32 to vector<8x128xf32>
    %72 = arith.subf %71, %61 : vector<8x128xf32>
    %73 = arith.mulf %72, %70 : vector<8x128xf32>
    %74 = arith.mulf %61, %12 : vector<8x128xf32>
    %75 = arith.addf %73, %74 : vector<8x128xf32>
    %76 = arith.addf %13, %75 : vector<8x128xf32>
    %cst_32 = arith.constant dense<0.000000e+00> : vector<8x384xf32>
    %77 = tpu.matmul %75, %7, %cst_32 {dimension_numbers = #tpu.dot_dimension_numbers<[1], [0], [0], [1], [0, 0, 1, 1], [], []>} : vector<8x128xf32>, vector<128x384xf32>, vector<8x384xf32> -> vector<8x384xf32>
    %c1 = arith.constant 1 : index
    %c0_33 = arith.constant 0 : index
    %c0_34 = arith.constant 0 : index
    %78 = vector.load %arg2[%c1, %c0_33, %c0_34] : memref<8x8x384xbf16, #tpu.memory_space<vmem>>, vector<1x8x384xbf16>
    %79 = vector.shape_cast %78 : vector<1x8x384xbf16> to vector<8x384xbf16>
    %80 = arith.extf %79 : vector<8x384xbf16> to vector<8x384xf32>
    %81 = vector.broadcast %3 : vector<1x384xf32> to vector<8x384xf32>
    %82 = arith.addf %80, %81 : vector<8x384xf32>
    %cst_35 = arith.constant dense<0.000000e+00> : vector<8x384xf32>
    %83 = tpu.matmul %48, %4, %cst_35 {dimension_numbers = #tpu.dot_dimension_numbers<[1], [0], [0], [1], [0, 0, 1, 1], [], []>} : vector<8x128xf32>, vector<128x384xf32>, vector<8x384xf32> -> vector<8x384xf32>
    %84 = vector.extract_strided_slice %82 {offsets = [0, 0], sizes = [8, 128], strides = [1, 1]} : vector<8x384xf32> to vector<8x128xf32>
    %85 = vector.extract_strided_slice %83 {offsets = [0, 0], sizes = [8, 128], strides = [1, 1]} : vector<8x384xf32> to vector<8x128xf32>
    %86 = arith.addf %84, %85 : vector<8x128xf32>
    %87 = arith.negf %86 : vector<8x128xf32>
    %88 = math.exp %87 : vector<8x128xf32>
    %cst_36 = arith.constant 1.000000e+00 : f32
    %89 = vector.broadcast %cst_36 : f32 to vector<8x128xf32>
    %90 = arith.addf %89, %88 : vector<8x128xf32>
    %91 = arith.divf %89, %90 : vector<8x128xf32>
    %92 = vector.extract_strided_slice %82 {offsets = [0, 128], sizes = [8, 128], strides = [1, 1]} : vector<8x384xf32> to vector<8x128xf32>
    %93 = vector.extract_strided_slice %83 {offsets = [0, 128], sizes = [8, 128], strides = [1, 1]} : vector<8x384xf32> to vector<8x128xf32>
    %94 = arith.addf %92, %93 : vector<8x128xf32>
    %95 = arith.negf %94 : vector<8x128xf32>
    %96 = math.exp %95 : vector<8x128xf32>
    %cst_37 = arith.constant 1.000000e+00 : f32
    %97 = vector.broadcast %cst_37 : f32 to vector<8x128xf32>
    %98 = arith.addf %97, %96 : vector<8x128xf32>
    %99 = arith.divf %97, %98 : vector<8x128xf32>
    %100 = vector.extract_strided_slice %82 {offsets = [0, 256], sizes = [8, 128], strides = [1, 1]} : vector<8x384xf32> to vector<8x128xf32>
    %101 = vector.extract_strided_slice %83 {offsets = [0, 256], sizes = [8, 128], strides = [1, 1]} : vector<8x384xf32> to vector<8x128xf32>
    %102 = vector.broadcast %5 : vector<1x128xf32> to vector<8x128xf32>
    %103 = arith.addf %101, %102 : vector<8x128xf32>
    %104 = arith.mulf %91, %103 : vector<8x128xf32>
    %105 = arith.addf %100, %104 : vector<8x128xf32>
    %106 = math.tanh %105 : vector<8x128xf32>
    %cst_38 = arith.constant 1.000000e+00 : f32
    %107 = vector.broadcast %cst_38 : f32 to vector<8x128xf32>
    %108 = arith.subf %107, %99 : vector<8x128xf32>
    %109 = arith.mulf %108, %106 : vector<8x128xf32>
    %110 = arith.mulf %99, %48 : vector<8x128xf32>
    %111 = arith.addf %109, %110 : vector<8x128xf32>
    %cst_39 = arith.constant dense<0.000000e+00> : vector<8x384xf32>
    %112 = tpu.matmul %111, %6, %cst_39 {dimension_numbers = #tpu.dot_dimension_numbers<[1], [0], [0], [1], [0, 0, 1, 1], [], []>} : vector<8x128xf32>, vector<128x384xf32>, vector<8x384xf32> -> vector<8x384xf32>
    %113 = vector.extract_strided_slice %112 {offsets = [0, 0], sizes = [8, 256], strides = [1, 1]} : vector<8x384xf32> to vector<8x256xf32>
    %114 = vector.extract_strided_slice %77 {offsets = [0, 0], sizes = [8, 256], strides = [1, 1]} : vector<8x384xf32> to vector<8x256xf32>
    %115 = arith.addf %113, %114 : vector<8x256xf32>
    %116 = vector.broadcast %8 : vector<1x256xf32> to vector<8x256xf32>
    %117 = arith.addf %115, %116 : vector<8x256xf32>
    %118 = arith.negf %117 : vector<8x256xf32>
    %119 = math.exp %118 : vector<8x256xf32>
    %cst_40 = arith.constant 1.000000e+00 : f32
    %120 = vector.broadcast %cst_40 : f32 to vector<8x256xf32>
    %121 = arith.addf %120, %119 : vector<8x256xf32>
    %122 = arith.divf %120, %121 : vector<8x256xf32>
    %123 = vector.extract_strided_slice %122 {offsets = [0, 0], sizes = [8, 128], strides = [1, 1]} : vector<8x256xf32> to vector<8x128xf32>
    %124 = vector.extract_strided_slice %122 {offsets = [0, 128], sizes = [8, 128], strides = [1, 1]} : vector<8x256xf32> to vector<8x128xf32>
    %125 = vector.extract_strided_slice %112 {offsets = [0, 256], sizes = [8, 128], strides = [1, 1]} : vector<8x384xf32> to vector<8x128xf32>
    %126 = vector.broadcast %9 : vector<1x128xf32> to vector<8x128xf32>
    %127 = arith.addf %125, %126 : vector<8x128xf32>
    %128 = vector.extract_strided_slice %77 {offsets = [0, 256], sizes = [8, 128], strides = [1, 1]} : vector<8x384xf32> to vector<8x128xf32>
    %129 = vector.broadcast %10 : vector<1x128xf32> to vector<8x128xf32>
    %130 = arith.addf %128, %129 : vector<8x128xf32>
    %131 = arith.mulf %123, %130 : vector<8x128xf32>
    %132 = arith.addf %127, %131 : vector<8x128xf32>
    %133 = math.tanh %132 : vector<8x128xf32>
    %cst_41 = arith.constant 1.000000e+00 : f32
    %134 = vector.broadcast %cst_41 : f32 to vector<8x128xf32>
    %135 = arith.subf %134, %124 : vector<8x128xf32>
    %136 = arith.mulf %135, %133 : vector<8x128xf32>
    %137 = arith.mulf %124, %75 : vector<8x128xf32>
    %138 = arith.addf %136, %137 : vector<8x128xf32>
    %139 = arith.addf %76, %138 : vector<8x128xf32>
    %cst_42 = arith.constant dense<0.000000e+00> : vector<8x384xf32>
    %140 = tpu.matmul %138, %7, %cst_42 {dimension_numbers = #tpu.dot_dimension_numbers<[1], [0], [0], [1], [0, 0, 1, 1], [], []>} : vector<8x128xf32>, vector<128x384xf32>, vector<8x384xf32> -> vector<8x384xf32>
    %c2 = arith.constant 2 : index
    %c0_43 = arith.constant 0 : index
    %c0_44 = arith.constant 0 : index
    %141 = vector.load %arg2[%c2, %c0_43, %c0_44] : memref<8x8x384xbf16, #tpu.memory_space<vmem>>, vector<1x8x384xbf16>
    %142 = vector.shape_cast %141 : vector<1x8x384xbf16> to vector<8x384xbf16>
    %143 = arith.extf %142 : vector<8x384xbf16> to vector<8x384xf32>
    %144 = vector.broadcast %3 : vector<1x384xf32> to vector<8x384xf32>
    %145 = arith.addf %143, %144 : vector<8x384xf32>
    %cst_45 = arith.constant dense<0.000000e+00> : vector<8x384xf32>
    %146 = tpu.matmul %111, %4, %cst_45 {dimension_numbers = #tpu.dot_dimension_numbers<[1], [0], [0], [1], [0, 0, 1, 1], [], []>} : vector<8x128xf32>, vector<128x384xf32>, vector<8x384xf32> -> vector<8x384xf32>
    %147 = vector.extract_strided_slice %145 {offsets = [0, 0], sizes = [8, 128], strides = [1, 1]} : vector<8x384xf32> to vector<8x128xf32>
    %148 = vector.extract_strided_slice %146 {offsets = [0, 0], sizes = [8, 128], strides = [1, 1]} : vector<8x384xf32> to vector<8x128xf32>
    %149 = arith.addf %147, %148 : vector<8x128xf32>
    %150 = arith.negf %149 : vector<8x128xf32>
    %151 = math.exp %150 : vector<8x128xf32>
    %cst_46 = arith.constant 1.000000e+00 : f32
    %152 = vector.broadcast %cst_46 : f32 to vector<8x128xf32>
    %153 = arith.addf %152, %151 : vector<8x128xf32>
    %154 = arith.divf %152, %153 : vector<8x128xf32>
    %155 = vector.extract_strided_slice %145 {offsets = [0, 128], sizes = [8, 128], strides = [1, 1]} : vector<8x384xf32> to vector<8x128xf32>
    %156 = vector.extract_strided_slice %146 {offsets = [0, 128], sizes = [8, 128], strides = [1, 1]} : vector<8x384xf32> to vector<8x128xf32>
    %157 = arith.addf %155, %156 : vector<8x128xf32>
    %158 = arith.negf %157 : vector<8x128xf32>
    %159 = math.exp %158 : vector<8x128xf32>
    %cst_47 = arith.constant 1.000000e+00 : f32
    %160 = vector.broadcast %cst_47 : f32 to vector<8x128xf32>
    %161 = arith.addf %160, %159 : vector<8x128xf32>
    %162 = arith.divf %160, %161 : vector<8x128xf32>
    %163 = vector.extract_strided_slice %145 {offsets = [0, 256], sizes = [8, 128], strides = [1, 1]} : vector<8x384xf32> to vector<8x128xf32>
    %164 = vector.extract_strided_slice %146 {offsets = [0, 256], sizes = [8, 128], strides = [1, 1]} : vector<8x384xf32> to vector<8x128xf32>
    %165 = vector.broadcast %5 : vector<1x128xf32> to vector<8x128xf32>
    %166 = arith.addf %164, %165 : vector<8x128xf32>
    %167 = arith.mulf %154, %166 : vector<8x128xf32>
    %168 = arith.addf %163, %167 : vector<8x128xf32>
    %169 = math.tanh %168 : vector<8x128xf32>
    %cst_48 = arith.constant 1.000000e+00 : f32
    %170 = vector.broadcast %cst_48 : f32 to vector<8x128xf32>
    %171 = arith.subf %170, %162 : vector<8x128xf32>
    %172 = arith.mulf %171, %169 : vector<8x128xf32>
    %173 = arith.mulf %162, %111 : vector<8x128xf32>
    %174 = arith.addf %172, %173 : vector<8x128xf32>
    %cst_49 = arith.constant dense<0.000000e+00> : vector<8x384xf32>
    %175 = tpu.matmul %174, %6, %cst_49 {dimension_numbers = #tpu.dot_dimension_numbers<[1], [0], [0], [1], [0, 0, 1, 1], [], []>} : vector<8x128xf32>, vector<128x384xf32>, vector<8x384xf32> -> vector<8x384xf32>
    %176 = vector.extract_strided_slice %175 {offsets = [0, 0], sizes = [8, 256], strides = [1, 1]} : vector<8x384xf32> to vector<8x256xf32>
    %177 = vector.extract_strided_slice %140 {offsets = [0, 0], sizes = [8, 256], strides = [1, 1]} : vector<8x384xf32> to vector<8x256xf32>
    %178 = arith.addf %176, %177 : vector<8x256xf32>
    %179 = vector.broadcast %8 : vector<1x256xf32> to vector<8x256xf32>
    %180 = arith.addf %178, %179 : vector<8x256xf32>
    %181 = arith.negf %180 : vector<8x256xf32>
    %182 = math.exp %181 : vector<8x256xf32>
    %cst_50 = arith.constant 1.000000e+00 : f32
    %183 = vector.broadcast %cst_50 : f32 to vector<8x256xf32>
    %184 = arith.addf %183, %182 : vector<8x256xf32>
    %185 = arith.divf %183, %184 : vector<8x256xf32>
    %186 = vector.extract_strided_slice %185 {offsets = [0, 0], sizes = [8, 128], strides = [1, 1]} : vector<8x256xf32> to vector<8x128xf32>
    %187 = vector.extract_strided_slice %185 {offsets = [0, 128], sizes = [8, 128], strides = [1, 1]} : vector<8x256xf32> to vector<8x128xf32>
    %188 = vector.extract_strided_slice %175 {offsets = [0, 256], sizes = [8, 128], strides = [1, 1]} : vector<8x384xf32> to vector<8x128xf32>
    %189 = vector.broadcast %9 : vector<1x128xf32> to vector<8x128xf32>
    %190 = arith.addf %188, %189 : vector<8x128xf32>
    %191 = vector.extract_strided_slice %140 {offsets = [0, 256], sizes = [8, 128], strides = [1, 1]} : vector<8x384xf32> to vector<8x128xf32>
    %192 = vector.broadcast %10 : vector<1x128xf32> to vector<8x128xf32>
    %193 = arith.addf %191, %192 : vector<8x128xf32>
    %194 = arith.mulf %186, %193 : vector<8x128xf32>
    %195 = arith.addf %190, %194 : vector<8x128xf32>
    %196 = math.tanh %195 : vector<8x128xf32>
    %cst_51 = arith.constant 1.000000e+00 : f32
    %197 = vector.broadcast %cst_51 : f32 to vector<8x128xf32>
    %198 = arith.subf %197, %187 : vector<8x128xf32>
    %199 = arith.mulf %198, %196 : vector<8x128xf32>
    %200 = arith.mulf %187, %138 : vector<8x128xf32>
    %201 = arith.addf %199, %200 : vector<8x128xf32>
    %202 = arith.addf %139, %201 : vector<8x128xf32>
    %cst_52 = arith.constant dense<0.000000e+00> : vector<8x384xf32>
    %203 = tpu.matmul %201, %7, %cst_52 {dimension_numbers = #tpu.dot_dimension_numbers<[1], [0], [0], [1], [0, 0, 1, 1], [], []>} : vector<8x128xf32>, vector<128x384xf32>, vector<8x384xf32> -> vector<8x384xf32>
    %c3 = arith.constant 3 : index
    %c0_53 = arith.constant 0 : index
    %c0_54 = arith.constant 0 : index
    %204 = vector.load %arg2[%c3, %c0_53, %c0_54] : memref<8x8x384xbf16, #tpu.memory_space<vmem>>, vector<1x8x384xbf16>
    %205 = vector.shape_cast %204 : vector<1x8x384xbf16> to vector<8x384xbf16>
    %206 = arith.extf %205 : vector<8x384xbf16> to vector<8x384xf32>
    %207 = vector.broadcast %3 : vector<1x384xf32> to vector<8x384xf32>
    %208 = arith.addf %206, %207 : vector<8x384xf32>
    %cst_55 = arith.constant dense<0.000000e+00> : vector<8x384xf32>
    %209 = tpu.matmul %174, %4, %cst_55 {dimension_numbers = #tpu.dot_dimension_numbers<[1], [0], [0], [1], [0, 0, 1, 1], [], []>} : vector<8x128xf32>, vector<128x384xf32>, vector<8x384xf32> -> vector<8x384xf32>
    %210 = vector.extract_strided_slice %208 {offsets = [0, 0], sizes = [8, 128], strides = [1, 1]} : vector<8x384xf32> to vector<8x128xf32>
    %211 = vector.extract_strided_slice %209 {offsets = [0, 0], sizes = [8, 128], strides = [1, 1]} : vector<8x384xf32> to vector<8x128xf32>
    %212 = arith.addf %210, %211 : vector<8x128xf32>
    %213 = arith.negf %212 : vector<8x128xf32>
    %214 = math.exp %213 : vector<8x128xf32>
    %cst_56 = arith.constant 1.000000e+00 : f32
    %215 = vector.broadcast %cst_56 : f32 to vector<8x128xf32>
    %216 = arith.addf %215, %214 : vector<8x128xf32>
    %217 = arith.divf %215, %216 : vector<8x128xf32>
    %218 = vector.extract_strided_slice %208 {offsets = [0, 128], sizes = [8, 128], strides = [1, 1]} : vector<8x384xf32> to vector<8x128xf32>
    %219 = vector.extract_strided_slice %209 {offsets = [0, 128], sizes = [8, 128], strides = [1, 1]} : vector<8x384xf32> to vector<8x128xf32>
    %220 = arith.addf %218, %219 : vector<8x128xf32>
    %221 = arith.negf %220 : vector<8x128xf32>
    %222 = math.exp %221 : vector<8x128xf32>
    %cst_57 = arith.constant 1.000000e+00 : f32
    %223 = vector.broadcast %cst_57 : f32 to vector<8x128xf32>
    %224 = arith.addf %223, %222 : vector<8x128xf32>
    %225 = arith.divf %223, %224 : vector<8x128xf32>
    %226 = vector.extract_strided_slice %208 {offsets = [0, 256], sizes = [8, 128], strides = [1, 1]} : vector<8x384xf32> to vector<8x128xf32>
    %227 = vector.extract_strided_slice %209 {offsets = [0, 256], sizes = [8, 128], strides = [1, 1]} : vector<8x384xf32> to vector<8x128xf32>
    %228 = vector.broadcast %5 : vector<1x128xf32> to vector<8x128xf32>
    %229 = arith.addf %227, %228 : vector<8x128xf32>
    %230 = arith.mulf %217, %229 : vector<8x128xf32>
    %231 = arith.addf %226, %230 : vector<8x128xf32>
    %232 = math.tanh %231 : vector<8x128xf32>
    %cst_58 = arith.constant 1.000000e+00 : f32
    %233 = vector.broadcast %cst_58 : f32 to vector<8x128xf32>
    %234 = arith.subf %233, %225 : vector<8x128xf32>
    %235 = arith.mulf %234, %232 : vector<8x128xf32>
    %236 = arith.mulf %225, %174 : vector<8x128xf32>
    %237 = arith.addf %235, %236 : vector<8x128xf32>
    %cst_59 = arith.constant dense<0.000000e+00> : vector<8x384xf32>
    %238 = tpu.matmul %237, %6, %cst_59 {dimension_numbers = #tpu.dot_dimension_numbers<[1], [0], [0], [1], [0, 0, 1, 1], [], []>} : vector<8x128xf32>, vector<128x384xf32>, vector<8x384xf32> -> vector<8x384xf32>
    %239 = vector.extract_strided_slice %238 {offsets = [0, 0], sizes = [8, 256], strides = [1, 1]} : vector<8x384xf32> to vector<8x256xf32>
    %240 = vector.extract_strided_slice %203 {offsets = [0, 0], sizes = [8, 256], strides = [1, 1]} : vector<8x384xf32> to vector<8x256xf32>
    %241 = arith.addf %239, %240 : vector<8x256xf32>
    %242 = vector.broadcast %8 : vector<1x256xf32> to vector<8x256xf32>
    %243 = arith.addf %241, %242 : vector<8x256xf32>
    %244 = arith.negf %243 : vector<8x256xf32>
    %245 = math.exp %244 : vector<8x256xf32>
    %cst_60 = arith.constant 1.000000e+00 : f32
    %246 = vector.broadcast %cst_60 : f32 to vector<8x256xf32>
    %247 = arith.addf %246, %245 : vector<8x256xf32>
    %248 = arith.divf %246, %247 : vector<8x256xf32>
    %249 = vector.extract_strided_slice %248 {offsets = [0, 0], sizes = [8, 128], strides = [1, 1]} : vector<8x256xf32> to vector<8x128xf32>
    %250 = vector.extract_strided_slice %248 {offsets = [0, 128], sizes = [8, 128], strides = [1, 1]} : vector<8x256xf32> to vector<8x128xf32>
    %251 = vector.extract_strided_slice %238 {offsets = [0, 256], sizes = [8, 128], strides = [1, 1]} : vector<8x384xf32> to vector<8x128xf32>
    %252 = vector.broadcast %9 : vector<1x128xf32> to vector<8x128xf32>
    %253 = arith.addf %251, %252 : vector<8x128xf32>
    %254 = vector.extract_strided_slice %203 {offsets = [0, 256], sizes = [8, 128], strides = [1, 1]} : vector<8x384xf32> to vector<8x128xf32>
    %255 = vector.broadcast %10 : vector<1x128xf32> to vector<8x128xf32>
    %256 = arith.addf %254, %255 : vector<8x128xf32>
    %257 = arith.mulf %249, %256 : vector<8x128xf32>
    %258 = arith.addf %253, %257 : vector<8x128xf32>
    %259 = math.tanh %258 : vector<8x128xf32>
    %cst_61 = arith.constant 1.000000e+00 : f32
    %260 = vector.broadcast %cst_61 : f32 to vector<8x128xf32>
    %261 = arith.subf %260, %250 : vector<8x128xf32>
    %262 = arith.mulf %261, %259 : vector<8x128xf32>
    %263 = arith.mulf %250, %201 : vector<8x128xf32>
    %264 = arith.addf %262, %263 : vector<8x128xf32>
    %265 = arith.addf %202, %264 : vector<8x128xf32>
    %cst_62 = arith.constant dense<0.000000e+00> : vector<8x384xf32>
    %266 = tpu.matmul %264, %7, %cst_62 {dimension_numbers = #tpu.dot_dimension_numbers<[1], [0], [0], [1], [0, 0, 1, 1], [], []>} : vector<8x128xf32>, vector<128x384xf32>, vector<8x384xf32> -> vector<8x384xf32>
    %c4 = arith.constant 4 : index
    %c0_63 = arith.constant 0 : index
    %c0_64 = arith.constant 0 : index
    %267 = vector.load %arg2[%c4, %c0_63, %c0_64] : memref<8x8x384xbf16, #tpu.memory_space<vmem>>, vector<1x8x384xbf16>
    %268 = vector.shape_cast %267 : vector<1x8x384xbf16> to vector<8x384xbf16>
    %269 = arith.extf %268 : vector<8x384xbf16> to vector<8x384xf32>
    %270 = vector.broadcast %3 : vector<1x384xf32> to vector<8x384xf32>
    %271 = arith.addf %269, %270 : vector<8x384xf32>
    %cst_65 = arith.constant dense<0.000000e+00> : vector<8x384xf32>
    %272 = tpu.matmul %237, %4, %cst_65 {dimension_numbers = #tpu.dot_dimension_numbers<[1], [0], [0], [1], [0, 0, 1, 1], [], []>} : vector<8x128xf32>, vector<128x384xf32>, vector<8x384xf32> -> vector<8x384xf32>
    %273 = vector.extract_strided_slice %271 {offsets = [0, 0], sizes = [8, 128], strides = [1, 1]} : vector<8x384xf32> to vector<8x128xf32>
    %274 = vector.extract_strided_slice %272 {offsets = [0, 0], sizes = [8, 128], strides = [1, 1]} : vector<8x384xf32> to vector<8x128xf32>
    %275 = arith.addf %273, %274 : vector<8x128xf32>
    %276 = arith.negf %275 : vector<8x128xf32>
    %277 = math.exp %276 : vector<8x128xf32>
    %cst_66 = arith.constant 1.000000e+00 : f32
    %278 = vector.broadcast %cst_66 : f32 to vector<8x128xf32>
    %279 = arith.addf %278, %277 : vector<8x128xf32>
    %280 = arith.divf %278, %279 : vector<8x128xf32>
    %281 = vector.extract_strided_slice %271 {offsets = [0, 128], sizes = [8, 128], strides = [1, 1]} : vector<8x384xf32> to vector<8x128xf32>
    %282 = vector.extract_strided_slice %272 {offsets = [0, 128], sizes = [8, 128], strides = [1, 1]} : vector<8x384xf32> to vector<8x128xf32>
    %283 = arith.addf %281, %282 : vector<8x128xf32>
    %284 = arith.negf %283 : vector<8x128xf32>
    %285 = math.exp %284 : vector<8x128xf32>
    %cst_67 = arith.constant 1.000000e+00 : f32
    %286 = vector.broadcast %cst_67 : f32 to vector<8x128xf32>
    %287 = arith.addf %286, %285 : vector<8x128xf32>
    %288 = arith.divf %286, %287 : vector<8x128xf32>
    %289 = vector.extract_strided_slice %271 {offsets = [0, 256], sizes = [8, 128], strides = [1, 1]} : vector<8x384xf32> to vector<8x128xf32>
    %290 = vector.extract_strided_slice %272 {offsets = [0, 256], sizes = [8, 128], strides = [1, 1]} : vector<8x384xf32> to vector<8x128xf32>
    %291 = vector.broadcast %5 : vector<1x128xf32> to vector<8x128xf32>
    %292 = arith.addf %290, %291 : vector<8x128xf32>
    %293 = arith.mulf %280, %292 : vector<8x128xf32>
    %294 = arith.addf %289, %293 : vector<8x128xf32>
    %295 = math.tanh %294 : vector<8x128xf32>
    %cst_68 = arith.constant 1.000000e+00 : f32
    %296 = vector.broadcast %cst_68 : f32 to vector<8x128xf32>
    %297 = arith.subf %296, %288 : vector<8x128xf32>
    %298 = arith.mulf %297, %295 : vector<8x128xf32>
    %299 = arith.mulf %288, %237 : vector<8x128xf32>
    %300 = arith.addf %298, %299 : vector<8x128xf32>
    %cst_69 = arith.constant dense<0.000000e+00> : vector<8x384xf32>
    %301 = tpu.matmul %300, %6, %cst_69 {dimension_numbers = #tpu.dot_dimension_numbers<[1], [0], [0], [1], [0, 0, 1, 1], [], []>} : vector<8x128xf32>, vector<128x384xf32>, vector<8x384xf32> -> vector<8x384xf32>
    %302 = vector.extract_strided_slice %301 {offsets = [0, 0], sizes = [8, 256], strides = [1, 1]} : vector<8x384xf32> to vector<8x256xf32>
    %303 = vector.extract_strided_slice %266 {offsets = [0, 0], sizes = [8, 256], strides = [1, 1]} : vector<8x384xf32> to vector<8x256xf32>
    %304 = arith.addf %302, %303 : vector<8x256xf32>
    %305 = vector.broadcast %8 : vector<1x256xf32> to vector<8x256xf32>
    %306 = arith.addf %304, %305 : vector<8x256xf32>
    %307 = arith.negf %306 : vector<8x256xf32>
    %308 = math.exp %307 : vector<8x256xf32>
    %cst_70 = arith.constant 1.000000e+00 : f32
    %309 = vector.broadcast %cst_70 : f32 to vector<8x256xf32>
    %310 = arith.addf %309, %308 : vector<8x256xf32>
    %311 = arith.divf %309, %310 : vector<8x256xf32>
    %312 = vector.extract_strided_slice %311 {offsets = [0, 0], sizes = [8, 128], strides = [1, 1]} : vector<8x256xf32> to vector<8x128xf32>
    %313 = vector.extract_strided_slice %311 {offsets = [0, 128], sizes = [8, 128], strides = [1, 1]} : vector<8x256xf32> to vector<8x128xf32>
    %314 = vector.extract_strided_slice %301 {offsets = [0, 256], sizes = [8, 128], strides = [1, 1]} : vector<8x384xf32> to vector<8x128xf32>
    %315 = vector.broadcast %9 : vector<1x128xf32> to vector<8x128xf32>
    %316 = arith.addf %314, %315 : vector<8x128xf32>
    %317 = vector.extract_strided_slice %266 {offsets = [0, 256], sizes = [8, 128], strides = [1, 1]} : vector<8x384xf32> to vector<8x128xf32>
    %318 = vector.broadcast %10 : vector<1x128xf32> to vector<8x128xf32>
    %319 = arith.addf %317, %318 : vector<8x128xf32>
    %320 = arith.mulf %312, %319 : vector<8x128xf32>
    %321 = arith.addf %316, %320 : vector<8x128xf32>
    %322 = math.tanh %321 : vector<8x128xf32>
    %cst_71 = arith.constant 1.000000e+00 : f32
    %323 = vector.broadcast %cst_71 : f32 to vector<8x128xf32>
    %324 = arith.subf %323, %313 : vector<8x128xf32>
    %325 = arith.mulf %324, %322 : vector<8x128xf32>
    %326 = arith.mulf %313, %264 : vector<8x128xf32>
    %327 = arith.addf %325, %326 : vector<8x128xf32>
    %328 = arith.addf %265, %327 : vector<8x128xf32>
    %cst_72 = arith.constant dense<0.000000e+00> : vector<8x384xf32>
    %329 = tpu.matmul %327, %7, %cst_72 {dimension_numbers = #tpu.dot_dimension_numbers<[1], [0], [0], [1], [0, 0, 1, 1], [], []>} : vector<8x128xf32>, vector<128x384xf32>, vector<8x384xf32> -> vector<8x384xf32>
    %c5 = arith.constant 5 : index
    %c0_73 = arith.constant 0 : index
    %c0_74 = arith.constant 0 : index
    %330 = vector.load %arg2[%c5, %c0_73, %c0_74] : memref<8x8x384xbf16, #tpu.memory_space<vmem>>, vector<1x8x384xbf16>
    %331 = vector.shape_cast %330 : vector<1x8x384xbf16> to vector<8x384xbf16>
    %332 = arith.extf %331 : vector<8x384xbf16> to vector<8x384xf32>
    %333 = vector.broadcast %3 : vector<1x384xf32> to vector<8x384xf32>
    %334 = arith.addf %332, %333 : vector<8x384xf32>
    %cst_75 = arith.constant dense<0.000000e+00> : vector<8x384xf32>
    %335 = tpu.matmul %300, %4, %cst_75 {dimension_numbers = #tpu.dot_dimension_numbers<[1], [0], [0], [1], [0, 0, 1, 1], [], []>} : vector<8x128xf32>, vector<128x384xf32>, vector<8x384xf32> -> vector<8x384xf32>
    %336 = vector.extract_strided_slice %334 {offsets = [0, 0], sizes = [8, 128], strides = [1, 1]} : vector<8x384xf32> to vector<8x128xf32>
    %337 = vector.extract_strided_slice %335 {offsets = [0, 0], sizes = [8, 128], strides = [1, 1]} : vector<8x384xf32> to vector<8x128xf32>
    %338 = arith.addf %336, %337 : vector<8x128xf32>
    %339 = arith.negf %338 : vector<8x128xf32>
    %340 = math.exp %339 : vector<8x128xf32>
    %cst_76 = arith.constant 1.000000e+00 : f32
    %341 = vector.broadcast %cst_76 : f32 to vector<8x128xf32>
    %342 = arith.addf %341, %340 : vector<8x128xf32>
    %343 = arith.divf %341, %342 : vector<8x128xf32>
    %344 = vector.extract_strided_slice %334 {offsets = [0, 128], sizes = [8, 128], strides = [1, 1]} : vector<8x384xf32> to vector<8x128xf32>
    %345 = vector.extract_strided_slice %335 {offsets = [0, 128], sizes = [8, 128], strides = [1, 1]} : vector<8x384xf32> to vector<8x128xf32>
    %346 = arith.addf %344, %345 : vector<8x128xf32>
    %347 = arith.negf %346 : vector<8x128xf32>
    %348 = math.exp %347 : vector<8x128xf32>
    %cst_77 = arith.constant 1.000000e+00 : f32
    %349 = vector.broadcast %cst_77 : f32 to vector<8x128xf32>
    %350 = arith.addf %349, %348 : vector<8x128xf32>
    %351 = arith.divf %349, %350 : vector<8x128xf32>
    %352 = vector.extract_strided_slice %334 {offsets = [0, 256], sizes = [8, 128], strides = [1, 1]} : vector<8x384xf32> to vector<8x128xf32>
    %353 = vector.extract_strided_slice %335 {offsets = [0, 256], sizes = [8, 128], strides = [1, 1]} : vector<8x384xf32> to vector<8x128xf32>
    %354 = vector.broadcast %5 : vector<1x128xf32> to vector<8x128xf32>
    %355 = arith.addf %353, %354 : vector<8x128xf32>
    %356 = arith.mulf %343, %355 : vector<8x128xf32>
    %357 = arith.addf %352, %356 : vector<8x128xf32>
    %358 = math.tanh %357 : vector<8x128xf32>
    %cst_78 = arith.constant 1.000000e+00 : f32
    %359 = vector.broadcast %cst_78 : f32 to vector<8x128xf32>
    %360 = arith.subf %359, %351 : vector<8x128xf32>
    %361 = arith.mulf %360, %358 : vector<8x128xf32>
    %362 = arith.mulf %351, %300 : vector<8x128xf32>
    %363 = arith.addf %361, %362 : vector<8x128xf32>
    %cst_79 = arith.constant dense<0.000000e+00> : vector<8x384xf32>
    %364 = tpu.matmul %363, %6, %cst_79 {dimension_numbers = #tpu.dot_dimension_numbers<[1], [0], [0], [1], [0, 0, 1, 1], [], []>} : vector<8x128xf32>, vector<128x384xf32>, vector<8x384xf32> -> vector<8x384xf32>
    %365 = vector.extract_strided_slice %364 {offsets = [0, 0], sizes = [8, 256], strides = [1, 1]} : vector<8x384xf32> to vector<8x256xf32>
    %366 = vector.extract_strided_slice %329 {offsets = [0, 0], sizes = [8, 256], strides = [1, 1]} : vector<8x384xf32> to vector<8x256xf32>
    %367 = arith.addf %365, %366 : vector<8x256xf32>
    %368 = vector.broadcast %8 : vector<1x256xf32> to vector<8x256xf32>
    %369 = arith.addf %367, %368 : vector<8x256xf32>
    %370 = arith.negf %369 : vector<8x256xf32>
    %371 = math.exp %370 : vector<8x256xf32>
    %cst_80 = arith.constant 1.000000e+00 : f32
    %372 = vector.broadcast %cst_80 : f32 to vector<8x256xf32>
    %373 = arith.addf %372, %371 : vector<8x256xf32>
    %374 = arith.divf %372, %373 : vector<8x256xf32>
    %375 = vector.extract_strided_slice %374 {offsets = [0, 0], sizes = [8, 128], strides = [1, 1]} : vector<8x256xf32> to vector<8x128xf32>
    %376 = vector.extract_strided_slice %374 {offsets = [0, 128], sizes = [8, 128], strides = [1, 1]} : vector<8x256xf32> to vector<8x128xf32>
    %377 = vector.extract_strided_slice %364 {offsets = [0, 256], sizes = [8, 128], strides = [1, 1]} : vector<8x384xf32> to vector<8x128xf32>
    %378 = vector.broadcast %9 : vector<1x128xf32> to vector<8x128xf32>
    %379 = arith.addf %377, %378 : vector<8x128xf32>
    %380 = vector.extract_strided_slice %329 {offsets = [0, 256], sizes = [8, 128], strides = [1, 1]} : vector<8x384xf32> to vector<8x128xf32>
    %381 = vector.broadcast %10 : vector<1x128xf32> to vector<8x128xf32>
    %382 = arith.addf %380, %381 : vector<8x128xf32>
    %383 = arith.mulf %375, %382 : vector<8x128xf32>
    %384 = arith.addf %379, %383 : vector<8x128xf32>
    %385 = math.tanh %384 : vector<8x128xf32>
    %cst_81 = arith.constant 1.000000e+00 : f32
    %386 = vector.broadcast %cst_81 : f32 to vector<8x128xf32>
    %387 = arith.subf %386, %376 : vector<8x128xf32>
    %388 = arith.mulf %387, %385 : vector<8x128xf32>
    %389 = arith.mulf %376, %327 : vector<8x128xf32>
    %390 = arith.addf %388, %389 : vector<8x128xf32>
    %391 = arith.addf %328, %390 : vector<8x128xf32>
    %cst_82 = arith.constant dense<0.000000e+00> : vector<8x384xf32>
    %392 = tpu.matmul %390, %7, %cst_82 {dimension_numbers = #tpu.dot_dimension_numbers<[1], [0], [0], [1], [0, 0, 1, 1], [], []>} : vector<8x128xf32>, vector<128x384xf32>, vector<8x384xf32> -> vector<8x384xf32>
    %c6 = arith.constant 6 : index
    %c0_83 = arith.constant 0 : index
    %c0_84 = arith.constant 0 : index
    %393 = vector.load %arg2[%c6, %c0_83, %c0_84] : memref<8x8x384xbf16, #tpu.memory_space<vmem>>, vector<1x8x384xbf16>
    %394 = vector.shape_cast %393 : vector<1x8x384xbf16> to vector<8x384xbf16>
    %395 = arith.extf %394 : vector<8x384xbf16> to vector<8x384xf32>
    %396 = vector.broadcast %3 : vector<1x384xf32> to vector<8x384xf32>
    %397 = arith.addf %395, %396 : vector<8x384xf32>
    %cst_85 = arith.constant dense<0.000000e+00> : vector<8x384xf32>
    %398 = tpu.matmul %363, %4, %cst_85 {dimension_numbers = #tpu.dot_dimension_numbers<[1], [0], [0], [1], [0, 0, 1, 1], [], []>} : vector<8x128xf32>, vector<128x384xf32>, vector<8x384xf32> -> vector<8x384xf32>
    %399 = vector.extract_strided_slice %397 {offsets = [0, 0], sizes = [8, 128], strides = [1, 1]} : vector<8x384xf32> to vector<8x128xf32>
    %400 = vector.extract_strided_slice %398 {offsets = [0, 0], sizes = [8, 128], strides = [1, 1]} : vector<8x384xf32> to vector<8x128xf32>
    %401 = arith.addf %399, %400 : vector<8x128xf32>
    %402 = arith.negf %401 : vector<8x128xf32>
    %403 = math.exp %402 : vector<8x128xf32>
    %cst_86 = arith.constant 1.000000e+00 : f32
    %404 = vector.broadcast %cst_86 : f32 to vector<8x128xf32>
    %405 = arith.addf %404, %403 : vector<8x128xf32>
    %406 = arith.divf %404, %405 : vector<8x128xf32>
    %407 = vector.extract_strided_slice %397 {offsets = [0, 128], sizes = [8, 128], strides = [1, 1]} : vector<8x384xf32> to vector<8x128xf32>
    %408 = vector.extract_strided_slice %398 {offsets = [0, 128], sizes = [8, 128], strides = [1, 1]} : vector<8x384xf32> to vector<8x128xf32>
    %409 = arith.addf %407, %408 : vector<8x128xf32>
    %410 = arith.negf %409 : vector<8x128xf32>
    %411 = math.exp %410 : vector<8x128xf32>
    %cst_87 = arith.constant 1.000000e+00 : f32
    %412 = vector.broadcast %cst_87 : f32 to vector<8x128xf32>
    %413 = arith.addf %412, %411 : vector<8x128xf32>
    %414 = arith.divf %412, %413 : vector<8x128xf32>
    %415 = vector.extract_strided_slice %397 {offsets = [0, 256], sizes = [8, 128], strides = [1, 1]} : vector<8x384xf32> to vector<8x128xf32>
    %416 = vector.extract_strided_slice %398 {offsets = [0, 256], sizes = [8, 128], strides = [1, 1]} : vector<8x384xf32> to vector<8x128xf32>
    %417 = vector.broadcast %5 : vector<1x128xf32> to vector<8x128xf32>
    %418 = arith.addf %416, %417 : vector<8x128xf32>
    %419 = arith.mulf %406, %418 : vector<8x128xf32>
    %420 = arith.addf %415, %419 : vector<8x128xf32>
    %421 = math.tanh %420 : vector<8x128xf32>
    %cst_88 = arith.constant 1.000000e+00 : f32
    %422 = vector.broadcast %cst_88 : f32 to vector<8x128xf32>
    %423 = arith.subf %422, %414 : vector<8x128xf32>
    %424 = arith.mulf %423, %421 : vector<8x128xf32>
    %425 = arith.mulf %414, %363 : vector<8x128xf32>
    %426 = arith.addf %424, %425 : vector<8x128xf32>
    %cst_89 = arith.constant dense<0.000000e+00> : vector<8x384xf32>
    %427 = tpu.matmul %426, %6, %cst_89 {dimension_numbers = #tpu.dot_dimension_numbers<[1], [0], [0], [1], [0, 0, 1, 1], [], []>} : vector<8x128xf32>, vector<128x384xf32>, vector<8x384xf32> -> vector<8x384xf32>
    %428 = vector.extract_strided_slice %427 {offsets = [0, 0], sizes = [8, 256], strides = [1, 1]} : vector<8x384xf32> to vector<8x256xf32>
    %429 = vector.extract_strided_slice %392 {offsets = [0, 0], sizes = [8, 256], strides = [1, 1]} : vector<8x384xf32> to vector<8x256xf32>
    %430 = arith.addf %428, %429 : vector<8x256xf32>
    %431 = vector.broadcast %8 : vector<1x256xf32> to vector<8x256xf32>
    %432 = arith.addf %430, %431 : vector<8x256xf32>
    %433 = arith.negf %432 : vector<8x256xf32>
    %434 = math.exp %433 : vector<8x256xf32>
    %cst_90 = arith.constant 1.000000e+00 : f32
    %435 = vector.broadcast %cst_90 : f32 to vector<8x256xf32>
    %436 = arith.addf %435, %434 : vector<8x256xf32>
    %437 = arith.divf %435, %436 : vector<8x256xf32>
    %438 = vector.extract_strided_slice %437 {offsets = [0, 0], sizes = [8, 128], strides = [1, 1]} : vector<8x256xf32> to vector<8x128xf32>
    %439 = vector.extract_strided_slice %437 {offsets = [0, 128], sizes = [8, 128], strides = [1, 1]} : vector<8x256xf32> to vector<8x128xf32>
    %440 = vector.extract_strided_slice %427 {offsets = [0, 256], sizes = [8, 128], strides = [1, 1]} : vector<8x384xf32> to vector<8x128xf32>
    %441 = vector.broadcast %9 : vector<1x128xf32> to vector<8x128xf32>
    %442 = arith.addf %440, %441 : vector<8x128xf32>
    %443 = vector.extract_strided_slice %392 {offsets = [0, 256], sizes = [8, 128], strides = [1, 1]} : vector<8x384xf32> to vector<8x128xf32>
    %444 = vector.broadcast %10 : vector<1x128xf32> to vector<8x128xf32>
    %445 = arith.addf %443, %444 : vector<8x128xf32>
    %446 = arith.mulf %438, %445 : vector<8x128xf32>
    %447 = arith.addf %442, %446 : vector<8x128xf32>
    %448 = math.tanh %447 : vector<8x128xf32>
    %cst_91 = arith.constant 1.000000e+00 : f32
    %449 = vector.broadcast %cst_91 : f32 to vector<8x128xf32>
    %450 = arith.subf %449, %439 : vector<8x128xf32>
    %451 = arith.mulf %450, %448 : vector<8x128xf32>
    %452 = arith.mulf %439, %390 : vector<8x128xf32>
    %453 = arith.addf %451, %452 : vector<8x128xf32>
    %454 = arith.addf %391, %453 : vector<8x128xf32>
    %cst_92 = arith.constant dense<0.000000e+00> : vector<8x384xf32>
    %455 = tpu.matmul %453, %7, %cst_92 {dimension_numbers = #tpu.dot_dimension_numbers<[1], [0], [0], [1], [0, 0, 1, 1], [], []>} : vector<8x128xf32>, vector<128x384xf32>, vector<8x384xf32> -> vector<8x384xf32>
    %c7 = arith.constant 7 : index
    %c0_93 = arith.constant 0 : index
    %c0_94 = arith.constant 0 : index
    %456 = vector.load %arg2[%c7, %c0_93, %c0_94] : memref<8x8x384xbf16, #tpu.memory_space<vmem>>, vector<1x8x384xbf16>
    %457 = vector.shape_cast %456 : vector<1x8x384xbf16> to vector<8x384xbf16>
    %458 = arith.extf %457 : vector<8x384xbf16> to vector<8x384xf32>
    %459 = vector.broadcast %3 : vector<1x384xf32> to vector<8x384xf32>
    %460 = arith.addf %458, %459 : vector<8x384xf32>
    %cst_95 = arith.constant dense<0.000000e+00> : vector<8x384xf32>
    %461 = tpu.matmul %426, %4, %cst_95 {dimension_numbers = #tpu.dot_dimension_numbers<[1], [0], [0], [1], [0, 0, 1, 1], [], []>} : vector<8x128xf32>, vector<128x384xf32>, vector<8x384xf32> -> vector<8x384xf32>
    %462 = vector.extract_strided_slice %460 {offsets = [0, 0], sizes = [8, 128], strides = [1, 1]} : vector<8x384xf32> to vector<8x128xf32>
    %463 = vector.extract_strided_slice %461 {offsets = [0, 0], sizes = [8, 128], strides = [1, 1]} : vector<8x384xf32> to vector<8x128xf32>
    %464 = arith.addf %462, %463 : vector<8x128xf32>
    %465 = arith.negf %464 : vector<8x128xf32>
    %466 = math.exp %465 : vector<8x128xf32>
    %cst_96 = arith.constant 1.000000e+00 : f32
    %467 = vector.broadcast %cst_96 : f32 to vector<8x128xf32>
    %468 = arith.addf %467, %466 : vector<8x128xf32>
    %469 = arith.divf %467, %468 : vector<8x128xf32>
    %470 = vector.extract_strided_slice %460 {offsets = [0, 128], sizes = [8, 128], strides = [1, 1]} : vector<8x384xf32> to vector<8x128xf32>
    %471 = vector.extract_strided_slice %461 {offsets = [0, 128], sizes = [8, 128], strides = [1, 1]} : vector<8x384xf32> to vector<8x128xf32>
    %472 = arith.addf %470, %471 : vector<8x128xf32>
    %473 = arith.negf %472 : vector<8x128xf32>
    %474 = math.exp %473 : vector<8x128xf32>
    %cst_97 = arith.constant 1.000000e+00 : f32
    %475 = vector.broadcast %cst_97 : f32 to vector<8x128xf32>
    %476 = arith.addf %475, %474 : vector<8x128xf32>
    %477 = arith.divf %475, %476 : vector<8x128xf32>
    %478 = vector.extract_strided_slice %460 {offsets = [0, 256], sizes = [8, 128], strides = [1, 1]} : vector<8x384xf32> to vector<8x128xf32>
    %479 = vector.extract_strided_slice %461 {offsets = [0, 256], sizes = [8, 128], strides = [1, 1]} : vector<8x384xf32> to vector<8x128xf32>
    %480 = vector.broadcast %5 : vector<1x128xf32> to vector<8x128xf32>
    %481 = arith.addf %479, %480 : vector<8x128xf32>
    %482 = arith.mulf %469, %481 : vector<8x128xf32>
    %483 = arith.addf %478, %482 : vector<8x128xf32>
    %484 = math.tanh %483 : vector<8x128xf32>
    %cst_98 = arith.constant 1.000000e+00 : f32
    %485 = vector.broadcast %cst_98 : f32 to vector<8x128xf32>
    %486 = arith.subf %485, %477 : vector<8x128xf32>
    %487 = arith.mulf %486, %484 : vector<8x128xf32>
    %488 = arith.mulf %477, %426 : vector<8x128xf32>
    %489 = arith.addf %487, %488 : vector<8x128xf32>
    %cst_99 = arith.constant dense<0.000000e+00> : vector<8x384xf32>
    %490 = tpu.matmul %489, %6, %cst_99 {dimension_numbers = #tpu.dot_dimension_numbers<[1], [0], [0], [1], [0, 0, 1, 1], [], []>} : vector<8x128xf32>, vector<128x384xf32>, vector<8x384xf32> -> vector<8x384xf32>
    %491 = vector.extract_strided_slice %490 {offsets = [0, 0], sizes = [8, 256], strides = [1, 1]} : vector<8x384xf32> to vector<8x256xf32>
    %492 = vector.extract_strided_slice %455 {offsets = [0, 0], sizes = [8, 256], strides = [1, 1]} : vector<8x384xf32> to vector<8x256xf32>
    %493 = arith.addf %491, %492 : vector<8x256xf32>
    %494 = vector.broadcast %8 : vector<1x256xf32> to vector<8x256xf32>
    %495 = arith.addf %493, %494 : vector<8x256xf32>
    %496 = arith.negf %495 : vector<8x256xf32>
    %497 = math.exp %496 : vector<8x256xf32>
    %cst_100 = arith.constant 1.000000e+00 : f32
    %498 = vector.broadcast %cst_100 : f32 to vector<8x256xf32>
    %499 = arith.addf %498, %497 : vector<8x256xf32>
    %500 = arith.divf %498, %499 : vector<8x256xf32>
    %501 = vector.extract_strided_slice %500 {offsets = [0, 0], sizes = [8, 128], strides = [1, 1]} : vector<8x256xf32> to vector<8x128xf32>
    %502 = vector.extract_strided_slice %500 {offsets = [0, 128], sizes = [8, 128], strides = [1, 1]} : vector<8x256xf32> to vector<8x128xf32>
    %503 = vector.extract_strided_slice %490 {offsets = [0, 256], sizes = [8, 128], strides = [1, 1]} : vector<8x384xf32> to vector<8x128xf32>
    %504 = vector.broadcast %9 : vector<1x128xf32> to vector<8x128xf32>
    %505 = arith.addf %503, %504 : vector<8x128xf32>
    %506 = vector.extract_strided_slice %455 {offsets = [0, 256], sizes = [8, 128], strides = [1, 1]} : vector<8x384xf32> to vector<8x128xf32>
    %507 = vector.broadcast %10 : vector<1x128xf32> to vector<8x128xf32>
    %508 = arith.addf %506, %507 : vector<8x128xf32>
    %509 = arith.mulf %501, %508 : vector<8x128xf32>
    %510 = arith.addf %505, %509 : vector<8x128xf32>
    %511 = math.tanh %510 : vector<8x128xf32>
    %cst_101 = arith.constant 1.000000e+00 : f32
    %512 = vector.broadcast %cst_101 : f32 to vector<8x128xf32>
    %513 = arith.subf %512, %502 : vector<8x128xf32>
    %514 = arith.mulf %513, %511 : vector<8x128xf32>
    %515 = arith.mulf %502, %453 : vector<8x128xf32>
    %516 = arith.addf %514, %515 : vector<8x128xf32>
    %517 = arith.addf %454, %516 : vector<8x128xf32>
    %c0_102 = arith.constant 0 : index
    %c0_103 = arith.constant 0 : index
    %518 = vector.load %arg15[%c0_102, %c0_103] : memref<8x128xf32, #tpu.memory_space<vmem>>, vector<8x128xf32>
    tpu.vector_store %arg15[%c0_102, %c0_103], %489 {strides = array<i32>} : memref<8x128xf32, #tpu.memory_space<vmem>>, vector<8x128xf32>,
    %c0_104 = arith.constant 0 : index
    %c0_105 = arith.constant 0 : index
    %519 = vector.load %arg16[%c0_104, %c0_105] : memref<8x128xf32, #tpu.memory_space<vmem>>, vector<8x128xf32>
    tpu.vector_store %arg16[%c0_104, %c0_105], %516 {strides = array<i32>} : memref<8x128xf32, #tpu.memory_space<vmem>>, vector<8x128xf32>,
    %c0_106 = arith.constant 0 : index
    %c0_107 = arith.constant 0 : index
    %520 = vector.load %arg17[%c0_106, %c0_107] : memref<8x128xf32, #tpu.memory_space<vmem>>, vector<8x128xf32>
    tpu.vector_store %arg17[%c0_106, %c0_107], %517 {strides = array<i32>} : memref<8x128xf32, #tpu.memory_space<vmem>>, vector<8x128xf32>,
    %521 = vector.shape_cast %75 : vector<8x128xf32> to vector<8x1x128xf32>
    %522 = vector.shape_cast %138 : vector<8x128xf32> to vector<8x1x128xf32>
    %523 = vector.shape_cast %201 : vector<8x128xf32> to vector<8x1x128xf32>
    %524 = vector.shape_cast %264 : vector<8x128xf32> to vector<8x1x128xf32>
    %525 = vector.shape_cast %327 : vector<8x128xf32> to vector<8x1x128xf32>
    %526 = vector.shape_cast %390 : vector<8x128xf32> to vector<8x1x128xf32>
    %527 = vector.shape_cast %453 : vector<8x128xf32> to vector<8x1x128xf32>
    %528 = vector.shape_cast %516 : vector<8x128xf32> to vector<8x1x128xf32>
    %529 = tpu.concatenate %521, %522, %523, %524, %525, %526, %527, %528 in 1 : vector<8x1x128xf32>, vector<8x1x128xf32>, vector<8x1x128xf32>, vector<8x1x128xf32>, vector<8x1x128xf32>, vector<8x1x128xf32>, vector<8x1x128xf32>, vector<8x1x128xf32> -> vector<8x8x128xf32>
    %c0_108 = arith.constant 0 : index
    %c0_109 = arith.constant 0 : index
    %c0_110 = arith.constant 0 : index
    %530 = vector.load %arg13[%c0_108, %c0_109, %c0_110] : memref<8x8x128xf32, #tpu.memory_space<vmem>>, vector<8x8x128xf32>
    tpu.vector_store %arg13[%c0_108, %c0_109, %c0_110], %529 {strides = array<i32>} : memref<8x8x128xf32, #tpu.memory_space<vmem>>, vector<8x8x128xf32>,
    %c1_i32 = arith.constant 1 : i32
    %531 = arith.cmpi eq, %arg1, %c1_i32 : i32
    %532 = arith.extui %531 : i1 to i32
    %c0_i32_111 = arith.constant 0 : i32
    %533 = arith.cmpi ne, %532, %c0_i32_111 : i32
    scf.if %533 {
      %c0_112 = arith.constant 0 : index
      %c0_113 = arith.constant 0 : index
      %534 = vector.load %arg17[%c0_112, %c0_113] : memref<8x128xf32, #tpu.memory_space<vmem>>, vector<8x128xf32>
      %535 = arith.mulf %534, %534 : vector<8x128xf32>
      %cst_114 = arith.constant dense<0.000000e+00> : vector<8xf32>
      %536 = vector.multi_reduction <add>, %535, %cst_114 [1] : vector<8x128xf32> to vector<8xf32>
      %537 = vector.shape_cast %536 : vector<8xf32> to vector<8x1xf32>
      %538 = math.rsqrt %537 : vector<8x1xf32>
      %539 = vector.broadcast %538 : vector<8x1xf32> to vector<8x128xf32>
      %540 = arith.mulf %534, %539 : vector<8x128xf32>
      %c0_115 = arith.constant 0 : index
      %c0_116 = arith.constant 0 : index
      %541 = vector.load %arg11[%c0_115, %c0_116] : memref<128x128xf32, #tpu.memory_space<vmem>>, vector<128x128xf32>
      %cst_117 = arith.constant dense<0.000000e+00> : vector<8x128xf32>
      %542 = tpu.matmul %540, %541, %cst_117 {dimension_numbers = #tpu.dot_dimension_numbers<[1], [0], [0], [1], [0, 0, 1, 1], [], []>} : vector<8x128xf32>, vector<128x128xf32>, vector<8x128xf32> -> vector<8x128xf32>
      %c0_118 = arith.constant 0 : index
      %c0_119 = arith.constant 0 : index
      %543 = vector.load %arg12[%c0_118, %c0_119] : memref<1x128xf32, #tpu.memory_space<vmem>>, vector<1x128xf32>
      %544 = vector.broadcast %543 : vector<1x128xf32> to vector<8x128xf32>
      %545 = arith.addf %542, %544 : vector<8x128xf32>
      %c0_120 = arith.constant 0 : index
      %c0_121 = arith.constant 0 : index
      %546 = vector.load %arg14[%c0_120, %c0_121] : memref<8x128xf32, #tpu.memory_space<vmem>>, vector<8x128xf32>
      tpu.vector_store %arg14[%c0_120, %c0_121], %545 {strides = array<i32>} : memref<8x128xf32, #tpu.memory_space<vmem>>, vector<8x128xf32>,
    } else {
    }
    return
  }
  func.func @transform_0(%arg0: i32, %arg1: i32) -> (i32, i32, i32) {
    %c0_i32 = arith.constant 0 : i32
    %c0_i32_0 = arith.constant 0 : i32
    return %arg1, %arg0, %c0_i32 : i32, i32, i32
  }
  func.func @transform_1(%arg0: i32, %arg1: i32) -> (i32, i32) {
    %c0_i32 = arith.constant 0 : i32
    %c0_i32_0 = arith.constant 0 : i32
    %c0_i32_1 = arith.constant 0 : i32
    return %c0_i32, %c0_i32_0 : i32, i32
  }
  func.func @transform_2(%arg0: i32, %arg1: i32) -> (i32, i32) {
    %c0_i32 = arith.constant 0 : i32
    %c0_i32_0 = arith.constant 0 : i32
    %c0_i32_1 = arith.constant 0 : i32
    return %c0_i32, %c0_i32_0 : i32, i32
  }
  func.func @transform_3(%arg0: i32, %arg1: i32) -> (i32, i32) {
    %c0_i32 = arith.constant 0 : i32
    %c0_i32_0 = arith.constant 0 : i32
    %c0_i32_1 = arith.constant 0 : i32
    return %c0_i32, %c0_i32_0 : i32, i32
  }
  func.func @transform_4(%arg0: i32, %arg1: i32) -> (i32, i32) {
    %c0_i32 = arith.constant 0 : i32
    %c0_i32_0 = arith.constant 0 : i32
    %c0_i32_1 = arith.constant 0 : i32
    return %c0_i32, %c0_i32_0 : i32, i32
  }
  func.func @transform_5(%arg0: i32, %arg1: i32) -> (i32, i32) {
    %c0_i32 = arith.constant 0 : i32
    %c0_i32_0 = arith.constant 0 : i32
    %c0_i32_1 = arith.constant 0 : i32
    return %c0_i32, %c0_i32_0 : i32, i32
  }
  func.func @transform_6(%arg0: i32, %arg1: i32) -> (i32, i32) {
    %c0_i32 = arith.constant 0 : i32
    %c0_i32_0 = arith.constant 0 : i32
    %c0_i32_1 = arith.constant 0 : i32
    return %c0_i32, %c0_i32_0 : i32, i32
  }
  func.func @transform_7(%arg0: i32, %arg1: i32) -> (i32, i32) {
    %c0_i32 = arith.constant 0 : i32
    %c0_i32_0 = arith.constant 0 : i32
    %c0_i32_1 = arith.constant 0 : i32
    return %c0_i32, %c0_i32_0 : i32, i32
  }
  func.func @transform_8(%arg0: i32, %arg1: i32) -> (i32, i32) {
    %c0_i32 = arith.constant 0 : i32
    %c0_i32_0 = arith.constant 0 : i32
    %c0_i32_1 = arith.constant 0 : i32
    return %c0_i32, %c0_i32_0 : i32, i32
  }
  func.func @transform_9(%arg0: i32, %arg1: i32) -> (i32, i32) {
    %c0_i32 = arith.constant 0 : i32
    %c0_i32_0 = arith.constant 0 : i32
    %c0_i32_1 = arith.constant 0 : i32
    return %c0_i32, %c0_i32_0 : i32, i32
  }
  func.func @transform_10(%arg0: i32, %arg1: i32) -> (i32, i32) {
    %c0_i32 = arith.constant 0 : i32
    %c0_i32_0 = arith.constant 0 : i32
    %c0_i32_1 = arith.constant 0 : i32
    return %c0_i32, %c0_i32_0 : i32, i32
  }
  func.func @transform_11(%arg0: i32, %arg1: i32) -> (i32, i32, i32) {
    %c0_i32 = arith.constant 0 : i32
    %c0_i32_0 = arith.constant 0 : i32
    return %arg0, %arg1, %c0_i32 : i32, i32, i32
  }
  func.func @transform_12(%arg0: i32, %arg1: i32) -> (i32, i32) {
    %c0_i32 = arith.constant 0 : i32
    %c0_i32_0 = arith.constant 0 : i32
    return %arg0, %c0_i32 : i32, i32
  }
}

</mosaic_0001>

<llo_original>
// kernel: tpu_custom_call.1
$region0: #{tpu_custom_call.1}
  #allocation0 [shape = 'u32[]', space=smem, size = 0x4, offset = 0x4, fixed_abs, tag = 'smem constant byte address 0x4 - core index']
  #allocation1 [shape = 'u32[144,128]{1,0:T(1,128)}', space=vmem, size = 0x12000, scoped, tag = 'internal scratch']
  #allocation2 [shape = 'f32[8,128]{1,0:T(8,128)}', space=vmem, size = 0x1000, scoped, tag = 'scratch operand']
  #allocation3 [shape = 'f32[8,128]{1,0:T(8,128)}', space=vmem, size = 0x1000, scoped, tag = 'scratch operand']
  #allocation4 [shape = 'f32[8,128]{1,0:T(8,128)}', space=vmem, size = 0x1000, scoped, tag = 'scratch operand']
  %s0 = inlined_call_operand.hbm [shape: bf16[16,8,384], index: 0, kind: input, shape index: {}]
  %s1 = inlined_call_operand.vmem [shape: f32[1,384], index: 1, kind: input, shape index: {}]
  %s2 = inlined_call_operand.hbm [shape: f32[128,384], index: 2, kind: input, shape index: {}]
  %s3 = inlined_call_operand.vmem [shape: f32[1,128], index: 3, kind: input, shape index: {}]
  %s4 = inlined_call_operand.hbm [shape: f32[128,384], index: 4, kind: input, shape index: {}]
  %s5 = inlined_call_operand.hbm [shape: f32[128,384], index: 5, kind: input, shape index: {}]
  %s6 = inlined_call_operand.vmem [shape: f32[1,256], index: 6, kind: input, shape index: {}]
  %s7 = inlined_call_operand.vmem [shape: f32[1,128], index: 7, kind: input, shape index: {}]
  %s8 = inlined_call_operand.vmem [shape: f32[1,128], index: 8, kind: input, shape index: {}]
  %s9 = inlined_call_operand.hbm [shape: f32[128,128], index: 9, kind: input, shape index: {}]
  %s10 = inlined_call_operand.vmem [shape: f32[1,128], index: 10, kind: input, shape index: {}]
  %s11 = inlined_call_operand.hbm [shape: f32[8,16,128], index: 11, kind: output, shape index: {0}]
  %s12 = inlined_call_operand.hbm [shape: f32[8,128], index: 12, kind: output, shape index: {1}]
  %13 = xla_tuple %s11, %s12
  %s14 = sld [smem:[#allocation0]]
  $region113: #{tpu_custom_call.1} parent=0
    _
  %s16 = ssub.s32 1, %s14
  %s17 = scalar_select 0, %s16, %s14
  $region1: #{tpu_custom_call.1} parent=0
    #allocation5 [shape = 'u8[98304]{0}', space=vmem, size = 0x18000, scoped, tag = 'input window, operand 0']
    #allocation6 [shape = 's32[2]{0}', space=sflag, size = 0x8, scoped, tag = 'scoped memory for tpu_custom_call.1']
    #allocation7 [shape = 's32[2]{0}', space=sflag, size = 0x8, scoped, tag = 'scoped memory for tpu_custom_call.1']
    #allocation8 [shape = 'u8[196608]{0}', space=vmem, size = 0x30000, scoped, tag = 'input window, operand 2, single buffered']
    #allocation9 [shape = 's32[1]{0}', space=sflag, size = 0x4, scoped, tag = 'scoped memory for tpu_custom_call.1']
    #allocation10 [shape = 'u8[196608]{0}', space=vmem, size = 0x30000, scoped, tag = 'input window, operand 4, single buffered']
    #allocation11 [shape = 'u8[196608]{0}', space=vmem, size = 0x30000, scoped, tag = 'input window, operand 5, single buffered']
    #allocation12 [shape = 's32[1]{0}', space=sflag, size = 0x4, scoped, tag = 'scoped memory for tpu_custom_call.1']
    #allocation13 [shape = 'u8[65536]{0}', space=vmem, size = 0x10000, scoped, tag = 'input window, operand 9, single buffered']
    #allocation14 [shape = 'u8[65536]{0}', space=vmem, size = 0x10000, scoped, tag = 'output window, operand 0']
    #allocation15 [shape = 'u8[4096]{0}', space=vmem, size = 0x1000, scoped, tag = 'output window, operand 1, single buffered']
    #allocation16 [shape = 's32[1]{0}', space=sflag, size = 0x4, scoped, tag = 'scoped memory for tpu_custom_call.1']
    %18 = vsyncpa [#allocation6], 0
    %s19 = scalar_lea.sflag [#allocation6], 1
    %20 = vsyncpa %s19, 0
    %21 = vsyncpa [#allocation9], 0
    %22 = vsyncpa [#allocation12], 0
    %23 = vsyncpa [#allocation7], 0
    %s24 = scalar_lea.sflag [#allocation7], 1
    %25 = vsyncpa %s24, 0
    %26 = vsyncpa [#allocation16], 0
    loop: start=0, step=1, limit=4
    $region2: #{tpu_custom_call.1} parent=1 // loop_pre_header
      _
    $region3: #{tpu_custom_call.1} parent=1 // loop_header
      %s28 = sphi 0, %s32
      %p29 = scmp.ge.s32.totalorder %s28, 4
      %s35 = sphi 0, %s47
      %s36 = sphi 0, %s43
      %s37 = sphi 0, %s35
      %s38 = sphi 0, %s36
      %s39 = sphi 0, %s37
      %s40 = sphi 0, %s38
      %s52 = sphi 0, %s54
      %s55 = sphi 0, %s52
      %s56 = sphi 0, %s55
      %s72 = sphi 0, %s56
      %s76 = sphi 0, %s76
      %s78 = sphi 0, %s76
      %s79 = sphi 0, %s78
      %s93 = sphi 0, %s79
      %s97 = sphi 0, %s97
      %s99 = sphi 0, %s97
      %s100 = sphi 0, %s99
      %s114 = sphi 0, %s100
      %s118 = sphi 0, %s118
      %s120 = sphi 0, %s118
      %s121 = sphi 0, %s120
      %s135 = sphi 0, %s121
      %s139 = sphi 0, %s139
      %s141 = sphi 0, %s139
      %s142 = sphi 0, %s141
      %s156 = sphi 0, %s142
      %s160 = sphi 0, %s160
      %s162 = sphi 0, %s160
      %s163 = sphi 0, %s162
      %s177 = sphi 0, %s163
      %s181 = sphi 0, %s181
      %s183 = sphi 0, %s181
      %s184 = sphi 0, %s183
      %s198 = sphi 0, %s184
      %s202 = sphi 0, %s202
      %s204 = sphi 0, %s202
      %s205 = sphi 0, %s204
      %s219 = sphi 0, %s205
      %s223 = sphi 0, %s223
      %s225 = sphi 0, %s223
      %s226 = sphi 0, %s225
      %s240 = sphi 0, %s226
      %s244 = sphi 0, %s244
      %s246 = sphi 0, %s244
      %s247 = sphi 0, %s246
      %s261 = sphi 0, %s247
      %s265 = sphi 0, %s265
      %s267 = sphi 0, %s265
      %s268 = sphi 0, %s267
      %s282 = sphi 0, %s268
      %s290 = sphi 0, %s292
      %s293 = sphi 0, %s290
      %s294 = sphi 0, %s293
      %s310 = sphi 0, %s294
      %s316 = sphi 0, %s318
      %s319 = sphi 0, %s316
      %s320 = sphi 0, %s319
      %s336 = sphi 0, %s320
    $region4: #{tpu_custom_call.1} parent=1 // loop_header_branch
      %31 = sbr.rel (%p29) target = $region8
    $region5: #{tpu_custom_call.1} parent=1 // loop_body
      %s33 = ssub.s32 %s28, 1
      %s34 = ssub.s32 %s28, 2
      %s41 = sadd.s32 1, %s36
      %p42 = scmp.ge.s32.totalorder %s41, 2
      %s43 = scalar_select %p42, 0, %s41
      %s44 = sadd.s32 1, %s35
      %s45 = scalar_select %p42, %s44, %s35
      %p46 = scmp.ge.s32.totalorder %s45, 1
      %s47 = scalar_select %p46, 0, %s45
      %s48 = ssub.s32 %s36, %s43
      %s49 = ssub.s32 %s35, %s47
      %s50 = sor.u32 %s48, %s49
      %p51 = scmp.eq.s32.totalorder %s50, 0
      %s53 = sadd.s32 %s52, 1
      %s54 = scalar_select %p51, %s52, %s53
      %p57 = pneg %p51
      %p58 = scmp.eq.s32.totalorder %s28, 1
      %p59 = por %p57, %p58
      %p60 = scmp.ne.s32.totalorder %s52, %s55
      %p61 = scmp.eq.s32.totalorder %s28, 0
      %p62 = por %p60, %p61
      %p63 = scmp.ne.s32.totalorder %s52, %s55
      %p64 = scmp.eq.s32.totalorder %s33, 1
      %p65 = por %p63, %p64
      %p66 = scmp.ne.s32.totalorder %s55, %s56
      %p67 = scmp.eq.s32.totalorder %s33, 0
      %p68 = por %p66, %p67
      %p69 = scmp.ne.s32.totalorder %s55, %s56
      %p70 = scmp.eq.s32.totalorder %s34, 1
      %p71 = por %p69, %p70
      %p73 = scmp.ne.s32.totalorder %s56, %s72
      %p74 = scmp.eq.s32.totalorder %s34, 0
      %p75 = por %p73, %p74
      %s77 = sadd.s32 %s76, 1
      %p80 = scmp.eq.s32.totalorder %s28, 1
      %p81 = scmp.ne.s32.totalorder %s76, %s78
      %p82 = scmp.eq.s32.totalorder %s28, 0
      %p83 = por %p81, %p82
      %p84 = scmp.ne.s32.totalorder %s76, %s78
      %p85 = scmp.eq.s32.totalorder %s33, 1
      %p86 = por %p84, %p85
      %p87 = scmp.ne.s32.totalorder %s78, %s79
      %p88 = scmp.eq.s32.totalorder %s33, 0
      %p89 = por %p87, %p88
      %p90 = scmp.ne.s32.totalorder %s78, %s79
      %p91 = scmp.eq.s32.totalorder %s34, 1
      %p92 = por %p90, %p91
      %p94 = scmp.ne.s32.totalorder %s79, %s93
      %p95 = scmp.eq.s32.totalorder %s34, 0
      %p96 = por %p94, %p95
      %s98 = sadd.s32 %s97, 1
      %p101 = scmp.eq.s32.totalorder %s28, 1
      %p102 = scmp.ne.s32.totalorder %s97, %s99
      %p103 = scmp.eq.s32.totalorder %s28, 0
      %p104 = por %p102, %p103
      %p105 = scmp.ne.s32.totalorder %s97, %s99
      %p106 = scmp.eq.s32.totalorder %s33, 1
      %p107 = por %p105, %p106
      %p108 = scmp.ne.s32.totalorder %s99, %s100
      %p109 = scmp.eq.s32.totalorder %s33, 0
      %p110 = por %p108, %p109
      %p111 = scmp.ne.s32.totalorder %s99, %s100
      %p112 = scmp.eq.s32.totalorder %s34, 1
      %p113 = por %p111, %p112
      %p115 = scmp.ne.s32.totalorder %s100, %s114
      %p116 = scmp.eq.s32.totalorder %s34, 0
      %p117 = por %p115, %p116
      %s119 = sadd.s32 %s118, 1
      %p122 = scmp.eq.s32.totalorder %s28, 1
      %p123 = scmp.ne.s32.totalorder %s118, %s120
      %p124 = scmp.eq.s32.totalorder %s28, 0
      %p125 = por %p123, %p124
      %p126 = scmp.ne.s32.totalorder %s118, %s120
      %p127 = scmp.eq.s32.totalorder %s33, 1
      %p128 = por %p126, %p127
      %p129 = scmp.ne.s32.totalorder %s120, %s121
      %p130 = scmp.eq.s32.totalorder %s33, 0
      %p131 = por %p129, %p130
      %p132 = scmp.ne.s32.totalorder %s120, %s121
      %p133 = scmp.eq.s32.totalorder %s34, 1
      %p134 = por %p132, %p133
      %p136 = scmp.ne.s32.totalorder %s121, %s135
      %p137 = scmp.eq.s32.totalorder %s34, 0
      %p138 = por %p136, %p137
      %s140 = sadd.s32 %s139, 1
      %p143 = scmp.eq.s32.totalorder %s28, 1
      %p144 = scmp.ne.s32.totalorder %s139, %s141
      %p145 = scmp.eq.s32.totalorder %s28, 0
      %p146 = por %p144, %p145
      %p147 = scmp.ne.s32.totalorder %s139, %s141
      %p148 = scmp.eq.s32.totalorder %s33, 1
      %p149 = por %p147, %p148
      %p150 = scmp.ne.s32.totalorder %s141, %s142
      %p151 = scmp.eq.s32.totalorder %s33, 0
      %p152 = por %p150, %p151
      %p153 = scmp.ne.s32.totalorder %s141, %s142
      %p154 = scmp.eq.s32.totalorder %s34, 1
      %p155 = por %p153, %p154
      %p157 = scmp.ne.s32.totalorder %s142, %s156
      %p158 = scmp.eq.s32.totalorder %s34, 0
      %p159 = por %p157, %p158
      %s161 = sadd.s32 %s160, 1
      %p164 = scmp.eq.s32.totalorder %s28, 1
      %p165 = scmp.ne.s32.totalorder %s160, %s162
      %p166 = scmp.eq.s32.totalorder %s28, 0
      %p167 = por %p165, %p166
      %p168 = scmp.ne.s32.totalorder %s160, %s162
      %p169 = scmp.eq.s32.totalorder %s33, 1
      %p170 = por %p168, %p169
      %p171 = scmp.ne.s32.totalorder %s162, %s163
      %p172 = scmp.eq.s32.totalorder %s33, 0
      %p173 = por %p171, %p172
      %p174 = scmp.ne.s32.totalorder %s162, %s163
      %p175 = scmp.eq.s32.totalorder %s34, 1
      %p176 = por %p174, %p175
      %p178 = scmp.ne.s32.totalorder %s163, %s177
      %p179 = scmp.eq.s32.totalorder %s34, 0
      %p180 = por %p178, %p179
      %s182 = sadd.s32 %s181, 1
      %p185 = scmp.eq.s32.totalorder %s28, 1
      %p186 = scmp.ne.s32.totalorder %s181, %s183
      %p187 = scmp.eq.s32.totalorder %s28, 0
      %p188 = por %p186, %p187
      %p189 = scmp.ne.s32.totalorder %s181, %s183
      %p190 = scmp.eq.s32.totalorder %s33, 1
      %p191 = por %p189, %p190
      %p192 = scmp.ne.s32.totalorder %s183, %s184
      %p193 = scmp.eq.s32.totalorder %s33, 0
      %p194 = por %p192, %p193
      %p195 = scmp.ne.s32.totalorder %s183, %s184
      %p196 = scmp.eq.s32.totalorder %s34, 1
      %p197 = por %p195, %p196
      %p199 = scmp.ne.s32.totalorder %s184, %s198
      %p200 = scmp.eq.s32.totalorder %s34, 0
      %p201 = por %p199, %p200
      %s203 = sadd.s32 %s202, 1
      %p206 = scmp.eq.s32.totalorder %s28, 1
      %p207 = scmp.ne.s32.totalorder %s202, %s204
      %p208 = scmp.eq.s32.totalorder %s28, 0
      %p209 = por %p207, %p208
      %p210 = scmp.ne.s32.totalorder %s202, %s204
      %p211 = scmp.eq.s32.totalorder %s33, 1
      %p212 = por %p210, %p211
      %p213 = scmp.ne.s32.totalorder %s204, %s205
      %p214 = scmp.eq.s32.totalorder %s33, 0
      %p215 = por %p213, %p214
      %p216 = scmp.ne.s32.totalorder %s204, %s205
      %p217 = scmp.eq.s32.totalorder %s34, 1
      %p218 = por %p216, %p217
      %p220 = scmp.ne.s32.totalorder %s205, %s219
      %p221 = scmp.eq.s32.totalorder %s34, 0
      %p222 = por %p220, %p221
      %s224 = sadd.s32 %s223, 1
      %p227 = scmp.eq.s32.totalorder %s28, 1
      %p228 = scmp.ne.s32.totalorder %s223, %s225
      %p229 = scmp.eq.s32.totalorder %s28, 0
      %p230 = por %p228, %p229
      %p231 = scmp.ne.s32.totalorder %s223, %s225
      %p232 = scmp.eq.s32.totalorder %s33, 1
      %p233 = por %p231, %p232
      %p234 = scmp.ne.s32.totalorder %s225, %s226
      %p235 = scmp.eq.s32.totalorder %s33, 0
      %p236 = por %p234, %p235
      %p237 = scmp.ne.s32.totalorder %s225, %s226
      %p238 = scmp.eq.s32.totalorder %s34, 1
      %p239 = por %p237, %p238
      %p241 = scmp.ne.s32.totalorder %s226, %s240
      %p242 = scmp.eq.s32.totalorder %s34, 0
      %p243 = por %p241, %p242
      %s245 = sadd.s32 %s244, 1
      %p248 = scmp.eq.s32.totalorder %s28, 1
      %p249 = scmp.ne.s32.totalorder %s244, %s246
      %p250 = scmp.eq.s32.totalorder %s28, 0
      %p251 = por %p249, %p250
      %p252 = scmp.ne.s32.totalorder %s244, %s246
      %p253 = scmp.eq.s32.totalorder %s33, 1
      %p254 = por %p252, %p253
      %p255 = scmp.ne.s32.totalorder %s246, %s247
      %p256 = scmp.eq.s32.totalorder %s33, 0
      %p257 = por %p255, %p256
      %p258 = scmp.ne.s32.totalorder %s246, %s247
      %p259 = scmp.eq.s32.totalorder %s34, 1
      %p260 = por %p258, %p259
      %p262 = scmp.ne.s32.totalorder %s247, %s261
      %p263 = scmp.eq.s32.totalorder %s34, 0
      %p264 = por %p262, %p263
      %s266 = sadd.s32 %s265, 1
      %p269 = scmp.eq.s32.totalorder %s28, 1
      %p270 = scmp.ne.s32.totalorder %s265, %s267
      %p271 = scmp.eq.s32.totalorder %s28, 0
      %p272 = por %p270, %p271
      %p273 = scmp.ne.s32.totalorder %s265, %s267
      %p274 = scmp.eq.s32.totalorder %s33, 1
      %p275 = por %p273, %p274
      %p276 = scmp.ne.s32.totalorder %s267, %s268
      %p277 = scmp.eq.s32.totalorder %s33, 0
      %p278 = por %p276, %p277
      %p279 = scmp.ne.s32.totalorder %s267, %s268
      %p280 = scmp.eq.s32.totalorder %s34, 1
      %p281 = por %p279, %p280
      %p283 = scmp.ne.s32.totalorder %s268, %s282
      %p284 = scmp.eq.s32.totalorder %s34, 0
      %p285 = por %p283, %p284
      %s286 = ssub.s32 %s35, %s47
      %s287 = ssub.s32 %s36, %s43
      %s288 = sor.u32 %s286, %s287
      %p289 = scmp.eq.s32.totalorder %s288, 0
      %s291 = sadd.s32 %s290, 1
      %s292 = scalar_select %p289, %s290, %s291
      %p295 = pneg %p289
      %p296 = scmp.eq.s32.totalorder %s28, 1
      %p297 = por %p295, %p296
      %p298 = scmp.ne.s32.totalorder %s290, %s293
      %p299 = scmp.eq.s32.totalorder %s28, 0
      %p300 = por %p298, %p299
      %p301 = scmp.ne.s32.totalorder %s290, %s293
      %p302 = scmp.eq.s32.totalorder %s33, 1
      %p303 = por %p301, %p302
      %p304 = scmp.ne.s32.totalorder %s293, %s294
      %p305 = scmp.eq.s32.totalorder %s33, 0
      %p306 = por %p304, %p305
      %p307 = scmp.ne.s32.totalorder %s293, %s294
      %p308 = scmp.eq.s32.totalorder %s34, 1
      %p309 = por %p307, %p308
      %p311 = scmp.ne.s32.totalorder %s294, %s310
      %p312 = scmp.eq.s32.totalorder %s34, 0
      %p313 = por %p311, %p312
      %s314 = ssub.s32 %s35, %s47
      %p315 = scmp.eq.s32.totalorder %s314, 0
      %s317 = sadd.s32 %s316, 1
      %s318 = scalar_select %p315, %s316, %s317
      %p321 = pneg %p315
      %p322 = scmp.eq.s32.totalorder %s28, 1
      %p323 = por %p321, %p322
      %p324 = scmp.ne.s32.totalorder %s316, %s319
      %p325 = scmp.eq.s32.totalorder %s28, 0
      %p326 = por %p324, %p325
      %p327 = scmp.ne.s32.totalorder %s316, %s319
      %p328 = scmp.eq.s32.totalorder %s33, 1
      %p329 = por %p327, %p328
      %p330 = scmp.ne.s32.totalorder %s319, %s320
      %p331 = scmp.eq.s32.totalorder %s33, 0
      %p332 = por %p330, %p331
      %p333 = scmp.ne.s32.totalorder %s319, %s320
      %p334 = scmp.eq.s32.totalorder %s34, 1
      %p335 = por %p333, %p334
      %p337 = scmp.ne.s32.totalorder %s320, %s336
      %p338 = scmp.eq.s32.totalorder %s34, 0
      %p339 = por %p337, %p338
      %p340 = scmp.le.s32.totalorder 1, %s28
      %p341 = scmp.lt.s32.totalorder %s28, 3
      %p342 = pnand %p340, %p341
      %p343 = pneg %p342
      // Predicated region
      $region9: #{tpu_custom_call.1} parent=5 // pred_check
        _
      $region10: #{tpu_custom_call.1} parent=5 // pred_check_branch
        %345 = sbr.rel (%p342) target = $region12
      $region11: #{tpu_custom_call.1} parent=5 // pred_region
        %s346 = ssub.s32 %s28, 1
        // Predicated region
        $region13: #{tpu_custom_call.1} parent=11 // pred_check
          %p347 = pneg %p89
        $region14: #{tpu_custom_call.1} parent=11 // pred_check_branch
          %349 = sbr.rel (%p347) target = $region16
        $region15: #{tpu_custom_call.1} parent=11 // pred_region
          _
        $region16: #{tpu_custom_call.1} parent=11 // pred_fallthru
          _
        // Predicated region
        $region17: #{tpu_custom_call.1} parent=11 // pred_check
          %p350 = pneg %p110
        $region18: #{tpu_custom_call.1} parent=11 // pred_check_branch
          %352 = sbr.rel (%p350) target = $region20
        $region19: #{tpu_custom_call.1} parent=11 // pred_region
          %s354 = ssub.s32 6144, 6144
          %355 = vsyncadd [#allocation9], %s354
          %s356 = sshll.u32 [#allocation8], 4
          %s357 = int_to_ptr.vmem [resolvable:$true] %s356
          %362 = dma.hbm_to_vmem [thread:$0]  %s2, 6144, %s357, [#allocation9], 384, 384, 24
        $region20: #{tpu_custom_call.1} parent=11 // pred_fallthru
          _
        // Predicated region
        $region21: #{tpu_custom_call.1} parent=11 // pred_check
          %p363 = pneg %p131
        $region22: #{tpu_custom_call.1} parent=11 // pred_check_branch
          %365 = sbr.rel (%p363) target = $region24
        $region23: #{tpu_custom_call.1} parent=11 // pred_region
          _
        $region24: #{tpu_custom_call.1} parent=11 // pred_fallthru
          _
        // Predicated region
        $region25: #{tpu_custom_call.1} parent=11 // pred_check
          %p366 = pneg %p152
        $region26: #{tpu_custom_call.1} parent=11 // pred_check_branch
          %368 = sbr.rel (%p366) target = $region28
        $region27: #{tpu_custom_call.1} parent=11 // pred_region
          %s370 = ssub.s32 6144, 6144
          %371 = vsyncadd [#allocation9], %s370
          %s372 = sshll.u32 [#allocation10], 4
          %s373 = int_to_ptr.vmem [resolvable:$true] %s372
          %378 = dma.hbm_to_vmem [thread:$0]  %s4, 6144, %s373, [#allocation9], 384, 384, 24
        $region28: #{tpu_custom_call.1} parent=11 // pred_fallthru
          _
        // Predicated region
        $region29: #{tpu_custom_call.1} parent=11 // pred_check
          %p379 = pneg %p173
        $region30: #{tpu_custom_call.1} parent=11 // pred_check_branch
          %381 = sbr.rel (%p379) target = $region32
        $region31: #{tpu_custom_call.1} parent=11 // pred_region
          %s383 = ssub.s32 6144, 6144
          %384 = vsyncadd [#allocation12], %s383
          %s385 = sshll.u32 [#allocation11], 4
          %s386 = int_to_ptr.vmem [resolvable:$true] %s385
          %391 = dma.hbm_to_vmem [thread:$0]  %s5, 6144, %s386, [#allocation12], 384, 384, 24
        $region32: #{tpu_custom_call.1} parent=11 // pred_fallthru
          _
        // Predicated region
        $region33: #{tpu_custom_call.1} parent=11 // pred_check
          %p392 = pneg %p194
        $region34: #{tpu_custom_call.1} parent=11 // pred_check_branch
          %394 = sbr.rel (%p392) target = $region36
        $region35: #{tpu_custom_call.1} parent=11 // pred_region
          _
        $region36: #{tpu_custom_call.1} parent=11 // pred_fallthru
          _
        // Predicated region
        $region37: #{tpu_custom_call.1} parent=11 // pred_check
          %p395 = pneg %p215
        $region38: #{tpu_custom_call.1} parent=11 // pred_check_branch
          %397 = sbr.rel (%p395) target = $region40
        $region39: #{tpu_custom_call.1} parent=11 // pred_region
          _
        $region40: #{tpu_custom_call.1} parent=11 // pred_fallthru
          _
        // Predicated region
        $region41: #{tpu_custom_call.1} parent=11 // pred_check
          %p398 = pneg %p236
        $region42: #{tpu_custom_call.1} parent=11 // pred_check_branch
          %400 = sbr.rel (%p398) target = $region44
        $region43: #{tpu_custom_call.1} parent=11 // pred_region
          _
        $region44: #{tpu_custom_call.1} parent=11 // pred_fallthru
          _
        // Predicated region
        $region45: #{tpu_custom_call.1} parent=11 // pred_check
          %p401 = pneg %p257
        $region46: #{tpu_custom_call.1} parent=11 // pred_check_branch
          %403 = sbr.rel (%p401) target = $region48
        $region47: #{tpu_custom_call.1} parent=11 // pred_region
          %s405 = ssub.s32 2048, 2048
          %406 = vsyncadd [#allocation12], %s405
          %s407 = sshll.u32 [#allocation13], 4
          %s408 = int_to_ptr.vmem [resolvable:$true] %s407
          %413 = dma.hbm_to_vmem [thread:$0]  %s9, 2048, %s408, [#allocation12], 128, 128, 8
        $region48: #{tpu_custom_call.1} parent=11 // pred_fallthru
          _
        // Predicated region
        $region49: #{tpu_custom_call.1} parent=11 // pred_check
          %p414 = pneg %p278
        $region50: #{tpu_custom_call.1} parent=11 // pred_check_branch
          %416 = sbr.rel (%p414) target = $region52
        $region51: #{tpu_custom_call.1} parent=11 // pred_region
          _
        $region52: #{tpu_custom_call.1} parent=11 // pred_fallthru
          _
      $region12: #{tpu_custom_call.1} parent=5 // pred_fallthru
        _
      %p417 = scmp.lt.s32.totalorder %s28, 2
      // Predicated region
      $region53: #{tpu_custom_call.1} parent=5 // pred_check
        %p418 = pneg %p417
      $region54: #{tpu_custom_call.1} parent=5 // pred_check_branch
        %420 = sbr.rel (%p418) target = $region56
      $region55: #{tpu_custom_call.1} parent=5 // pred_region
        // Predicated region
        $region57: #{tpu_custom_call.1} parent=55 // pred_check
          %p421 = pneg %p62
        $region58: #{tpu_custom_call.1} parent=55 // pred_check_branch
          %423 = sbr.rel (%p421) target = $region60
        $region59: #{tpu_custom_call.1} parent=55 // pred_region
          %s424 = sand.u32 %s52, 1
          %s425 = scalar_lea.sflag [#allocation6], %s424
          %s426 = sand.u32 %s52, 1
          %s427 = smul.addr %s426, 96
          %s428 = scalar_lea.vmem [#allocation5], %s427
          %s429 = smul.u32 8, %s36
          %s431 = ssub.s32 1536, 1536
          %432 = vsyncadd %s425, %s431
          %s433 = smul.addr %s35, 3
          %s434 = smul.addr %s429, 3
          %s435 = sadd.s32 %s433, %s434
          %s436 = smul.addr %s435, 64
          %s437 = scalar_lea.hbm %s0, %s436
          %s438 = sshll.u32 %s428, 4
          %s439 = int_to_ptr.vmem [resolvable:$true] %s438
          %444 = dma.hbm_to_vmem [thread:$0]  %s437, 1536, %s439, %s425, 192, 192, 12
        $region60: #{tpu_custom_call.1} parent=55 // pred_fallthru
          _
      $region56: #{tpu_custom_call.1} parent=5 // pred_fallthru
        _
      %p445 = scmp.le.s32.totalorder 1, %s28
      %p446 = scmp.lt.s32.totalorder %s28, 3
      %p447 = pnand %p445, %p446
      %p448 = pneg %p447
      // Predicated region
      $region61: #{tpu_custom_call.1} parent=5 // pred_check
        _
      $region62: #{tpu_custom_call.1} parent=5 // pred_check_branch
        %450 = sbr.rel (%p447) target = $region64
      $region63: #{tpu_custom_call.1} parent=5 // pred_region
        %s451 = ssub.s32 %s28, 1
        %s452 = sand.u32 %s55, 1
        %s453 = scalar_lea.sflag [#allocation6], %s452
        %s454 = sand.u32 %s55, 1
        %s455 = smul.addr %s454, 96
        %s456 = scalar_lea.vmem [#allocation5], %s455
        // Predicated region
        $region65: #{tpu_custom_call.1} parent=63 // pred_check
          %p457 = pneg %p68
        $region66: #{tpu_custom_call.1} parent=63 // pred_check_branch
          %459 = sbr.rel (%p457) target = $region68
        $region67: #{tpu_custom_call.1} parent=63 // pred_region
          %460 = dma.done %s453, 1536
        $region68: #{tpu_custom_call.1} parent=63 // pred_fallthru
          _
        // Predicated region
        $region69: #{tpu_custom_call.1} parent=63 // pred_check
          %p461 = pneg %p110
        $region70: #{tpu_custom_call.1} parent=63 // pred_check_branch
          %463 = sbr.rel (%p461) target = $region72
        $region71: #{tpu_custom_call.1} parent=63 // pred_region
          %464 = dma.done [#allocation9], 6144
        $region72: #{tpu_custom_call.1} parent=63 // pred_fallthru
          _
        // Predicated region
        $region73: #{tpu_custom_call.1} parent=63 // pred_check
          %p465 = pneg %p152
        $region74: #{tpu_custom_call.1} parent=63 // pred_check_branch
          %467 = sbr.rel (%p465) target = $region76
        $region75: #{tpu_custom_call.1} parent=63 // pred_region
          %468 = dma.done [#allocation9], 6144
        $region76: #{tpu_custom_call.1} parent=63 // pred_fallthru
          _
        // Predicated region
        $region77: #{tpu_custom_call.1} parent=63 // pred_check
          %p469 = pneg %p173
        $region78: #{tpu_custom_call.1} parent=63 // pred_check_branch
          %471 = sbr.rel (%p469) target = $region80
        $region79: #{tpu_custom_call.1} parent=63 // pred_region
          %472 = dma.done [#allocation12], 6144
        $region80: #{tpu_custom_call.1} parent=63 // pred_fallthru
          _
        // Predicated region
        $region81: #{tpu_custom_call.1} parent=63 // pred_check
          %p473 = pneg %p257
        $region82: #{tpu_custom_call.1} parent=63 // pred_check_branch
          %475 = sbr.rel (%p473) target = $region84
        $region83: #{tpu_custom_call.1} parent=63 // pred_region
          %476 = dma.done [#allocation12], 2048
        $region84: #{tpu_custom_call.1} parent=63 // pred_fallthru
          _
        %s477 = sand.u32 %s55, 1
        %s478 = scalar_lea.sflag [#allocation6], %s477
        %s479 = sand.u32 %s55, 1
        %s480 = smul.addr %s479, 96
        %s481 = scalar_lea.vmem [#allocation5], %s480
        %p482 = pneg %p68
        %p483 = pneg %p65
        %p484 = pneg %p89
        %p485 = pneg %p86
        %p486 = pneg %p110
        %p487 = pneg %p107
        %p488 = pneg %p131
        %p489 = pneg %p128
        %p490 = pneg %p152
        %p491 = pneg %p149
        %p492 = pneg %p173
        %p493 = pneg %p170
        %p494 = pneg %p194
        %p495 = pneg %p191
        %p496 = pneg %p215
        %p497 = pneg %p212
        %p498 = pneg %p236
        %p499 = pneg %p233
        %p500 = pneg %p257
        %p501 = pneg %p254
        %p502 = pneg %p278
        %p503 = pneg %p275
        %p504 = pneg %p306
        %p505 = pneg %p303
        %s506 = sand.u32 %s293, 1
        %s507 = scalar_lea.sflag [#allocation7], %s506
        %s508 = sand.u32 %s293, 1
        %s509 = smul.addr %s508, 64
        %s510 = scalar_lea.vmem [#allocation14], %s509
        %p511 = pneg %p332
        %p512 = pneg %p329
        %s513 = smul.u32 8, %s38
        %s514 = smul.u32 8, %s37
        %p515 = scmp.eq.s32.totalorder %s38, 0
        // Predicated region
        $region85: #{tpu_custom_call.1} parent=63 // pred_check
          %p516 = pneg %p515
        $region86: #{tpu_custom_call.1} parent=63 // pred_check_branch
          %518 = sbr.rel (%p516) target = $region88
        $region87: #{tpu_custom_call.1} parent=63 // pred_region
          %519 = vst [vmem:[#allocation2] sm:$0xff] 0.0
          %520 = vst [vmem:[#allocation3] sm:$0xff] 0.0
          %521 = vst [vmem:[#allocation4] sm:$0xff] 0.0
        $region88: #{tpu_custom_call.1} parent=63 // pred_fallthru
          _
        %v522 = vld [vmem:[%s1] sm:$0x7]
        %v523 = vld [vmem:[#allocation8] sm:$0xff]
        %v524 = vld [vmem:[#allocation8 + $0x8] sm:$0xff]
        %v525 = vld [vmem:[#allocation8 + $0x10] sm:$0xff]
        %v526 = vld [vmem:[#allocation8 + $0x18] sm:$0xff]
        %v527 = vld [vmem:[#allocation8 + $0x20] sm:$0xff]
        %v528 = vld [vmem:[#allocation8 + $0x28] sm:$0xff]
        %v529 = vld [vmem:[#allocation8 + $0x30] sm:$0xff]
        %v530 = vld [vmem:[#allocation8 + $0x38] sm:$0xff]
        %v531 = vld [vmem:[#allocation8 + $0x40] sm:$0xff]
        %v532 = vld [vmem:[#allocation8 + $0x48] sm:$0xff]
        %v533 = vld [vmem:[#allocation8 + $0x50] sm:$0xff]
        %v534 = vld [vmem:[#allocation8 + $0x58] sm:$0xff]
        %v535 = vld [vmem:[#allocation8 + $0x60] sm:$0xff]
        %v536 = vld [vmem:[#allocation8 + $0x68] sm:$0xff]
        %v537 = vld [vmem:[#allocation8 + $0x70] sm:$0xff]
        %v538 = vld [vmem:[#allocation8 + $0x78] sm:$0xff]
        %v539 = vld [vmem:[#allocation8 + $0x80] sm:$0xff]
        %v540 = vld [vmem:[#allocation8 + $0x88] sm:$0xff]
        %v541 = vld [vmem:[#allocation8 + $0x90] sm:$0xff]
        %v542 = vld [vmem:[#allocation8 + $0x98] sm:$0xff]
        %v543 = vld [vmem:[#allocation8 + $0xa0] sm:$0xff]
        %v544 = vld [vmem:[#allocation8 + $0xa8] sm:$0xff]
        %v545 = vld [vmem:[#allocation8 + $0xb0] sm:$0xff]
        %v546 = vld [vmem:[#allocation8 + $0xb8] sm:$0xff]
        %v547 = vld [vmem:[#allocation8 + $0xc0] sm:$0xff]
        %v548 = vld [vmem:[#allocation8 + $0xc8] sm:$0xff]
        %v549 = vld [vmem:[#allocation8 + $0xd0] sm:$0xff]
        %v550 = vld [vmem:[#allocation8 + $0xd8] sm:$0xff]
        %v551 = vld [vmem:[#allocation8 + $0xe0] sm:$0xff]
        %v552 = vld [vmem:[#allocation8 + $0xe8] sm:$0xff]
        %v553 = vld [vmem:[#allocation8 + $0xf0] sm:$0xff]
        %v554 = vld [vmem:[#allocation8 + $0xf8] sm:$0xff]
        %v555 = vld [vmem:[#allocation8 + $0x100] sm:$0xff]
        %v556 = vld [vmem:[#allocation8 + $0x108] sm:$0xff]
        %v557 = vld [vmem:[#allocation8 + $0x110] sm:$0xff]
        %v558 = vld [vmem:[#allocation8 + $0x118] sm:$0xff]
        %v559 = vld [vmem:[#allocation8 + $0x120] sm:$0xff]
        %v560 = vld [vmem:[#allocation8 + $0x128] sm:$0xff]
        %v561 = vld [vmem:[#allocation8 + $0x130] sm:$0xff]
        %v562 = vld [vmem:[#allocation8 + $0x138] sm:$0xff]
        %v563 = vld [vmem:[#allocation8 + $0x140] sm:$0xff]
        %v564 = vld [vmem:[#allocation8 + $0x148] sm:$0xff]
        %v565 = vld [vmem:[#allocation8 + $0x150] sm:$0xff]
        %v566 = vld [vmem:[#allocation8 + $0x158] sm:$0xff]
        %v567 = vld [vmem:[#allocation8 + $0x160] sm:$0xff]
        %v568 = vld [vmem:[#allocation8 + $0x168] sm:$0xff]
        %v569 = vld [vmem:[#allocation8 + $0x170] sm:$0xff]
        %v570 = vld [vmem:[#allocation8 + $0x178] sm:$0xff]
        %v571 = vld [vmem:[%s3] sm:$0x1]
        %v572 = vld [vmem:[#allocation10] sm:$0xff]
        %v573 = vld [vmem:[#allocation10 + $0x8] sm:$0xff]
        %v574 = vld [vmem:[#allocation10 + $0x10] sm:$0xff]
        %v575 = vld [vmem:[#allocation10 + $0x18] sm:$0xff]
        %v576 = vld [vmem:[#allocation10 + $0x20] sm:$0xff]
        %v577 = vld [vmem:[#allocation10 + $0x28] sm:$0xff]
        %v578 = vld [vmem:[#allocation10 + $0x30] sm:$0xff]
        %v579 = vld [vmem:[#allocation10 + $0x38] sm:$0xff]
        %v580 = vld [vmem:[#allocation10 + $0x40] sm:$0xff]
        %v581 = vld [vmem:[#allocation10 + $0x48] sm:$0xff]
        %v582 = vld [vmem:[#allocation10 + $0x50] sm:$0xff]
        %v583 = vld [vmem:[#allocation10 + $0x58] sm:$0xff]
        %v584 = vld [vmem:[#allocation10 + $0x60] sm:$0xff]
        %v585 = vld [vmem:[#allocation10 + $0x68] sm:$0xff]
        %v586 = vld [vmem:[#allocation10 + $0x70] sm:$0xff]
        %v587 = vld [vmem:[#allocation10 + $0x78] sm:$0xff]
        %v588 = vld [vmem:[#allocation10 + $0x80] sm:$0xff]
        %v589 = vld [vmem:[#allocation10 + $0x88] sm:$0xff]
        %v590 = vld [vmem:[#allocation10 + $0x90] sm:$0xff]
        %v591 = vld [vmem:[#allocation10 + $0x98] sm:$0xff]
        %v592 = vld [vmem:[#allocation10 + $0xa0] sm:$0xff]
        %v593 = vld [vmem:[#allocation10 + $0xa8] sm:$0xff]
        %v594 = vld [vmem:[#allocation10 + $0xb0] sm:$0xff]
        %v595 = vld [vmem:[#allocation10 + $0xb8] sm:$0xff]
        %v596 = vld [vmem:[#allocation10 + $0xc0] sm:$0xff]
        %v597 = vld [vmem:[#allocation10 + $0xc8] sm:$0xff]
        %v598 = vld [vmem:[#allocation10 + $0xd0] sm:$0xff]
        %v599 = vld [vmem:[#allocation10 + $0xd8] sm:$0xff]
        %v600 = vld [vmem:[#allocation10 + $0xe0] sm:$0xff]
        %v601 = vld [vmem:[#allocation10 + $0xe8] sm:$0xff]
        %v602 = vld [vmem:[#allocation10 + $0xf0] sm:$0xff]
        %v603 = vld [vmem:[#allocation10 + $0xf8] sm:$0xff]
        %v604 = vld [vmem:[#allocation10 + $0x100] sm:$0xff]
        %v605 = vld [vmem:[#allocation10 + $0x108] sm:$0xff]
        %v606 = vld [vmem:[#allocation10 + $0x110] sm:$0xff]
        %v607 = vld [vmem:[#allocation10 + $0x118] sm:$0xff]
        %v608 = vld [vmem:[#allocation10 + $0x120] sm:$0xff]
        %v609 = vld [vmem:[#allocation10 + $0x128] sm:$0xff]
        %v610 = vld [vmem:[#allocation10 + $0x130] sm:$0xff]
        %v611 = vld [vmem:[#allocation10 + $0x138] sm:$0xff]
        %v612 = vld [vmem:[#allocation10 + $0x140] sm:$0xff]
        %v613 = vld [vmem:[#allocation10 + $0x148] sm:$0xff]
        %v614 = vld [vmem:[#allocation10 + $0x150] sm:$0xff]
        %v615 = vld [vmem:[#allocation10 + $0x158] sm:$0xff]
        %v616 = vld [vmem:[#allocation10 + $0x160] sm:$0xff]
        %v617 = vld [vmem:[#allocation10 + $0x168] sm:$0xff]
        %v618 = vld [vmem:[#allocation10 + $0x170] sm:$0xff]
        %v619 = vld [vmem:[#allocation10 + $0x178] sm:$0xff]
        %v620 = vld [vmem:[#allocation11] sm:$0xff]
        %v621 = vld [vmem:[#allocation11 + $0x8] sm:$0xff]
        %v622 = vld [vmem:[#allocation11 + $0x10] sm:$0xff]
        %v623 = vld [vmem:[#allocation11 + $0x18] sm:$0xff]
        %v624 = vld [vmem:[#allocation11 + $0x20] sm:$0xff]
        %v625 = vld [vmem:[#allocation11 + $0x28] sm:$0xff]
        %v626 = vld [vmem:[#allocation11 + $0x30] sm:$0xff]
        %v627 = vld [vmem:[#allocation11 + $0x38] sm:$0xff]
        %v628 = vld [vmem:[#allocation11 + $0x40] sm:$0xff]
        %v629 = vld [vmem:[#allocation11 + $0x48] sm:$0xff]
        %v630 = vld [vmem:[#allocation11 + $0x50] sm:$0xff]
        %v631 = vld [vmem:[#allocation11 + $0x58] sm:$0xff]
        %v632 = vld [vmem:[#allocation11 + $0x60] sm:$0xff]
        %v633 = vld [vmem:[#allocation11 + $0x68] sm:$0xff]
        %v634 = vld [vmem:[#allocation11 + $0x70] sm:$0xff]
        %v635 = vld [vmem:[#allocation11 + $0x78] sm:$0xff]
        %v636 = vld [vmem:[#allocation11 + $0x80] sm:$0xff]
        %v637 = vld [vmem:[#allocation11 + $0x88] sm:$0xff]
        %v638 = vld [vmem:[#allocation11 + $0x90] sm:$0xff]
        %v639 = vld [vmem:[#allocation11 + $0x98] sm:$0xff]
        %v640 = vld [vmem:[#allocation11 + $0xa0] sm:$0xff]
        %v641 = vld [vmem:[#allocation11 + $0xa8] sm:$0xff]
        %v642 = vld [vmem:[#allocation11 + $0xb0] sm:$0xff]
        %v643 = vld [vmem:[#allocation11 + $0xb8] sm:$0xff]
        %v644 = vld [vmem:[#allocation11 + $0xc0] sm:$0xff]
        %v645 = vld [vmem:[#allocation11 + $0xc8] sm:$0xff]
        %v646 = vld [vmem:[#allocation11 + $0xd0] sm:$0xff]
        %v647 = vld [vmem:[#allocation11 + $0xd8] sm:$0xff]
        %v648 = vld [vmem:[#allocation11 + $0xe0] sm:$0xff]
        %v649 = vld [vmem:[#allocation11 + $0xe8] sm:$0xff]
        %v650 = vld [vmem:[#allocation11 + $0xf0] sm:$0xff]
        %v651 = vld [vmem:[#allocation11 + $0xf8] sm:$0xff]
        %v652 = vld [vmem:[#allocation11 + $0x100] sm:$0xff]
        %v653 = vld [vmem:[#allocation11 + $0x108] sm:$0xff]
        %v654 = vld [vmem:[#allocation11 + $0x110] sm:$0xff]
        %v655 = vld [vmem:[#allocation11 + $0x118] sm:$0xff]
        %v656 = vld [vmem:[#allocation11 + $0x120] sm:$0xff]
        %v657 = vld [vmem:[#allocation11 + $0x128] sm:$0xff]
        %v658 = vld [vmem:[#allocation11 + $0x130] sm:$0xff]
        %v659 = vld [vmem:[#allocation11 + $0x138] sm:$0xff]
        %v660 = vld [vmem:[#allocation11 + $0x140] sm:$0xff]
        %v661 = vld [vmem:[#allocation11 + $0x148] sm:$0xff]
        %v662 = vld [vmem:[#allocation11 + $0x150] sm:$0xff]
        %v663 = vld [vmem:[#allocation11 + $0x158] sm:$0xff]
        %v664 = vld [vmem:[#allocation11 + $0x160] sm:$0xff]
        %v665 = vld [vmem:[#allocation11 + $0x168] sm:$0xff]
        %v666 = vld [vmem:[#allocation11 + $0x170] sm:$0xff]
        %v667 = vld [vmem:[#allocation11 + $0x178] sm:$0xff]
        %v668 = vld [vmem:[%s6] sm:$0x3]
        %v669 = vld [vmem:[%s7] sm:$0x1]
        %v670 = vld [vmem:[%s8] sm:$0x1]
        %v671 = vld [vmem:[#allocation2] sm:$0xff]
        %v672 = vld [vmem:[#allocation3] sm:$0xff]
        %v673 = vld [vmem:[#allocation4] sm:$0xff]
        %674 = vmatprep.subr.mxu0 %v621
        %675 = vmatpush1.msra.mxu0 %v620
        %676 = vmatprep.subr.mxu0 %v624
        %677 = vmatpush1.msra.mxu0 %v623
        %678 = vmatprep.subr.mxu0 %v627
        %679 = vmatpush1.msra.mxu0 %v626
        %680 = vmatprep.subr.mxu0 %v630
        %681 = vmatpush1.msra.mxu0 %v629
        %682 = vmatprep.subr.mxu0 %v633
        %683 = vmatpush1.msra.mxu0 %v632
        %684 = vmatprep.subr.mxu0 %v636
        %685 = vmatpush1.msra.mxu0 %v635
        %686 = vmatprep.subr.mxu0 %v639
        %687 = vmatpush1.msra.mxu0 %v638
        %688 = vmatprep.subr.mxu0 %v642
        %689 = vmatpush1.msra.mxu0 %v641
        %690 = vmatprep.subr.mxu0 %v645
        %691 = vmatpush1.msra.mxu0 %v644
        %692 = vmatprep.subr.mxu0 %v648
        %693 = vmatpush1.msra.mxu0 %v647
        %694 = vmatprep.subr.mxu0 %v651
        %695 = vmatpush1.msra.mxu0 %v650
        %696 = vmatprep.subr.mxu0 %v654
        %697 = vmatpush1.msra.mxu0 %v653
        %698 = vmatprep.subr.mxu0 %v657
        %699 = vmatpush1.msra.mxu0 %v656
        %700 = vmatprep.subr.mxu0 %v660
        %701 = vmatpush1.msra.mxu0 %v659
        %702 = vmatprep.subr.mxu0 %v663
        %703 = vmatpush1.msra.mxu0 %v662
        %704 = vmatprep.subr.mxu0 %v666
        %705 = vmatpush1.msra.mxu0 %v665
        %706 = vmatprep.subr.mxu0 0.0
        %707 = vmatpush1.msra.mxu0 0.0
        %708 = vmatprep.subr.mxu0 0.0
        %709 = vmatpush1.msra.mxu0 0.0
        %710 = vmatprep.subr.mxu0 0.0
        %711 = vmatpush1.msra.mxu0 0.0
        %712 = vmatprep.subr.mxu0 0.0
        %713 = vmatpush1.msra.mxu0 0.0
        %714 = vmatprep.subr.mxu0 0.0
        %715 = vmatpush1.msra.mxu0 0.0
        %716 = vmatprep.subr.mxu0 0.0
        %717 = vmatpush1.msra.mxu0 0.0
        %718 = vmatprep.subr.mxu0 0.0
        %719 = vmatpush1.msra.mxu0 0.0
        %720 = vmatprep.subr.mxu0 0.0
        %721 = vmatpush1.msra.mxu0 0.0
        %722 = vmatprep.subr.mxu0 0.0
        %723 = vmatpush1.msra.mxu0 0.0
        %724 = vmatprep.subr.mxu0 0.0
        %725 = vmatpush1.msra.mxu0 0.0
        %726 = vmatprep.subr.mxu0 0.0
        %727 = vmatpush1.msra.mxu0 0.0
        %728 = vmatprep.subr.mxu0 0.0
        %729 = vmatpush1.msra.mxu0 0.0
        %730 = vmatprep.subr.mxu0 0.0
        %731 = vmatpush1.msra.mxu0 0.0
        %732 = vmatprep.subr.mxu0 0.0
        %733 = vmatpush1.msra.mxu0 0.0
        %734 = vmatprep.subr.mxu0 0.0
        %735 = vmatpush1.msra.mxu0 0.0
        %736 = vmatprep.subr.mxu0 0.0
        %737 = vmatpush1.msra.mxu0 0.0
        %738 = vmatprep.mubr.f32.mxu0 0.0
        %739 = vmatmul.mubr.f32.gmra.mrb[0].mxu0 %v672
        %v740 = vpop.f32.mrb[0].mxu0
        %v741 = vadd.f32 0.0, %v740
        %v742 = vpop.f32.mrb[0].mxu0
        %v743 = vadd.f32 0.0, %v742
        %744 = vdwg.mxu0
        %745 = vmatprep.subr.mxu0 0.0
        %746 = vmatpush1.msra.mxu0 %v622
        %747 = vmatprep.subr.mxu0 0.0
        %748 = vmatpush1.msra.mxu0 %v625
        %749 = vmatprep.subr.mxu0 0.0
        %750 = vmatpush1.msra.mxu0 %v628
        %751 = vmatprep.subr.mxu0 0.0
        %752 = vmatpush1.msra.mxu0 %v631
        %753 = vmatprep.subr.mxu0 0.0
        %754 = vmatpush1.msra.mxu0 %v634
        %755 = vmatprep.subr.mxu0 0.0
        %756 = vmatpush1.msra.mxu0 %v637
        %757 = vmatprep.subr.mxu0 0.0
        %758 = vmatpush1.msra.mxu0 %v640
        %759 = vmatprep.subr.mxu0 0.0
        %760 = vmatpush1.msra.mxu0 %v643
        %761 = vmatprep.subr.mxu0 0.0
        %762 = vmatpush1.msra.mxu0 %v646
        %763 = vmatprep.subr.mxu0 0.0
        %764 = vmatpush1.msra.mxu0 %v649
        %765 = vmatprep.subr.mxu0 0.0
        %766 = vmatpush1.msra.mxu0 %v652
        %767 = vmatprep.subr.mxu0 0.0
        %768 = vmatpush1.msra.mxu0 %v655
        %769 = vmatprep.subr.mxu0 0.0
        %770 = vmatpush1.msra.mxu0 %v658
        %771 = vmatprep.subr.mxu0 0.0
        %772 = vmatpush1.msra.mxu0 %v661
        %773 = vmatprep.subr.mxu0 0.0
        %774 = vmatpush1.msra.mxu0 %v664
        %775 = vmatprep.subr.mxu0 0.0
        %776 = vmatpush1.msra.mxu0 %v667
        %777 = vmatprep.subr.mxu0 0.0
        %778 = vmatpush1.msra.mxu0 0.0
        %779 = vmatprep.subr.mxu0 0.0
        %780 = vmatpush1.msra.mxu0 0.0
        %781 = vmatprep.subr.mxu0 0.0
        %782 = vmatpush1.msra.mxu0 0.0
        %783 = vmatprep.subr.mxu0 0.0
        %784 = vmatpush1.msra.mxu0 0.0
        %785 = vmatprep.subr.mxu0 0.0
        %786 = vmatpush1.msra.mxu0 0.0
        %787 = vmatprep.subr.mxu0 0.0
        %788 = vmatpush1.msra.mxu0 0.0
        %789 = vmatprep.subr.mxu0 0.0
        %790 = vmatpush1.msra.mxu0 0.0
        %791 = vmatprep.subr.mxu0 0.0
        %792 = vmatpush1.msra.mxu0 0.0
        %793 = vmatprep.subr.mxu0 0.0
        %794 = vmatpush1.msra.mxu0 0.0
        %795 = vmatprep.subr.mxu0 0.0
        %796 = vmatpush1.msra.mxu0 0.0
        %797 = vmatprep.subr.mxu0 0.0
        %798 = vmatpush1.msra.mxu0 0.0
        %799 = vmatprep.subr.mxu0 0.0
        %800 = vmatpush1.msra.mxu0 0.0
        %801 = vmatprep.subr.mxu0 0.0
        %802 = vmatpush1.msra.mxu0 0.0
        %803 = vmatprep.subr.mxu0 0.0
        %804 = vmatpush1.msra.mxu0 0.0
        %805 = vmatprep.subr.mxu0 0.0
        %806 = vmatpush1.msra.mxu0 0.0
        %807 = vmatprep.subr.mxu0 0.0
        %808 = vmatpush1.msra.mxu0 0.0
        %809 = vmatprep.mubr.f32.mxu0 0.0
        %810 = vmatmul.mubr.f32.gmra.mrb[0].mxu0 %v672
        %v811 = vpop.f32.mrb[0].mxu0
        %v812 = vadd.f32 0.0, %v811
        %v813 = vpop.f32.mrb[0].mxu0
        %814 = vdwg.mxu0
        %v815 = vld [vmem:[%s456] sm:$0xff]
        %v816 = vld [vmem:[%s456 + $0x8] sm:$0xf]
        %v817 = vunpack.c.l.bf16 %v815
        %v818 = vunpack.c.h.bf16 %v815
        %v819 = vunpack.c.l.bf16 %v816
        %v821 = vlaneseq
        %v822 = vshrl.u32 %v821, 7
        %v823 = vsub.s32 0, %v822
        %v824 = vrot.slane %v522, %v823
        %v825 = vlaneseq
        %v826 = vshrl.u32 %v825, 7
        %v827 = vsub.s32 1, %v826
        %v828 = vrot.slane %v522, %v827
        %v829 = vlaneseq
        %v830 = vshrl.u32 %v829, 7
        %v831 = vsub.s32 2, %v830
        %v832 = vrot.slane %v522, %v831
        %v836 = vadd.f32 %v817, %v824
        %v837 = vadd.f32 %v818, %v828
        %v838 = vadd.f32 %v819, %v832
        %839 = vmatprep.subr.mxu0 %v524
        %840 = vmatpush1.msra.mxu0 %v523
        %841 = vmatprep.subr.mxu0 %v527
        %842 = vmatpush1.msra.mxu0 %v526
        %843 = vmatprep.subr.mxu0 %v530
        %844 = vmatpush1.msra.mxu0 %v529
        %845 = vmatprep.subr.mxu0 %v533
        %846 = vmatpush1.msra.mxu0 %v532
        %847 = vmatprep.subr.mxu0 %v536
        %848 = vmatpush1.msra.mxu0 %v535
        %849 = vmatprep.subr.mxu0 %v539
        %850 = vmatpush1.msra.mxu0 %v538
        %851 = vmatprep.subr.mxu0 %v542
        %852 = vmatpush1.msra.mxu0 %v541
        %853 = vmatprep.subr.mxu0 %v545
        %854 = vmatpush1.msra.mxu0 %v544
        %855 = vmatprep.subr.mxu0 %v548
        %856 = vmatpush1.msra.mxu0 %v547
        %857 = vmatprep.subr.mxu0 %v551
        %858 = vmatpush1.msra.mxu0 %v550
        %859 = vmatprep.subr.mxu0 %v554
        %860 = vmatpush1.msra.mxu0 %v553
        %861 = vmatprep.subr.mxu0 %v557
        %862 = vmatpush1.msra.mxu0 %v556
        %863 = vmatprep.subr.mxu0 %v560
        %864 = vmatpush1.msra.mxu0 %v559
        %865 = vmatprep.subr.mxu0 %v563
        %866 = vmatpush1.msra.mxu0 %v562
        %867 = vmatprep.subr.mxu0 %v566
        %868 = vmatpush1.msra.mxu0 %v565
        %869 = vmatprep.subr.mxu0 %v569
        %870 = vmatpush1.msra.mxu0 %v568
        %871 = vmatprep.subr.mxu0 0.0
        %872 = vmatpush1.msra.mxu0 0.0
        %873 = vmatprep.subr.mxu0 0.0
        %874 = vmatpush1.msra.mxu0 0.0
        %875 = vmatprep.subr.mxu0 0.0
        %876 = vmatpush1.msra.mxu0 0.0
        %877 = vmatprep.subr.mxu0 0.0
        %878 = vmatpush1.msra.mxu0 0.0
        %879 = vmatprep.subr.mxu0 0.0
        %880 = vmatpush1.msra.mxu0 0.0
        %881 = vmatprep.subr.mxu0 0.0
        %882 = vmatpush1.msra.mxu0 0.0
        %883 = vmatprep.subr.mxu0 0.0
        %884 = vmatpush1.msra.mxu0 0.0
        %885 = vmatprep.subr.mxu0 0.0
        %886 = vmatpush1.msra.mxu0 0.0
        %887 = vmatprep.subr.mxu0 0.0
        %888 = vmatpush1.msra.mxu0 0.0
        %889 = vmatprep.subr.mxu0 0.0
        %890 = vmatpush1.msra.mxu0 0.0
        %891 = vmatprep.subr.mxu0 0.0
        %892 = vmatpush1.msra.mxu0 0.0
        %893 = vmatprep.subr.mxu0 0.0
        %894 = vmatpush1.msra.mxu0 0.0
        %895 = vmatprep.subr.mxu0 0.0
        %896 = vmatpush1.msra.mxu0 0.0
        %897 = vmatprep.subr.mxu0 0.0
        %898 = vmatpush1.msra.mxu0 0.0
        %899 = vmatprep.subr.mxu0 0.0
        %900 = vmatpush1.msra.mxu0 0.0
        %901 = vmatprep.subr.mxu0 0.0
        %902 = vmatpush1.msra.mxu0 0.0
        %903 = vmatprep.mubr.f32.mxu0 0.0
        %904 = vmatmul.mubr.f32.gmra.mrb[0].mxu0 %v671
        %v905 = vpop.f32.mrb[0].mxu0
        %v906 = vadd.f32 0.0, %v905
        %v907 = vpop.f32.mrb[0].mxu0
        %v908 = vadd.f32 0.0, %v907
        %909 = vdwg.mxu0
        %910 = vmatprep.subr.mxu0 0.0
        %911 = vmatpush1.msra.mxu0 %v525
        %912 = vmatprep.subr.mxu0 0.0
        %913 = vmatpush1.msra.mxu0 %v528
        %914 = vmatprep.subr.mxu0 0.0
        %915 = vmatpush1.msra.mxu0 %v531
        %916 = vmatprep.subr.mxu0 0.0
        %917 = vmatpush1.msra.mxu0 %v534
        %918 = vmatprep.subr.mxu0 0.0
        %919 = vmatpush1.msra.mxu0 %v537
        %920 = vmatprep.subr.mxu0 0.0
        %921 = vmatpush1.msra.mxu0 %v540
        %922 = vmatprep.subr.mxu0 0.0
        %923 = vmatpush1.msra.mxu0 %v543
        %924 = vmatprep.subr.mxu0 0.0
        %925 = vmatpush1.msra.mxu0 %v546
        %926 = vmatprep.subr.mxu0 0.0
        %927 = vmatpush1.msra.mxu0 %v549
        %928 = vmatprep.subr.mxu0 0.0
        %929 = vmatpush1.msra.mxu0 %v552
        %930 = vmatprep.subr.mxu0 0.0
        %931 = vmatpush1.msra.mxu0 %v555
        %932 = vmatprep.subr.mxu0 0.0
        %933 = vmatpush1.msra.mxu0 %v558
        %934 = vmatprep.subr.mxu0 0.0
        %935 = vmatpush1.msra.mxu0 %v561
        %936 = vmatprep.subr.mxu0 0.0
        %937 = vmatpush1.msra.mxu0 %v564
        %938 = vmatprep.subr.mxu0 0.0
        %939 = vmatpush1.msra.mxu0 %v567
        %940 = vmatprep.subr.mxu0 0.0
        %941 = vmatpush1.msra.mxu0 %v570
        %942 = vmatprep.subr.mxu0 0.0
        %943 = vmatpush1.msra.mxu0 0.0
        %944 = vmatprep.subr.mxu0 0.0
        %945 = vmatpush1.msra.mxu0 0.0
        %946 = vmatprep.subr.mxu0 0.0
        %947 = vmatpush1.msra.mxu0 0.0
        %948 = vmatprep.subr.mxu0 0.0
        %949 = vmatpush1.msra.mxu0 0.0
        %950 = vmatprep.subr.mxu0 0.0
        %951 = vmatpush1.msra.mxu0 0.0
        %952 = vmatprep.subr.mxu0 0.0
        %953 = vmatpush1.msra.mxu0 0.0
        %954 = vmatprep.subr.mxu0 0.0
        %955 = vmatpush1.msra.mxu0 0.0
        %956 = vmatprep.subr.mxu0 0.0
        %957 = vmatpush1.msra.mxu0 0.0
        %958 = vmatprep.subr.mxu0 0.0
        %959 = vmatpush1.msra.mxu0 0.0
        %960 = vmatprep.subr.mxu0 0.0
        %961 = vmatpush1.msra.mxu0 0.0
        %962 = vmatprep.subr.mxu0 0.0
        %963 = vmatpush1.msra.mxu0 0.0
        %964 = vmatprep.subr.mxu0 0.0
        %965 = vmatpush1.msra.mxu0 0.0
        %966 = vmatprep.subr.mxu0 0.0
        %967 = vmatpush1.msra.mxu0 0.0
        %968 = vmatprep.subr.mxu0 0.0
        %969 = vmatpush1.msra.mxu0 0.0
        %970 = vmatprep.subr.mxu0 0.0
        %971 = vmatpush1.msra.mxu0 0.0
        %972 = vmatprep.subr.mxu0 0.0
        %973 = vmatpush1.msra.mxu0 0.0
        %974 = vmatprep.mubr.f32.mxu0 0.0
        %975 = vmatmul.mubr.f32.gmra.mrb[0].mxu0 %v671
        %v976 = vpop.f32.mrb[0].mxu0
        %v977 = vadd.f32 0.0, %v976
        %v978 = vpop.f32.mrb[0].mxu0
        %979 = vdwg.mxu0
        %v980 = vadd.f32 %v836, %v906
        %v981 = vxor.u32 %v980, 2147483648
        %v982 = vmul.f32 %v981, 1.442695
        %v983 = vpow.pop %v982
        %v984 = vadd.f32 %v983, 1.0
        %v985 = vrcp.pop %v984
        %v986 = vmul.f32 1.0, %v985
        %v987 = vadd.f32 %v837, %v908
        %v988 = vxor.u32 %v987, 2147483648
        %v989 = vmul.f32 %v988, 1.442695
        %v990 = vpow.pop %v989
        %v991 = vadd.f32 %v990, 1.0
        %v992 = vrcp.pop %v991
        %v993 = vmul.f32 1.0, %v992
        %v995 = vlaneseq
        %v996 = vshrl.u32 %v995, 7
        %v997 = vsub.s32 0, %v996
        %v998 = vrot.slane %v571, %v997
        %v1000 = vadd.f32 %v977, %v998
        %v1001 = vmul.f32 %v986, %v1000
        %v1002 = vadd.f32 %v838, %v1001
        %v1003 = vtanh.pop %v1002
        %v1004 = vsub.f32 1.0, %v993
        %v1005 = vmul.f32 %v1004, %v1003
        %v1006 = vmul.f32 %v993, %v671
        %v1007 = vadd.f32 %v1005, %v1006
        %1008 = vmatprep.subr.mxu0 %v573
        %1009 = vmatpush1.msra.mxu0 %v572
        %1010 = vmatprep.subr.mxu0 %v576
        %1011 = vmatpush1.msra.mxu0 %v575
        %1012 = vmatprep.subr.mxu0 %v579
        %1013 = vmatpush1.msra.mxu0 %v578
        %1014 = vmatprep.subr.mxu0 %v582
        %1015 = vmatpush1.msra.mxu0 %v581
        %1016 = vmatprep.subr.mxu0 %v585
        %1017 = vmatpush1.msra.mxu0 %v584
        %1018 = vmatprep.subr.mxu0 %v588
        %1019 = vmatpush1.msra.mxu0 %v587
        %1020 = vmatprep.subr.mxu0 %v591
        %1021 = vmatpush1.msra.mxu0 %v590
        %1022 = vmatprep.subr.mxu0 %v594
        %1023 = vmatpush1.msra.mxu0 %v593
        %1024 = vmatprep.subr.mxu0 %v597
        %1025 = vmatpush1.msra.mxu0 %v596
        %1026 = vmatprep.subr.mxu0 %v600
        %1027 = vmatpush1.msra.mxu0 %v599
        %1028 = vmatprep.subr.mxu0 %v603
        %1029 = vmatpush1.msra.mxu0 %v602
        %1030 = vmatprep.subr.mxu0 %v606
        %1031 = vmatpush1.msra.mxu0 %v605
        %1032 = vmatprep.subr.mxu0 %v609
        %1033 = vmatpush1.msra.mxu0 %v608
        %1034 = vmatprep.subr.mxu0 %v612
        %1035 = vmatpush1.msra.mxu0 %v611
        %1036 = vmatprep.subr.mxu0 %v615
        %1037 = vmatpush1.msra.mxu0 %v614
        %1038 = vmatprep.subr.mxu0 %v618
        %1039 = vmatpush1.msra.mxu0 %v617
        %1040 = vmatprep.subr.mxu0 0.0
        %1041 = vmatpush1.msra.mxu0 0.0
        %1042 = vmatprep.subr.mxu0 0.0
        %1043 = vmatpush1.msra.mxu0 0.0
        %1044 = vmatprep.subr.mxu0 0.0
        %1045 = vmatpush1.msra.mxu0 0.0
        %1046 = vmatprep.subr.mxu0 0.0
        %1047 = vmatpush1.msra.mxu0 0.0
        %1048 = vmatprep.subr.mxu0 0.0
        %1049 = vmatpush1.msra.mxu0 0.0
        %1050 = vmatprep.subr.mxu0 0.0
        %1051 = vmatpush1.msra.mxu0 0.0
        %1052 = vmatprep.subr.mxu0 0.0
        %1053 = vmatpush1.msra.mxu0 0.0
        %1054 = vmatprep.subr.mxu0 0.0
        %1055 = vmatpush1.msra.mxu0 0.0
        %1056 = vmatprep.subr.mxu0 0.0
        %1057 = vmatpush1.msra.mxu0 0.0
        %1058 = vmatprep.subr.mxu0 0.0
        %1059 = vmatpush1.msra.mxu0 0.0
        %1060 = vmatprep.subr.mxu0 0.0
        %1061 = vmatpush1.msra.mxu0 0.0
        %1062 = vmatprep.subr.mxu0 0.0
        %1063 = vmatpush1.msra.mxu0 0.0
        %1064 = vmatprep.subr.mxu0 0.0
        %1065 = vmatpush1.msra.mxu0 0.0
        %1066 = vmatprep.subr.mxu0 0.0
        %1067 = vmatpush1.msra.mxu0 0.0
        %1068 = vmatprep.subr.mxu0 0.0
        %1069 = vmatpush1.msra.mxu0 0.0
        %1070 = vmatprep.subr.mxu0 0.0
        %1071 = vmatpush1.msra.mxu0 0.0
        %1072 = vmatprep.mubr.f32.mxu0 0.0
        %1073 = vmatmul.mubr.f32.gmra.mrb[0].mxu0 %v1007
        %v1074 = vpop.f32.mrb[0].mxu0
        %v1075 = vadd.f32 0.0, %v1074
        %v1076 = vpop.f32.mrb[0].mxu0
        %v1077 = vadd.f32 0.0, %v1076
        %1078 = vdwg.mxu0
        %1079 = vmatprep.subr.mxu0 0.0
        %1080 = vmatpush1.msra.mxu0 %v574
        %1081 = vmatprep.subr.mxu0 0.0
        %1082 = vmatpush1.msra.mxu0 %v577
        %1083 = vmatprep.subr.mxu0 0.0
        %1084 = vmatpush1.msra.mxu0 %v580
        %1085 = vmatprep.subr.mxu0 0.0
        %1086 = vmatpush1.msra.mxu0 %v583
        %1087 = vmatprep.subr.mxu0 0.0
        %1088 = vmatpush1.msra.mxu0 %v586
        %1089 = vmatprep.subr.mxu0 0.0
        %1090 = vmatpush1.msra.mxu0 %v589
        %1091 = vmatprep.subr.mxu0 0.0
        %1092 = vmatpush1.msra.mxu0 %v592
        %1093 = vmatprep.subr.mxu0 0.0
        %1094 = vmatpush1.msra.mxu0 %v595
        %1095 = vmatprep.subr.mxu0 0.0
        %1096 = vmatpush1.msra.mxu0 %v598
        %1097 = vmatprep.subr.mxu0 0.0
        %1098 = vmatpush1.msra.mxu0 %v601
        %1099 = vmatprep.subr.mxu0 0.0
        %1100 = vmatpush1.msra.mxu0 %v604
        %1101 = vmatprep.subr.mxu0 0.0
        %1102 = vmatpush1.msra.mxu0 %v607
        %1103 = vmatprep.subr.mxu0 0.0
        %1104 = vmatpush1.msra.mxu0 %v610
        %1105 = vmatprep.subr.mxu0 0.0
        %1106 = vmatpush1.msra.mxu0 %v613
        %1107 = vmatprep.subr.mxu0 0.0
        %1108 = vmatpush1.msra.mxu0 %v616
        %1109 = vmatprep.subr.mxu0 0.0
        %1110 = vmatpush1.msra.mxu0 %v619
        %1111 = vmatprep.subr.mxu0 0.0
        %1112 = vmatpush1.msra.mxu0 0.0
        %1113 = vmatprep.subr.mxu0 0.0
        %1114 = vmatpush1.msra.mxu0 0.0
        %1115 = vmatprep.subr.mxu0 0.0
        %1116 = vmatpush1.msra.mxu0 0.0
        %1117 = vmatprep.subr.mxu0 0.0
        %1118 = vmatpush1.msra.mxu0 0.0
        %1119 = vmatprep.subr.mxu0 0.0
        %1120 = vmatpush1.msra.mxu0 0.0
        %1121 = vmatprep.subr.mxu0 0.0
        %1122 = vmatpush1.msra.mxu0 0.0
        %1123 = vmatprep.subr.mxu0 0.0
        %1124 = vmatpush1.msra.mxu0 0.0
        %1125 = vmatprep.subr.mxu0 0.0
        %1126 = vmatpush1.msra.mxu0 0.0
        %1127 = vmatprep.subr.mxu0 0.0
        %1128 = vmatpush1.msra.mxu0 0.0
        %1129 = vmatprep.subr.mxu0 0.0
        %1130 = vmatpush1.msra.mxu0 0.0
        %1131 = vmatprep.subr.mxu0 0.0
        %1132 = vmatpush1.msra.mxu0 0.0
        %1133 = vmatprep.subr.mxu0 0.0
        %1134 = vmatpush1.msra.mxu0 0.0
        %1135 = vmatprep.subr.mxu0 0.0
        %1136 = vmatpush1.msra.mxu0 0.0
        %1137 = vmatprep.subr.mxu0 0.0
        %1138 = vmatpush1.msra.mxu0 0.0
        %1139 = vmatprep.subr.mxu0 0.0
        %1140 = vmatpush1.msra.mxu0 0.0
        %1141 = vmatprep.subr.mxu0 0.0
        %1142 = vmatpush1.msra.mxu0 0.0
        %1143 = vmatprep.mubr.f32.mxu0 0.0
        %1144 = vmatmul.mubr.f32.gmra.mrb[0].mxu0 %v1007
        %v1145 = vpop.f32.mrb[0].mxu0
        %v1146 = vadd.f32 0.0, %v1145
        %v1147 = vpop.f32.mrb[0].mxu0
        %1148 = vdwg.mxu0
        %v1149 = vadd.f32 %v1075, %v741
        %v1150 = vadd.f32 %v1077, %v743
        %v1152 = vlaneseq
        %v1153 = vshrl.u32 %v1152, 7
        %v1154 = vsub.s32 0, %v1153
        %v1155 = vrot.slane %v668, %v1154
        %v1156 = vlaneseq
        %v1157 = vshrl.u32 %v1156, 7
        %v1158 = vsub.s32 1, %v1157
        %v1159 = vrot.slane %v668, %v1158
        %v1162 = vadd.f32 %v1149, %v1155
        %v1163 = vadd.f32 %v1150, %v1159
        %v1164 = vxor.u32 %v1162, 2147483648
        %v1165 = vxor.u32 %v1163, 2147483648
        %v1166 = vmul.f32 %v1164, 1.442695
        %v1167 = vpow.pop %v1166
        %v1168 = vmul.f32 %v1165, 1.442695
        %v1169 = vpow.pop %v1168
        %v1170 = vadd.f32 %v1167, 1.0
        %v1171 = vadd.f32 %v1169, 1.0
        %v1172 = vrcp.pop %v1170
        %v1173 = vmul.f32 1.0, %v1172
        %v1174 = vrcp.pop %v1171
        %v1175 = vmul.f32 1.0, %v1174
        %v1177 = vlaneseq
        %v1178 = vshrl.u32 %v1177, 7
        %v1179 = vsub.s32 0, %v1178
        %v1180 = vrot.slane %v669, %v1179
        %v1182 = vadd.f32 %v1146, %v1180
        %v1184 = vlaneseq
        %v1185 = vshrl.u32 %v1184, 7
        %v1186 = vsub.s32 0, %v1185
        %v1187 = vrot.slane %v670, %v1186
        %v1189 = vadd.f32 %v812, %v1187
        %v1190 = vmul.f32 %v1173, %v1189
        %v1191 = vadd.f32 %v1182, %v1190
        %v1192 = vtanh.pop %v1191
        %v1193 = vsub.f32 1.0, %v1175
        %v1194 = vmul.f32 %v1193, %v1192
        %v1195 = vmul.f32 %v1175, %v672
        %v1196 = vadd.f32 %v1194, %v1195
        %v1197 = vadd.f32 %v673, %v1196
        %1198 = vmatprep.subr.mxu0 %v621
        %1199 = vmatpush1.msra.mxu0 %v620
        %1200 = vmatprep.subr.mxu0 %v624
        %1201 = vmatpush1.msra.mxu0 %v623
        %1202 = vmatprep.subr.mxu0 %v627
        %1203 = vmatpush1.msra.mxu0 %v626
        %1204 = vmatprep.subr.mxu0 %v630
        %1205 = vmatpush1.msra.mxu0 %v629
        %1206 = vmatprep.subr.mxu0 %v633
        %1207 = vmatpush1.msra.mxu0 %v632
        %1208 = vmatprep.subr.mxu0 %v636
        %1209 = vmatpush1.msra.mxu0 %v635
        %1210 = vmatprep.subr.mxu0 %v639
        %1211 = vmatpush1.msra.mxu0 %v638
        %1212 = vmatprep.subr.mxu0 %v642
        %1213 = vmatpush1.msra.mxu0 %v641
        %1214 = vmatprep.subr.mxu0 %v645
        %1215 = vmatpush1.msra.mxu0 %v644
        %1216 = vmatprep.subr.mxu0 %v648
        %1217 = vmatpush1.msra.mxu0 %v647
        %1218 = vmatprep.subr.mxu0 %v651
        %1219 = vmatpush1.msra.mxu0 %v650
        %1220 = vmatprep.subr.mxu0 %v654
        %1221 = vmatpush1.msra.mxu0 %v653
        %1222 = vmatprep.subr.mxu0 %v657
        %1223 = vmatpush1.msra.mxu0 %v656
        %1224 = vmatprep.subr.mxu0 %v660
        %1225 = vmatpush1.msra.mxu0 %v659
        %1226 = vmatprep.subr.mxu0 %v663
        %1227 = vmatpush1.msra.mxu0 %v662
        %1228 = vmatprep.subr.mxu0 %v666
        %1229 = vmatpush1.msra.mxu0 %v665
        %1230 = vmatprep.subr.mxu0 0.0
        %1231 = vmatpush1.msra.mxu0 0.0
        %1232 = vmatprep.subr.mxu0 0.0
        %1233 = vmatpush1.msra.mxu0 0.0
        %1234 = vmatprep.subr.mxu0 0.0
        %1235 = vmatpush1.msra.mxu0 0.0
        %1236 = vmatprep.subr.mxu0 0.0
        %1237 = vmatpush1.msra.mxu0 0.0
        %1238 = vmatprep.subr.mxu0 0.0
        %1239 = vmatpush1.msra.mxu0 0.0
        %1240 = vmatprep.subr.mxu0 0.0
        %1241 = vmatpush1.msra.mxu0 0.0
        %1242 = vmatprep.subr.mxu0 0.0
        %1243 = vmatpush1.msra.mxu0 0.0
        %1244 = vmatprep.subr.mxu0 0.0
        %1245 = vmatpush1.msra.mxu0 0.0
        %1246 = vmatprep.subr.mxu0 0.0
        %1247 = vmatpush1.msra.mxu0 0.0
        %1248 = vmatprep.subr.mxu0 0.0
        %1249 = vmatpush1.msra.mxu0 0.0
        %1250 = vmatprep.subr.mxu0 0.0
        %1251 = vmatpush1.msra.mxu0 0.0
        %1252 = vmatprep.subr.mxu0 0.0
        %1253 = vmatpush1.msra.mxu0 0.0
        %1254 = vmatprep.subr.mxu0 0.0
        %1255 = vmatpush1.msra.mxu0 0.0
        %1256 = vmatprep.subr.mxu0 0.0
        %1257 = vmatpush1.msra.mxu0 0.0
        %1258 = vmatprep.subr.mxu0 0.0
        %1259 = vmatpush1.msra.mxu0 0.0
        %1260 = vmatprep.subr.mxu0 0.0
        %1261 = vmatpush1.msra.mxu0 0.0
        %1262 = vmatprep.mubr.f32.mxu0 0.0
        %1263 = vmatmul.mubr.f32.gmra.mrb[0].mxu0 %v1196
        %v1264 = vpop.f32.mrb[0].mxu0
        %v1265 = vadd.f32 0.0, %v1264
        %v1266 = vpop.f32.mrb[0].mxu0
        %v1267 = vadd.f32 0.0, %v1266
        %1268 = vdwg.mxu0
        %1269 = vmatprep.subr.mxu0 0.0
        %1270 = vmatpush1.msra.mxu0 %v622
        %1271 = vmatprep.subr.mxu0 0.0
        %1272 = vmatpush1.msra.mxu0 %v625
        %1273 = vmatprep.subr.mxu0 0.0
        %1274 = vmatpush1.msra.mxu0 %v628
        %1275 = vmatprep.subr.mxu0 0.0
        %1276 = vmatpush1.msra.mxu0 %v631
        %1277 = vmatprep.subr.mxu0 0.0
        %1278 = vmatpush1.msra.mxu0 %v634
        %1279 = vmatprep.subr.mxu0 0.0
        %1280 = vmatpush1.msra.mxu0 %v637
        %1281 = vmatprep.subr.mxu0 0.0
        %1282 = vmatpush1.msra.mxu0 %v640
        %1283 = vmatprep.subr.mxu0 0.0
        %1284 = vmatpush1.msra.mxu0 %v643
        %1285 = vmatprep.subr.mxu0 0.0
        %1286 = vmatpush1.msra.mxu0 %v646
        %1287 = vmatprep.subr.mxu0 0.0
        %1288 = vmatpush1.msra.mxu0 %v649
        %1289 = vmatprep.subr.mxu0 0.0
        %1290 = vmatpush1.msra.mxu0 %v652
        %1291 = vmatprep.subr.mxu0 0.0
        %1292 = vmatpush1.msra.mxu0 %v655
        %1293 = vmatprep.subr.mxu0 0.0
        %1294 = vmatpush1.msra.mxu0 %v658
        %1295 = vmatprep.subr.mxu0 0.0
        %1296 = vmatpush1.msra.mxu0 %v661
        %1297 = vmatprep.subr.mxu0 0.0
        %1298 = vmatpush1.msra.mxu0 %v664
        %1299 = vmatprep.subr.mxu0 0.0
        %1300 = vmatpush1.msra.mxu0 %v667
        %1301 = vmatprep.subr.mxu0 0.0
        %1302 = vmatpush1.msra.mxu0 0.0
        %1303 = vmatprep.subr.mxu0 0.0
        %1304 = vmatpush1.msra.mxu0 0.0
        %1305 = vmatprep.subr.mxu0 0.0
        %1306 = vmatpush1.msra.mxu0 0.0
        %1307 = vmatprep.subr.mxu0 0.0
        %1308 = vmatpush1.msra.mxu0 0.0
        %1309 = vmatprep.subr.mxu0 0.0
        %1310 = vmatpush1.msra.mxu0 0.0
        %1311 = vmatprep.subr.mxu0 0.0
        %1312 = vmatpush1.msra.mxu0 0.0
        %1313 = vmatprep.subr.mxu0 0.0
        %1314 = vmatpush1.msra.mxu0 0.0
        %1315 = vmatprep.subr.mxu0 0.0
        %1316 = vmatpush1.msra.mxu0 0.0
        %1317 = vmatprep.subr.mxu0 0.0
        %1318 = vmatpush1.msra.mxu0 0.0
        %1319 = vmatprep.subr.mxu0 0.0
        %1320 = vmatpush1.msra.mxu0 0.0
        %1321 = vmatprep.subr.mxu0 0.0
        %1322 = vmatpush1.msra.mxu0 0.0
        %1323 = vmatprep.subr.mxu0 0.0
        %1324 = vmatpush1.msra.mxu0 0.0
        %1325 = vmatprep.subr.mxu0 0.0
        %1326 = vmatpush1.msra.mxu0 0.0
        %1327 = vmatprep.subr.mxu0 0.0
        %1328 = vmatpush1.msra.mxu0 0.0
        %1329 = vmatprep.subr.mxu0 0.0
        %1330 = vmatpush1.msra.mxu0 0.0
        %1331 = vmatprep.subr.mxu0 0.0
        %1332 = vmatpush1.msra.mxu0 0.0
        %1333 = vmatprep.mubr.f32.mxu0 0.0
        %1334 = vmatmul.mubr.f32.gmra.mrb[0].mxu0 %v1196
        %v1335 = vpop.f32.mrb[0].mxu0
        %v1336 = vadd.f32 0.0, %v1335
        %v1337 = vpop.f32.mrb[0].mxu0
        %1338 = vdwg.mxu0
        %s1339 = scalar_lea.vmem %s456, 12 [#allocation5]
        %v1340 = vld [vmem:[%s1339] sm:$0xff]
        %v1341 = vld [vmem:[%s1339 + $0x8] sm:$0xf]
        %v1342 = vunpack.c.l.bf16 %v1340
        %v1343 = vunpack.c.h.bf16 %v1340
        %v1344 = vunpack.c.l.bf16 %v1341
        %v1345 = vadd.f32 %v1342, %v824
        %v1346 = vadd.f32 %v1343, %v828
        %v1347 = vadd.f32 %v1344, %v832
        %1348 = vmatprep.subr.mxu0 %v524
        %1349 = vmatpush1.msra.mxu0 %v523
        %1350 = vmatprep.subr.mxu0 %v527
        %1351 = vmatpush1.msra.mxu0 %v526
        %1352 = vmatprep.subr.mxu0 %v530
        %1353 = vmatpush1.msra.mxu0 %v529
        %1354 = vmatprep.subr.mxu0 %v533
        %1355 = vmatpush1.msra.mxu0 %v532
        %1356 = vmatprep.subr.mxu0 %v536
        %1357 = vmatpush1.msra.mxu0 %v535
        %1358 = vmatprep.subr.mxu0 %v539
        %1359 = vmatpush1.msra.mxu0 %v538
        %1360 = vmatprep.subr.mxu0 %v542
        %1361 = vmatpush1.msra.mxu0 %v541
        %1362 = vmatprep.subr.mxu0 %v545
        %1363 = vmatpush1.msra.mxu0 %v544
        %1364 = vmatprep.subr.mxu0 %v548
        %1365 = vmatpush1.msra.mxu0 %v547
        %1366 = vmatprep.subr.mxu0 %v551
        %1367 = vmatpush1.msra.mxu0 %v550
        %1368 = vmatprep.subr.mxu0 %v554
        %1369 = vmatpush1.msra.mxu0 %v553
        %1370 = vmatprep.subr.mxu0 %v557
        %1371 = vmatpush1.msra.mxu0 %v556
        %1372 = vmatprep.subr.mxu0 %v560
        %1373 = vmatpush1.msra.mxu0 %v559
        %1374 = vmatprep.subr.mxu0 %v563
        %1375 = vmatpush1.msra.mxu0 %v562
        %1376 = vmatprep.subr.mxu0 %v566
        %1377 = vmatpush1.msra.mxu0 %v565
        %1378 = vmatprep.subr.mxu0 %v569
        %1379 = vmatpush1.msra.mxu0 %v568
        %1380 = vmatprep.subr.mxu0 0.0
        %1381 = vmatpush1.msra.mxu0 0.0
        %1382 = vmatprep.subr.mxu0 0.0
        %1383 = vmatpush1.msra.mxu0 0.0
        %1384 = vmatprep.subr.mxu0 0.0
        %1385 = vmatpush1.msra.mxu0 0.0
        %1386 = vmatprep.subr.mxu0 0.0
        %1387 = vmatpush1.msra.mxu0 0.0
        %1388 = vmatprep.subr.mxu0 0.0
        %1389 = vmatpush1.msra.mxu0 0.0
        %1390 = vmatprep.subr.mxu0 0.0
        %1391 = vmatpush1.msra.mxu0 0.0
        %1392 = vmatprep.subr.mxu0 0.0
        %1393 = vmatpush1.msra.mxu0 0.0
        %1394 = vmatprep.subr.mxu0 0.0
        %1395 = vmatpush1.msra.mxu0 0.0
        %1396 = vmatprep.subr.mxu0 0.0
        %1397 = vmatpush1.msra.mxu0 0.0
        %1398 = vmatprep.subr.mxu0 0.0
        %1399 = vmatpush1.msra.mxu0 0.0
        %1400 = vmatprep.subr.mxu0 0.0
        %1401 = vmatpush1.msra.mxu0 0.0
        %1402 = vmatprep.subr.mxu0 0.0
        %1403 = vmatpush1.msra.mxu0 0.0
        %1404 = vmatprep.subr.mxu0 0.0
        %1405 = vmatpush1.msra.mxu0 0.0
        %1406 = vmatprep.subr.mxu0 0.0
        %1407 = vmatpush1.msra.mxu0 0.0
        %1408 = vmatprep.subr.mxu0 0.0
        %1409 = vmatpush1.msra.mxu0 0.0
        %1410 = vmatprep.subr.mxu0 0.0
        %1411 = vmatpush1.msra.mxu0 0.0
        %1412 = vmatprep.mubr.f32.mxu0 0.0
        %1413 = vmatmul.mubr.f32.gmra.mrb[0].mxu0 %v1007
        %v1414 = vpop.f32.mrb[0].mxu0
        %v1415 = vadd.f32 0.0, %v1414
        %v1416 = vpop.f32.mrb[0].mxu0
        %v1417 = vadd.f32 0.0, %v1416
        %1418 = vdwg.mxu0
        %1419 = vmatprep.subr.mxu0 0.0
        %1420 = vmatpush1.msra.mxu0 %v525
        %1421 = vmatprep.subr.mxu0 0.0
        %1422 = vmatpush1.msra.mxu0 %v528
        %1423 = vmatprep.subr.mxu0 0.0
        %1424 = vmatpush1.msra.mxu0 %v531
        %1425 = vmatprep.subr.mxu0 0.0
        %1426 = vmatpush1.msra.mxu0 %v534
        %1427 = vmatprep.subr.mxu0 0.0
        %1428 = vmatpush1.msra.mxu0 %v537
        %1429 = vmatprep.subr.mxu0 0.0
        %1430 = vmatpush1.msra.mxu0 %v540
        %1431 = vmatprep.subr.mxu0 0.0
        %1432 = vmatpush1.msra.mxu0 %v543
        %1433 = vmatprep.subr.mxu0 0.0
        %1434 = vmatpush1.msra.mxu0 %v546
        %1435 = vmatprep.subr.mxu0 0.0
        %1436 = vmatpush1.msra.mxu0 %v549
        %1437 = vmatprep.subr.mxu0 0.0
        %1438 = vmatpush1.msra.mxu0 %v552
        %1439 = vmatprep.subr.mxu0 0.0
        %1440 = vmatpush1.msra.mxu0 %v555
        %1441 = vmatprep.subr.mxu0 0.0
        %1442 = vmatpush1.msra.mxu0 %v558
        %1443 = vmatprep.subr.mxu0 0.0
        %1444 = vmatpush1.msra.mxu0 %v561
        %1445 = vmatprep.subr.mxu0 0.0
        %1446 = vmatpush1.msra.mxu0 %v564
        %1447 = vmatprep.subr.mxu0 0.0
        %1448 = vmatpush1.msra.mxu0 %v567
        %1449 = vmatprep.subr.mxu0 0.0
        %1450 = vmatpush1.msra.mxu0 %v570
        %1451 = vmatprep.subr.mxu0 0.0
        %1452 = vmatpush1.msra.mxu0 0.0
        %1453 = vmatprep.subr.mxu0 0.0
        %1454 = vmatpush1.msra.mxu0 0.0
        %1455 = vmatprep.subr.mxu0 0.0
        %1456 = vmatpush1.msra.mxu0 0.0
        %1457 = vmatprep.subr.mxu0 0.0
        %1458 = vmatpush1.msra.mxu0 0.0
        %1459 = vmatprep.subr.mxu0 0.0
        %1460 = vmatpush1.msra.mxu0 0.0
        %1461 = vmatprep.subr.mxu0 0.0
        %1462 = vmatpush1.msra.mxu0 0.0
        %1463 = vmatprep.subr.mxu0 0.0
        %1464 = vmatpush1.msra.mxu0 0.0
        %1465 = vmatprep.subr.mxu0 0.0
        %1466 = vmatpush1.msra.mxu0 0.0
        %1467 = vmatprep.subr.mxu0 0.0
        %1468 = vmatpush1.msra.mxu0 0.0
        %1469 = vmatprep.subr.mxu0 0.0
        %1470 = vmatpush1.msra.mxu0 0.0
        %1471 = vmatprep.subr.mxu0 0.0
        %1472 = vmatpush1.msra.mxu0 0.0
        %1473 = vmatprep.subr.mxu0 0.0
        %1474 = vmatpush1.msra.mxu0 0.0
        %1475 = vmatprep.subr.mxu0 0.0
        %1476 = vmatpush1.msra.mxu0 0.0
        %1477 = vmatprep.subr.mxu0 0.0
        %1478 = vmatpush1.msra.mxu0 0.0
        %1479 = vmatprep.subr.mxu0 0.0
        %1480 = vmatpush1.msra.mxu0 0.0
        %1481 = vmatprep.subr.mxu0 0.0
        %1482 = vmatpush1.msra.mxu0 0.0
        %1483 = vmatprep.mubr.f32.mxu0 0.0
        %1484 = vmatmul.mubr.f32.gmra.mrb[0].mxu0 %v1007
        %v1485 = vpop.f32.mrb[0].mxu0
        %v1486 = vadd.f32 0.0, %v1485
        %v1487 = vpop.f32.mrb[0].mxu0
        %1488 = vdwg.mxu0
        %v1489 = vadd.f32 %v1345, %v1415
        %v1490 = vxor.u32 %v1489, 2147483648
        %v1491 = vmul.f32 %v1490, 1.442695
        %v1492 = vpow.pop %v1491
        %v1493 = vadd.f32 %v1492, 1.0
        %v1494 = vrcp.pop %v1493
        %v1495 = vmul.f32 1.0, %v1494
        %v1496 = vadd.f32 %v1346, %v1417
        %v1497 = vxor.u32 %v1496, 2147483648
        %v1498 = vmul.f32 %v1497, 1.442695
        %v1499 = vpow.pop %v1498
        %v1500 = vadd.f32 %v1499, 1.0
        %v1501 = vrcp.pop %v1500
        %v1502 = vmul.f32 1.0, %v1501
        %v1503 = vadd.f32 %v1486, %v998
        %v1504 = vmul.f32 %v1495, %v1503
        %v1505 = vadd.f32 %v1347, %v1504
        %v1506 = vtanh.pop %v1505
        %v1507 = vsub.f32 1.0, %v1502
        %v1508 = vmul.f32 %v1507, %v1506
        %v1509 = vmul.f32 %v1502, %v1007
        %v1510 = vadd.f32 %v1508, %v1509
        %1511 = vmatprep.subr.mxu0 %v573
        %1512 = vmatpush1.msra.mxu0 %v572
        %1513 = vmatprep.subr.mxu0 %v576
        %1514 = vmatpush1.msra.mxu0 %v575
        %1515 = vmatprep.subr.mxu0 %v579
        %1516 = vmatpush1.msra.mxu0 %v578
        %1517 = vmatprep.subr.mxu0 %v582
        %1518 = vmatpush1.msra.mxu0 %v581
        %1519 = vmatprep.subr.mxu0 %v585
        %1520 = vmatpush1.msra.mxu0 %v584
        %1521 = vmatprep.subr.mxu0 %v588
        %1522 = vmatpush1.msra.mxu0 %v587
        %1523 = vmatprep.subr.mxu0 %v591
        %1524 = vmatpush1.msra.mxu0 %v590
        %1525 = vmatprep.subr.mxu0 %v594
        %1526 = vmatpush1.msra.mxu0 %v593
        %1527 = vmatprep.subr.mxu0 %v597
        %1528 = vmatpush1.msra.mxu0 %v596
        %1529 = vmatprep.subr.mxu0 %v600
        %1530 = vmatpush1.msra.mxu0 %v599
        %1531 = vmatprep.subr.mxu0 %v603
        %1532 = vmatpush1.msra.mxu0 %v602
        %1533 = vmatprep.subr.mxu0 %v606
        %1534 = vmatpush1.msra.mxu0 %v605
        %1535 = vmatprep.subr.mxu0 %v609
        %1536 = vmatpush1.msra.mxu0 %v608
        %1537 = vmatprep.subr.mxu0 %v612
        %1538 = vmatpush1.msra.mxu0 %v611
        %1539 = vmatprep.subr.mxu0 %v615
        %1540 = vmatpush1.msra.mxu0 %v614
        %1541 = vmatprep.subr.mxu0 %v618
        %1542 = vmatpush1.msra.mxu0 %v617
        %1543 = vmatprep.subr.mxu0 0.0
        %1544 = vmatpush1.msra.mxu0 0.0
        %1545 = vmatprep.subr.mxu0 0.0
        %1546 = vmatpush1.msra.mxu0 0.0
        %1547 = vmatprep.subr.mxu0 0.0
        %1548 = vmatpush1.msra.mxu0 0.0
        %1549 = vmatprep.subr.mxu0 0.0
        %1550 = vmatpush1.msra.mxu0 0.0
        %1551 = vmatprep.subr.mxu0 0.0
        %1552 = vmatpush1.msra.mxu0 0.0
        %1553 = vmatprep.subr.mxu0 0.0
        %1554 = vmatpush1.msra.mxu0 0.0
        %1555 = vmatprep.subr.mxu0 0.0
        %1556 = vmatpush1.msra.mxu0 0.0
        %1557 = vmatprep.subr.mxu0 0.0
        %1558 = vmatpush1.msra.mxu0 0.0
        %1559 = vmatprep.subr.mxu0 0.0
        %1560 = vmatpush1.msra.mxu0 0.0
        %1561 = vmatprep.subr.mxu0 0.0
        %1562 = vmatpush1.msra.mxu0 0.0
        %1563 = vmatprep.subr.mxu0 0.0
        %1564 = vmatpush1.msra.mxu0 0.0
        %1565 = vmatprep.subr.mxu0 0.0
        %1566 = vmatpush1.msra.mxu0 0.0
        %1567 = vmatprep.subr.mxu0 0.0
        %1568 = vmatpush1.msra.mxu0 0.0
        %1569 = vmatprep.subr.mxu0 0.0
        %1570 = vmatpush1.msra.mxu0 0.0
        %1571 = vmatprep.subr.mxu0 0.0
        %1572 = vmatpush1.msra.mxu0 0.0
        %1573 = vmatprep.subr.mxu0 0.0
        %1574 = vmatpush1.msra.mxu0 0.0
        %1575 = vmatprep.mubr.f32.mxu0 0.0
        %1576 = vmatmul.mubr.f32.gmra.mrb[0].mxu0 %v1510
        %v1577 = vpop.f32.mrb[0].mxu0
        %v1578 = vadd.f32 0.0, %v1577
        %v1579 = vpop.f32.mrb[0].mxu0
        %v1580 = vadd.f32 0.0, %v1579
        %1581 = vdwg.mxu0
        %1582 = vmatprep.subr.mxu0 0.0
        %1583 = vmatpush1.msra.mxu0 %v574
        %1584 = vmatprep.subr.mxu0 0.0
        %1585 = vmatpush1.msra.mxu0 %v577
        %1586 = vmatprep.subr.mxu0 0.0
        %1587 = vmatpush1.msra.mxu0 %v580
        %1588 = vmatprep.subr.mxu0 0.0
        %1589 = vmatpush1.msra.mxu0 %v583
        %1590 = vmatprep.subr.mxu0 0.0
        %1591 = vmatpush1.msra.mxu0 %v586
        %1592 = vmatprep.subr.mxu0 0.0
        %1593 = vmatpush1.msra.mxu0 %v589
        %1594 = vmatprep.subr.mxu0 0.0
        %1595 = vmatpush1.msra.mxu0 %v592
        %1596 = vmatprep.subr.mxu0 0.0
        %1597 = vmatpush1.msra.mxu0 %v595
        %1598 = vmatprep.subr.mxu0 0.0
        %1599 = vmatpush1.msra.mxu0 %v598
        %1600 = vmatprep.subr.mxu0 0.0
        %1601 = vmatpush1.msra.mxu0 %v601
        %1602 = vmatprep.subr.mxu0 0.0
        %1603 = vmatpush1.msra.mxu0 %v604
        %1604 = vmatprep.subr.mxu0 0.0
        %1605 = vmatpush1.msra.mxu0 %v607
        %1606 = vmatprep.subr.mxu0 0.0
        %1607 = vmatpush1.msra.mxu0 %v610
        %1608 = vmatprep.subr.mxu0 0.0
        %1609 = vmatpush1.msra.mxu0 %v613
        %1610 = vmatprep.subr.mxu0 0.0
        %1611 = vmatpush1.msra.mxu0 %v616
        %1612 = vmatprep.subr.mxu0 0.0
        %1613 = vmatpush1.msra.mxu0 %v619
        %1614 = vmatprep.subr.mxu0 0.0
        %1615 = vmatpush1.msra.mxu0 0.0
        %1616 = vmatprep.subr.mxu0 0.0
        %1617 = vmatpush1.msra.mxu0 0.0
        %1618 = vmatprep.subr.mxu0 0.0
        %1619 = vmatpush1.msra.mxu0 0.0
        %1620 = vmatprep.subr.mxu0 0.0
        %1621 = vmatpush1.msra.mxu0 0.0
        %1622 = vmatprep.subr.mxu0 0.0
        %1623 = vmatpush1.msra.mxu0 0.0
        %1624 = vmatprep.subr.mxu0 0.0
        %1625 = vmatpush1.msra.mxu0 0.0
        %1626 = vmatprep.subr.mxu0 0.0
        %1627 = vmatpush1.msra.mxu0 0.0
        %1628 = vmatprep.subr.mxu0 0.0
        %1629 = vmatpush1.msra.mxu0 0.0
        %1630 = vmatprep.subr.mxu0 0.0
        %1631 = vmatpush1.msra.mxu0 0.0
        %1632 = vmatprep.subr.mxu0 0.0
        %1633 = vmatpush1.msra.mxu0 0.0
        %1634 = vmatprep.subr.mxu0 0.0
        %1635 = vmatpush1.msra.mxu0 0.0
        %1636 = vmatprep.subr.mxu0 0.0
        %1637 = vmatpush1.msra.mxu0 0.0
        %1638 = vmatprep.subr.mxu0 0.0
        %1639 = vmatpush1.msra.mxu0 0.0
        %1640 = vmatprep.subr.mxu0 0.0
        %1641 = vmatpush1.msra.mxu0 0.0
        %1642 = vmatprep.subr.mxu0 0.0
        %1643 = vmatpush1.msra.mxu0 0.0
        %1644 = vmatprep.subr.mxu0 0.0
        %1645 = vmatpush1.msra.mxu0 0.0
        %1646 = vmatprep.mubr.f32.mxu0 0.0
        %1647 = vmatmul.mubr.f32.gmra.mrb[0].mxu0 %v1510
        %v1648 = vpop.f32.mrb[0].mxu0
        %v1649 = vadd.f32 0.0, %v1648
        %v1650 = vpop.f32.mrb[0].mxu0
        %1651 = vdwg.mxu0
        %v1652 = vadd.f32 %v1578, %v1265
        %v1653 = vadd.f32 %v1580, %v1267
        %v1654 = vadd.f32 %v1652, %v1155
        %v1655 = vadd.f32 %v1653, %v1159
        %v1656 = vxor.u32 %v1654, 2147483648
        %v1657 = vxor.u32 %v1655, 2147483648
        %v1658 = vmul.f32 %v1656, 1.442695
        %v1659 = vpow.pop %v1658
        %v1660 = vmul.f32 %v1657, 1.442695
        %v1661 = vpow.pop %v1660
        %v1662 = vadd.f32 %v1659, 1.0
        %v1663 = vadd.f32 %v1661, 1.0
        %v1664 = vrcp.pop %v1662
        %v1665 = vmul.f32 1.0, %v1664
        %v1666 = vrcp.pop %v1663
        %v1667 = vmul.f32 1.0, %v1666
        %v1668 = vadd.f32 %v1649, %v1180
        %v1669 = vadd.f32 %v1336, %v1187
        %v1670 = vmul.f32 %v1665, %v1669
        %v1671 = vadd.f32 %v1668, %v1670
        %v1672 = vtanh.pop %v1671
        %v1673 = vsub.f32 1.0, %v1667
        %v1674 = vmul.f32 %v1673, %v1672
        %v1675 = vmul.f32 %v1667, %v1196
        %v1676 = vadd.f32 %v1674, %v1675
        %v1677 = vadd.f32 %v1197, %v1676
        %1678 = vmatprep.subr.mxu0 %v621
        %1679 = vmatpush1.msra.mxu0 %v620
        %1680 = vmatprep.subr.mxu0 %v624
        %1681 = vmatpush1.msra.mxu0 %v623
        %1682 = vmatprep.subr.mxu0 %v627
        %1683 = vmatpush1.msra.mxu0 %v626
        %1684 = vmatprep.subr.mxu0 %v630
        %1685 = vmatpush1.msra.mxu0 %v629
        %1686 = vmatprep.subr.mxu0 %v633
        %1687 = vmatpush1.msra.mxu0 %v632
        %1688 = vmatprep.subr.mxu0 %v636
        %1689 = vmatpush1.msra.mxu0 %v635
        %1690 = vmatprep.subr.mxu0 %v639
        %1691 = vmatpush1.msra.mxu0 %v638
        %1692 = vmatprep.subr.mxu0 %v642
        %1693 = vmatpush1.msra.mxu0 %v641
        %1694 = vmatprep.subr.mxu0 %v645
        %1695 = vmatpush1.msra.mxu0 %v644
        %1696 = vmatprep.subr.mxu0 %v648
        %1697 = vmatpush1.msra.mxu0 %v647
        %1698 = vmatprep.subr.mxu0 %v651
        %1699 = vmatpush1.msra.mxu0 %v650
        %1700 = vmatprep.subr.mxu0 %v654
        %1701 = vmatpush1.msra.mxu0 %v653
        %1702 = vmatprep.subr.mxu0 %v657
        %1703 = vmatpush1.msra.mxu0 %v656
        %1704 = vmatprep.subr.mxu0 %v660
        %1705 = vmatpush1.msra.mxu0 %v659
        %1706 = vmatprep.subr.mxu0 %v663
        %1707 = vmatpush1.msra.mxu0 %v662
        %1708 = vmatprep.subr.mxu0 %v666
        %1709 = vmatpush1.msra.mxu0 %v665
        %1710 = vmatprep.subr.mxu0 0.0
        %1711 = vmatpush1.msra.mxu0 0.0
        %1712 = vmatprep.subr.mxu0 0.0
        %1713 = vmatpush1.msra.mxu0 0.0
        %1714 = vmatprep.subr.mxu0 0.0
        %1715 = vmatpush1.msra.mxu0 0.0
        %1716 = vmatprep.subr.mxu0 0.0
        %1717 = vmatpush1.msra.mxu0 0.0
        %1718 = vmatprep.subr.mxu0 0.0
        %1719 = vmatpush1.msra.mxu0 0.0
        %1720 = vmatprep.subr.mxu0 0.0
        %1721 = vmatpush1.msra.mxu0 0.0
        %1722 = vmatprep.subr.mxu0 0.0
        %1723 = vmatpush1.msra.mxu0 0.0
        %1724 = vmatprep.subr.mxu0 0.0
        %1725 = vmatpush1.msra.mxu0 0.0
        %1726 = vmatprep.subr.mxu0 0.0
        %1727 = vmatpush1.msra.mxu0 0.0
        %1728 = vmatprep.subr.mxu0 0.0
        %1729 = vmatpush1.msra.mxu0 0.0
        %1730 = vmatprep.subr.mxu0 0.0
        %1731 = vmatpush1.msra.mxu0 0.0
        %1732 = vmatprep.subr.mxu0 0.0
        %1733 = vmatpush1.msra.mxu0 0.0
        %1734 = vmatprep.subr.mxu0 0.0
        %1735 = vmatpush1.msra.mxu0 0.0
        %1736 = vmatprep.subr.mxu0 0.0
        %1737 = vmatpush1.msra.mxu0 0.0
        %1738 = vmatprep.subr.mxu0 0.0
        %1739 = vmatpush1.msra.mxu0 0.0
        %1740 = vmatprep.subr.mxu0 0.0
        %1741 = vmatpush1.msra.mxu0 0.0
        %1742 = vmatprep.mubr.f32.mxu0 0.0
        %1743 = vmatmul.mubr.f32.gmra.mrb[0].mxu0 %v1676
        %v1744 = vpop.f32.mrb[0].mxu0
        %v1745 = vadd.f32 0.0, %v1744
        %v1746 = vpop.f32.mrb[0].mxu0
        %v1747 = vadd.f32 0.0, %v1746
        %1748 = vdwg.mxu0
        %1749 = vmatprep.subr.mxu0 0.0
        %1750 = vmatpush1.msra.mxu0 %v622
        %1751 = vmatprep.subr.mxu0 0.0
        %1752 = vmatpush1.msra.mxu0 %v625
        %1753 = vmatprep.subr.mxu0 0.0
        %1754 = vmatpush1.msra.mxu0 %v628
        %1755 = vmatprep.subr.mxu0 0.0
        %1756 = vmatpush1.msra.mxu0 %v631
        %1757 = vmatprep.subr.mxu0 0.0
        %1758 = vmatpush1.msra.mxu0 %v634
        %1759 = vmatprep.subr.mxu0 0.0
        %1760 = vmatpush1.msra.mxu0 %v637
        %1761 = vmatprep.subr.mxu0 0.0
        %1762 = vmatpush1.msra.mxu0 %v640
        %1763 = vmatprep.subr.mxu0 0.0
        %1764 = vmatpush1.msra.mxu0 %v643
        %1765 = vmatprep.subr.mxu0 0.0
        %1766 = vmatpush1.msra.mxu0 %v646
        %1767 = vmatprep.subr.mxu0 0.0
        %1768 = vmatpush1.msra.mxu0 %v649
        %1769 = vmatprep.subr.mxu0 0.0
        %1770 = vmatpush1.msra.mxu0 %v652
        %1771 = vmatprep.subr.mxu0 0.0
        %1772 = vmatpush1.msra.mxu0 %v655
        %1773 = vmatprep.subr.mxu0 0.0
        %1774 = vmatpush1.msra.mxu0 %v658
        %1775 = vmatprep.subr.mxu0 0.0
        %1776 = vmatpush1.msra.mxu0 %v661
        %1777 = vmatprep.subr.mxu0 0.0
        %1778 = vmatpush1.msra.mxu0 %v664
        %1779 = vmatprep.subr.mxu0 0.0
        %1780 = vmatpush1.msra.mxu0 %v667
        %1781 = vmatprep.subr.mxu0 0.0
        %1782 = vmatpush1.msra.mxu0 0.0
        %1783 = vmatprep.subr.mxu0 0.0
        %1784 = vmatpush1.msra.mxu0 0.0
        %1785 = vmatprep.subr.mxu0 0.0
        %1786 = vmatpush1.msra.mxu0 0.0
        %1787 = vmatprep.subr.mxu0 0.0
        %1788 = vmatpush1.msra.mxu0 0.0
        %1789 = vmatprep.subr.mxu0 0.0
        %1790 = vmatpush1.msra.mxu0 0.0
        %1791 = vmatprep.subr.mxu0 0.0
        %1792 = vmatpush1.msra.mxu0 0.0
        %1793 = vmatprep.subr.mxu0 0.0
        %1794 = vmatpush1.msra.mxu0 0.0
        %1795 = vmatprep.subr.mxu0 0.0
        %1796 = vmatpush1.msra.mxu0 0.0
        %1797 = vmatprep.subr.mxu0 0.0
        %1798 = vmatpush1.msra.mxu0 0.0
        %1799 = vmatprep.subr.mxu0 0.0
        %1800 = vmatpush1.msra.mxu0 0.0
        %1801 = vmatprep.subr.mxu0 0.0
        %1802 = vmatpush1.msra.mxu0 0.0
        %1803 = vmatprep.subr.mxu0 0.0
        %1804 = vmatpush1.msra.mxu0 0.0
        %1805 = vmatprep.subr.mxu0 0.0
        %1806 = vmatpush1.msra.mxu0 0.0
        %1807 = vmatprep.subr.mxu0 0.0
        %1808 = vmatpush1.msra.mxu0 0.0
        %1809 = vmatprep.subr.mxu0 0.0
        %1810 = vmatpush1.msra.mxu0 0.0
        %1811 = vmatprep.subr.mxu0 0.0
        %1812 = vmatpush1.msra.mxu0 0.0
        %1813 = vmatprep.mubr.f32.mxu0 0.0
        %1814 = vmatmul.mubr.f32.gmra.mrb[0].mxu0 %v1676
        %v1815 = vpop.f32.mrb[0].mxu0
        %v1816 = vadd.f32 0.0, %v1815
        %v1817 = vpop.f32.mrb[0].mxu0
        %1818 = vdwg.mxu0
        %s1819 = scalar_lea.vmem %s456, 24 [#allocation5]
        %v1820 = vld [vmem:[%s1819] sm:$0xff]
        %v1821 = vld [vmem:[%s1819 + $0x8] sm:$0xf]
        %v1822 = vunpack.c.l.bf16 %v1820
        %v1823 = vunpack.c.h.bf16 %v1820
        %v1824 = vunpack.c.l.bf16 %v1821
        %v1825 = vadd.f32 %v1822, %v824
        %v1826 = vadd.f32 %v1823, %v828
        %v1827 = vadd.f32 %v1824, %v832
        %1828 = vmatprep.subr.mxu0 %v524
        %1829 = vmatpush1.msra.mxu0 %v523
        %1830 = vmatprep.subr.mxu0 %v527
        %1831 = vmatpush1.msra.mxu0 %v526
        %1832 = vmatprep.subr.mxu0 %v530
        %1833 = vmatpush1.msra.mxu0 %v529
        %1834 = vmatprep.subr.mxu0 %v533
        %1835 = vmatpush1.msra.mxu0 %v532
        %1836 = vmatprep.subr.mxu0 %v536
        %1837 = vmatpush1.msra.mxu0 %v535
        %1838 = vmatprep.subr.mxu0 %v539
        %1839 = vmatpush1.msra.mxu0 %v538
        %1840 = vmatprep.subr.mxu0 %v542
        %1841 = vmatpush1.msra.mxu0 %v541
        %1842 = vmatprep.subr.mxu0 %v545
        %1843 = vmatpush1.msra.mxu0 %v544
        %1844 = vmatprep.subr.mxu0 %v548
        %1845 = vmatpush1.msra.mxu0 %v547
        %1846 = vmatprep.subr.mxu0 %v551
        %1847 = vmatpush1.msra.mxu0 %v550
        %1848 = vmatprep.subr.mxu0 %v554
        %1849 = vmatpush1.msra.mxu0 %v553
        %1850 = vmatprep.subr.mxu0 %v557
        %1851 = vmatpush1.msra.mxu0 %v556
        %1852 = vmatprep.subr.mxu0 %v560
        %1853 = vmatpush1.msra.mxu0 %v559
        %1854 = vmatprep.subr.mxu0 %v563
        %1855 = vmatpush1.msra.mxu0 %v562
        %1856 = vmatprep.subr.mxu0 %v566
        %1857 = vmatpush1.msra.mxu0 %v565
        %1858 = vmatprep.subr.mxu0 %v569
        %1859 = vmatpush1.msra.mxu0 %v568
        %1860 = vmatprep.subr.mxu0 0.0
        %1861 = vmatpush1.msra.mxu0 0.0
        %1862 = vmatprep.subr.mxu0 0.0
        %1863 = vmatpush1.msra.mxu0 0.0
        %1864 = vmatprep.subr.mxu0 0.0
        %1865 = vmatpush1.msra.mxu0 0.0
        %1866 = vmatprep.subr.mxu0 0.0
        %1867 = vmatpush1.msra.mxu0 0.0
        %1868 = vmatprep.subr.mxu0 0.0
        %1869 = vmatpush1.msra.mxu0 0.0
        %1870 = vmatprep.subr.mxu0 0.0
        %1871 = vmatpush1.msra.mxu0 0.0
        %1872 = vmatprep.subr.mxu0 0.0
        %1873 = vmatpush1.msra.mxu0 0.0
        %1874 = vmatprep.subr.mxu0 0.0
        %1875 = vmatpush1.msra.mxu0 0.0
        %1876 = vmatprep.subr.mxu0 0.0
        %1877 = vmatpush1.msra.mxu0 0.0
        %1878 = vmatprep.subr.mxu0 0.0
        %1879 = vmatpush1.msra.mxu0 0.0
        %1880 = vmatprep.subr.mxu0 0.0
        %1881 = vmatpush1.msra.mxu0 0.0
        %1882 = vmatprep.subr.mxu0 0.0
        %1883 = vmatpush1.msra.mxu0 0.0
        %1884 = vmatprep.subr.mxu0 0.0
        %1885 = vmatpush1.msra.mxu0 0.0
        %1886 = vmatprep.subr.mxu0 0.0
        %1887 = vmatpush1.msra.mxu0 0.0
        %1888 = vmatprep.subr.mxu0 0.0
        %1889 = vmatpush1.msra.mxu0 0.0
        %1890 = vmatprep.subr.mxu0 0.0
        %1891 = vmatpush1.msra.mxu0 0.0
        %1892 = vmatprep.mubr.f32.mxu0 0.0
        %1893 = vmatmul.mubr.f32.gmra.mrb[0].mxu0 %v1510
        %v1894 = vpop.f32.mrb[0].mxu0
        %v1895 = vadd.f32 0.0, %v1894
        %v1896 = vpop.f32.mrb[0].mxu0
        %v1897 = vadd.f32 0.0, %v1896
        %1898 = vdwg.mxu0
        %1899 = vmatprep.subr.mxu0 0.0
        %1900 = vmatpush1.msra.mxu0 %v525
        %1901 = vmatprep.subr.mxu0 0.0
        %1902 = vmatpush1.msra.mxu0 %v528
        %1903 = vmatprep.subr.mxu0 0.0
        %1904 = vmatpush1.msra.mxu0 %v531
        %1905 = vmatprep.subr.mxu0 0.0
        %1906 = vmatpush1.msra.mxu0 %v534
        %1907 = vmatprep.subr.mxu0 0.0
        %1908 = vmatpush1.msra.mxu0 %v537
        %1909 = vmatprep.subr.mxu0 0.0
        %1910 = vmatpush1.msra.mxu0 %v540
        %1911 = vmatprep.subr.mxu0 0.0
        %1912 = vmatpush1.msra.mxu0 %v543
        %1913 = vmatprep.subr.mxu0 0.0
        %1914 = vmatpush1.msra.mxu0 %v546
        %1915 = vmatprep.subr.mxu0 0.0
        %1916 = vmatpush1.msra.mxu0 %v549
        %1917 = vmatprep.subr.mxu0 0.0
        %1918 = vmatpush1.msra.mxu0 %v552
        %1919 = vmatprep.subr.mxu0 0.0
        %1920 = vmatpush1.msra.mxu0 %v555
        %1921 = vmatprep.subr.mxu0 0.0
        %1922 = vmatpush1.msra.mxu0 %v558
        %1923 = vmatprep.subr.mxu0 0.0
        %1924 = vmatpush1.msra.mxu0 %v561
        %1925 = vmatprep.subr.mxu0 0.0
        %1926 = vmatpush1.msra.mxu0 %v564
        %1927 = vmatprep.subr.mxu0 0.0
        %1928 = vmatpush1.msra.mxu0 %v567
        %1929 = vmatprep.subr.mxu0 0.0
        %1930 = vmatpush1.msra.mxu0 %v570
        %1931 = vmatprep.subr.mxu0 0.0
        %1932 = vmatpush1.msra.mxu0 0.0
        %1933 = vmatprep.subr.mxu0 0.0
        %1934 = vmatpush1.msra.mxu0 0.0
        %1935 = vmatprep.subr.mxu0 0.0
        %1936 = vmatpush1.msra.mxu0 0.0
        %1937 = vmatprep.subr.mxu0 0.0
        %1938 = vmatpush1.msra.mxu0 0.0
        %1939 = vmatprep.subr.mxu0 0.0
        %1940 = vmatpush1.msra.mxu0 0.0
        %1941 = vmatprep.subr.mxu0 0.0
        %1942 = vmatpush1.msra.mxu0 0.0
        %1943 = vmatprep.subr.mxu0 0.0
        %1944 = vmatpush1.msra.mxu0 0.0
        %1945 = vmatprep.subr.mxu0 0.0
        %1946 = vmatpush1.msra.mxu0 0.0
        %1947 = vmatprep.subr.mxu0 0.0
        %1948 = vmatpush1.msra.mxu0 0.0
        %1949 = vmatprep.subr.mxu0 0.0
        %1950 = vmatpush1.msra.mxu0 0.0
        %1951 = vmatprep.subr.mxu0 0.0
        %1952 = vmatpush1.msra.mxu0 0.0
        %1953 = vmatprep.subr.mxu0 0.0
        %1954 = vmatpush1.msra.mxu0 0.0
        %1955 = vmatprep.subr.mxu0 0.0
        %1956 = vmatpush1.msra.mxu0 0.0
        %1957 = vmatprep.subr.mxu0 0.0
        %1958 = vmatpush1.msra.mxu0 0.0
        %1959 = vmatprep.subr.mxu0 0.0
        %1960 = vmatpush1.msra.mxu0 0.0
        %1961 = vmatprep.subr.mxu0 0.0
        %1962 = vmatpush1.msra.mxu0 0.0
        %1963 = vmatprep.mubr.f32.mxu0 0.0
        %1964 = vmatmul.mubr.f32.gmra.mrb[0].mxu0 %v1510
        %v1965 = vpop.f32.mrb[0].mxu0
        %v1966 = vadd.f32 0.0, %v1965
        %v1967 = vpop.f32.mrb[0].mxu0
        %1968 = vdwg.mxu0
        %v1969 = vadd.f32 %v1825, %v1895
        %v1970 = vxor.u32 %v1969, 2147483648
        %v1971 = vmul.f32 %v1970, 1.442695
        %v1972 = vpow.pop %v1971
        %v1973 = vadd.f32 %v1972, 1.0
        %v1974 = vrcp.pop %v1973
        %v1975 = vmul.f32 1.0, %v1974
        %v1976 = vadd.f32 %v1826, %v1897
        %v1977 = vxor.u32 %v1976, 2147483648
        %v1978 = vmul.f32 %v1977, 1.442695
        %v1979 = vpow.pop %v1978
        %v1980 = vadd.f32 %v1979, 1.0
        %v1981 = vrcp.pop %v1980
        %v1982 = vmul.f32 1.0, %v1981
        %v1983 = vadd.f32 %v1966, %v998
        %v1984 = vmul.f32 %v1975, %v1983
        %v1985 = vadd.f32 %v1827, %v1984
        %v1986 = vtanh.pop %v1985
        %v1987 = vsub.f32 1.0, %v1982
        %v1988 = vmul.f32 %v1987, %v1986
        %v1989 = vmul.f32 %v1982, %v1510
        %v1990 = vadd.f32 %v1988, %v1989
        %1991 = vmatprep.subr.mxu0 %v573
        %1992 = vmatpush1.msra.mxu0 %v572
        %1993 = vmatprep.subr.mxu0 %v576
        %1994 = vmatpush1.msra.mxu0 %v575
        %1995 = vmatprep.subr.mxu0 %v579
        %1996 = vmatpush1.msra.mxu0 %v578
        %1997 = vmatprep.subr.mxu0 %v582
        %1998 = vmatpush1.msra.mxu0 %v581
        %1999 = vmatprep.subr.mxu0 %v585
        %2000 = vmatpush1.msra.mxu0 %v584
        %2001 = vmatprep.subr.mxu0 %v588
        %2002 = vmatpush1.msra.mxu0 %v587
        %2003 = vmatprep.subr.mxu0 %v591
        %2004 = vmatpush1.msra.mxu0 %v590
        %2005 = vmatprep.subr.mxu0 %v594
        %2006 = vmatpush1.msra.mxu0 %v593
        %2007 = vmatprep.subr.mxu0 %v597
        %2008 = vmatpush1.msra.mxu0 %v596
        %2009 = vmatprep.subr.mxu0 %v600
        %2010 = vmatpush1.msra.mxu0 %v599
        %2011 = vmatprep.subr.mxu0 %v603
        %2012 = vmatpush1.msra.mxu0 %v602
        %2013 = vmatprep.subr.mxu0 %v606
        %2014 = vmatpush1.msra.mxu0 %v605
        %2015 = vmatprep.subr.mxu0 %v609
        %2016 = vmatpush1.msra.mxu0 %v608
        %2017 = vmatprep.subr.mxu0 %v612
        %2018 = vmatpush1.msra.mxu0 %v611
        %2019 = vmatprep.subr.mxu0 %v615
        %2020 = vmatpush1.msra.mxu0 %v614
        %2021 = vmatprep.subr.mxu0 %v618
        %2022 = vmatpush1.msra.mxu0 %v617
        %2023 = vmatprep.subr.mxu0 0.0
        %2024 = vmatpush1.msra.mxu0 0.0
        %2025 = vmatprep.subr.mxu0 0.0
        %2026 = vmatpush1.msra.mxu0 0.0
        %2027 = vmatprep.subr.mxu0 0.0
        %2028 = vmatpush1.msra.mxu0 0.0
        %2029 = vmatprep.subr.mxu0 0.0
        %2030 = vmatpush1.msra.mxu0 0.0
        %2031 = vmatprep.subr.mxu0 0.0
        %2032 = vmatpush1.msra.mxu0 0.0
        %2033 = vmatprep.subr.mxu0 0.0
        %2034 = vmatpush1.msra.mxu0 0.0
        %2035 = vmatprep.subr.mxu0 0.0
        %2036 = vmatpush1.msra.mxu0 0.0
        %2037 = vmatprep.subr.mxu0 0.0
        %2038 = vmatpush1.msra.mxu0 0.0
        %2039 = vmatprep.subr.mxu0 0.0
        %2040 = vmatpush1.msra.mxu0 0.0
        %2041 = vmatprep.subr.mxu0 0.0
        %2042 = vmatpush1.msra.mxu0 0.0
        %2043 = vmatprep.subr.mxu0 0.0
        %2044 = vmatpush1.msra.mxu0 0.0
        %2045 = vmatprep.subr.mxu0 0.0
        %2046 = vmatpush1.msra.mxu0 0.0
        %2047 = vmatprep.subr.mxu0 0.0
        %2048 = vmatpush1.msra.mxu0 0.0
        %2049 = vmatprep.subr.mxu0 0.0
        %2050 = vmatpush1.msra.mxu0 0.0
        %2051 = vmatprep.subr.mxu0 0.0
        %2052 = vmatpush1.msra.mxu0 0.0
        %2053 = vmatprep.subr.mxu0 0.0
        %2054 = vmatpush1.msra.mxu0 0.0
        %2055 = vmatprep.mubr.f32.mxu0 0.0
        %2056 = vmatmul.mubr.f32.gmra.mrb[0].mxu0 %v1990
        %v2057 = vpop.f32.mrb[0].mxu0
        %v2058 = vadd.f32 0.0, %v2057
        %v2059 = vpop.f32.mrb[0].mxu0
        %v2060 = vadd.f32 0.0, %v2059
        %2061 = vdwg.mxu0
        %2062 = vmatprep.subr.mxu0 0.0
        %2063 = vmatpush1.msra.mxu0 %v574
        %2064 = vmatprep.subr.mxu0 0.0
        %2065 = vmatpush1.msra.mxu0 %v577
        %2066 = vmatprep.subr.mxu0 0.0
        %2067 = vmatpush1.msra.mxu0 %v580
        %2068 = vmatprep.subr.mxu0 0.0
        %2069 = vmatpush1.msra.mxu0 %v583
        %2070 = vmatprep.subr.mxu0 0.0
        %2071 = vmatpush1.msra.mxu0 %v586
        %2072 = vmatprep.subr.mxu0 0.0
        %2073 = vmatpush1.msra.mxu0 %v589
        %2074 = vmatprep.subr.mxu0 0.0
        %2075 = vmatpush1.msra.mxu0 %v592
        %2076 = vmatprep.subr.mxu0 0.0
        %2077 = vmatpush1.msra.mxu0 %v595
        %2078 = vmatprep.subr.mxu0 0.0
        %2079 = vmatpush1.msra.mxu0 %v598
        %2080 = vmatprep.subr.mxu0 0.0
        %2081 = vmatpush1.msra.mxu0 %v601
        %2082 = vmatprep.subr.mxu0 0.0
        %2083 = vmatpush1.msra.mxu0 %v604
        %2084 = vmatprep.subr.mxu0 0.0
        %2085 = vmatpush1.msra.mxu0 %v607
        %2086 = vmatprep.subr.mxu0 0.0
        %2087 = vmatpush1.msra.mxu0 %v610
        %2088 = vmatprep.subr.mxu0 0.0
        %2089 = vmatpush1.msra.mxu0 %v613
        %2090 = vmatprep.subr.mxu0 0.0
        %2091 = vmatpush1.msra.mxu0 %v616
        %2092 = vmatprep.subr.mxu0 0.0
        %2093 = vmatpush1.msra.mxu0 %v619
        %2094 = vmatprep.subr.mxu0 0.0
        %2095 = vmatpush1.msra.mxu0 0.0
        %2096 = vmatprep.subr.mxu0 0.0
        %2097 = vmatpush1.msra.mxu0 0.0
        %2098 = vmatprep.subr.mxu0 0.0
        %2099 = vmatpush1.msra.mxu0 0.0
        %2100 = vmatprep.subr.mxu0 0.0
        %2101 = vmatpush1.msra.mxu0 0.0
        %2102 = vmatprep.subr.mxu0 0.0
        %2103 = vmatpush1.msra.mxu0 0.0
        %2104 = vmatprep.subr.mxu0 0.0
        %2105 = vmatpush1.msra.mxu0 0.0
        %2106 = vmatprep.subr.mxu0 0.0
        %2107 = vmatpush1.msra.mxu0 0.0
        %2108 = vmatprep.subr.mxu0 0.0
        %2109 = vmatpush1.msra.mxu0 0.0
        %2110 = vmatprep.subr.mxu0 0.0
        %2111 = vmatpush1.msra.mxu0 0.0
        %2112 = vmatprep.subr.mxu0 0.0
        %2113 = vmatpush1.msra.mxu0 0.0
        %2114 = vmatprep.subr.mxu0 0.0
        %2115 = vmatpush1.msra.mxu0 0.0
        %2116 = vmatprep.subr.mxu0 0.0
        %2117 = vmatpush1.msra.mxu0 0.0
        %2118 = vmatprep.subr.mxu0 0.0
        %2119 = vmatpush1.msra.mxu0 0.0
        %2120 = vmatprep.subr.mxu0 0.0
        %2121 = vmatpush1.msra.mxu0 0.0
        %2122 = vmatprep.subr.mxu0 0.0
        %2123 = vmatpush1.msra.mxu0 0.0
        %2124 = vmatprep.subr.mxu0 0.0
        %2125 = vmatpush1.msra.mxu0 0.0
        %2126 = vmatprep.mubr.f32.mxu0 0.0
        %2127 = vmatmul.mubr.f32.gmra.mrb[0].mxu0 %v1990
        %v2128 = vpop.f32.mrb[0].mxu0
        %v2129 = vadd.f32 0.0, %v2128
        %v2130 = vpop.f32.mrb[0].mxu0
        %2131 = vdwg.mxu0
        %v2132 = vadd.f32 %v2058, %v1745
        %v2133 = vadd.f32 %v2060, %v1747
        %v2134 = vadd.f32 %v2132, %v1155
        %v2135 = vadd.f32 %v2133, %v1159
        %v2136 = vxor.u32 %v2134, 2147483648
        %v2137 = vxor.u32 %v2135, 2147483648
        %v2138 = vmul.f32 %v2136, 1.442695
        %v2139 = vpow.pop %v2138
        %v2140 = vmul.f32 %v2137, 1.442695
        %v2141 = vpow.pop %v2140
        %v2142 = vadd.f32 %v2139, 1.0
        %v2143 = vadd.f32 %v2141, 1.0
        %v2144 = vrcp.pop %v2142
        %v2145 = vmul.f32 1.0, %v2144
        %v2146 = vrcp.pop %v2143
        %v2147 = vmul.f32 1.0, %v2146
        %v2148 = vadd.f32 %v2129, %v1180
        %v2149 = vadd.f32 %v1816, %v1187
        %v2150 = vmul.f32 %v2145, %v2149
        %v2151 = vadd.f32 %v2148, %v2150
        %v2152 = vtanh.pop %v2151
        %v2153 = vsub.f32 1.0, %v2147
        %v2154 = vmul.f32 %v2153, %v2152
        %v2155 = vmul.f32 %v2147, %v1676
        %v2156 = vadd.f32 %v2154, %v2155
        %v2157 = vadd.f32 %v1677, %v2156
        %2158 = vmatprep.subr.mxu0 %v621
        %2159 = vmatpush1.msra.mxu0 %v620
        %2160 = vmatprep.subr.mxu0 %v624
        %2161 = vmatpush1.msra.mxu0 %v623
        %2162 = vmatprep.subr.mxu0 %v627
        %2163 = vmatpush1.msra.mxu0 %v626
        %2164 = vmatprep.subr.mxu0 %v630
        %2165 = vmatpush1.msra.mxu0 %v629
        %2166 = vmatprep.subr.mxu0 %v633
        %2167 = vmatpush1.msra.mxu0 %v632
        %2168 = vmatprep.subr.mxu0 %v636
        %2169 = vmatpush1.msra.mxu0 %v635
        %2170 = vmatprep.subr.mxu0 %v639
        %2171 = vmatpush1.msra.mxu0 %v638
        %2172 = vmatprep.subr.mxu0 %v642
        %2173 = vmatpush1.msra.mxu0 %v641
        %2174 = vmatprep.subr.mxu0 %v645
        %2175 = vmatpush1.msra.mxu0 %v644
        %2176 = vmatprep.subr.mxu0 %v648
        %2177 = vmatpush1.msra.mxu0 %v647
        %2178 = vmatprep.subr.mxu0 %v651
        %2179 = vmatpush1.msra.mxu0 %v650
        %2180 = vmatprep.subr.mxu0 %v654
        %2181 = vmatpush1.msra.mxu0 %v653
        %2182 = vmatprep.subr.mxu0 %v657
        %2183 = vmatpush1.msra.mxu0 %v656
        %2184 = vmatprep.subr.mxu0 %v660
        %2185 = vmatpush1.msra.mxu0 %v659
        %2186 = vmatprep.subr.mxu0 %v663
        %2187 = vmatpush1.msra.mxu0 %v662
        %2188 = vmatprep.subr.mxu0 %v666
        %2189 = vmatpush1.msra.mxu0 %v665
        %2190 = vmatprep.subr.mxu0 0.0
        %2191 = vmatpush1.msra.mxu0 0.0
        %2192 = vmatprep.subr.mxu0 0.0
        %2193 = vmatpush1.msra.mxu0 0.0
        %2194 = vmatprep.subr.mxu0 0.0
        %2195 = vmatpush1.msra.mxu0 0.0
        %2196 = vmatprep.subr.mxu0 0.0
        %2197 = vmatpush1.msra.mxu0 0.0
        %2198 = vmatprep.subr.mxu0 0.0
        %2199 = vmatpush1.msra.mxu0 0.0
        %2200 = vmatprep.subr.mxu0 0.0
        %2201 = vmatpush1.msra.mxu0 0.0
        %2202 = vmatprep.subr.mxu0 0.0
        %2203 = vmatpush1.msra.mxu0 0.0
        %2204 = vmatprep.subr.mxu0 0.0
        %2205 = vmatpush1.msra.mxu0 0.0
        %2206 = vmatprep.subr.mxu0 0.0
        %2207 = vmatpush1.msra.mxu0 0.0
        %2208 = vmatprep.subr.mxu0 0.0
        %2209 = vmatpush1.msra.mxu0 0.0
        %2210 = vmatprep.subr.mxu0 0.0
        %2211 = vmatpush1.msra.mxu0 0.0
        %2212 = vmatprep.subr.mxu0 0.0
        %2213 = vmatpush1.msra.mxu0 0.0
        %2214 = vmatprep.subr.mxu0 0.0
        %2215 = vmatpush1.msra.mxu0 0.0
        %2216 = vmatprep.subr.mxu0 0.0
        %2217 = vmatpush1.msra.mxu0 0.0
        %2218 = vmatprep.subr.mxu0 0.0
        %2219 = vmatpush1.msra.mxu0 0.0
        %2220 = vmatprep.subr.mxu0 0.0
        %2221 = vmatpush1.msra.mxu0 0.0
        %2222 = vmatprep.mubr.f32.mxu0 0.0
        %2223 = vmatmul.mubr.f32.gmra.mrb[0].mxu0 %v2156
        %v2224 = vpop.f32.mrb[0].mxu0
        %v2225 = vadd.f32 0.0, %v2224
        %v2226 = vpop.f32.mrb[0].mxu0
        %v2227 = vadd.f32 0.0, %v2226
        %2228 = vdwg.mxu0
        %2229 = vmatprep.subr.mxu0 0.0
        %2230 = vmatpush1.msra.mxu0 %v622
        %2231 = vmatprep.subr.mxu0 0.0
        %2232 = vmatpush1.msra.mxu0 %v625
        %2233 = vmatprep.subr.mxu0 0.0
        %2234 = vmatpush1.msra.mxu0 %v628
        %2235 = vmatprep.subr.mxu0 0.0
        %2236 = vmatpush1.msra.mxu0 %v631
        %2237 = vmatprep.subr.mxu0 0.0
        %2238 = vmatpush1.msra.mxu0 %v634
        %2239 = vmatprep.subr.mxu0 0.0
        %2240 = vmatpush1.msra.mxu0 %v637
        %2241 = vmatprep.subr.mxu0 0.0
        %2242 = vmatpush1.msra.mxu0 %v640
        %2243 = vmatprep.subr.mxu0 0.0
        %2244 = vmatpush1.msra.mxu0 %v643
        %2245 = vmatprep.subr.mxu0 0.0
        %2246 = vmatpush1.msra.mxu0 %v646
        %2247 = vmatprep.subr.mxu0 0.0
        %2248 = vmatpush1.msra.mxu0 %v649
        %2249 = vmatprep.subr.mxu0 0.0
        %2250 = vmatpush1.msra.mxu0 %v652
        %2251 = vmatprep.subr.mxu0 0.0
        %2252 = vmatpush1.msra.mxu0 %v655
        %2253 = vmatprep.subr.mxu0 0.0
        %2254 = vmatpush1.msra.mxu0 %v658
        %2255 = vmatprep.subr.mxu0 0.0
        %2256 = vmatpush1.msra.mxu0 %v661
        %2257 = vmatprep.subr.mxu0 0.0
        %2258 = vmatpush1.msra.mxu0 %v664
        %2259 = vmatprep.subr.mxu0 0.0
        %2260 = vmatpush1.msra.mxu0 %v667
        %2261 = vmatprep.subr.mxu0 0.0
        %2262 = vmatpush1.msra.mxu0 0.0
        %2263 = vmatprep.subr.mxu0 0.0
        %2264 = vmatpush1.msra.mxu0 0.0
        %2265 = vmatprep.subr.mxu0 0.0
        %2266 = vmatpush1.msra.mxu0 0.0
        %2267 = vmatprep.subr.mxu0 0.0
        %2268 = vmatpush1.msra.mxu0 0.0
        %2269 = vmatprep.subr.mxu0 0.0
        %2270 = vmatpush1.msra.mxu0 0.0
        %2271 = vmatprep.subr.mxu0 0.0
        %2272 = vmatpush1.msra.mxu0 0.0
        %2273 = vmatprep.subr.mxu0 0.0
        %2274 = vmatpush1.msra.mxu0 0.0
        %2275 = vmatprep.subr.mxu0 0.0
        %2276 = vmatpush1.msra.mxu0 0.0
        %2277 = vmatprep.subr.mxu0 0.0
        %2278 = vmatpush1.msra.mxu0 0.0
        %2279 = vmatprep.subr.mxu0 0.0
        %2280 = vmatpush1.msra.mxu0 0.0
        %2281 = vmatprep.subr.mxu0 0.0
        %2282 = vmatpush1.msra.mxu0 0.0
        %2283 = vmatprep.subr.mxu0 0.0
        %2284 = vmatpush1.msra.mxu0 0.0
        %2285 = vmatprep.subr.mxu0 0.0
        %2286 = vmatpush1.msra.mxu0 0.0
        %2287 = vmatprep.subr.mxu0 0.0
        %2288 = vmatpush1.msra.mxu0 0.0
        %2289 = vmatprep.subr.mxu0 0.0
        %2290 = vmatpush1.msra.mxu0 0.0
        %2291 = vmatprep.subr.mxu0 0.0
        %2292 = vmatpush1.msra.mxu0 0.0
        %2293 = vmatprep.mubr.f32.mxu0 0.0
        %2294 = vmatmul.mubr.f32.gmra.mrb[0].mxu0 %v2156
        %v2295 = vpop.f32.mrb[0].mxu0
        %v2296 = vadd.f32 0.0, %v2295
        %v2297 = vpop.f32.mrb[0].mxu0
        %2298 = vdwg.mxu0
        %s2299 = scalar_lea.vmem %s456, 36 [#allocation5]
        %v2300 = vld [vmem:[%s2299] sm:$0xff]
        %v2301 = vld [vmem:[%s2299 + $0x8] sm:$0xf]
        %v2302 = vunpack.c.l.bf16 %v2300
        %v2303 = vunpack.c.h.bf16 %v2300
        %v2304 = vunpack.c.l.bf16 %v2301
        %v2305 = vadd.f32 %v2302, %v824
        %v2306 = vadd.f32 %v2303, %v828
        %v2307 = vadd.f32 %v2304, %v832
        %2308 = vmatprep.subr.mxu0 %v524
        %2309 = vmatpush1.msra.mxu0 %v523
        %2310 = vmatprep.subr.mxu0 %v527
        %2311 = vmatpush1.msra.mxu0 %v526
        %2312 = vmatprep.subr.mxu0 %v530
        %2313 = vmatpush1.msra.mxu0 %v529
        %2314 = vmatprep.subr.mxu0 %v533
        %2315 = vmatpush1.msra.mxu0 %v532
        %2316 = vmatprep.subr.mxu0 %v536
        %2317 = vmatpush1.msra.mxu0 %v535
        %2318 = vmatprep.subr.mxu0 %v539
        %2319 = vmatpush1.msra.mxu0 %v538
        %2320 = vmatprep.subr.mxu0 %v542
        %2321 = vmatpush1.msra.mxu0 %v541
        %2322 = vmatprep.subr.mxu0 %v545
        %2323 = vmatpush1.msra.mxu0 %v544
        %2324 = vmatprep.subr.mxu0 %v548
        %2325 = vmatpush1.msra.mxu0 %v547
        %2326 = vmatprep.subr.mxu0 %v551
        %2327 = vmatpush1.msra.mxu0 %v550
        %2328 = vmatprep.subr.mxu0 %v554
        %2329 = vmatpush1.msra.mxu0 %v553
        %2330 = vmatprep.subr.mxu0 %v557
        %2331 = vmatpush1.msra.mxu0 %v556
        %2332 = vmatprep.subr.mxu0 %v560
        %2333 = vmatpush1.msra.mxu0 %v559
        %2334 = vmatprep.subr.mxu0 %v563
        %2335 = vmatpush1.msra.mxu0 %v562
        %2336 = vmatprep.subr.mxu0 %v566
        %2337 = vmatpush1.msra.mxu0 %v565
        %2338 = vmatprep.subr.mxu0 %v569
        %2339 = vmatpush1.msra.mxu0 %v568
        %2340 = vmatprep.subr.mxu0 0.0
        %2341 = vmatpush1.msra.mxu0 0.0
        %2342 = vmatprep.subr.mxu0 0.0
        %2343 = vmatpush1.msra.mxu0 0.0
        %2344 = vmatprep.subr.mxu0 0.0
        %2345 = vmatpush1.msra.mxu0 0.0
        %2346 = vmatprep.subr.mxu0 0.0
        %2347 = vmatpush1.msra.mxu0 0.0
        %2348 = vmatprep.subr.mxu0 0.0
        %2349 = vmatpush1.msra.mxu0 0.0
        %2350 = vmatprep.subr.mxu0 0.0
        %2351 = vmatpush1.msra.mxu0 0.0
        %2352 = vmatprep.subr.mxu0 0.0
        %2353 = vmatpush1.msra.mxu0 0.0
        %2354 = vmatprep.subr.mxu0 0.0
        %2355 = vmatpush1.msra.mxu0 0.0
        %2356 = vmatprep.subr.mxu0 0.0
        %2357 = vmatpush1.msra.mxu0 0.0
        %2358 = vmatprep.subr.mxu0 0.0
        %2359 = vmatpush1.msra.mxu0 0.0
        %2360 = vmatprep.subr.mxu0 0.0
        %2361 = vmatpush1.msra.mxu0 0.0
        %2362 = vmatprep.subr.mxu0 0.0
        %2363 = vmatpush1.msra.mxu0 0.0
        %2364 = vmatprep.subr.mxu0 0.0
        %2365 = vmatpush1.msra.mxu0 0.0
        %2366 = vmatprep.subr.mxu0 0.0
        %2367 = vmatpush1.msra.mxu0 0.0
        %2368 = vmatprep.subr.mxu0 0.0
        %2369 = vmatpush1.msra.mxu0 0.0
        %2370 = vmatprep.subr.mxu0 0.0
        %2371 = vmatpush1.msra.mxu0 0.0
        %2372 = vmatprep.mubr.f32.mxu0 0.0
        %2373 = vmatmul.mubr.f32.gmra.mrb[0].mxu0 %v1990
        %v2374 = vpop.f32.mrb[0].mxu0
        %v2375 = vadd.f32 0.0, %v2374
        %v2376 = vpop.f32.mrb[0].mxu0
        %v2377 = vadd.f32 0.0, %v2376
        %2378 = vdwg.mxu0
        %2379 = vmatprep.subr.mxu0 0.0
        %2380 = vmatpush1.msra.mxu0 %v525
        %2381 = vmatprep.subr.mxu0 0.0
        %2382 = vmatpush1.msra.mxu0 %v528
        %2383 = vmatprep.subr.mxu0 0.0
        %2384 = vmatpush1.msra.mxu0 %v531
        %2385 = vmatprep.subr.mxu0 0.0
        %2386 = vmatpush1.msra.mxu0 %v534
        %2387 = vmatprep.subr.mxu0 0.0
        %2388 = vmatpush1.msra.mxu0 %v537
        %2389 = vmatprep.subr.mxu0 0.0
        %2390 = vmatpush1.msra.mxu0 %v540
        %2391 = vmatprep.subr.mxu0 0.0
        %2392 = vmatpush1.msra.mxu0 %v543
        %2393 = vmatprep.subr.mxu0 0.0
        %2394 = vmatpush1.msra.mxu0 %v546
        %2395 = vmatprep.subr.mxu0 0.0
        %2396 = vmatpush1.msra.mxu0 %v549
        %2397 = vmatprep.subr.mxu0 0.0
        %2398 = vmatpush1.msra.mxu0 %v552
        %2399 = vmatprep.subr.mxu0 0.0
        %2400 = vmatpush1.msra.mxu0 %v555
        %2401 = vmatprep.subr.mxu0 0.0
        %2402 = vmatpush1.msra.mxu0 %v558
        %2403 = vmatprep.subr.mxu0 0.0
        %2404 = vmatpush1.msra.mxu0 %v561
        %2405 = vmatprep.subr.mxu0 0.0
        %2406 = vmatpush1.msra.mxu0 %v564
        %2407 = vmatprep.subr.mxu0 0.0
        %2408 = vmatpush1.msra.mxu0 %v567
        %2409 = vmatprep.subr.mxu0 0.0
        %2410 = vmatpush1.msra.mxu0 %v570
        %2411 = vmatprep.subr.mxu0 0.0
        %2412 = vmatpush1.msra.mxu0 0.0
        %2413 = vmatprep.subr.mxu0 0.0
        %2414 = vmatpush1.msra.mxu0 0.0
        %2415 = vmatprep.subr.mxu0 0.0
        %2416 = vmatpush1.msra.mxu0 0.0
        %2417 = vmatprep.subr.mxu0 0.0
        %2418 = vmatpush1.msra.mxu0 0.0
        %2419 = vmatprep.subr.mxu0 0.0
        %2420 = vmatpush1.msra.mxu0 0.0
        %2421 = vmatprep.subr.mxu0 0.0
        %2422 = vmatpush1.msra.mxu0 0.0
        %2423 = vmatprep.subr.mxu0 0.0
        %2424 = vmatpush1.msra.mxu0 0.0
        %2425 = vmatprep.subr.mxu0 0.0
        %2426 = vmatpush1.msra.mxu0 0.0
        %2427 = vmatprep.subr.mxu0 0.0
        %2428 = vmatpush1.msra.mxu0 0.0
        %2429 = vmatprep.subr.mxu0 0.0
        %2430 = vmatpush1.msra.mxu0 0.0
        %2431 = vmatprep.subr.mxu0 0.0
        %2432 = vmatpush1.msra.mxu0 0.0
        %2433 = vmatprep.subr.mxu0 0.0
        %2434 = vmatpush1.msra.mxu0 0.0
        %2435 = vmatprep.subr.mxu0 0.0
        %2436 = vmatpush1.msra.mxu0 0.0
        %2437 = vmatprep.subr.mxu0 0.0
        %2438 = vmatpush1.msra.mxu0 0.0
        %2439 = vmatprep.subr.mxu0 0.0
        %2440 = vmatpush1.msra.mxu0 0.0
        %2441 = vmatprep.subr.mxu0 0.0
        %2442 = vmatpush1.msra.mxu0 0.0
        %2443 = vmatprep.mubr.f32.mxu0 0.0
        %2444 = vmatmul.mubr.f32.gmra.mrb[0].mxu0 %v1990
        %v2445 = vpop.f32.mrb[0].mxu0
        %v2446 = vadd.f32 0.0, %v2445
        %v2447 = vpop.f32.mrb[0].mxu0
        %2448 = vdwg.mxu0
        %v2449 = vadd.f32 %v2305, %v2375
        %v2450 = vxor.u32 %v2449, 2147483648
        %v2451 = vmul.f32 %v2450, 1.442695
        %v2452 = vpow.pop %v2451
        %v2453 = vadd.f32 %v2452, 1.0
        %v2454 = vrcp.pop %v2453
        %v2455 = vmul.f32 1.0, %v2454
        %v2456 = vadd.f32 %v2306, %v2377
        %v2457 = vxor.u32 %v2456, 2147483648
        %v2458 = vmul.f32 %v2457, 1.442695
        %v2459 = vpow.pop %v2458
        %v2460 = vadd.f32 %v2459, 1.0
        %v2461 = vrcp.pop %v2460
        %v2462 = vmul.f32 1.0, %v2461
        %v2463 = vadd.f32 %v2446, %v998
        %v2464 = vmul.f32 %v2455, %v2463
        %v2465 = vadd.f32 %v2307, %v2464
        %v2466 = vtanh.pop %v2465
        %v2467 = vsub.f32 1.0, %v2462
        %v2468 = vmul.f32 %v2467, %v2466
        %v2469 = vmul.f32 %v2462, %v1990
        %v2470 = vadd.f32 %v2468, %v2469
        %2471 = vmatprep.subr.mxu0 %v573
        %2472 = vmatpush1.msra.mxu0 %v572
        %2473 = vmatprep.subr.mxu0 %v576
        %2474 = vmatpush1.msra.mxu0 %v575
        %2475 = vmatprep.subr.mxu0 %v579
        %2476 = vmatpush1.msra.mxu0 %v578
        %2477 = vmatprep.subr.mxu0 %v582
        %2478 = vmatpush1.msra.mxu0 %v581
        %2479 = vmatprep.subr.mxu0 %v585
        %2480 = vmatpush1.msra.mxu0 %v584
        %2481 = vmatprep.subr.mxu0 %v588
        %2482 = vmatpush1.msra.mxu0 %v587
        %2483 = vmatprep.subr.mxu0 %v591
        %2484 = vmatpush1.msra.mxu0 %v590
        %2485 = vmatprep.subr.mxu0 %v594
        %2486 = vmatpush1.msra.mxu0 %v593
        %2487 = vmatprep.subr.mxu0 %v597
        %2488 = vmatpush1.msra.mxu0 %v596
        %2489 = vmatprep.subr.mxu0 %v600
        %2490 = vmatpush1.msra.mxu0 %v599
        %2491 = vmatprep.subr.mxu0 %v603
        %2492 = vmatpush1.msra.mxu0 %v602
        %2493 = vmatprep.subr.mxu0 %v606
        %2494 = vmatpush1.msra.mxu0 %v605
        %2495 = vmatprep.subr.mxu0 %v609
        %2496 = vmatpush1.msra.mxu0 %v608
        %2497 = vmatprep.subr.mxu0 %v612
        %2498 = vmatpush1.msra.mxu0 %v611
        %2499 = vmatprep.subr.mxu0 %v615
        %2500 = vmatpush1.msra.mxu0 %v614
        %2501 = vmatprep.subr.mxu0 %v618
        %2502 = vmatpush1.msra.mxu0 %v617
        %2503 = vmatprep.subr.mxu0 0.0
        %2504 = vmatpush1.msra.mxu0 0.0
        %2505 = vmatprep.subr.mxu0 0.0
        %2506 = vmatpush1.msra.mxu0 0.0
        %2507 = vmatprep.subr.mxu0 0.0
        %2508 = vmatpush1.msra.mxu0 0.0
        %2509 = vmatprep.subr.mxu0 0.0
        %2510 = vmatpush1.msra.mxu0 0.0
        %2511 = vmatprep.subr.mxu0 0.0
        %2512 = vmatpush1.msra.mxu0 0.0
        %2513 = vmatprep.subr.mxu0 0.0
        %2514 = vmatpush1.msra.mxu0 0.0
        %2515 = vmatprep.subr.mxu0 0.0
        %2516 = vmatpush1.msra.mxu0 0.0
        %2517 = vmatprep.subr.mxu0 0.0
        %2518 = vmatpush1.msra.mxu0 0.0
        %2519 = vmatprep.subr.mxu0 0.0
        %2520 = vmatpush1.msra.mxu0 0.0
        %2521 = vmatprep.subr.mxu0 0.0
        %2522 = vmatpush1.msra.mxu0 0.0
        %2523 = vmatprep.subr.mxu0 0.0
        %2524 = vmatpush1.msra.mxu0 0.0
        %2525 = vmatprep.subr.mxu0 0.0
        %2526 = vmatpush1.msra.mxu0 0.0
        %2527 = vmatprep.subr.mxu0 0.0
        %2528 = vmatpush1.msra.mxu0 0.0
        %2529 = vmatprep.subr.mxu0 0.0
        %2530 = vmatpush1.msra.mxu0 0.0
        %2531 = vmatprep.subr.mxu0 0.0
        %2532 = vmatpush1.msra.mxu0 0.0
        %2533 = vmatprep.subr.mxu0 0.0
        %2534 = vmatpush1.msra.mxu0 0.0
        %2535 = vmatprep.mubr.f32.mxu0 0.0
        %2536 = vmatmul.mubr.f32.gmra.mrb[0].mxu0 %v2470
        %v2537 = vpop.f32.mrb[0].mxu0
        %v2538 = vadd.f32 0.0, %v2537
        %v2539 = vpop.f32.mrb[0].mxu0
        %v2540 = vadd.f32 0.0, %v2539
        %2541 = vdwg.mxu0
        %2542 = vmatprep.subr.mxu0 0.0
        %2543 = vmatpush1.msra.mxu0 %v574
        %2544 = vmatprep.subr.mxu0 0.0
        %2545 = vmatpush1.msra.mxu0 %v577
        %2546 = vmatprep.subr.mxu0 0.0
        %2547 = vmatpush1.msra.mxu0 %v580
        %2548 = vmatprep.subr.mxu0 0.0
        %2549 = vmatpush1.msra.mxu0 %v583
        %2550 = vmatprep.subr.mxu0 0.0
        %2551 = vmatpush1.msra.mxu0 %v586
        %2552 = vmatprep.subr.mxu0 0.0
        %2553 = vmatpush1.msra.mxu0 %v589
        %2554 = vmatprep.subr.mxu0 0.0
        %2555 = vmatpush1.msra.mxu0 %v592
        %2556 = vmatprep.subr.mxu0 0.0
        %2557 = vmatpush1.msra.mxu0 %v595
        %2558 = vmatprep.subr.mxu0 0.0
        %2559 = vmatpush1.msra.mxu0 %v598
        %2560 = vmatprep.subr.mxu0 0.0
        %2561 = vmatpush1.msra.mxu0 %v601
        %2562 = vmatprep.subr.mxu0 0.0
        %2563 = vmatpush1.msra.mxu0 %v604
        %2564 = vmatprep.subr.mxu0 0.0
        %2565 = vmatpush1.msra.mxu0 %v607
        %2566 = vmatprep.subr.mxu0 0.0
        %2567 = vmatpush1.msra.mxu0 %v610
        %2568 = vmatprep.subr.mxu0 0.0
        %2569 = vmatpush1.msra.mxu0 %v613
        %2570 = vmatprep.subr.mxu0 0.0
        %2571 = vmatpush1.msra.mxu0 %v616
        %2572 = vmatprep.subr.mxu0 0.0
        %2573 = vmatpush1.msra.mxu0 %v619
        %2574 = vmatprep.subr.mxu0 0.0
        %2575 = vmatpush1.msra.mxu0 0.0
        %2576 = vmatprep.subr.mxu0 0.0
        %2577 = vmatpush1.msra.mxu0 0.0
        %2578 = vmatprep.subr.mxu0 0.0
        %2579 = vmatpush1.msra.mxu0 0.0
        %2580 = vmatprep.subr.mxu0 0.0
        %2581 = vmatpush1.msra.mxu0 0.0
        %2582 = vmatprep.subr.mxu0 0.0
        %2583 = vmatpush1.msra.mxu0 0.0
        %2584 = vmatprep.subr.mxu0 0.0
        %2585 = vmatpush1.msra.mxu0 0.0
        %2586 = vmatprep.subr.mxu0 0.0
        %2587 = vmatpush1.msra.mxu0 0.0
        %2588 = vmatprep.subr.mxu0 0.0
        %2589 = vmatpush1.msra.mxu0 0.0
        %2590 = vmatprep.subr.mxu0 0.0
        %2591 = vmatpush1.msra.mxu0 0.0
        %2592 = vmatprep.subr.mxu0 0.0
        %2593 = vmatpush1.msra.mxu0 0.0
        %2594 = vmatprep.subr.mxu0 0.0
        %2595 = vmatpush1.msra.mxu0 0.0
        %2596 = vmatprep.subr.mxu0 0.0
        %2597 = vmatpush1.msra.mxu0 0.0
        %2598 = vmatprep.subr.mxu0 0.0
        %2599 = vmatpush1.msra.mxu0 0.0
        %2600 = vmatprep.subr.mxu0 0.0
        %2601 = vmatpush1.msra.mxu0 0.0
        %2602 = vmatprep.subr.mxu0 0.0
        %2603 = vmatpush1.msra.mxu0 0.0
        %2604 = vmatprep.subr.mxu0 0.0
        %2605 = vmatpush1.msra.mxu0 0.0
        %2606 = vmatprep.mubr.f32.mxu0 0.0
        %2607 = vmatmul.mubr.f32.gmra.mrb[0].mxu0 %v2470
        %v2608 = vpop.f32.mrb[0].mxu0
        %v2609 = vadd.f32 0.0, %v2608
        %v2610 = vpop.f32.mrb[0].mxu0
        %2611 = vdwg.mxu0
        %v2612 = vadd.f32 %v2538, %v2225
        %v2613 = vadd.f32 %v2540, %v2227
        %v2614 = vadd.f32 %v2612, %v1155
        %v2615 = vadd.f32 %v2613, %v1159
        %v2616 = vxor.u32 %v2614, 2147483648
        %v2617 = vxor.u32 %v2615, 2147483648
        %v2618 = vmul.f32 %v2616, 1.442695
        %v2619 = vpow.pop %v2618
        %v2620 = vmul.f32 %v2617, 1.442695
        %v2621 = vpow.pop %v2620
        %v2622 = vadd.f32 %v2619, 1.0
        %v2623 = vadd.f32 %v2621, 1.0
        %v2624 = vrcp.pop %v2622
        %v2625 = vmul.f32 1.0, %v2624
        %v2626 = vrcp.pop %v2623
        %v2627 = vmul.f32 1.0, %v2626
        %v2628 = vadd.f32 %v2609, %v1180
        %v2629 = vadd.f32 %v2296, %v1187
        %v2630 = vmul.f32 %v2625, %v2629
        %v2631 = vadd.f32 %v2628, %v2630
        %v2632 = vtanh.pop %v2631
        %v2633 = vsub.f32 1.0, %v2627
        %v2634 = vmul.f32 %v2633, %v2632
        %v2635 = vmul.f32 %v2627, %v2156
        %v2636 = vadd.f32 %v2634, %v2635
        %v2637 = vadd.f32 %v2157, %v2636
        %2638 = vmatprep.subr.mxu0 %v621
        %2639 = vmatpush1.msra.mxu0 %v620
        %2640 = vmatprep.subr.mxu0 %v624
        %2641 = vmatpush1.msra.mxu0 %v623
        %2642 = vmatprep.subr.mxu0 %v627
        %2643 = vmatpush1.msra.mxu0 %v626
        %2644 = vmatprep.subr.mxu0 %v630
        %2645 = vmatpush1.msra.mxu0 %v629
        %2646 = vmatprep.subr.mxu0 %v633
        %2647 = vmatpush1.msra.mxu0 %v632
        %2648 = vmatprep.subr.mxu0 %v636
        %2649 = vmatpush1.msra.mxu0 %v635
        %2650 = vmatprep.subr.mxu0 %v639
        %2651 = vmatpush1.msra.mxu0 %v638
        %2652 = vmatprep.subr.mxu0 %v642
        %2653 = vmatpush1.msra.mxu0 %v641
        %2654 = vmatprep.subr.mxu0 %v645
        %2655 = vmatpush1.msra.mxu0 %v644
        %2656 = vmatprep.subr.mxu0 %v648
        %2657 = vmatpush1.msra.mxu0 %v647
        %2658 = vmatprep.subr.mxu0 %v651
        %2659 = vmatpush1.msra.mxu0 %v650
        %2660 = vmatprep.subr.mxu0 %v654
        %2661 = vmatpush1.msra.mxu0 %v653
        %2662 = vmatprep.subr.mxu0 %v657
        %2663 = vmatpush1.msra.mxu0 %v656
        %2664 = vmatprep.subr.mxu0 %v660
        %2665 = vmatpush1.msra.mxu0 %v659
        %2666 = vmatprep.subr.mxu0 %v663
        %2667 = vmatpush1.msra.mxu0 %v662
        %2668 = vmatprep.subr.mxu0 %v666
        %2669 = vmatpush1.msra.mxu0 %v665
        %2670 = vmatprep.subr.mxu0 0.0
        %2671 = vmatpush1.msra.mxu0 0.0
        %2672 = vmatprep.subr.mxu0 0.0
        %2673 = vmatpush1.msra.mxu0 0.0
        %2674 = vmatprep.subr.mxu0 0.0
        %2675 = vmatpush1.msra.mxu0 0.0
        %2676 = vmatprep.subr.mxu0 0.0
        %2677 = vmatpush1.msra.mxu0 0.0
        %2678 = vmatprep.subr.mxu0 0.0
        %2679 = vmatpush1.msra.mxu0 0.0
        %2680 = vmatprep.subr.mxu0 0.0
        %2681 = vmatpush1.msra.mxu0 0.0
        %2682 = vmatprep.subr.mxu0 0.0
        %2683 = vmatpush1.msra.mxu0 0.0
        %2684 = vmatprep.subr.mxu0 0.0
        %2685 = vmatpush1.msra.mxu0 0.0
        %2686 = vmatprep.subr.mxu0 0.0
        %2687 = vmatpush1.msra.mxu0 0.0
        %2688 = vmatprep.subr.mxu0 0.0
        %2689 = vmatpush1.msra.mxu0 0.0
        %2690 = vmatprep.subr.mxu0 0.0
        %2691 = vmatpush1.msra.mxu0 0.0
        %2692 = vmatprep.subr.mxu0 0.0
        %2693 = vmatpush1.msra.mxu0 0.0
        %2694 = vmatprep.subr.mxu0 0.0
        %2695 = vmatpush1.msra.mxu0 0.0
        %2696 = vmatprep.subr.mxu0 0.0
        %2697 = vmatpush1.msra.mxu0 0.0
        %2698 = vmatprep.subr.mxu0 0.0
        %2699 = vmatpush1.msra.mxu0 0.0
        %2700 = vmatprep.subr.mxu0 0.0
        %2701 = vmatpush1.msra.mxu0 0.0
        %2702 = vmatprep.mubr.f32.mxu0 0.0
        %2703 = vmatmul.mubr.f32.gmra.mrb[0].mxu0 %v2636
        %v2704 = vpop.f32.mrb[0].mxu0
        %v2705 = vadd.f32 0.0, %v2704
        %v2706 = vpop.f32.mrb[0].mxu0
        %v2707 = vadd.f32 0.0, %v2706
        %2708 = vdwg.mxu0
        %2709 = vmatprep.subr.mxu0 0.0
        %2710 = vmatpush1.msra.mxu0 %v622
        %2711 = vmatprep.subr.mxu0 0.0
        %2712 = vmatpush1.msra.mxu0 %v625
        %2713 = vmatprep.subr.mxu0 0.0
        %2714 = vmatpush1.msra.mxu0 %v628
        %2715 = vmatprep.subr.mxu0 0.0
        %2716 = vmatpush1.msra.mxu0 %v631
        %2717 = vmatprep.subr.mxu0 0.0
        %2718 = vmatpush1.msra.mxu0 %v634
        %2719 = vmatprep.subr.mxu0 0.0
        %2720 = vmatpush1.msra.mxu0 %v637
        %2721 = vmatprep.subr.mxu0 0.0
        %2722 = vmatpush1.msra.mxu0 %v640
        %2723 = vmatprep.subr.mxu0 0.0
        %2724 = vmatpush1.msra.mxu0 %v643
        %2725 = vmatprep.subr.mxu0 0.0
        %2726 = vmatpush1.msra.mxu0 %v646
        %2727 = vmatprep.subr.mxu0 0.0
        %2728 = vmatpush1.msra.mxu0 %v649
        %2729 = vmatprep.subr.mxu0 0.0
        %2730 = vmatpush1.msra.mxu0 %v652
        %2731 = vmatprep.subr.mxu0 0.0
        %2732 = vmatpush1.msra.mxu0 %v655
        %2733 = vmatprep.subr.mxu0 0.0
        %2734 = vmatpush1.msra.mxu0 %v658
        %2735 = vmatprep.subr.mxu0 0.0
        %2736 = vmatpush1.msra.mxu0 %v661
        %2737 = vmatprep.subr.mxu0 0.0
        %2738 = vmatpush1.msra.mxu0 %v664
        %2739 = vmatprep.subr.mxu0 0.0
        %2740 = vmatpush1.msra.mxu0 %v667
        %2741 = vmatprep.subr.mxu0 0.0
        %2742 = vmatpush1.msra.mxu0 0.0
        %2743 = vmatprep.subr.mxu0 0.0
        %2744 = vmatpush1.msra.mxu0 0.0
        %2745 = vmatprep.subr.mxu0 0.0
        %2746 = vmatpush1.msra.mxu0 0.0
        %2747 = vmatprep.subr.mxu0 0.0
        %2748 = vmatpush1.msra.mxu0 0.0
        %2749 = vmatprep.subr.mxu0 0.0
        %2750 = vmatpush1.msra.mxu0 0.0
        %2751 = vmatprep.subr.mxu0 0.0
        %2752 = vmatpush1.msra.mxu0 0.0
        %2753 = vmatprep.subr.mxu0 0.0
        %2754 = vmatpush1.msra.mxu0 0.0
        %2755 = vmatprep.subr.mxu0 0.0
        %2756 = vmatpush1.msra.mxu0 0.0
        %2757 = vmatprep.subr.mxu0 0.0
        %2758 = vmatpush1.msra.mxu0 0.0
        %2759 = vmatprep.subr.mxu0 0.0
        %2760 = vmatpush1.msra.mxu0 0.0
        %2761 = vmatprep.subr.mxu0 0.0
        %2762 = vmatpush1.msra.mxu0 0.0
        %2763 = vmatprep.subr.mxu0 0.0
        %2764 = vmatpush1.msra.mxu0 0.0
        %2765 = vmatprep.subr.mxu0 0.0
        %2766 = vmatpush1.msra.mxu0 0.0
        %2767 = vmatprep.subr.mxu0 0.0
        %2768 = vmatpush1.msra.mxu0 0.0
        %2769 = vmatprep.subr.mxu0 0.0
        %2770 = vmatpush1.msra.mxu0 0.0
        %2771 = vmatprep.subr.mxu0 0.0
        %2772 = vmatpush1.msra.mxu0 0.0
        %2773 = vmatprep.mubr.f32.mxu0 0.0
        %2774 = vmatmul.mubr.f32.gmra.mrb[0].mxu0 %v2636
        %v2775 = vpop.f32.mrb[0].mxu0
        %v2776 = vadd.f32 0.0, %v2775
        %v2777 = vpop.f32.mrb[0].mxu0
        %2778 = vdwg.mxu0
        %s2779 = scalar_lea.vmem %s456, 48 [#allocation5]
        %v2780 = vld [vmem:[%s2779] sm:$0xff]
        %v2781 = vld [vmem:[%s2779 + $0x8] sm:$0xf]
        %v2782 = vunpack.c.l.bf16 %v2780
        %v2783 = vunpack.c.h.bf16 %v2780
        %v2784 = vunpack.c.l.bf16 %v2781
        %v2785 = vadd.f32 %v2782, %v824
        %v2786 = vadd.f32 %v2783, %v828
        %v2787 = vadd.f32 %v2784, %v832
        %2788 = vmatprep.subr.mxu0 %v524
        %2789 = vmatpush1.msra.mxu0 %v523
        %2790 = vmatprep.subr.mxu0 %v527
        %2791 = vmatpush1.msra.mxu0 %v526
        %2792 = vmatprep.subr.mxu0 %v530
        %2793 = vmatpush1.msra.mxu0 %v529
        %2794 = vmatprep.subr.mxu0 %v533
        %2795 = vmatpush1.msra.mxu0 %v532
        %2796 = vmatprep.subr.mxu0 %v536
        %2797 = vmatpush1.msra.mxu0 %v535
        %2798 = vmatprep.subr.mxu0 %v539
        %2799 = vmatpush1.msra.mxu0 %v538
        %2800 = vmatprep.subr.mxu0 %v542
        %2801 = vmatpush1.msra.mxu0 %v541
        %2802 = vmatprep.subr.mxu0 %v545
        %2803 = vmatpush1.msra.mxu0 %v544
        %2804 = vmatprep.subr.mxu0 %v548
        %2805 = vmatpush1.msra.mxu0 %v547
        %2806 = vmatprep.subr.mxu0 %v551
        %2807 = vmatpush1.msra.mxu0 %v550
        %2808 = vmatprep.subr.mxu0 %v554
        %2809 = vmatpush1.msra.mxu0 %v553
        %2810 = vmatprep.subr.mxu0 %v557
        %2811 = vmatpush1.msra.mxu0 %v556
        %2812 = vmatprep.subr.mxu0 %v560
        %2813 = vmatpush1.msra.mxu0 %v559
        %2814 = vmatprep.subr.mxu0 %v563
        %2815 = vmatpush1.msra.mxu0 %v562
        %2816 = vmatprep.subr.mxu0 %v566
        %2817 = vmatpush1.msra.mxu0 %v565
        %2818 = vmatprep.subr.mxu0 %v569
        %2819 = vmatpush1.msra.mxu0 %v568
        %2820 = vmatprep.subr.mxu0 0.0
        %2821 = vmatpush1.msra.mxu0 0.0
        %2822 = vmatprep.subr.mxu0 0.0
        %2823 = vmatpush1.msra.mxu0 0.0
        %2824 = vmatprep.subr.mxu0 0.0
        %2825 = vmatpush1.msra.mxu0 0.0
        %2826 = vmatprep.subr.mxu0 0.0
        %2827 = vmatpush1.msra.mxu0 0.0
        %2828 = vmatprep.subr.mxu0 0.0
        %2829 = vmatpush1.msra.mxu0 0.0
        %2830 = vmatprep.subr.mxu0 0.0
        %2831 = vmatpush1.msra.mxu0 0.0
        %2832 = vmatprep.subr.mxu0 0.0
        %2833 = vmatpush1.msra.mxu0 0.0
        %2834 = vmatprep.subr.mxu0 0.0
        %2835 = vmatpush1.msra.mxu0 0.0
        %2836 = vmatprep.subr.mxu0 0.0
        %2837 = vmatpush1.msra.mxu0 0.0
        %2838 = vmatprep.subr.mxu0 0.0
        %2839 = vmatpush1.msra.mxu0 0.0
        %2840 = vmatprep.subr.mxu0 0.0
        %2841 = vmatpush1.msra.mxu0 0.0
        %2842 = vmatprep.subr.mxu0 0.0
        %2843 = vmatpush1.msra.mxu0 0.0
        %2844 = vmatprep.subr.mxu0 0.0
        %2845 = vmatpush1.msra.mxu0 0.0
        %2846 = vmatprep.subr.mxu0 0.0
        %2847 = vmatpush1.msra.mxu0 0.0
        %2848 = vmatprep.subr.mxu0 0.0
        %2849 = vmatpush1.msra.mxu0 0.0
        %2850 = vmatprep.subr.mxu0 0.0
        %2851 = vmatpush1.msra.mxu0 0.0
        %2852 = vmatprep.mubr.f32.mxu0 0.0
        %2853 = vmatmul.mubr.f32.gmra.mrb[0].mxu0 %v2470
        %v2854 = vpop.f32.mrb[0].mxu0
        %v2855 = vadd.f32 0.0, %v2854
        %v2856 = vpop.f32.mrb[0].mxu0
        %v2857 = vadd.f32 0.0, %v2856
        %2858 = vdwg.mxu0
        %2859 = vmatprep.subr.mxu0 0.0
        %2860 = vmatpush1.msra.mxu0 %v525
        %2861 = vmatprep.subr.mxu0 0.0
        %2862 = vmatpush1.msra.mxu0 %v528
        %2863 = vmatprep.subr.mxu0 0.0
        %2864 = vmatpush1.msra.mxu0 %v531
        %2865 = vmatprep.subr.mxu0 0.0
        %2866 = vmatpush1.msra.mxu0 %v534
        %2867 = vmatprep.subr.mxu0 0.0
        %2868 = vmatpush1.msra.mxu0 %v537
        %2869 = vmatprep.subr.mxu0 0.0
        %2870 = vmatpush1.msra.mxu0 %v540
        %2871 = vmatprep.subr.mxu0 0.0
        %2872 = vmatpush1.msra.mxu0 %v543
        %2873 = vmatprep.subr.mxu0 0.0
        %2874 = vmatpush1.msra.mxu0 %v546
        %2875 = vmatprep.subr.mxu0 0.0
        %2876 = vmatpush1.msra.mxu0 %v549
        %2877 = vmatprep.subr.mxu0 0.0
        %2878 = vmatpush1.msra.mxu0 %v552
        %2879 = vmatprep.subr.mxu0 0.0
        %2880 = vmatpush1.msra.mxu0 %v555
        %2881 = vmatprep.subr.mxu0 0.0
        %2882 = vmatpush1.msra.mxu0 %v558
        %2883 = vmatprep.subr.mxu0 0.0
        %2884 = vmatpush1.msra.mxu0 %v561
        %2885 = vmatprep.subr.mxu0 0.0
        %2886 = vmatpush1.msra.mxu0 %v564
        %2887 = vmatprep.subr.mxu0 0.0
        %2888 = vmatpush1.msra.mxu0 %v567
        %2889 = vmatprep.subr.mxu0 0.0
        %2890 = vmatpush1.msra.mxu0 %v570
        %2891 = vmatprep.subr.mxu0 0.0
        %2892 = vmatpush1.msra.mxu0 0.0
        %2893 = vmatprep.subr.mxu0 0.0
        %2894 = vmatpush1.msra.mxu0 0.0
        %2895 = vmatprep.subr.mxu0 0.0
        %2896 = vmatpush1.msra.mxu0 0.0
        %2897 = vmatprep.subr.mxu0 0.0
        %2898 = vmatpush1.msra.mxu0 0.0
        %2899 = vmatprep.subr.mxu0 0.0
        %2900 = vmatpush1.msra.mxu0 0.0
        %2901 = vmatprep.subr.mxu0 0.0
        %2902 = vmatpush1.msra.mxu0 0.0
        %2903 = vmatprep.subr.mxu0 0.0
        %2904 = vmatpush1.msra.mxu0 0.0
        %2905 = vmatprep.subr.mxu0 0.0
        %2906 = vmatpush1.msra.mxu0 0.0
        %2907 = vmatprep.subr.mxu0 0.0
        %2908 = vmatpush1.msra.mxu0 0.0
        %2909 = vmatprep.subr.mxu0 0.0
        %2910 = vmatpush1.msra.mxu0 0.0
        %2911 = vmatprep.subr.mxu0 0.0
        %2912 = vmatpush1.msra.mxu0 0.0
        %2913 = vmatprep.subr.mxu0 0.0
        %2914 = vmatpush1.msra.mxu0 0.0
        %2915 = vmatprep.subr.mxu0 0.0
        %2916 = vmatpush1.msra.mxu0 0.0
        %2917 = vmatprep.subr.mxu0 0.0
        %2918 = vmatpush1.msra.mxu0 0.0
        %2919 = vmatprep.subr.mxu0 0.0
        %2920 = vmatpush1.msra.mxu0 0.0
        %2921 = vmatprep.subr.mxu0 0.0
        %2922 = vmatpush1.msra.mxu0 0.0
        %2923 = vmatprep.mubr.f32.mxu0 0.0
        %2924 = vmatmul.mubr.f32.gmra.mrb[0].mxu0 %v2470
        %v2925 = vpop.f32.mrb[0].mxu0
        %v2926 = vadd.f32 0.0, %v2925
        %v2927 = vpop.f32.mrb[0].mxu0
        %2928 = vdwg.mxu0
        %v2929 = vadd.f32 %v2785, %v2855
        %v2930 = vxor.u32 %v2929, 2147483648
        %v2931 = vmul.f32 %v2930, 1.442695
        %v2932 = vpow.pop %v2931
        %v2933 = vadd.f32 %v2932, 1.0
        %v2934 = vrcp.pop %v2933
        %v2935 = vmul.f32 1.0, %v2934
        %v2936 = vadd.f32 %v2786, %v2857
        %v2937 = vxor.u32 %v2936, 2147483648
        %v2938 = vmul.f32 %v2937, 1.442695
        %v2939 = vpow.pop %v2938
        %v2940 = vadd.f32 %v2939, 1.0
        %v2941 = vrcp.pop %v2940
        %v2942 = vmul.f32 1.0, %v2941
        %v2943 = vadd.f32 %v2926, %v998
        %v2944 = vmul.f32 %v2935, %v2943
        %v2945 = vadd.f32 %v2787, %v2944
        %v2946 = vtanh.pop %v2945
        %v2947 = vsub.f32 1.0, %v2942
        %v2948 = vmul.f32 %v2947, %v2946
        %v2949 = vmul.f32 %v2942, %v2470
        %v2950 = vadd.f32 %v2948, %v2949
        %2951 = vmatprep.subr.mxu0 %v573
        %2952 = vmatpush1.msra.mxu0 %v572
        %2953 = vmatprep.subr.mxu0 %v576
        %2954 = vmatpush1.msra.mxu0 %v575
        %2955 = vmatprep.subr.mxu0 %v579
        %2956 = vmatpush1.msra.mxu0 %v578
        %2957 = vmatprep.subr.mxu0 %v582
        %2958 = vmatpush1.msra.mxu0 %v581
        %2959 = vmatprep.subr.mxu0 %v585
        %2960 = vmatpush1.msra.mxu0 %v584
        %2961 = vmatprep.subr.mxu0 %v588
        %2962 = vmatpush1.msra.mxu0 %v587
        %2963 = vmatprep.subr.mxu0 %v591
        %2964 = vmatpush1.msra.mxu0 %v590
        %2965 = vmatprep.subr.mxu0 %v594
        %2966 = vmatpush1.msra.mxu0 %v593
        %2967 = vmatprep.subr.mxu0 %v597
        %2968 = vmatpush1.msra.mxu0 %v596
        %2969 = vmatprep.subr.mxu0 %v600
        %2970 = vmatpush1.msra.mxu0 %v599
        %2971 = vmatprep.subr.mxu0 %v603
        %2972 = vmatpush1.msra.mxu0 %v602
        %2973 = vmatprep.subr.mxu0 %v606
        %2974 = vmatpush1.msra.mxu0 %v605
        %2975 = vmatprep.subr.mxu0 %v609
        %2976 = vmatpush1.msra.mxu0 %v608
        %2977 = vmatprep.subr.mxu0 %v612
        %2978 = vmatpush1.msra.mxu0 %v611
        %2979 = vmatprep.subr.mxu0 %v615
        %2980 = vmatpush1.msra.mxu0 %v614
        %2981 = vmatprep.subr.mxu0 %v618
        %2982 = vmatpush1.msra.mxu0 %v617
        %2983 = vmatprep.subr.mxu0 0.0
        %2984 = vmatpush1.msra.mxu0 0.0
        %2985 = vmatprep.subr.mxu0 0.0
        %2986 = vmatpush1.msra.mxu0 0.0
        %2987 = vmatprep.subr.mxu0 0.0
        %2988 = vmatpush1.msra.mxu0 0.0
        %2989 = vmatprep.subr.mxu0 0.0
        %2990 = vmatpush1.msra.mxu0 0.0
        %2991 = vmatprep.subr.mxu0 0.0
        %2992 = vmatpush1.msra.mxu0 0.0
        %2993 = vmatprep.subr.mxu0 0.0
        %2994 = vmatpush1.msra.mxu0 0.0
        %2995 = vmatprep.subr.mxu0 0.0
        %2996 = vmatpush1.msra.mxu0 0.0
        %2997 = vmatprep.subr.mxu0 0.0
        %2998 = vmatpush1.msra.mxu0 0.0
        %2999 = vmatprep.subr.mxu0 0.0
        %3000 = vmatpush1.msra.mxu0 0.0
        %3001 = vmatprep.subr.mxu0 0.0
        %3002 = vmatpush1.msra.mxu0 0.0
        %3003 = vmatprep.subr.mxu0 0.0
        %3004 = vmatpush1.msra.mxu0 0.0
        %3005 = vmatprep.subr.mxu0 0.0
        %3006 = vmatpush1.msra.mxu0 0.0
        %3007 = vmatprep.subr.mxu0 0.0
        %3008 = vmatpush1.msra.mxu0 0.0
        %3009 = vmatprep.subr.mxu0 0.0
        %3010 = vmatpush1.msra.mxu0 0.0
        %3011 = vmatprep.subr.mxu0 0.0
        %3012 = vmatpush1.msra.mxu0 0.0
        %3013 = vmatprep.subr.mxu0 0.0
        %3014 = vmatpush1.msra.mxu0 0.0
        %3015 = vmatprep.mubr.f32.mxu0 0.0
        %3016 = vmatmul.mubr.f32.gmra.mrb[0].mxu0 %v2950
        %v3017 = vpop.f32.mrb[0].mxu0
        %v3018 = vadd.f32 0.0, %v3017
        %v3019 = vpop.f32.mrb[0].mxu0
        %v3020 = vadd.f32 0.0, %v3019
        %3021 = vdwg.mxu0
        %3022 = vmatprep.subr.mxu0 0.0
        %3023 = vmatpush1.msra.mxu0 %v574
        %3024 = vmatprep.subr.mxu0 0.0
        %3025 = vmatpush1.msra.mxu0 %v577
        %3026 = vmatprep.subr.mxu0 0.0
        %3027 = vmatpush1.msra.mxu0 %v580
        %3028 = vmatprep.subr.mxu0 0.0
        %3029 = vmatpush1.msra.mxu0 %v583
        %3030 = vmatprep.subr.mxu0 0.0
        %3031 = vmatpush1.msra.mxu0 %v586
        %3032 = vmatprep.subr.mxu0 0.0
        %3033 = vmatpush1.msra.mxu0 %v589
        %3034 = vmatprep.subr.mxu0 0.0
        %3035 = vmatpush1.msra.mxu0 %v592
        %3036 = vmatprep.subr.mxu0 0.0
        %3037 = vmatpush1.msra.mxu0 %v595
        %3038 = vmatprep.subr.mxu0 0.0
        %3039 = vmatpush1.msra.mxu0 %v598
        %3040 = vmatprep.subr.mxu0 0.0
        %3041 = vmatpush1.msra.mxu0 %v601
        %3042 = vmatprep.subr.mxu0 0.0
        %3043 = vmatpush1.msra.mxu0 %v604
        %3044 = vmatprep.subr.mxu0 0.0
        %3045 = vmatpush1.msra.mxu0 %v607
        %3046 = vmatprep.subr.mxu0 0.0
        %3047 = vmatpush1.msra.mxu0 %v610
        %3048 = vmatprep.subr.mxu0 0.0
        %3049 = vmatpush1.msra.mxu0 %v613
        %3050 = vmatprep.subr.mxu0 0.0
        %3051 = vmatpush1.msra.mxu0 %v616
        %3052 = vmatprep.subr.mxu0 0.0
        %3053 = vmatpush1.msra.mxu0 %v619
        %3054 = vmatprep.subr.mxu0 0.0
        %3055 = vmatpush1.msra.mxu0 0.0
        %3056 = vmatprep.subr.mxu0 0.0
        %3057 = vmatpush1.msra.mxu0 0.0
        %3058 = vmatprep.subr.mxu0 0.0
        %3059 = vmatpush1.msra.mxu0 0.0
        %3060 = vmatprep.subr.mxu0 0.0
        %3061 = vmatpush1.msra.mxu0 0.0
        %3062 = vmatprep.subr.mxu0 0.0
        %3063 = vmatpush1.msra.mxu0 0.0
        %3064 = vmatprep.subr.mxu0 0.0
        %3065 = vmatpush1.msra.mxu0 0.0
        %3066 = vmatprep.subr.mxu0 0.0
        %3067 = vmatpush1.msra.mxu0 0.0
        %3068 = vmatprep.subr.mxu0 0.0
        %3069 = vmatpush1.msra.mxu0 0.0
        %3070 = vmatprep.subr.mxu0 0.0
        %3071 = vmatpush1.msra.mxu0 0.0
        %3072 = vmatprep.subr.mxu0 0.0
        %3073 = vmatpush1.msra.mxu0 0.0
        %3074 = vmatprep.subr.mxu0 0.0
        %3075 = vmatpush1.msra.mxu0 0.0
        %3076 = vmatprep.subr.mxu0 0.0
        %3077 = vmatpush1.msra.mxu0 0.0
        %3078 = vmatprep.subr.mxu0 0.0
        %3079 = vmatpush1.msra.mxu0 0.0
        %3080 = vmatprep.subr.mxu0 0.0
        %3081 = vmatpush1.msra.mxu0 0.0
        %3082 = vmatprep.subr.mxu0 0.0
        %3083 = vmatpush1.msra.mxu0 0.0
        %3084 = vmatprep.subr.mxu0 0.0
        %3085 = vmatpush1.msra.mxu0 0.0
        %3086 = vmatprep.mubr.f32.mxu0 0.0
        %3087 = vmatmul.mubr.f32.gmra.mrb[0].mxu0 %v2950
        %v3088 = vpop.f32.mrb[0].mxu0
        %v3089 = vadd.f32 0.0, %v3088
        %v3090 = vpop.f32.mrb[0].mxu0
        %3091 = vdwg.mxu0
        %v3092 = vadd.f32 %v3018, %v2705
        %v3093 = vadd.f32 %v3020, %v2707
        %v3094 = vadd.f32 %v3092, %v1155
        %v3095 = vadd.f32 %v3093, %v1159
        %v3096 = vxor.u32 %v3094, 2147483648
        %v3097 = vxor.u32 %v3095, 2147483648
        %v3098 = vmul.f32 %v3096, 1.442695
        %v3099 = vpow.pop %v3098
        %v3100 = vmul.f32 %v3097, 1.442695
        %v3101 = vpow.pop %v3100
        %v3102 = vadd.f32 %v3099, 1.0
        %v3103 = vadd.f32 %v3101, 1.0
        %v3104 = vrcp.pop %v3102
        %v3105 = vmul.f32 1.0, %v3104
        %v3106 = vrcp.pop %v3103
        %v3107 = vmul.f32 1.0, %v3106
        %v3108 = vadd.f32 %v3089, %v1180
        %v3109 = vadd.f32 %v2776, %v1187
        %v3110 = vmul.f32 %v3105, %v3109
        %v3111 = vadd.f32 %v3108, %v3110
        %v3112 = vtanh.pop %v3111
        %v3113 = vsub.f32 1.0, %v3107
        %v3114 = vmul.f32 %v3113, %v3112
        %v3115 = vmul.f32 %v3107, %v2636
        %v3116 = vadd.f32 %v3114, %v3115
        %v3117 = vadd.f32 %v2637, %v3116
        %3118 = vmatprep.subr.mxu0 %v621
        %3119 = vmatpush1.msra.mxu0 %v620
        %3120 = vmatprep.subr.mxu0 %v624
        %3121 = vmatpush1.msra.mxu0 %v623
        %3122 = vmatprep.subr.mxu0 %v627
        %3123 = vmatpush1.msra.mxu0 %v626
        %3124 = vmatprep.subr.mxu0 %v630
        %3125 = vmatpush1.msra.mxu0 %v629
        %3126 = vmatprep.subr.mxu0 %v633
        %3127 = vmatpush1.msra.mxu0 %v632
        %3128 = vmatprep.subr.mxu0 %v636
        %3129 = vmatpush1.msra.mxu0 %v635
        %3130 = vmatprep.subr.mxu0 %v639
        %3131 = vmatpush1.msra.mxu0 %v638
        %3132 = vmatprep.subr.mxu0 %v642
        %3133 = vmatpush1.msra.mxu0 %v641
        %3134 = vmatprep.subr.mxu0 %v645
        %3135 = vmatpush1.msra.mxu0 %v644
        %3136 = vmatprep.subr.mxu0 %v648
        %3137 = vmatpush1.msra.mxu0 %v647
        %3138 = vmatprep.subr.mxu0 %v651
        %3139 = vmatpush1.msra.mxu0 %v650
        %3140 = vmatprep.subr.mxu0 %v654
        %3141 = vmatpush1.msra.mxu0 %v653
        %3142 = vmatprep.subr.mxu0 %v657
        %3143 = vmatpush1.msra.mxu0 %v656
        %3144 = vmatprep.subr.mxu0 %v660
        %3145 = vmatpush1.msra.mxu0 %v659
        %3146 = vmatprep.subr.mxu0 %v663
        %3147 = vmatpush1.msra.mxu0 %v662
        %3148 = vmatprep.subr.mxu0 %v666
        %3149 = vmatpush1.msra.mxu0 %v665
        %3150 = vmatprep.subr.mxu0 0.0
        %3151 = vmatpush1.msra.mxu0 0.0
        %3152 = vmatprep.subr.mxu0 0.0
        %3153 = vmatpush1.msra.mxu0 0.0
        %3154 = vmatprep.subr.mxu0 0.0
        %3155 = vmatpush1.msra.mxu0 0.0
        %3156 = vmatprep.subr.mxu0 0.0
        %3157 = vmatpush1.msra.mxu0 0.0
        %3158 = vmatprep.subr.mxu0 0.0
        %3159 = vmatpush1.msra.mxu0 0.0
        %3160 = vmatprep.subr.mxu0 0.0
        %3161 = vmatpush1.msra.mxu0 0.0
        %3162 = vmatprep.subr.mxu0 0.0
        %3163 = vmatpush1.msra.mxu0 0.0
        %3164 = vmatprep.subr.mxu0 0.0
        %3165 = vmatpush1.msra.mxu0 0.0
        %3166 = vmatprep.subr.mxu0 0.0
        %3167 = vmatpush1.msra.mxu0 0.0
        %3168 = vmatprep.subr.mxu0 0.0
        %3169 = vmatpush1.msra.mxu0 0.0
        %3170 = vmatprep.subr.mxu0 0.0
        %3171 = vmatpush1.msra.mxu0 0.0
        %3172 = vmatprep.subr.mxu0 0.0
        %3173 = vmatpush1.msra.mxu0 0.0
        %3174 = vmatprep.subr.mxu0 0.0
        %3175 = vmatpush1.msra.mxu0 0.0
        %3176 = vmatprep.subr.mxu0 0.0
        %3177 = vmatpush1.msra.mxu0 0.0
        %3178 = vmatprep.subr.mxu0 0.0
        %3179 = vmatpush1.msra.mxu0 0.0
        %3180 = vmatprep.subr.mxu0 0.0
        %3181 = vmatpush1.msra.mxu0 0.0
        %3182 = vmatprep.mubr.f32.mxu0 0.0
        %3183 = vmatmul.mubr.f32.gmra.mrb[0].mxu0 %v3116
        %v3184 = vpop.f32.mrb[0].mxu0
        %v3185 = vadd.f32 0.0, %v3184
        %v3186 = vpop.f32.mrb[0].mxu0
        %v3187 = vadd.f32 0.0, %v3186
        %3188 = vdwg.mxu0
        %3189 = vmatprep.subr.mxu0 0.0
        %3190 = vmatpush1.msra.mxu0 %v622
        %3191 = vmatprep.subr.mxu0 0.0
        %3192 = vmatpush1.msra.mxu0 %v625
        %3193 = vmatprep.subr.mxu0 0.0
        %3194 = vmatpush1.msra.mxu0 %v628
        %3195 = vmatprep.subr.mxu0 0.0
        %3196 = vmatpush1.msra.mxu0 %v631
        %3197 = vmatprep.subr.mxu0 0.0
        %3198 = vmatpush1.msra.mxu0 %v634
        %3199 = vmatprep.subr.mxu0 0.0
        %3200 = vmatpush1.msra.mxu0 %v637
        %3201 = vmatprep.subr.mxu0 0.0
        %3202 = vmatpush1.msra.mxu0 %v640
        %3203 = vmatprep.subr.mxu0 0.0
        %3204 = vmatpush1.msra.mxu0 %v643
        %3205 = vmatprep.subr.mxu0 0.0
        %3206 = vmatpush1.msra.mxu0 %v646
        %3207 = vmatprep.subr.mxu0 0.0
        %3208 = vmatpush1.msra.mxu0 %v649
        %3209 = vmatprep.subr.mxu0 0.0
        %3210 = vmatpush1.msra.mxu0 %v652
        %3211 = vmatprep.subr.mxu0 0.0
        %3212 = vmatpush1.msra.mxu0 %v655
        %3213 = vmatprep.subr.mxu0 0.0
        %3214 = vmatpush1.msra.mxu0 %v658
        %3215 = vmatprep.subr.mxu0 0.0
        %3216 = vmatpush1.msra.mxu0 %v661
        %3217 = vmatprep.subr.mxu0 0.0
        %3218 = vmatpush1.msra.mxu0 %v664
        %3219 = vmatprep.subr.mxu0 0.0
        %3220 = vmatpush1.msra.mxu0 %v667
        %3221 = vmatprep.subr.mxu0 0.0
        %3222 = vmatpush1.msra.mxu0 0.0
        %3223 = vmatprep.subr.mxu0 0.0
        %3224 = vmatpush1.msra.mxu0 0.0
        %3225 = vmatprep.subr.mxu0 0.0
        %3226 = vmatpush1.msra.mxu0 0.0
        %3227 = vmatprep.subr.mxu0 0.0
        %3228 = vmatpush1.msra.mxu0 0.0
        %3229 = vmatprep.subr.mxu0 0.0
        %3230 = vmatpush1.msra.mxu0 0.0
        %3231 = vmatprep.subr.mxu0 0.0
        %3232 = vmatpush1.msra.mxu0 0.0
        %3233 = vmatprep.subr.mxu0 0.0
        %3234 = vmatpush1.msra.mxu0 0.0
        %3235 = vmatprep.subr.mxu0 0.0
        %3236 = vmatpush1.msra.mxu0 0.0
        %3237 = vmatprep.subr.mxu0 0.0
        %3238 = vmatpush1.msra.mxu0 0.0
        %3239 = vmatprep.subr.mxu0 0.0
        %3240 = vmatpush1.msra.mxu0 0.0
        %3241 = vmatprep.subr.mxu0 0.0
        %3242 = vmatpush1.msra.mxu0 0.0
        %3243 = vmatprep.subr.mxu0 0.0
        %3244 = vmatpush1.msra.mxu0 0.0
        %3245 = vmatprep.subr.mxu0 0.0
        %3246 = vmatpush1.msra.mxu0 0.0
        %3247 = vmatprep.subr.mxu0 0.0
        %3248 = vmatpush1.msra.mxu0 0.0
        %3249 = vmatprep.subr.mxu0 0.0
        %3250 = vmatpush1.msra.mxu0 0.0
        %3251 = vmatprep.subr.mxu0 0.0
        %3252 = vmatpush1.msra.mxu0 0.0
        %3253 = vmatprep.mubr.f32.mxu0 0.0
        %3254 = vmatmul.mubr.f32.gmra.mrb[0].mxu0 %v3116
        %v3255 = vpop.f32.mrb[0].mxu0
        %v3256 = vadd.f32 0.0, %v3255
        %v3257 = vpop.f32.mrb[0].mxu0
        %3258 = vdwg.mxu0
        %s3259 = scalar_lea.vmem %s456, 60 [#allocation5]
        %v3260 = vld [vmem:[%s3259] sm:$0xff]
        %v3261 = vld [vmem:[%s3259 + $0x8] sm:$0xf]
        %v3262 = vunpack.c.l.bf16 %v3260
        %v3263 = vunpack.c.h.bf16 %v3260
        %v3264 = vunpack.c.l.bf16 %v3261
        %v3265 = vadd.f32 %v3262, %v824
        %v3266 = vadd.f32 %v3263, %v828
        %v3267 = vadd.f32 %v3264, %v832
        %3268 = vmatprep.subr.mxu0 %v524
        %3269 = vmatpush1.msra.mxu0 %v523
        %3270 = vmatprep.subr.mxu0 %v527
        %3271 = vmatpush1.msra.mxu0 %v526
        %3272 = vmatprep.subr.mxu0 %v530
        %3273 = vmatpush1.msra.mxu0 %v529
        %3274 = vmatprep.subr.mxu0 %v533
        %3275 = vmatpush1.msra.mxu0 %v532
        %3276 = vmatprep.subr.mxu0 %v536
        %3277 = vmatpush1.msra.mxu0 %v535
        %3278 = vmatprep.subr.mxu0 %v539
        %3279 = vmatpush1.msra.mxu0 %v538
        %3280 = vmatprep.subr.mxu0 %v542
        %3281 = vmatpush1.msra.mxu0 %v541
        %3282 = vmatprep.subr.mxu0 %v545
        %3283 = vmatpush1.msra.mxu0 %v544
        %3284 = vmatprep.subr.mxu0 %v548
        %3285 = vmatpush1.msra.mxu0 %v547
        %3286 = vmatprep.subr.mxu0 %v551
        %3287 = vmatpush1.msra.mxu0 %v550
        %3288 = vmatprep.subr.mxu0 %v554
        %3289 = vmatpush1.msra.mxu0 %v553
        %3290 = vmatprep.subr.mxu0 %v557
        %3291 = vmatpush1.msra.mxu0 %v556
        %3292 = vmatprep.subr.mxu0 %v560
        %3293 = vmatpush1.msra.mxu0 %v559
        %3294 = vmatprep.subr.mxu0 %v563
        %3295 = vmatpush1.msra.mxu0 %v562
        %3296 = vmatprep.subr.mxu0 %v566
        %3297 = vmatpush1.msra.mxu0 %v565
        %3298 = vmatprep.subr.mxu0 %v569
        %3299 = vmatpush1.msra.mxu0 %v568
        %3300 = vmatprep.subr.mxu0 0.0
        %3301 = vmatpush1.msra.mxu0 0.0
        %3302 = vmatprep.subr.mxu0 0.0
        %3303 = vmatpush1.msra.mxu0 0.0
        %3304 = vmatprep.subr.mxu0 0.0
        %3305 = vmatpush1.msra.mxu0 0.0
        %3306 = vmatprep.subr.mxu0 0.0
        %3307 = vmatpush1.msra.mxu0 0.0
        %3308 = vmatprep.subr.mxu0 0.0
        %3309 = vmatpush1.msra.mxu0 0.0
        %3310 = vmatprep.subr.mxu0 0.0
        %3311 = vmatpush1.msra.mxu0 0.0
        %3312 = vmatprep.subr.mxu0 0.0
        %3313 = vmatpush1.msra.mxu0 0.0
        %3314 = vmatprep.subr.mxu0 0.0
        %3315 = vmatpush1.msra.mxu0 0.0
        %3316 = vmatprep.subr.mxu0 0.0
        %3317 = vmatpush1.msra.mxu0 0.0
        %3318 = vmatprep.subr.mxu0 0.0
        %3319 = vmatpush1.msra.mxu0 0.0
        %3320 = vmatprep.subr.mxu0 0.0
        %3321 = vmatpush1.msra.mxu0 0.0
        %3322 = vmatprep.subr.mxu0 0.0
        %3323 = vmatpush1.msra.mxu0 0.0
        %3324 = vmatprep.subr.mxu0 0.0
        %3325 = vmatpush1.msra.mxu0 0.0
        %3326 = vmatprep.subr.mxu0 0.0
        %3327 = vmatpush1.msra.mxu0 0.0
        %3328 = vmatprep.subr.mxu0 0.0
        %3329 = vmatpush1.msra.mxu0 0.0
        %3330 = vmatprep.subr.mxu0 0.0
        %3331 = vmatpush1.msra.mxu0 0.0
        %3332 = vmatprep.mubr.f32.mxu0 0.0
        %3333 = vmatmul.mubr.f32.gmra.mrb[0].mxu0 %v2950
        %v3334 = vpop.f32.mrb[0].mxu0
        %v3335 = vadd.f32 0.0, %v3334
        %v3336 = vpop.f32.mrb[0].mxu0
        %v3337 = vadd.f32 0.0, %v3336
        %3338 = vdwg.mxu0
        %3339 = vmatprep.subr.mxu0 0.0
        %3340 = vmatpush1.msra.mxu0 %v525
        %3341 = vmatprep.subr.mxu0 0.0
        %3342 = vmatpush1.msra.mxu0 %v528
        %3343 = vmatprep.subr.mxu0 0.0
        %3344 = vmatpush1.msra.mxu0 %v531
        %3345 = vmatprep.subr.mxu0 0.0
        %3346 = vmatpush1.msra.mxu0 %v534
        %3347 = vmatprep.subr.mxu0 0.0
        %3348 = vmatpush1.msra.mxu0 %v537
        %3349 = vmatprep.subr.mxu0 0.0
        %3350 = vmatpush1.msra.mxu0 %v540
        %3351 = vmatprep.subr.mxu0 0.0
        %3352 = vmatpush1.msra.mxu0 %v543
        %3353 = vmatprep.subr.mxu0 0.0
        %3354 = vmatpush1.msra.mxu0 %v546
        %3355 = vmatprep.subr.mxu0 0.0
        %3356 = vmatpush1.msra.mxu0 %v549
        %3357 = vmatprep.subr.mxu0 0.0
        %3358 = vmatpush1.msra.mxu0 %v552
        %3359 = vmatprep.subr.mxu0 0.0
        %3360 = vmatpush1.msra.mxu0 %v555
        %3361 = vmatprep.subr.mxu0 0.0
        %3362 = vmatpush1.msra.mxu0 %v558
        %3363 = vmatprep.subr.mxu0 0.0
        %3364 = vmatpush1.msra.mxu0 %v561
        %3365 = vmatprep.subr.mxu0 0.0
        %3366 = vmatpush1.msra.mxu0 %v564
        %3367 = vmatprep.subr.mxu0 0.0
        %3368 = vmatpush1.msra.mxu0 %v567
        %3369 = vmatprep.subr.mxu0 0.0
        %3370 = vmatpush1.msra.mxu0 %v570
        %3371 = vmatprep.subr.mxu0 0.0
        %3372 = vmatpush1.msra.mxu0 0.0
        %3373 = vmatprep.subr.mxu0 0.0
        %3374 = vmatpush1.msra.mxu0 0.0
        %3375 = vmatprep.subr.mxu0 0.0
        %3376 = vmatpush1.msra.mxu0 0.0
        %3377 = vmatprep.subr.mxu0 0.0
        %3378 = vmatpush1.msra.mxu0 0.0
        %3379 = vmatprep.subr.mxu0 0.0
        %3380 = vmatpush1.msra.mxu0 0.0
        %3381 = vmatprep.subr.mxu0 0.0
        %3382 = vmatpush1.msra.mxu0 0.0
        %3383 = vmatprep.subr.mxu0 0.0
        %3384 = vmatpush1.msra.mxu0 0.0
        %3385 = vmatprep.subr.mxu0 0.0
        %3386 = vmatpush1.msra.mxu0 0.0
        %3387 = vmatprep.subr.mxu0 0.0
        %3388 = vmatpush1.msra.mxu0 0.0
        %3389 = vmatprep.subr.mxu0 0.0
        %3390 = vmatpush1.msra.mxu0 0.0
        %3391 = vmatprep.subr.mxu0 0.0
        %3392 = vmatpush1.msra.mxu0 0.0
        %3393 = vmatprep.subr.mxu0 0.0
        %3394 = vmatpush1.msra.mxu0 0.0
        %3395 = vmatprep.subr.mxu0 0.0
        %3396 = vmatpush1.msra.mxu0 0.0
        %3397 = vmatprep.subr.mxu0 0.0
        %3398 = vmatpush1.msra.mxu0 0.0
        %3399 = vmatprep.subr.mxu0 0.0
        %3400 = vmatpush1.msra.mxu0 0.0
        %3401 = vmatprep.subr.mxu0 0.0
        %3402 = vmatpush1.msra.mxu0 0.0
        %3403 = vmatprep.mubr.f32.mxu0 0.0
        %3404 = vmatmul.mubr.f32.gmra.mrb[0].mxu0 %v2950
        %v3405 = vpop.f32.mrb[0].mxu0
        %v3406 = vadd.f32 0.0, %v3405
        %v3407 = vpop.f32.mrb[0].mxu0
        %3408 = vdwg.mxu0
        %v3409 = vadd.f32 %v3265, %v3335
        %v3410 = vxor.u32 %v3409, 2147483648
        %v3411 = vmul.f32 %v3410, 1.442695
        %v3412 = vpow.pop %v3411
        %v3413 = vadd.f32 %v3412, 1.0
        %v3414 = vrcp.pop %v3413
        %v3415 = vmul.f32 1.0, %v3414
        %v3416 = vadd.f32 %v3266, %v3337
        %v3417 = vxor.u32 %v3416, 2147483648
        %v3418 = vmul.f32 %v3417, 1.442695
        %v3419 = vpow.pop %v3418
        %v3420 = vadd.f32 %v3419, 1.0
        %v3421 = vrcp.pop %v3420
        %v3422 = vmul.f32 1.0, %v3421
        %v3423 = vadd.f32 %v3406, %v998
        %v3424 = vmul.f32 %v3415, %v3423
        %v3425 = vadd.f32 %v3267, %v3424
        %v3426 = vtanh.pop %v3425
        %v3427 = vsub.f32 1.0, %v3422
        %v3428 = vmul.f32 %v3427, %v3426
        %v3429 = vmul.f32 %v3422, %v2950
        %v3430 = vadd.f32 %v3428, %v3429
        %3431 = vmatprep.subr.mxu0 %v573
        %3432 = vmatpush1.msra.mxu0 %v572
        %3433 = vmatprep.subr.mxu0 %v576
        %3434 = vmatpush1.msra.mxu0 %v575
        %3435 = vmatprep.subr.mxu0 %v579
        %3436 = vmatpush1.msra.mxu0 %v578
        %3437 = vmatprep.subr.mxu0 %v582
        %3438 = vmatpush1.msra.mxu0 %v581
        %3439 = vmatprep.subr.mxu0 %v585
        %3440 = vmatpush1.msra.mxu0 %v584
        %3441 = vmatprep.subr.mxu0 %v588
        %3442 = vmatpush1.msra.mxu0 %v587
        %3443 = vmatprep.subr.mxu0 %v591
        %3444 = vmatpush1.msra.mxu0 %v590
        %3445 = vmatprep.subr.mxu0 %v594
        %3446 = vmatpush1.msra.mxu0 %v593
        %3447 = vmatprep.subr.mxu0 %v597
        %3448 = vmatpush1.msra.mxu0 %v596
        %3449 = vmatprep.subr.mxu0 %v600
        %3450 = vmatpush1.msra.mxu0 %v599
        %3451 = vmatprep.subr.mxu0 %v603
        %3452 = vmatpush1.msra.mxu0 %v602
        %3453 = vmatprep.subr.mxu0 %v606
        %3454 = vmatpush1.msra.mxu0 %v605
        %3455 = vmatprep.subr.mxu0 %v609
        %3456 = vmatpush1.msra.mxu0 %v608
        %3457 = vmatprep.subr.mxu0 %v612
        %3458 = vmatpush1.msra.mxu0 %v611
        %3459 = vmatprep.subr.mxu0 %v615
        %3460 = vmatpush1.msra.mxu0 %v614
        %3461 = vmatprep.subr.mxu0 %v618
        %3462 = vmatpush1.msra.mxu0 %v617
        %3463 = vmatprep.subr.mxu0 0.0
        %3464 = vmatpush1.msra.mxu0 0.0
        %3465 = vmatprep.subr.mxu0 0.0
        %3466 = vmatpush1.msra.mxu0 0.0
        %3467 = vmatprep.subr.mxu0 0.0
        %3468 = vmatpush1.msra.mxu0 0.0
        %3469 = vmatprep.subr.mxu0 0.0
        %3470 = vmatpush1.msra.mxu0 0.0
        %3471 = vmatprep.subr.mxu0 0.0
        %3472 = vmatpush1.msra.mxu0 0.0
        %3473 = vmatprep.subr.mxu0 0.0
        %3474 = vmatpush1.msra.mxu0 0.0
        %3475 = vmatprep.subr.mxu0 0.0
        %3476 = vmatpush1.msra.mxu0 0.0
        %3477 = vmatprep.subr.mxu0 0.0
        %3478 = vmatpush1.msra.mxu0 0.0
        %3479 = vmatprep.subr.mxu0 0.0
        %3480 = vmatpush1.msra.mxu0 0.0
        %3481 = vmatprep.subr.mxu0 0.0
        %3482 = vmatpush1.msra.mxu0 0.0
        %3483 = vmatprep.subr.mxu0 0.0
        %3484 = vmatpush1.msra.mxu0 0.0
        %3485 = vmatprep.subr.mxu0 0.0
        %3486 = vmatpush1.msra.mxu0 0.0
        %3487 = vmatprep.subr.mxu0 0.0
        %3488 = vmatpush1.msra.mxu0 0.0
        %3489 = vmatprep.subr.mxu0 0.0
        %3490 = vmatpush1.msra.mxu0 0.0
        %3491 = vmatprep.subr.mxu0 0.0
        %3492 = vmatpush1.msra.mxu0 0.0
        %3493 = vmatprep.subr.mxu0 0.0
        %3494 = vmatpush1.msra.mxu0 0.0
        %3495 = vmatprep.mubr.f32.mxu0 0.0
        %3496 = vmatmul.mubr.f32.gmra.mrb[0].mxu0 %v3430
        %v3497 = vpop.f32.mrb[0].mxu0
        %v3498 = vadd.f32 0.0, %v3497
        %v3499 = vpop.f32.mrb[0].mxu0
        %v3500 = vadd.f32 0.0, %v3499
        %3501 = vdwg.mxu0
        %3502 = vmatprep.subr.mxu0 0.0
        %3503 = vmatpush1.msra.mxu0 %v574
        %3504 = vmatprep.subr.mxu0 0.0
        %3505 = vmatpush1.msra.mxu0 %v577
        %3506 = vmatprep.subr.mxu0 0.0
        %3507 = vmatpush1.msra.mxu0 %v580
        %3508 = vmatprep.subr.mxu0 0.0
        %3509 = vmatpush1.msra.mxu0 %v583
        %3510 = vmatprep.subr.mxu0 0.0
        %3511 = vmatpush1.msra.mxu0 %v586
        %3512 = vmatprep.subr.mxu0 0.0
        %3513 = vmatpush1.msra.mxu0 %v589
        %3514 = vmatprep.subr.mxu0 0.0
        %3515 = vmatpush1.msra.mxu0 %v592
        %3516 = vmatprep.subr.mxu0 0.0
        %3517 = vmatpush1.msra.mxu0 %v595
        %3518 = vmatprep.subr.mxu0 0.0
        %3519 = vmatpush1.msra.mxu0 %v598
        %3520 = vmatprep.subr.mxu0 0.0
        %3521 = vmatpush1.msra.mxu0 %v601
        %3522 = vmatprep.subr.mxu0 0.0
        %3523 = vmatpush1.msra.mxu0 %v604
        %3524 = vmatprep.subr.mxu0 0.0
        %3525 = vmatpush1.msra.mxu0 %v607
        %3526 = vmatprep.subr.mxu0 0.0
        %3527 = vmatpush1.msra.mxu0 %v610
        %3528 = vmatprep.subr.mxu0 0.0
        %3529 = vmatpush1.msra.mxu0 %v613
        %3530 = vmatprep.subr.mxu0 0.0
        %3531 = vmatpush1.msra.mxu0 %v616
        %3532 = vmatprep.subr.mxu0 0.0
        %3533 = vmatpush1.msra.mxu0 %v619
        %3534 = vmatprep.subr.mxu0 0.0
        %3535 = vmatpush1.msra.mxu0 0.0
        %3536 = vmatprep.subr.mxu0 0.0
        %3537 = vmatpush1.msra.mxu0 0.0
        %3538 = vmatprep.subr.mxu0 0.0
        %3539 = vmatpush1.msra.mxu0 0.0
        %3540 = vmatprep.subr.mxu0 0.0
        %3541 = vmatpush1.msra.mxu0 0.0
        %3542 = vmatprep.subr.mxu0 0.0
        %3543 = vmatpush1.msra.mxu0 0.0
        %3544 = vmatprep.subr.mxu0 0.0
        %3545 = vmatpush1.msra.mxu0 0.0
        %3546 = vmatprep.subr.mxu0 0.0
        %3547 = vmatpush1.msra.mxu0 0.0
        %3548 = vmatprep.subr.mxu0 0.0
        %3549 = vmatpush1.msra.mxu0 0.0
        %3550 = vmatprep.subr.mxu0 0.0
        %3551 = vmatpush1.msra.mxu0 0.0
        %3552 = vmatprep.subr.mxu0 0.0
        %3553 = vmatpush1.msra.mxu0 0.0
        %3554 = vmatprep.subr.mxu0 0.0
        %3555 = vmatpush1.msra.mxu0 0.0
        %3556 = vmatprep.subr.mxu0 0.0
        %3557 = vmatpush1.msra.mxu0 0.0
        %3558 = vmatprep.subr.mxu0 0.0
        %3559 = vmatpush1.msra.mxu0 0.0
        %3560 = vmatprep.subr.mxu0 0.0
        %3561 = vmatpush1.msra.mxu0 0.0
        %3562 = vmatprep.subr.mxu0 0.0
        %3563 = vmatpush1.msra.mxu0 0.0
        %3564 = vmatprep.subr.mxu0 0.0
        %3565 = vmatpush1.msra.mxu0 0.0
        %3566 = vmatprep.mubr.f32.mxu0 0.0
        %3567 = vmatmul.mubr.f32.gmra.mrb[0].mxu0 %v3430
        %v3568 = vpop.f32.mrb[0].mxu0
        %v3569 = vadd.f32 0.0, %v3568
        %v3570 = vpop.f32.mrb[0].mxu0
        %3571 = vdwg.mxu0
        %v3572 = vadd.f32 %v3498, %v3185
        %v3573 = vadd.f32 %v3500, %v3187
        %v3574 = vadd.f32 %v3572, %v1155
        %v3575 = vadd.f32 %v3573, %v1159
        %v3576 = vxor.u32 %v3574, 2147483648
        %v3577 = vxor.u32 %v3575, 2147483648
        %v3578 = vmul.f32 %v3576, 1.442695
        %v3579 = vpow.pop %v3578
        %v3580 = vmul.f32 %v3577, 1.442695
        %v3581 = vpow.pop %v3580
        %v3582 = vadd.f32 %v3579, 1.0
        %v3583 = vadd.f32 %v3581, 1.0
        %v3584 = vrcp.pop %v3582
        %v3585 = vmul.f32 1.0, %v3584
        %v3586 = vrcp.pop %v3583
        %v3587 = vmul.f32 1.0, %v3586
        %v3588 = vadd.f32 %v3569, %v1180
        %v3589 = vadd.f32 %v3256, %v1187
        %v3590 = vmul.f32 %v3585, %v3589
        %v3591 = vadd.f32 %v3588, %v3590
        %v3592 = vtanh.pop %v3591
        %v3593 = vsub.f32 1.0, %v3587
        %v3594 = vmul.f32 %v3593, %v3592
        %v3595 = vmul.f32 %v3587, %v3116
        %v3596 = vadd.f32 %v3594, %v3595
        %v3597 = vadd.f32 %v3117, %v3596
        %3598 = vmatprep.subr.mxu0 %v621
        %3599 = vmatpush1.msra.mxu0 %v620
        %3600 = vmatprep.subr.mxu0 %v624
        %3601 = vmatpush1.msra.mxu0 %v623
        %3602 = vmatprep.subr.mxu0 %v627
        %3603 = vmatpush1.msra.mxu0 %v626
        %3604 = vmatprep.subr.mxu0 %v630
        %3605 = vmatpush1.msra.mxu0 %v629
        %3606 = vmatprep.subr.mxu0 %v633
        %3607 = vmatpush1.msra.mxu0 %v632
        %3608 = vmatprep.subr.mxu0 %v636
        %3609 = vmatpush1.msra.mxu0 %v635
        %3610 = vmatprep.subr.mxu0 %v639
        %3611 = vmatpush1.msra.mxu0 %v638
        %3612 = vmatprep.subr.mxu0 %v642
        %3613 = vmatpush1.msra.mxu0 %v641
        %3614 = vmatprep.subr.mxu0 %v645
        %3615 = vmatpush1.msra.mxu0 %v644
        %3616 = vmatprep.subr.mxu0 %v648
        %3617 = vmatpush1.msra.mxu0 %v647
        %3618 = vmatprep.subr.mxu0 %v651
        %3619 = vmatpush1.msra.mxu0 %v650
        %3620 = vmatprep.subr.mxu0 %v654
        %3621 = vmatpush1.msra.mxu0 %v653
        %3622 = vmatprep.subr.mxu0 %v657
        %3623 = vmatpush1.msra.mxu0 %v656
        %3624 = vmatprep.subr.mxu0 %v660
        %3625 = vmatpush1.msra.mxu0 %v659
        %3626 = vmatprep.subr.mxu0 %v663
        %3627 = vmatpush1.msra.mxu0 %v662
        %3628 = vmatprep.subr.mxu0 %v666
        %3629 = vmatpush1.msra.mxu0 %v665
        %3630 = vmatprep.subr.mxu0 0.0
        %3631 = vmatpush1.msra.mxu0 0.0
        %3632 = vmatprep.subr.mxu0 0.0
        %3633 = vmatpush1.msra.mxu0 0.0
        %3634 = vmatprep.subr.mxu0 0.0
        %3635 = vmatpush1.msra.mxu0 0.0
        %3636 = vmatprep.subr.mxu0 0.0
        %3637 = vmatpush1.msra.mxu0 0.0
        %3638 = vmatprep.subr.mxu0 0.0
        %3639 = vmatpush1.msra.mxu0 0.0
        %3640 = vmatprep.subr.mxu0 0.0
        %3641 = vmatpush1.msra.mxu0 0.0
        %3642 = vmatprep.subr.mxu0 0.0
        %3643 = vmatpush1.msra.mxu0 0.0
        %3644 = vmatprep.subr.mxu0 0.0
        %3645 = vmatpush1.msra.mxu0 0.0
        %3646 = vmatprep.subr.mxu0 0.0
        %3647 = vmatpush1.msra.mxu0 0.0
        %3648 = vmatprep.subr.mxu0 0.0
        %3649 = vmatpush1.msra.mxu0 0.0
        %3650 = vmatprep.subr.mxu0 0.0
        %3651 = vmatpush1.msra.mxu0 0.0
        %3652 = vmatprep.subr.mxu0 0.0
        %3653 = vmatpush1.msra.mxu0 0.0
        %3654 = vmatprep.subr.mxu0 0.0
        %3655 = vmatpush1.msra.mxu0 0.0
        %3656 = vmatprep.subr.mxu0 0.0
        %3657 = vmatpush1.msra.mxu0 0.0
        %3658 = vmatprep.subr.mxu0 0.0
        %3659 = vmatpush1.msra.mxu0 0.0
        %3660 = vmatprep.subr.mxu0 0.0
        %3661 = vmatpush1.msra.mxu0 0.0
        %3662 = vmatprep.mubr.f32.mxu0 0.0
        %3663 = vmatmul.mubr.f32.gmra.mrb[0].mxu0 %v3596
        %v3664 = vpop.f32.mrb[0].mxu0
        %v3665 = vadd.f32 0.0, %v3664
        %v3666 = vpop.f32.mrb[0].mxu0
        %v3667 = vadd.f32 0.0, %v3666
        %3668 = vdwg.mxu0
        %3669 = vmatprep.subr.mxu0 0.0
        %3670 = vmatpush1.msra.mxu0 %v622
        %3671 = vmatprep.subr.mxu0 0.0
        %3672 = vmatpush1.msra.mxu0 %v625
        %3673 = vmatprep.subr.mxu0 0.0
        %3674 = vmatpush1.msra.mxu0 %v628
        %3675 = vmatprep.subr.mxu0 0.0
        %3676 = vmatpush1.msra.mxu0 %v631
        %3677 = vmatprep.subr.mxu0 0.0
        %3678 = vmatpush1.msra.mxu0 %v634
        %3679 = vmatprep.subr.mxu0 0.0
        %3680 = vmatpush1.msra.mxu0 %v637
        %3681 = vmatprep.subr.mxu0 0.0
        %3682 = vmatpush1.msra.mxu0 %v640
        %3683 = vmatprep.subr.mxu0 0.0
        %3684 = vmatpush1.msra.mxu0 %v643
        %3685 = vmatprep.subr.mxu0 0.0
        %3686 = vmatpush1.msra.mxu0 %v646
        %3687 = vmatprep.subr.mxu0 0.0
        %3688 = vmatpush1.msra.mxu0 %v649
        %3689 = vmatprep.subr.mxu0 0.0
        %3690 = vmatpush1.msra.mxu0 %v652
        %3691 = vmatprep.subr.mxu0 0.0
        %3692 = vmatpush1.msra.mxu0 %v655
        %3693 = vmatprep.subr.mxu0 0.0
        %3694 = vmatpush1.msra.mxu0 %v658
        %3695 = vmatprep.subr.mxu0 0.0
        %3696 = vmatpush1.msra.mxu0 %v661
        %3697 = vmatprep.subr.mxu0 0.0
        %3698 = vmatpush1.msra.mxu0 %v664
        %3699 = vmatprep.subr.mxu0 0.0
        %3700 = vmatpush1.msra.mxu0 %v667
        %3701 = vmatprep.subr.mxu0 0.0
        %3702 = vmatpush1.msra.mxu0 0.0
        %3703 = vmatprep.subr.mxu0 0.0
        %3704 = vmatpush1.msra.mxu0 0.0
        %3705 = vmatprep.subr.mxu0 0.0
        %3706 = vmatpush1.msra.mxu0 0.0
        %3707 = vmatprep.subr.mxu0 0.0
        %3708 = vmatpush1.msra.mxu0 0.0
        %3709 = vmatprep.subr.mxu0 0.0
        %3710 = vmatpush1.msra.mxu0 0.0
        %3711 = vmatprep.subr.mxu0 0.0
        %3712 = vmatpush1.msra.mxu0 0.0
        %3713 = vmatprep.subr.mxu0 0.0
        %3714 = vmatpush1.msra.mxu0 0.0
        %3715 = vmatprep.subr.mxu0 0.0
        %3716 = vmatpush1.msra.mxu0 0.0
        %3717 = vmatprep.subr.mxu0 0.0
        %3718 = vmatpush1.msra.mxu0 0.0
        %3719 = vmatprep.subr.mxu0 0.0
        %3720 = vmatpush1.msra.mxu0 0.0
        %3721 = vmatprep.subr.mxu0 0.0
        %3722 = vmatpush1.msra.mxu0 0.0
        %3723 = vmatprep.subr.mxu0 0.0
        %3724 = vmatpush1.msra.mxu0 0.0
        %3725 = vmatprep.subr.mxu0 0.0
        %3726 = vmatpush1.msra.mxu0 0.0
        %3727 = vmatprep.subr.mxu0 0.0
        %3728 = vmatpush1.msra.mxu0 0.0
        %3729 = vmatprep.subr.mxu0 0.0
        %3730 = vmatpush1.msra.mxu0 0.0
        %3731 = vmatprep.subr.mxu0 0.0
        %3732 = vmatpush1.msra.mxu0 0.0
        %3733 = vmatprep.mubr.f32.mxu0 0.0
        %3734 = vmatmul.mubr.f32.gmra.mrb[0].mxu0 %v3596
        %v3735 = vpop.f32.mrb[0].mxu0
        %v3736 = vadd.f32 0.0, %v3735
        %v3737 = vpop.f32.mrb[0].mxu0
        %3738 = vdwg.mxu0
        %s3739 = scalar_lea.vmem %s456, 72 [#allocation5]
        %v3740 = vld [vmem:[%s3739] sm:$0xff]
        %v3741 = vld [vmem:[%s3739 + $0x8] sm:$0xf]
        %v3742 = vunpack.c.l.bf16 %v3740
        %v3743 = vunpack.c.h.bf16 %v3740
        %v3744 = vunpack.c.l.bf16 %v3741
        %v3745 = vadd.f32 %v3742, %v824
        %v3746 = vadd.f32 %v3743, %v828
        %v3747 = vadd.f32 %v3744, %v832
        %3748 = vmatprep.subr.mxu0 %v524
        %3749 = vmatpush1.msra.mxu0 %v523
        %3750 = vmatprep.subr.mxu0 %v527
        %3751 = vmatpush1.msra.mxu0 %v526
        %3752 = vmatprep.subr.mxu0 %v530
        %3753 = vmatpush1.msra.mxu0 %v529
        %3754 = vmatprep.subr.mxu0 %v533
        %3755 = vmatpush1.msra.mxu0 %v532
        %3756 = vmatprep.subr.mxu0 %v536
        %3757 = vmatpush1.msra.mxu0 %v535
        %3758 = vmatprep.subr.mxu0 %v539
        %3759 = vmatpush1.msra.mxu0 %v538
        %3760 = vmatprep.subr.mxu0 %v542
        %3761 = vmatpush1.msra.mxu0 %v541
        %3762 = vmatprep.subr.mxu0 %v545
        %3763 = vmatpush1.msra.mxu0 %v544
        %3764 = vmatprep.subr.mxu0 %v548
        %3765 = vmatpush1.msra.mxu0 %v547
        %3766 = vmatprep.subr.mxu0 %v551
        %3767 = vmatpush1.msra.mxu0 %v550
        %3768 = vmatprep.subr.mxu0 %v554
        %3769 = vmatpush1.msra.mxu0 %v553
        %3770 = vmatprep.subr.mxu0 %v557
        %3771 = vmatpush1.msra.mxu0 %v556
        %3772 = vmatprep.subr.mxu0 %v560
        %3773 = vmatpush1.msra.mxu0 %v559
        %3774 = vmatprep.subr.mxu0 %v563
        %3775 = vmatpush1.msra.mxu0 %v562
        %3776 = vmatprep.subr.mxu0 %v566
        %3777 = vmatpush1.msra.mxu0 %v565
        %3778 = vmatprep.subr.mxu0 %v569
        %3779 = vmatpush1.msra.mxu0 %v568
        %3780 = vmatprep.subr.mxu0 0.0
        %3781 = vmatpush1.msra.mxu0 0.0
        %3782 = vmatprep.subr.mxu0 0.0
        %3783 = vmatpush1.msra.mxu0 0.0
        %3784 = vmatprep.subr.mxu0 0.0
        %3785 = vmatpush1.msra.mxu0 0.0
        %3786 = vmatprep.subr.mxu0 0.0
        %3787 = vmatpush1.msra.mxu0 0.0
        %3788 = vmatprep.subr.mxu0 0.0
        %3789 = vmatpush1.msra.mxu0 0.0
        %3790 = vmatprep.subr.mxu0 0.0
        %3791 = vmatpush1.msra.mxu0 0.0
        %3792 = vmatprep.subr.mxu0 0.0
        %3793 = vmatpush1.msra.mxu0 0.0
        %3794 = vmatprep.subr.mxu0 0.0
        %3795 = vmatpush1.msra.mxu0 0.0
        %3796 = vmatprep.subr.mxu0 0.0
        %3797 = vmatpush1.msra.mxu0 0.0
        %3798 = vmatprep.subr.mxu0 0.0
        %3799 = vmatpush1.msra.mxu0 0.0
        %3800 = vmatprep.subr.mxu0 0.0
        %3801 = vmatpush1.msra.mxu0 0.0
        %3802 = vmatprep.subr.mxu0 0.0
        %3803 = vmatpush1.msra.mxu0 0.0
        %3804 = vmatprep.subr.mxu0 0.0
        %3805 = vmatpush1.msra.mxu0 0.0
        %3806 = vmatprep.subr.mxu0 0.0
        %3807 = vmatpush1.msra.mxu0 0.0
        %3808 = vmatprep.subr.mxu0 0.0
        %3809 = vmatpush1.msra.mxu0 0.0
        %3810 = vmatprep.subr.mxu0 0.0
        %3811 = vmatpush1.msra.mxu0 0.0
        %3812 = vmatprep.mubr.f32.mxu0 0.0
        %3813 = vmatmul.mubr.f32.gmra.mrb[0].mxu0 %v3430
        %v3814 = vpop.f32.mrb[0].mxu0
        %v3815 = vadd.f32 0.0, %v3814
        %v3816 = vpop.f32.mrb[0].mxu0
        %v3817 = vadd.f32 0.0, %v3816
        %3818 = vdwg.mxu0
        %3819 = vmatprep.subr.mxu0 0.0
        %3820 = vmatpush1.msra.mxu0 %v525
        %3821 = vmatprep.subr.mxu0 0.0
        %3822 = vmatpush1.msra.mxu0 %v528
        %3823 = vmatprep.subr.mxu0 0.0
        %3824 = vmatpush1.msra.mxu0 %v531
        %3825 = vmatprep.subr.mxu0 0.0
        %3826 = vmatpush1.msra.mxu0 %v534
        %3827 = vmatprep.subr.mxu0 0.0
        %3828 = vmatpush1.msra.mxu0 %v537
        %3829 = vmatprep.subr.mxu0 0.0
        %3830 = vmatpush1.msra.mxu0 %v540
        %3831 = vmatprep.subr.mxu0 0.0
        %3832 = vmatpush1.msra.mxu0 %v543
        %3833 = vmatprep.subr.mxu0 0.0
        %3834 = vmatpush1.msra.mxu0 %v546
        %3835 = vmatprep.subr.mxu0 0.0
        %3836 = vmatpush1.msra.mxu0 %v549
        %3837 = vmatprep.subr.mxu0 0.0
        %3838 = vmatpush1.msra.mxu0 %v552
        %3839 = vmatprep.subr.mxu0 0.0
        %3840 = vmatpush1.msra.mxu0 %v555
        %3841 = vmatprep.subr.mxu0 0.0
        %3842 = vmatpush1.msra.mxu0 %v558
        %3843 = vmatprep.subr.mxu0 0.0
        %3844 = vmatpush1.msra.mxu0 %v561
        %3845 = vmatprep.subr.mxu0 0.0
        %3846 = vmatpush1.msra.mxu0 %v564
        %3847 = vmatprep.subr.mxu0 0.0
        %3848 = vmatpush1.msra.mxu0 %v567
        %3849 = vmatprep.subr.mxu0 0.0
        %3850 = vmatpush1.msra.mxu0 %v570
        %3851 = vmatprep.subr.mxu0 0.0
        %3852 = vmatpush1.msra.mxu0 0.0
        %3853 = vmatprep.subr.mxu0 0.0
        %3854 = vmatpush1.msra.mxu0 0.0
        %3855 = vmatprep.subr.mxu0 0.0
        %3856 = vmatpush1.msra.mxu0 0.0
        %3857 = vmatprep.subr.mxu0 0.0
        %3858 = vmatpush1.msra.mxu0 0.0
        %3859 = vmatprep.subr.mxu0 0.0
        %3860 = vmatpush1.msra.mxu0 0.0
        %3861 = vmatprep.subr.mxu0 0.0
        %3862 = vmatpush1.msra.mxu0 0.0
        %3863 = vmatprep.subr.mxu0 0.0
        %3864 = vmatpush1.msra.mxu0 0.0
        %3865 = vmatprep.subr.mxu0 0.0
        %3866 = vmatpush1.msra.mxu0 0.0
        %3867 = vmatprep.subr.mxu0 0.0
        %3868 = vmatpush1.msra.mxu0 0.0
        %3869 = vmatprep.subr.mxu0 0.0
        %3870 = vmatpush1.msra.mxu0 0.0
        %3871 = vmatprep.subr.mxu0 0.0
        %3872 = vmatpush1.msra.mxu0 0.0
        %3873 = vmatprep.subr.mxu0 0.0
        %3874 = vmatpush1.msra.mxu0 0.0
        %3875 = vmatprep.subr.mxu0 0.0
        %3876 = vmatpush1.msra.mxu0 0.0
        %3877 = vmatprep.subr.mxu0 0.0
        %3878 = vmatpush1.msra.mxu0 0.0
        %3879 = vmatprep.subr.mxu0 0.0
        %3880 = vmatpush1.msra.mxu0 0.0
        %3881 = vmatprep.subr.mxu0 0.0
        %3882 = vmatpush1.msra.mxu0 0.0
        %3883 = vmatprep.mubr.f32.mxu0 0.0
        %3884 = vmatmul.mubr.f32.gmra.mrb[0].mxu0 %v3430
        %v3885 = vpop.f32.mrb[0].mxu0
        %v3886 = vadd.f32 0.0, %v3885
        %v3887 = vpop.f32.mrb[0].mxu0
        %3888 = vdwg.mxu0
        %v3889 = vadd.f32 %v3745, %v3815
        %v3890 = vxor.u32 %v3889, 2147483648
        %v3891 = vmul.f32 %v3890, 1.442695
        %v3892 = vpow.pop %v3891
        %v3893 = vadd.f32 %v3892, 1.0
        %v3894 = vrcp.pop %v3893
        %v3895 = vmul.f32 1.0, %v3894
        %v3896 = vadd.f32 %v3746, %v3817
        %v3897 = vxor.u32 %v3896, 2147483648
        %v3898 = vmul.f32 %v3897, 1.442695
        %v3899 = vpow.pop %v3898
        %v3900 = vadd.f32 %v3899, 1.0
        %v3901 = vrcp.pop %v3900
        %v3902 = vmul.f32 1.0, %v3901
        %v3903 = vadd.f32 %v3886, %v998
        %v3904 = vmul.f32 %v3895, %v3903
        %v3905 = vadd.f32 %v3747, %v3904
        %v3906 = vtanh.pop %v3905
        %v3907 = vsub.f32 1.0, %v3902
        %v3908 = vmul.f32 %v3907, %v3906
        %v3909 = vmul.f32 %v3902, %v3430
        %v3910 = vadd.f32 %v3908, %v3909
        %3911 = vmatprep.subr.mxu0 %v573
        %3912 = vmatpush1.msra.mxu0 %v572
        %3913 = vmatprep.subr.mxu0 %v576
        %3914 = vmatpush1.msra.mxu0 %v575
        %3915 = vmatprep.subr.mxu0 %v579
        %3916 = vmatpush1.msra.mxu0 %v578
        %3917 = vmatprep.subr.mxu0 %v582
        %3918 = vmatpush1.msra.mxu0 %v581
        %3919 = vmatprep.subr.mxu0 %v585
        %3920 = vmatpush1.msra.mxu0 %v584
        %3921 = vmatprep.subr.mxu0 %v588
        %3922 = vmatpush1.msra.mxu0 %v587
        %3923 = vmatprep.subr.mxu0 %v591
        %3924 = vmatpush1.msra.mxu0 %v590
        %3925 = vmatprep.subr.mxu0 %v594
        %3926 = vmatpush1.msra.mxu0 %v593
        %3927 = vmatprep.subr.mxu0 %v597
        %3928 = vmatpush1.msra.mxu0 %v596
        %3929 = vmatprep.subr.mxu0 %v600
        %3930 = vmatpush1.msra.mxu0 %v599
        %3931 = vmatprep.subr.mxu0 %v603
        %3932 = vmatpush1.msra.mxu0 %v602
        %3933 = vmatprep.subr.mxu0 %v606
        %3934 = vmatpush1.msra.mxu0 %v605
        %3935 = vmatprep.subr.mxu0 %v609
        %3936 = vmatpush1.msra.mxu0 %v608
        %3937 = vmatprep.subr.mxu0 %v612
        %3938 = vmatpush1.msra.mxu0 %v611
        %3939 = vmatprep.subr.mxu0 %v615
        %3940 = vmatpush1.msra.mxu0 %v614
        %3941 = vmatprep.subr.mxu0 %v618
        %3942 = vmatpush1.msra.mxu0 %v617
        %3943 = vmatprep.subr.mxu0 0.0
        %3944 = vmatpush1.msra.mxu0 0.0
        %3945 = vmatprep.subr.mxu0 0.0
        %3946 = vmatpush1.msra.mxu0 0.0
        %3947 = vmatprep.subr.mxu0 0.0
        %3948 = vmatpush1.msra.mxu0 0.0
        %3949 = vmatprep.subr.mxu0 0.0
        %3950 = vmatpush1.msra.mxu0 0.0
        %3951 = vmatprep.subr.mxu0 0.0
        %3952 = vmatpush1.msra.mxu0 0.0
        %3953 = vmatprep.subr.mxu0 0.0
        %3954 = vmatpush1.msra.mxu0 0.0
        %3955 = vmatprep.subr.mxu0 0.0
        %3956 = vmatpush1.msra.mxu0 0.0
        %3957 = vmatprep.subr.mxu0 0.0
        %3958 = vmatpush1.msra.mxu0 0.0
        %3959 = vmatprep.subr.mxu0 0.0
        %3960 = vmatpush1.msra.mxu0 0.0
        %3961 = vmatprep.subr.mxu0 0.0
        %3962 = vmatpush1.msra.mxu0 0.0
        %3963 = vmatprep.subr.mxu0 0.0
        %3964 = vmatpush1.msra.mxu0 0.0
        %3965 = vmatprep.subr.mxu0 0.0
        %3966 = vmatpush1.msra.mxu0 0.0
        %3967 = vmatprep.subr.mxu0 0.0
        %3968 = vmatpush1.msra.mxu0 0.0
        %3969 = vmatprep.subr.mxu0 0.0
        %3970 = vmatpush1.msra.mxu0 0.0
        %3971 = vmatprep.subr.mxu0 0.0
        %3972 = vmatpush1.msra.mxu0 0.0
        %3973 = vmatprep.subr.mxu0 0.0
        %3974 = vmatpush1.msra.mxu0 0.0
        %3975 = vmatprep.mubr.f32.mxu0 0.0
        %3976 = vmatmul.mubr.f32.gmra.mrb[0].mxu0 %v3910
        %v3977 = vpop.f32.mrb[0].mxu0
        %v3978 = vadd.f32 0.0, %v3977
        %v3979 = vpop.f32.mrb[0].mxu0
        %v3980 = vadd.f32 0.0, %v3979
        %3981 = vdwg.mxu0
        %3982 = vmatprep.subr.mxu0 0.0
        %3983 = vmatpush1.msra.mxu0 %v574
        %3984 = vmatprep.subr.mxu0 0.0
        %3985 = vmatpush1.msra.mxu0 %v577
        %3986 = vmatprep.subr.mxu0 0.0
        %3987 = vmatpush1.msra.mxu0 %v580
        %3988 = vmatprep.subr.mxu0 0.0
        %3989 = vmatpush1.msra.mxu0 %v583
        %3990 = vmatprep.subr.mxu0 0.0
        %3991 = vmatpush1.msra.mxu0 %v586
        %3992 = vmatprep.subr.mxu0 0.0
        %3993 = vmatpush1.msra.mxu0 %v589
        %3994 = vmatprep.subr.mxu0 0.0
        %3995 = vmatpush1.msra.mxu0 %v592
        %3996 = vmatprep.subr.mxu0 0.0
        %3997 = vmatpush1.msra.mxu0 %v595
        %3998 = vmatprep.subr.mxu0 0.0
        %3999 = vmatpush1.msra.mxu0 %v598
        %4000 = vmatprep.subr.mxu0 0.0
        %4001 = vmatpush1.msra.mxu0 %v601
        %4002 = vmatprep.subr.mxu0 0.0
        %4003 = vmatpush1.msra.mxu0 %v604
        %4004 = vmatprep.subr.mxu0 0.0
        %4005 = vmatpush1.msra.mxu0 %v607
        %4006 = vmatprep.subr.mxu0 0.0
        %4007 = vmatpush1.msra.mxu0 %v610
        %4008 = vmatprep.subr.mxu0 0.0
        %4009 = vmatpush1.msra.mxu0 %v613
        %4010 = vmatprep.subr.mxu0 0.0
        %4011 = vmatpush1.msra.mxu0 %v616
        %4012 = vmatprep.subr.mxu0 0.0
        %4013 = vmatpush1.msra.mxu0 %v619
        %4014 = vmatprep.subr.mxu0 0.0
        %4015 = vmatpush1.msra.mxu0 0.0
        %4016 = vmatprep.subr.mxu0 0.0
        %4017 = vmatpush1.msra.mxu0 0.0
        %4018 = vmatprep.subr.mxu0 0.0
        %4019 = vmatpush1.msra.mxu0 0.0
        %4020 = vmatprep.subr.mxu0 0.0
        %4021 = vmatpush1.msra.mxu0 0.0
        %4022 = vmatprep.subr.mxu0 0.0
        %4023 = vmatpush1.msra.mxu0 0.0
        %4024 = vmatprep.subr.mxu0 0.0
        %4025 = vmatpush1.msra.mxu0 0.0
        %4026 = vmatprep.subr.mxu0 0.0
        %4027 = vmatpush1.msra.mxu0 0.0
        %4028 = vmatprep.subr.mxu0 0.0
        %4029 = vmatpush1.msra.mxu0 0.0
        %4030 = vmatprep.subr.mxu0 0.0
        %4031 = vmatpush1.msra.mxu0 0.0
        %4032 = vmatprep.subr.mxu0 0.0
        %4033 = vmatpush1.msra.mxu0 0.0
        %4034 = vmatprep.subr.mxu0 0.0
        %4035 = vmatpush1.msra.mxu0 0.0
        %4036 = vmatprep.subr.mxu0 0.0
        %4037 = vmatpush1.msra.mxu0 0.0
        %4038 = vmatprep.subr.mxu0 0.0
        %4039 = vmatpush1.msra.mxu0 0.0
        %4040 = vmatprep.subr.mxu0 0.0
        %4041 = vmatpush1.msra.mxu0 0.0
        %4042 = vmatprep.subr.mxu0 0.0
        %4043 = vmatpush1.msra.mxu0 0.0
        %4044 = vmatprep.subr.mxu0 0.0
        %4045 = vmatpush1.msra.mxu0 0.0
        %4046 = vmatprep.mubr.f32.mxu0 0.0
        %4047 = vmatmul.mubr.f32.gmra.mrb[0].mxu0 %v3910
        %v4048 = vpop.f32.mrb[0].mxu0
        %v4049 = vadd.f32 0.0, %v4048
        %v4050 = vpop.f32.mrb[0].mxu0
        %4051 = vdwg.mxu0
        %v4052 = vadd.f32 %v3978, %v3665
        %v4053 = vadd.f32 %v3980, %v3667
        %v4054 = vadd.f32 %v4052, %v1155
        %v4055 = vadd.f32 %v4053, %v1159
        %v4056 = vxor.u32 %v4054, 2147483648
        %v4057 = vxor.u32 %v4055, 2147483648
        %v4058 = vmul.f32 %v4056, 1.442695
        %v4059 = vpow.pop %v4058
        %v4060 = vmul.f32 %v4057, 1.442695
        %v4061 = vpow.pop %v4060
        %v4062 = vadd.f32 %v4059, 1.0
        %v4063 = vadd.f32 %v4061, 1.0
        %v4064 = vrcp.pop %v4062
        %v4065 = vmul.f32 1.0, %v4064
        %v4066 = vrcp.pop %v4063
        %v4067 = vmul.f32 1.0, %v4066
        %v4068 = vadd.f32 %v4049, %v1180
        %v4069 = vadd.f32 %v3736, %v1187
        %v4070 = vmul.f32 %v4065, %v4069
        %v4071 = vadd.f32 %v4068, %v4070
        %v4072 = vtanh.pop %v4071
        %v4073 = vsub.f32 1.0, %v4067
        %v4074 = vmul.f32 %v4073, %v4072
        %v4075 = vmul.f32 %v4067, %v3596
        %v4076 = vadd.f32 %v4074, %v4075
        %v4077 = vadd.f32 %v3597, %v4076
        %4078 = vmatprep.subr.mxu0 %v621
        %4079 = vmatpush1.msra.mxu0 %v620
        %4080 = vmatprep.subr.mxu0 %v624
        %4081 = vmatpush1.msra.mxu0 %v623
        %4082 = vmatprep.subr.mxu0 %v627
        %4083 = vmatpush1.msra.mxu0 %v626
        %4084 = vmatprep.subr.mxu0 %v630
        %4085 = vmatpush1.msra.mxu0 %v629
        %4086 = vmatprep.subr.mxu0 %v633
        %4087 = vmatpush1.msra.mxu0 %v632
        %4088 = vmatprep.subr.mxu0 %v636
        %4089 = vmatpush1.msra.mxu0 %v635
        %4090 = vmatprep.subr.mxu0 %v639
        %4091 = vmatpush1.msra.mxu0 %v638
        %4092 = vmatprep.subr.mxu0 %v642
        %4093 = vmatpush1.msra.mxu0 %v641
        %4094 = vmatprep.subr.mxu0 %v645
        %4095 = vmatpush1.msra.mxu0 %v644
        %4096 = vmatprep.subr.mxu0 %v648
        %4097 = vmatpush1.msra.mxu0 %v647
        %4098 = vmatprep.subr.mxu0 %v651
        %4099 = vmatpush1.msra.mxu0 %v650
        %4100 = vmatprep.subr.mxu0 %v654
        %4101 = vmatpush1.msra.mxu0 %v653
        %4102 = vmatprep.subr.mxu0 %v657
        %4103 = vmatpush1.msra.mxu0 %v656
        %4104 = vmatprep.subr.mxu0 %v660
        %4105 = vmatpush1.msra.mxu0 %v659
        %4106 = vmatprep.subr.mxu0 %v663
        %4107 = vmatpush1.msra.mxu0 %v662
        %4108 = vmatprep.subr.mxu0 %v666
        %4109 = vmatpush1.msra.mxu0 %v665
        %4110 = vmatprep.subr.mxu0 0.0
        %4111 = vmatpush1.msra.mxu0 0.0
        %4112 = vmatprep.subr.mxu0 0.0
        %4113 = vmatpush1.msra.mxu0 0.0
        %4114 = vmatprep.subr.mxu0 0.0
        %4115 = vmatpush1.msra.mxu0 0.0
        %4116 = vmatprep.subr.mxu0 0.0
        %4117 = vmatpush1.msra.mxu0 0.0
        %4118 = vmatprep.subr.mxu0 0.0
        %4119 = vmatpush1.msra.mxu0 0.0
        %4120 = vmatprep.subr.mxu0 0.0
        %4121 = vmatpush1.msra.mxu0 0.0
        %4122 = vmatprep.subr.mxu0 0.0
        %4123 = vmatpush1.msra.mxu0 0.0
        %4124 = vmatprep.subr.mxu0 0.0
        %4125 = vmatpush1.msra.mxu0 0.0
        %4126 = vmatprep.subr.mxu0 0.0
        %4127 = vmatpush1.msra.mxu0 0.0
        %4128 = vmatprep.subr.mxu0 0.0
        %4129 = vmatpush1.msra.mxu0 0.0
        %4130 = vmatprep.subr.mxu0 0.0
        %4131 = vmatpush1.msra.mxu0 0.0
        %4132 = vmatprep.subr.mxu0 0.0
        %4133 = vmatpush1.msra.mxu0 0.0
        %4134 = vmatprep.subr.mxu0 0.0
        %4135 = vmatpush1.msra.mxu0 0.0
        %4136 = vmatprep.subr.mxu0 0.0
        %4137 = vmatpush1.msra.mxu0 0.0
        %4138 = vmatprep.subr.mxu0 0.0
        %4139 = vmatpush1.msra.mxu0 0.0
        %4140 = vmatprep.subr.mxu0 0.0
        %4141 = vmatpush1.msra.mxu0 0.0
        %4142 = vmatprep.mubr.f32.mxu0 0.0
        %4143 = vmatmul.mubr.f32.gmra.mrb[0].mxu0 %v4076
        %v4144 = vpop.f32.mrb[0].mxu0
        %v4145 = vadd.f32 0.0, %v4144
        %v4146 = vpop.f32.mrb[0].mxu0
        %v4147 = vadd.f32 0.0, %v4146
        %4148 = vdwg.mxu0
        %4149 = vmatprep.subr.mxu0 0.0
        %4150 = vmatpush1.msra.mxu0 %v622
        %4151 = vmatprep.subr.mxu0 0.0
        %4152 = vmatpush1.msra.mxu0 %v625
        %4153 = vmatprep.subr.mxu0 0.0
        %4154 = vmatpush1.msra.mxu0 %v628
        %4155 = vmatprep.subr.mxu0 0.0
        %4156 = vmatpush1.msra.mxu0 %v631
        %4157 = vmatprep.subr.mxu0 0.0
        %4158 = vmatpush1.msra.mxu0 %v634
        %4159 = vmatprep.subr.mxu0 0.0
        %4160 = vmatpush1.msra.mxu0 %v637
        %4161 = vmatprep.subr.mxu0 0.0
        %4162 = vmatpush1.msra.mxu0 %v640
        %4163 = vmatprep.subr.mxu0 0.0
        %4164 = vmatpush1.msra.mxu0 %v643
        %4165 = vmatprep.subr.mxu0 0.0
        %4166 = vmatpush1.msra.mxu0 %v646
        %4167 = vmatprep.subr.mxu0 0.0
        %4168 = vmatpush1.msra.mxu0 %v649
        %4169 = vmatprep.subr.mxu0 0.0
        %4170 = vmatpush1.msra.mxu0 %v652
        %4171 = vmatprep.subr.mxu0 0.0
        %4172 = vmatpush1.msra.mxu0 %v655
        %4173 = vmatprep.subr.mxu0 0.0
        %4174 = vmatpush1.msra.mxu0 %v658
        %4175 = vmatprep.subr.mxu0 0.0
        %4176 = vmatpush1.msra.mxu0 %v661
        %4177 = vmatprep.subr.mxu0 0.0
        %4178 = vmatpush1.msra.mxu0 %v664
        %4179 = vmatprep.subr.mxu0 0.0
        %4180 = vmatpush1.msra.mxu0 %v667
        %4181 = vmatprep.subr.mxu0 0.0
        %4182 = vmatpush1.msra.mxu0 0.0
        %4183 = vmatprep.subr.mxu0 0.0
        %4184 = vmatpush1.msra.mxu0 0.0
        %4185 = vmatprep.subr.mxu0 0.0
        %4186 = vmatpush1.msra.mxu0 0.0
        %4187 = vmatprep.subr.mxu0 0.0
        %4188 = vmatpush1.msra.mxu0 0.0
        %4189 = vmatprep.subr.mxu0 0.0
        %4190 = vmatpush1.msra.mxu0 0.0
        %4191 = vmatprep.subr.mxu0 0.0
        %4192 = vmatpush1.msra.mxu0 0.0
        %4193 = vmatprep.subr.mxu0 0.0
        %4194 = vmatpush1.msra.mxu0 0.0
        %4195 = vmatprep.subr.mxu0 0.0
        %4196 = vmatpush1.msra.mxu0 0.0
        %4197 = vmatprep.subr.mxu0 0.0
        %4198 = vmatpush1.msra.mxu0 0.0
        %4199 = vmatprep.subr.mxu0 0.0
        %4200 = vmatpush1.msra.mxu0 0.0
        %4201 = vmatprep.subr.mxu0 0.0
        %4202 = vmatpush1.msra.mxu0 0.0
        %4203 = vmatprep.subr.mxu0 0.0
        %4204 = vmatpush1.msra.mxu0 0.0
        %4205 = vmatprep.subr.mxu0 0.0
        %4206 = vmatpush1.msra.mxu0 0.0
        %4207 = vmatprep.subr.mxu0 0.0
        %4208 = vmatpush1.msra.mxu0 0.0
        %4209 = vmatprep.subr.mxu0 0.0
        %4210 = vmatpush1.msra.mxu0 0.0
        %4211 = vmatprep.subr.mxu0 0.0
        %4212 = vmatpush1.msra.mxu0 0.0
        %4213 = vmatprep.mubr.f32.mxu0 0.0
        %4214 = vmatmul.mubr.f32.gmra.mrb[0].mxu0 %v4076
        %v4215 = vpop.f32.mrb[0].mxu0
        %v4216 = vadd.f32 0.0, %v4215
        %v4217 = vpop.f32.mrb[0].mxu0
        %4218 = vdwg.mxu0
        %s4219 = scalar_lea.vmem %s456, 84 [#allocation5]
        %v4220 = vld [vmem:[%s4219] sm:$0xff]
        %v4221 = vld [vmem:[%s4219 + $0x8] sm:$0xf]
        %v4222 = vunpack.c.l.bf16 %v4220
        %v4223 = vunpack.c.h.bf16 %v4220
        %v4224 = vunpack.c.l.bf16 %v4221
        %v4225 = vadd.f32 %v4222, %v824
        %v4226 = vadd.f32 %v4223, %v828
        %v4227 = vadd.f32 %v4224, %v832
        %4228 = vmatprep.subr.mxu0 %v524
        %4229 = vmatpush1.msra.mxu0 %v523
        %4230 = vmatprep.subr.mxu0 %v527
        %4231 = vmatpush1.msra.mxu0 %v526
        %4232 = vmatprep.subr.mxu0 %v530
        %4233 = vmatpush1.msra.mxu0 %v529
        %4234 = vmatprep.subr.mxu0 %v533
        %4235 = vmatpush1.msra.mxu0 %v532
        %4236 = vmatprep.subr.mxu0 %v536
        %4237 = vmatpush1.msra.mxu0 %v535
        %4238 = vmatprep.subr.mxu0 %v539
        %4239 = vmatpush1.msra.mxu0 %v538
        %4240 = vmatprep.subr.mxu0 %v542
        %4241 = vmatpush1.msra.mxu0 %v541
        %4242 = vmatprep.subr.mxu0 %v545
        %4243 = vmatpush1.msra.mxu0 %v544
        %4244 = vmatprep.subr.mxu0 %v548
        %4245 = vmatpush1.msra.mxu0 %v547
        %4246 = vmatprep.subr.mxu0 %v551
        %4247 = vmatpush1.msra.mxu0 %v550
        %4248 = vmatprep.subr.mxu0 %v554
        %4249 = vmatpush1.msra.mxu0 %v553
        %4250 = vmatprep.subr.mxu0 %v557
        %4251 = vmatpush1.msra.mxu0 %v556
        %4252 = vmatprep.subr.mxu0 %v560
        %4253 = vmatpush1.msra.mxu0 %v559
        %4254 = vmatprep.subr.mxu0 %v563
        %4255 = vmatpush1.msra.mxu0 %v562
        %4256 = vmatprep.subr.mxu0 %v566
        %4257 = vmatpush1.msra.mxu0 %v565
        %4258 = vmatprep.subr.mxu0 %v569
        %4259 = vmatpush1.msra.mxu0 %v568
        %4260 = vmatprep.subr.mxu0 0.0
        %4261 = vmatpush1.msra.mxu0 0.0
        %4262 = vmatprep.subr.mxu0 0.0
        %4263 = vmatpush1.msra.mxu0 0.0
        %4264 = vmatprep.subr.mxu0 0.0
        %4265 = vmatpush1.msra.mxu0 0.0
        %4266 = vmatprep.subr.mxu0 0.0
        %4267 = vmatpush1.msra.mxu0 0.0
        %4268 = vmatprep.subr.mxu0 0.0
        %4269 = vmatpush1.msra.mxu0 0.0
        %4270 = vmatprep.subr.mxu0 0.0
        %4271 = vmatpush1.msra.mxu0 0.0
        %4272 = vmatprep.subr.mxu0 0.0
        %4273 = vmatpush1.msra.mxu0 0.0
        %4274 = vmatprep.subr.mxu0 0.0
        %4275 = vmatpush1.msra.mxu0 0.0
        %4276 = vmatprep.subr.mxu0 0.0
        %4277 = vmatpush1.msra.mxu0 0.0
        %4278 = vmatprep.subr.mxu0 0.0
        %4279 = vmatpush1.msra.mxu0 0.0
        %4280 = vmatprep.subr.mxu0 0.0
        %4281 = vmatpush1.msra.mxu0 0.0
        %4282 = vmatprep.subr.mxu0 0.0
        %4283 = vmatpush1.msra.mxu0 0.0
        %4284 = vmatprep.subr.mxu0 0.0
        %4285 = vmatpush1.msra.mxu0 0.0
        %4286 = vmatprep.subr.mxu0 0.0
        %4287 = vmatpush1.msra.mxu0 0.0
        %4288 = vmatprep.subr.mxu0 0.0
        %4289 = vmatpush1.msra.mxu0 0.0
        %4290 = vmatprep.subr.mxu0 0.0
        %4291 = vmatpush1.msra.mxu0 0.0
        %4292 = vmatprep.mubr.f32.mxu0 0.0
        %4293 = vmatmul.mubr.f32.gmra.mrb[0].mxu0 %v3910
        %v4294 = vpop.f32.mrb[0].mxu0
        %v4295 = vadd.f32 0.0, %v4294
        %v4296 = vpop.f32.mrb[0].mxu0
        %v4297 = vadd.f32 0.0, %v4296
        %4298 = vdwg.mxu0
        %4299 = vmatprep.subr.mxu0 0.0
        %4300 = vmatpush1.msra.mxu0 %v525
        %4301 = vmatprep.subr.mxu0 0.0
        %4302 = vmatpush1.msra.mxu0 %v528
        %4303 = vmatprep.subr.mxu0 0.0
        %4304 = vmatpush1.msra.mxu0 %v531
        %4305 = vmatprep.subr.mxu0 0.0
        %4306 = vmatpush1.msra.mxu0 %v534
        %4307 = vmatprep.subr.mxu0 0.0
        %4308 = vmatpush1.msra.mxu0 %v537
        %4309 = vmatprep.subr.mxu0 0.0
        %4310 = vmatpush1.msra.mxu0 %v540
        %4311 = vmatprep.subr.mxu0 0.0
        %4312 = vmatpush1.msra.mxu0 %v543
        %4313 = vmatprep.subr.mxu0 0.0
        %4314 = vmatpush1.msra.mxu0 %v546
        %4315 = vmatprep.subr.mxu0 0.0
        %4316 = vmatpush1.msra.mxu0 %v549
        %4317 = vmatprep.subr.mxu0 0.0
        %4318 = vmatpush1.msra.mxu0 %v552
        %4319 = vmatprep.subr.mxu0 0.0
        %4320 = vmatpush1.msra.mxu0 %v555
        %4321 = vmatprep.subr.mxu0 0.0
        %4322 = vmatpush1.msra.mxu0 %v558
        %4323 = vmatprep.subr.mxu0 0.0
        %4324 = vmatpush1.msra.mxu0 %v561
        %4325 = vmatprep.subr.mxu0 0.0
        %4326 = vmatpush1.msra.mxu0 %v564
        %4327 = vmatprep.subr.mxu0 0.0
        %4328 = vmatpush1.msra.mxu0 %v567
        %4329 = vmatprep.subr.mxu0 0.0
        %4330 = vmatpush1.msra.mxu0 %v570
        %4331 = vmatprep.subr.mxu0 0.0
        %4332 = vmatpush1.msra.mxu0 0.0
        %4333 = vmatprep.subr.mxu0 0.0
        %4334 = vmatpush1.msra.mxu0 0.0
        %4335 = vmatprep.subr.mxu0 0.0
        %4336 = vmatpush1.msra.mxu0 0.0
        %4337 = vmatprep.subr.mxu0 0.0
        %4338 = vmatpush1.msra.mxu0 0.0
        %4339 = vmatprep.subr.mxu0 0.0
        %4340 = vmatpush1.msra.mxu0 0.0
        %4341 = vmatprep.subr.mxu0 0.0
        %4342 = vmatpush1.msra.mxu0 0.0
        %4343 = vmatprep.subr.mxu0 0.0
        %4344 = vmatpush1.msra.mxu0 0.0
        %4345 = vmatprep.subr.mxu0 0.0
        %4346 = vmatpush1.msra.mxu0 0.0
        %4347 = vmatprep.subr.mxu0 0.0
        %4348 = vmatpush1.msra.mxu0 0.0
        %4349 = vmatprep.subr.mxu0 0.0
        %4350 = vmatpush1.msra.mxu0 0.0
        %4351 = vmatprep.subr.mxu0 0.0
        %4352 = vmatpush1.msra.mxu0 0.0
        %4353 = vmatprep.subr.mxu0 0.0
        %4354 = vmatpush1.msra.mxu0 0.0
        %4355 = vmatprep.subr.mxu0 0.0
        %4356 = vmatpush1.msra.mxu0 0.0
        %4357 = vmatprep.subr.mxu0 0.0
        %4358 = vmatpush1.msra.mxu0 0.0
        %4359 = vmatprep.subr.mxu0 0.0
        %4360 = vmatpush1.msra.mxu0 0.0
        %4361 = vmatprep.subr.mxu0 0.0
        %4362 = vmatpush1.msra.mxu0 0.0
        %4363 = vmatprep.mubr.f32.mxu0 0.0
        %4364 = vmatmul.mubr.f32.gmra.mrb[0].mxu0 %v3910
        %v4365 = vpop.f32.mrb[0].mxu0
        %v4366 = vadd.f32 0.0, %v4365
        %v4367 = vpop.f32.mrb[0].mxu0
        %4368 = vdwg.mxu0
        %v4369 = vadd.f32 %v4225, %v4295
        %v4370 = vxor.u32 %v4369, 2147483648
        %v4371 = vmul.f32 %v4370, 1.442695
        %v4372 = vpow.pop %v4371
        %v4373 = vadd.f32 %v4372, 1.0
        %v4374 = vrcp.pop %v4373
        %v4375 = vmul.f32 1.0, %v4374
        %v4376 = vadd.f32 %v4226, %v4297
        %v4377 = vxor.u32 %v4376, 2147483648
        %v4378 = vmul.f32 %v4377, 1.442695
        %v4379 = vpow.pop %v4378
        %v4380 = vadd.f32 %v4379, 1.0
        %v4381 = vrcp.pop %v4380
        %v4382 = vmul.f32 1.0, %v4381
        %v4383 = vadd.f32 %v4366, %v998
        %v4384 = vmul.f32 %v4375, %v4383
        %v4385 = vadd.f32 %v4227, %v4384
        %v4386 = vtanh.pop %v4385
        %v4387 = vsub.f32 1.0, %v4382
        %v4388 = vmul.f32 %v4387, %v4386
        %v4389 = vmul.f32 %v4382, %v3910
        %v4390 = vadd.f32 %v4388, %v4389
        %4391 = vmatprep.subr.mxu0 %v573
        %4392 = vmatpush1.msra.mxu0 %v572
        %4393 = vmatprep.subr.mxu0 %v576
        %4394 = vmatpush1.msra.mxu0 %v575
        %4395 = vmatprep.subr.mxu0 %v579
        %4396 = vmatpush1.msra.mxu0 %v578
        %4397 = vmatprep.subr.mxu0 %v582
        %4398 = vmatpush1.msra.mxu0 %v581
        %4399 = vmatprep.subr.mxu0 %v585
        %4400 = vmatpush1.msra.mxu0 %v584
        %4401 = vmatprep.subr.mxu0 %v588
        %4402 = vmatpush1.msra.mxu0 %v587
        %4403 = vmatprep.subr.mxu0 %v591
        %4404 = vmatpush1.msra.mxu0 %v590
        %4405 = vmatprep.subr.mxu0 %v594
        %4406 = vmatpush1.msra.mxu0 %v593
        %4407 = vmatprep.subr.mxu0 %v597
        %4408 = vmatpush1.msra.mxu0 %v596
        %4409 = vmatprep.subr.mxu0 %v600
        %4410 = vmatpush1.msra.mxu0 %v599
        %4411 = vmatprep.subr.mxu0 %v603
        %4412 = vmatpush1.msra.mxu0 %v602
        %4413 = vmatprep.subr.mxu0 %v606
        %4414 = vmatpush1.msra.mxu0 %v605
        %4415 = vmatprep.subr.mxu0 %v609
        %4416 = vmatpush1.msra.mxu0 %v608
        %4417 = vmatprep.subr.mxu0 %v612
        %4418 = vmatpush1.msra.mxu0 %v611
        %4419 = vmatprep.subr.mxu0 %v615
        %4420 = vmatpush1.msra.mxu0 %v614
        %4421 = vmatprep.subr.mxu0 %v618
        %4422 = vmatpush1.msra.mxu0 %v617
        %4423 = vmatprep.subr.mxu0 0.0
        %4424 = vmatpush1.msra.mxu0 0.0
        %4425 = vmatprep.subr.mxu0 0.0
        %4426 = vmatpush1.msra.mxu0 0.0
        %4427 = vmatprep.subr.mxu0 0.0
        %4428 = vmatpush1.msra.mxu0 0.0
        %4429 = vmatprep.subr.mxu0 0.0
        %4430 = vmatpush1.msra.mxu0 0.0
        %4431 = vmatprep.subr.mxu0 0.0
        %4432 = vmatpush1.msra.mxu0 0.0
        %4433 = vmatprep.subr.mxu0 0.0
        %4434 = vmatpush1.msra.mxu0 0.0
        %4435 = vmatprep.subr.mxu0 0.0
        %4436 = vmatpush1.msra.mxu0 0.0
        %4437 = vmatprep.subr.mxu0 0.0
        %4438 = vmatpush1.msra.mxu0 0.0
        %4439 = vmatprep.subr.mxu0 0.0
        %4440 = vmatpush1.msra.mxu0 0.0
        %4441 = vmatprep.subr.mxu0 0.0
        %4442 = vmatpush1.msra.mxu0 0.0
        %4443 = vmatprep.subr.mxu0 0.0
        %4444 = vmatpush1.msra.mxu0 0.0
        %4445 = vmatprep.subr.mxu0 0.0
        %4446 = vmatpush1.msra.mxu0 0.0
        %4447 = vmatprep.subr.mxu0 0.0
        %4448 = vmatpush1.msra.mxu0 0.0
        %4449 = vmatprep.subr.mxu0 0.0
        %4450 = vmatpush1.msra.mxu0 0.0
        %4451 = vmatprep.subr.mxu0 0.0
        %4452 = vmatpush1.msra.mxu0 0.0
        %4453 = vmatprep.subr.mxu0 0.0
        %4454 = vmatpush1.msra.mxu0 0.0
        %4455 = vmatprep.mubr.f32.mxu0 0.0
        %4456 = vmatmul.mubr.f32.gmra.mrb[0].mxu0 %v4390
        %v4457 = vpop.f32.mrb[0].mxu0
        %v4458 = vadd.f32 0.0, %v4457
        %v4459 = vpop.f32.mrb[0].mxu0
        %v4460 = vadd.f32 0.0, %v4459
        %4461 = vdwg.mxu0
        %4462 = vmatprep.subr.mxu0 0.0
        %4463 = vmatpush1.msra.mxu0 %v574
        %4464 = vmatprep.subr.mxu0 0.0
        %4465 = vmatpush1.msra.mxu0 %v577
        %4466 = vmatprep.subr.mxu0 0.0
        %4467 = vmatpush1.msra.mxu0 %v580
        %4468 = vmatprep.subr.mxu0 0.0
        %4469 = vmatpush1.msra.mxu0 %v583
        %4470 = vmatprep.subr.mxu0 0.0
        %4471 = vmatpush1.msra.mxu0 %v586
        %4472 = vmatprep.subr.mxu0 0.0
        %4473 = vmatpush1.msra.mxu0 %v589
        %4474 = vmatprep.subr.mxu0 0.0
        %4475 = vmatpush1.msra.mxu0 %v592
        %4476 = vmatprep.subr.mxu0 0.0
        %4477 = vmatpush1.msra.mxu0 %v595
        %4478 = vmatprep.subr.mxu0 0.0
        %4479 = vmatpush1.msra.mxu0 %v598
        %4480 = vmatprep.subr.mxu0 0.0
        %4481 = vmatpush1.msra.mxu0 %v601
        %4482 = vmatprep.subr.mxu0 0.0
        %4483 = vmatpush1.msra.mxu0 %v604
        %4484 = vmatprep.subr.mxu0 0.0
        %4485 = vmatpush1.msra.mxu0 %v607
        %4486 = vmatprep.subr.mxu0 0.0
        %4487 = vmatpush1.msra.mxu0 %v610
        %4488 = vmatprep.subr.mxu0 0.0
        %4489 = vmatpush1.msra.mxu0 %v613
        %4490 = vmatprep.subr.mxu0 0.0
        %4491 = vmatpush1.msra.mxu0 %v616
        %4492 = vmatprep.subr.mxu0 0.0
        %4493 = vmatpush1.msra.mxu0 %v619
        %4494 = vmatprep.subr.mxu0 0.0
        %4495 = vmatpush1.msra.mxu0 0.0
        %4496 = vmatprep.subr.mxu0 0.0
        %4497 = vmatpush1.msra.mxu0 0.0
        %4498 = vmatprep.subr.mxu0 0.0
        %4499 = vmatpush1.msra.mxu0 0.0
        %4500 = vmatprep.subr.mxu0 0.0
        %4501 = vmatpush1.msra.mxu0 0.0
        %4502 = vmatprep.subr.mxu0 0.0
        %4503 = vmatpush1.msra.mxu0 0.0
        %4504 = vmatprep.subr.mxu0 0.0
        %4505 = vmatpush1.msra.mxu0 0.0
        %4506 = vmatprep.subr.mxu0 0.0
        %4507 = vmatpush1.msra.mxu0 0.0
        %4508 = vmatprep.subr.mxu0 0.0
        %4509 = vmatpush1.msra.mxu0 0.0
        %4510 = vmatprep.subr.mxu0 0.0
        %4511 = vmatpush1.msra.mxu0 0.0
        %4512 = vmatprep.subr.mxu0 0.0
        %4513 = vmatpush1.msra.mxu0 0.0
        %4514 = vmatprep.subr.mxu0 0.0
        %4515 = vmatpush1.msra.mxu0 0.0
        %4516 = vmatprep.subr.mxu0 0.0
        %4517 = vmatpush1.msra.mxu0 0.0
        %4518 = vmatprep.subr.mxu0 0.0
        %4519 = vmatpush1.msra.mxu0 0.0
        %4520 = vmatprep.subr.mxu0 0.0
        %4521 = vmatpush1.msra.mxu0 0.0
        %4522 = vmatprep.subr.mxu0 0.0
        %4523 = vmatpush1.msra.mxu0 0.0
        %4524 = vmatprep.subr.mxu0 0.0
        %4525 = vmatpush1.msra.mxu0 0.0
        %4526 = vmatprep.mubr.f32.mxu0 0.0
        %4527 = vmatmul.mubr.f32.gmra.mrb[0].mxu0 %v4390
        %v4528 = vpop.f32.mrb[0].mxu0
        %v4529 = vadd.f32 0.0, %v4528
        %v4530 = vpop.f32.mrb[0].mxu0
        %4531 = vdwg.mxu0
        %v4532 = vadd.f32 %v4458, %v4145
        %v4533 = vadd.f32 %v4460, %v4147
        %v4534 = vadd.f32 %v4532, %v1155
        %v4535 = vadd.f32 %v4533, %v1159
        %v4536 = vxor.u32 %v4534, 2147483648
        %v4537 = vxor.u32 %v4535, 2147483648
        %v4538 = vmul.f32 %v4536, 1.442695
        %v4539 = vpow.pop %v4538
        %v4540 = vmul.f32 %v4537, 1.442695
        %v4541 = vpow.pop %v4540
        %v4542 = vadd.f32 %v4539, 1.0
        %v4543 = vadd.f32 %v4541, 1.0
        %v4544 = vrcp.pop %v4542
        %v4545 = vmul.f32 1.0, %v4544
        %v4546 = vrcp.pop %v4543
        %v4547 = vmul.f32 1.0, %v4546
        %v4548 = vadd.f32 %v4529, %v1180
        %v4549 = vadd.f32 %v4216, %v1187
        %v4550 = vmul.f32 %v4545, %v4549
        %v4551 = vadd.f32 %v4548, %v4550
        %v4552 = vtanh.pop %v4551
        %v4553 = vsub.f32 1.0, %v4547
        %v4554 = vmul.f32 %v4553, %v4552
        %v4555 = vmul.f32 %v4547, %v4076
        %v4556 = vadd.f32 %v4554, %v4555
        %v4557 = vadd.f32 %v4077, %v4556
        %4558 = vst [vmem:[#allocation2] sm:$0xff] %v4390
        %4559 = vst [vmem:[#allocation3] sm:$0xff] %v4556
        %4560 = vst [vmem:[#allocation4] sm:$0xff] %v4557
        %v4562 = vcombine.high %v1196, %v1196
        %v4564 = vunpack.c.l.s4 1966171168
        %v4565 = vunpack.c.0.s8 %v4564
        %v4566 = vlaneseq
        %v4567 = vshrl.u32 %v4566, 7
        %v4568 = vsub.s32 %v4565, %v4567
        %v4569 = vrot.slane %v1196, %v4568
        %v4571 = vunpack.c.l.s4 1966171168
        %v4572 = vunpack.c.0.s8 %v4571
        %v4573 = vlaneseq
        %v4574 = vshrl.u32 %v4573, 7
        %v4575 = vsub.s32 %v4572, %v4574
        %v4576 = vrot.slane %v4562, %v4575
        %v4577 = vcombine.high %v4569, %v4569
        %v4578 = vcombine.high %v4576, %v4576
        %v4580 = vunpack.c.l.s4 1966171168
        %v4581 = vunpack.c.0.s8 %v4580
        %v4582 = vlaneseq
        %v4583 = vshrl.u32 %v4582, 7
        %v4584 = vsub.s32 %v4581, %v4583
        %v4585 = vrot.slane %v4569, %v4584
        %v4587 = vunpack.c.l.s4 1966171168
        %v4588 = vunpack.c.0.s8 %v4587
        %v4589 = vlaneseq
        %v4590 = vshrl.u32 %v4589, 7
        %v4591 = vsub.s32 %v4588, %v4590
        %v4592 = vrot.slane %v4576, %v4591
        %v4594 = vunpack.c.l.s4 1966171168
        %v4595 = vunpack.c.0.s8 %v4594
        %v4596 = vlaneseq
        %v4597 = vshrl.u32 %v4596, 7
        %v4598 = vsub.s32 %v4595, %v4597
        %v4599 = vrot.slane %v4577, %v4598
        %v4601 = vunpack.c.l.s4 1966171168
        %v4602 = vunpack.c.0.s8 %v4601
        %v4603 = vlaneseq
        %v4604 = vshrl.u32 %v4603, 7
        %v4605 = vsub.s32 %v4602, %v4604
        %v4606 = vrot.slane %v4578, %v4605
        %v4607 = vcombine.high %v4585, %v4585
        %v4608 = vcombine.high %v4592, %v4592
        %v4609 = vcombine.high %v4599, %v4599
        %v4610 = vcombine.high %v4606, %v4606
        %v4620 = vcombine.high %v1676, %v1676
        %v4622 = vunpack.c.l.s4 1966171168
        %v4623 = vunpack.c.0.s8 %v4622
        %v4624 = vlaneseq
        %v4625 = vshrl.u32 %v4624, 7
        %v4626 = vsub.s32 %v4623, %v4625
        %v4627 = vrot.slane %v1676, %v4626
        %v4629 = vunpack.c.l.s4 1966171168
        %v4630 = vunpack.c.0.s8 %v4629
        %v4631 = vlaneseq
        %v4632 = vshrl.u32 %v4631, 7
        %v4633 = vsub.s32 %v4630, %v4632
        %v4634 = vrot.slane %v4620, %v4633
        %v4635 = vcombine.high %v4627, %v4627
        %v4636 = vcombine.high %v4634, %v4634
        %v4638 = vunpack.c.l.s4 1966171168
        %v4639 = vunpack.c.0.s8 %v4638
        %v4640 = vlaneseq
        %v4641 = vshrl.u32 %v4640, 7
        %v4642 = vsub.s32 %v4639, %v4641
        %v4643 = vrot.slane %v4627, %v4642
        %v4645 = vunpack.c.l.s4 1966171168
        %v4646 = vunpack.c.0.s8 %v4645
        %v4647 = vlaneseq
        %v4648 = vshrl.u32 %v4647, 7
        %v4649 = vsub.s32 %v4646, %v4648
        %v4650 = vrot.slane %v4634, %v4649
        %v4652 = vunpack.c.l.s4 1966171168
        %v4653 = vunpack.c.0.s8 %v4652
        %v4654 = vlaneseq
        %v4655 = vshrl.u32 %v4654, 7
        %v4656 = vsub.s32 %v4653, %v4655
        %v4657 = vrot.slane %v4635, %v4656
        %v4659 = vunpack.c.l.s4 1966171168
        %v4660 = vunpack.c.0.s8 %v4659
        %v4661 = vlaneseq
        %v4662 = vshrl.u32 %v4661, 7
        %v4663 = vsub.s32 %v4660, %v4662
        %v4664 = vrot.slane %v4636, %v4663
        %v4665 = vcombine.high %v4643, %v4643
        %v4666 = vcombine.high %v4650, %v4650
        %v4667 = vcombine.high %v4657, %v4657
        %v4668 = vcombine.high %v4664, %v4664
        %v4670 = vcombine.high %v2156, %v2156
        %v4672 = vunpack.c.l.s4 1966171168
        %v4673 = vunpack.c.0.s8 %v4672
        %v4674 = vlaneseq
        %v4675 = vshrl.u32 %v4674, 7
        %v4676 = vsub.s32 %v4673, %v4675
        %v4677 = vrot.slane %v2156, %v4676
        %v4679 = vunpack.c.l.s4 1966171168
        %v4680 = vunpack.c.0.s8 %v4679
        %v4681 = vlaneseq
        %v4682 = vshrl.u32 %v4681, 7
        %v4683 = vsub.s32 %v4680, %v4682
        %v4684 = vrot.slane %v4670, %v4683
        %v4685 = vcombine.high %v4677, %v4677
        %v4686 = vcombine.high %v4684, %v4684
        %v4688 = vunpack.c.l.s4 1966171168
        %v4689 = vunpack.c.0.s8 %v4688
        %v4690 = vlaneseq
        %v4691 = vshrl.u32 %v4690, 7
        %v4692 = vsub.s32 %v4689, %v4691
        %v4693 = vrot.slane %v4677, %v4692
        %v4695 = vunpack.c.l.s4 1966171168
        %v4696 = vunpack.c.0.s8 %v4695
        %v4697 = vlaneseq
        %v4698 = vshrl.u32 %v4697, 7
        %v4699 = vsub.s32 %v4696, %v4698
        %v4700 = vrot.slane %v4684, %v4699
        %v4702 = vunpack.c.l.s4 1966171168
        %v4703 = vunpack.c.0.s8 %v4702
        %v4704 = vlaneseq
        %v4705 = vshrl.u32 %v4704, 7
        %v4706 = vsub.s32 %v4703, %v4705
        %v4707 = vrot.slane %v4685, %v4706
        %v4709 = vunpack.c.l.s4 1966171168
        %v4710 = vunpack.c.0.s8 %v4709
        %v4711 = vlaneseq
        %v4712 = vshrl.u32 %v4711, 7
        %v4713 = vsub.s32 %v4710, %v4712
        %v4714 = vrot.slane %v4686, %v4713
        %v4715 = vcombine.high %v4693, %v4693
        %v4716 = vcombine.high %v4700, %v4700
        %v4717 = vcombine.high %v4707, %v4707
        %v4718 = vcombine.high %v4714, %v4714
        %v4720 = vcombine.high %v2636, %v2636
        %v4722 = vunpack.c.l.s4 1966171168
        %v4723 = vunpack.c.0.s8 %v4722
        %v4724 = vlaneseq
        %v4725 = vshrl.u32 %v4724, 7
        %v4726 = vsub.s32 %v4723, %v4725
        %v4727 = vrot.slane %v2636, %v4726
        %v4729 = vunpack.c.l.s4 1966171168
        %v4730 = vunpack.c.0.s8 %v4729
        %v4731 = vlaneseq
        %v4732 = vshrl.u32 %v4731, 7
        %v4733 = vsub.s32 %v4730, %v4732
        %v4734 = vrot.slane %v4720, %v4733
        %v4735 = vcombine.high %v4727, %v4727
        %v4736 = vcombine.high %v4734, %v4734
        %v4738 = vunpack.c.l.s4 1966171168
        %v4739 = vunpack.c.0.s8 %v4738
        %v4740 = vlaneseq
        %v4741 = vshrl.u32 %v4740, 7
        %v4742 = vsub.s32 %v4739, %v4741
        %v4743 = vrot.slane %v4727, %v4742
        %v4745 = vunpack.c.l.s4 1966171168
        %v4746 = vunpack.c.0.s8 %v4745
        %v4747 = vlaneseq
        %v4748 = vshrl.u32 %v4747, 7
        %v4749 = vsub.s32 %v4746, %v4748
        %v4750 = vrot.slane %v4734, %v4749
        %v4752 = vunpack.c.l.s4 1966171168
        %v4753 = vunpack.c.0.s8 %v4752
        %v4754 = vlaneseq
        %v4755 = vshrl.u32 %v4754, 7
        %v4756 = vsub.s32 %v4753, %v4755
        %v4757 = vrot.slane %v4735, %v4756
        %v4759 = vunpack.c.l.s4 1966171168
        %v4760 = vunpack.c.0.s8 %v4759
        %v4761 = vlaneseq
        %v4762 = vshrl.u32 %v4761, 7
        %v4763 = vsub.s32 %v4760, %v4762
        %v4764 = vrot.slane %v4736, %v4763
        %v4765 = vcombine.high %v4743, %v4743
        %v4766 = vcombine.high %v4750, %v4750
        %v4767 = vcombine.high %v4757, %v4757
        %v4768 = vcombine.high %v4764, %v4764
        %v4770 = vcombine.high %v3116, %v3116
        %v4772 = vunpack.c.l.s4 1966171168
        %v4773 = vunpack.c.0.s8 %v4772
        %v4774 = vlaneseq
        %v4775 = vshrl.u32 %v4774, 7
        %v4776 = vsub.s32 %v4773, %v4775
        %v4777 = vrot.slane %v3116, %v4776
        %v4779 = vunpack.c.l.s4 1966171168
        %v4780 = vunpack.c.0.s8 %v4779
        %v4781 = vlaneseq
        %v4782 = vshrl.u32 %v4781, 7
        %v4783 = vsub.s32 %v4780, %v4782
        %v4784 = vrot.slane %v4770, %v4783
        %v4785 = vcombine.high %v4777, %v4777
        %v4786 = vcombine.high %v4784, %v4784
        %v4788 = vunpack.c.l.s4 1966171168
        %v4789 = vunpack.c.0.s8 %v4788
        %v4790 = vlaneseq
        %v4791 = vshrl.u32 %v4790, 7
        %v4792 = vsub.s32 %v4789, %v4791
        %v4793 = vrot.slane %v4777, %v4792
        %v4795 = vunpack.c.l.s4 1966171168
        %v4796 = vunpack.c.0.s8 %v4795
        %v4797 = vlaneseq
        %v4798 = vshrl.u32 %v4797, 7
        %v4799 = vsub.s32 %v4796, %v4798
        %v4800 = vrot.slane %v4784, %v4799
        %v4802 = vunpack.c.l.s4 1966171168
        %v4803 = vunpack.c.0.s8 %v4802
        %v4804 = vlaneseq
        %v4805 = vshrl.u32 %v4804, 7
        %v4806 = vsub.s32 %v4803, %v4805
        %v4807 = vrot.slane %v4785, %v4806
        %v4809 = vunpack.c.l.s4 1966171168
        %v4810 = vunpack.c.0.s8 %v4809
        %v4811 = vlaneseq
        %v4812 = vshrl.u32 %v4811, 7
        %v4813 = vsub.s32 %v4810, %v4812
        %v4814 = vrot.slane %v4786, %v4813
        %v4815 = vcombine.high %v4793, %v4793
        %v4816 = vcombine.high %v4800, %v4800
        %v4817 = vcombine.high %v4807, %v4807
        %v4818 = vcombine.high %v4814, %v4814
        %v4820 = vcombine.high %v3596, %v3596
        %v4822 = vunpack.c.l.s4 1966171168
        %v4823 = vunpack.c.0.s8 %v4822
        %v4824 = vlaneseq
        %v4825 = vshrl.u32 %v4824, 7
        %v4826 = vsub.s32 %v4823, %v4825
        %v4827 = vrot.slane %v3596, %v4826
        %v4829 = vunpack.c.l.s4 1966171168
        %v4830 = vunpack.c.0.s8 %v4829
        %v4831 = vlaneseq
        %v4832 = vshrl.u32 %v4831, 7
        %v4833 = vsub.s32 %v4830, %v4832
        %v4834 = vrot.slane %v4820, %v4833
        %v4835 = vcombine.high %v4827, %v4827
        %v4836 = vcombine.high %v4834, %v4834
        %v4838 = vunpack.c.l.s4 1966171168
        %v4839 = vunpack.c.0.s8 %v4838
        %v4840 = vlaneseq
        %v4841 = vshrl.u32 %v4840, 7
        %v4842 = vsub.s32 %v4839, %v4841
        %v4843 = vrot.slane %v4827, %v4842
        %v4845 = vunpack.c.l.s4 1966171168
        %v4846 = vunpack.c.0.s8 %v4845
        %v4847 = vlaneseq
        %v4848 = vshrl.u32 %v4847, 7
        %v4849 = vsub.s32 %v4846, %v4848
        %v4850 = vrot.slane %v4834, %v4849
        %v4852 = vunpack.c.l.s4 1966171168
        %v4853 = vunpack.c.0.s8 %v4852
        %v4854 = vlaneseq
        %v4855 = vshrl.u32 %v4854, 7
        %v4856 = vsub.s32 %v4853, %v4855
        %v4857 = vrot.slane %v4835, %v4856
        %v4859 = vunpack.c.l.s4 1966171168
        %v4860 = vunpack.c.0.s8 %v4859
        %v4861 = vlaneseq
        %v4862 = vshrl.u32 %v4861, 7
        %v4863 = vsub.s32 %v4860, %v4862
        %v4864 = vrot.slane %v4836, %v4863
        %v4865 = vcombine.high %v4843, %v4843
        %v4866 = vcombine.high %v4850, %v4850
        %v4867 = vcombine.high %v4857, %v4857
        %v4868 = vcombine.high %v4864, %v4864
        %v4870 = vcombine.high %v4076, %v4076
        %v4872 = vunpack.c.l.s4 1966171168
        %v4873 = vunpack.c.0.s8 %v4872
        %v4874 = vlaneseq
        %v4875 = vshrl.u32 %v4874, 7
        %v4876 = vsub.s32 %v4873, %v4875
        %v4877 = vrot.slane %v4076, %v4876
        %v4879 = vunpack.c.l.s4 1966171168
        %v4880 = vunpack.c.0.s8 %v4879
        %v4881 = vlaneseq
        %v4882 = vshrl.u32 %v4881, 7
        %v4883 = vsub.s32 %v4880, %v4882
        %v4884 = vrot.slane %v4870, %v4883
        %v4885 = vcombine.high %v4877, %v4877
        %v4886 = vcombine.high %v4884, %v4884
        %v4888 = vunpack.c.l.s4 1966171168
        %v4889 = vunpack.c.0.s8 %v4888
        %v4890 = vlaneseq
        %v4891 = vshrl.u32 %v4890, 7
        %v4892 = vsub.s32 %v4889, %v4891
        %v4893 = vrot.slane %v4877, %v4892
        %v4895 = vunpack.c.l.s4 1966171168
        %v4896 = vunpack.c.0.s8 %v4895
        %v4897 = vlaneseq
        %v4898 = vshrl.u32 %v4897, 7
        %v4899 = vsub.s32 %v4896, %v4898
        %v4900 = vrot.slane %v4884, %v4899
        %v4902 = vunpack.c.l.s4 1966171168
        %v4903 = vunpack.c.0.s8 %v4902
        %v4904 = vlaneseq
        %v4905 = vshrl.u32 %v4904, 7
        %v4906 = vsub.s32 %v4903, %v4905
        %v4907 = vrot.slane %v4885, %v4906
        %v4909 = vunpack.c.l.s4 1966171168
        %v4910 = vunpack.c.0.s8 %v4909
        %v4911 = vlaneseq
        %v4912 = vshrl.u32 %v4911, 7
        %v4913 = vsub.s32 %v4910, %v4912
        %v4914 = vrot.slane %v4886, %v4913
        %v4915 = vcombine.high %v4893, %v4893
        %v4916 = vcombine.high %v4900, %v4900
        %v4917 = vcombine.high %v4907, %v4907
        %v4918 = vcombine.high %v4914, %v4914
        %v4920 = vcombine.high %v4556, %v4556
        %v4922 = vunpack.c.l.s4 1966171168
        %v4923 = vunpack.c.0.s8 %v4922
        %v4924 = vlaneseq
        %v4925 = vshrl.u32 %v4924, 7
        %v4926 = vsub.s32 %v4923, %v4925
        %v4927 = vrot.slane %v4556, %v4926
        %v4929 = vunpack.c.l.s4 1966171168
        %v4930 = vunpack.c.0.s8 %v4929
        %v4931 = vlaneseq
        %v4932 = vshrl.u32 %v4931, 7
        %v4933 = vsub.s32 %v4930, %v4932
        %v4934 = vrot.slane %v4920, %v4933
        %v4935 = vcombine.high %v4927, %v4927
        %v4936 = vcombine.high %v4934, %v4934
        %v4938 = vunpack.c.l.s4 1966171168
        %v4939 = vunpack.c.0.s8 %v4938
        %v4940 = vlaneseq
        %v4941 = vshrl.u32 %v4940, 7
        %v4942 = vsub.s32 %v4939, %v4941
        %v4943 = vrot.slane %v4927, %v4942
        %v4945 = vunpack.c.l.s4 1966171168
        %v4946 = vunpack.c.0.s8 %v4945
        %v4947 = vlaneseq
        %v4948 = vshrl.u32 %v4947, 7
        %v4949 = vsub.s32 %v4946, %v4948
        %v4950 = vrot.slane %v4934, %v4949
        %v4952 = vunpack.c.l.s4 1966171168
        %v4953 = vunpack.c.0.s8 %v4952
        %v4954 = vlaneseq
        %v4955 = vshrl.u32 %v4954, 7
        %v4956 = vsub.s32 %v4953, %v4955
        %v4957 = vrot.slane %v4935, %v4956
        %v4959 = vunpack.c.l.s4 1966171168
        %v4960 = vunpack.c.0.s8 %v4959
        %v4961 = vlaneseq
        %v4962 = vshrl.u32 %v4961, 7
        %v4963 = vsub.s32 %v4960, %v4962
        %v4964 = vrot.slane %v4936, %v4963
        %v4965 = vcombine.high %v4943, %v4943
        %v4966 = vcombine.high %v4950, %v4950
        %v4967 = vcombine.high %v4957, %v4957
        %v4968 = vcombine.high %v4964, %v4964
        %v4969 = vlaneseq
        %v4970 = vshrl.u32 %v4969, 7
        %v4971 = vsub.s32 0, %v4970
        %v4972 = vrot.slane %v4643, %v4971
        %v4973 = vlaneseq
        %v4974 = vshrl.u32 %v4973, 7
        %v4975 = vsub.s32 0, %v4974
        %v4976 = vrot.slane %v4657, %v4975
        %v4977 = vlaneseq
        %v4978 = vshrl.u32 %v4977, 7
        %v4979 = vsub.s32 0, %v4978
        %v4980 = vrot.slane %v4665, %v4979
        %v4981 = vlaneseq
        %v4982 = vshrl.u32 %v4981, 7
        %v4983 = vsub.s32 0, %v4982
        %v4984 = vrot.slane %v4667, %v4983
        %v4985 = vlaneseq
        %v4986 = vshrl.u32 %v4985, 7
        %v4987 = vsub.s32 0, %v4986
        %v4988 = vrot.slane %v4650, %v4987
        %v4989 = vlaneseq
        %v4990 = vshrl.u32 %v4989, 7
        %v4991 = vsub.s32 0, %v4990
        %v4992 = vrot.slane %v4664, %v4991
        %v4993 = vlaneseq
        %v4994 = vshrl.u32 %v4993, 7
        %v4995 = vsub.s32 0, %v4994
        %v4996 = vrot.slane %v4666, %v4995
        %v4997 = vlaneseq
        %v4998 = vshrl.u32 %v4997, 7
        %v4999 = vsub.s32 0, %v4998
        %v5000 = vrot.slane %v4668, %v4999
        %v5009 = vlaneseq
        %v5010 = vshrl.u32 %v5009, 7
        %v5011 = vsub.s32 0, %v5010
        %v5012 = vrot.slane %v4693, %v5011
        %v5013 = vlaneseq
        %v5014 = vshrl.u32 %v5013, 7
        %v5015 = vsub.s32 0, %v5014
        %v5016 = vrot.slane %v4707, %v5015
        %v5017 = vlaneseq
        %v5018 = vshrl.u32 %v5017, 7
        %v5019 = vsub.s32 0, %v5018
        %v5020 = vrot.slane %v4715, %v5019
        %v5021 = vlaneseq
        %v5022 = vshrl.u32 %v5021, 7
        %v5023 = vsub.s32 0, %v5022
        %v5024 = vrot.slane %v4717, %v5023
        %v5025 = vlaneseq
        %v5026 = vshrl.u32 %v5025, 7
        %v5027 = vsub.s32 0, %v5026
        %v5028 = vrot.slane %v4700, %v5027
        %v5029 = vlaneseq
        %v5030 = vshrl.u32 %v5029, 7
        %v5031 = vsub.s32 0, %v5030
        %v5032 = vrot.slane %v4714, %v5031
        %v5033 = vlaneseq
        %v5034 = vshrl.u32 %v5033, 7
        %v5035 = vsub.s32 0, %v5034
        %v5036 = vrot.slane %v4716, %v5035
        %v5037 = vlaneseq
        %v5038 = vshrl.u32 %v5037, 7
        %v5039 = vsub.s32 0, %v5038
        %v5040 = vrot.slane %v4718, %v5039
        %v5049 = vlaneseq
        %v5050 = vshrl.u32 %v5049, 7
        %v5051 = vsub.s32 0, %v5050
        %v5052 = vrot.slane %v4743, %v5051
        %v5053 = vlaneseq
        %v5054 = vshrl.u32 %v5053, 7
        %v5055 = vsub.s32 0, %v5054
        %v5056 = vrot.slane %v4757, %v5055
        %v5057 = vlaneseq
        %v5058 = vshrl.u32 %v5057, 7
        %v5059 = vsub.s32 0, %v5058
        %v5060 = vrot.slane %v4765, %v5059
        %v5061 = vlaneseq
        %v5062 = vshrl.u32 %v5061, 7
        %v5063 = vsub.s32 0, %v5062
        %v5064 = vrot.slane %v4767, %v5063
        %v5065 = vlaneseq
        %v5066 = vshrl.u32 %v5065, 7
        %v5067 = vsub.s32 0, %v5066
        %v5068 = vrot.slane %v4750, %v5067
        %v5069 = vlaneseq
        %v5070 = vshrl.u32 %v5069, 7
        %v5071 = vsub.s32 0, %v5070
        %v5072 = vrot.slane %v4764, %v5071
        %v5073 = vlaneseq
        %v5074 = vshrl.u32 %v5073, 7
        %v5075 = vsub.s32 0, %v5074
        %v5076 = vrot.slane %v4766, %v5075
        %v5077 = vlaneseq
        %v5078 = vshrl.u32 %v5077, 7
        %v5079 = vsub.s32 0, %v5078
        %v5080 = vrot.slane %v4768, %v5079
        %v5089 = vlaneseq
        %v5090 = vshrl.u32 %v5089, 7
        %v5091 = vsub.s32 0, %v5090
        %v5092 = vrot.slane %v4793, %v5091
        %v5093 = vlaneseq
        %v5094 = vshrl.u32 %v5093, 7
        %v5095 = vsub.s32 0, %v5094
        %v5096 = vrot.slane %v4807, %v5095
        %v5097 = vlaneseq
        %v5098 = vshrl.u32 %v5097, 7
        %v5099 = vsub.s32 0, %v5098
        %v5100 = vrot.slane %v4815, %v5099
        %v5101 = vlaneseq
        %v5102 = vshrl.u32 %v5101, 7
        %v5103 = vsub.s32 0, %v5102
        %v5104 = vrot.slane %v4817, %v5103
        %v5105 = vlaneseq
        %v5106 = vshrl.u32 %v5105, 7
        %v5107 = vsub.s32 0, %v5106
        %v5108 = vrot.slane %v4800, %v5107
        %v5109 = vlaneseq
        %v5110 = vshrl.u32 %v5109, 7
        %v5111 = vsub.s32 0, %v5110
        %v5112 = vrot.slane %v4814, %v5111
        %v5113 = vlaneseq
        %v5114 = vshrl.u32 %v5113, 7
        %v5115 = vsub.s32 0, %v5114
        %v5116 = vrot.slane %v4816, %v5115
        %v5117 = vlaneseq
        %v5118 = vshrl.u32 %v5117, 7
        %v5119 = vsub.s32 0, %v5118
        %v5120 = vrot.slane %v4818, %v5119
        %v5129 = vlaneseq
        %v5130 = vshrl.u32 %v5129, 7
        %v5131 = vsub.s32 0, %v5130
        %v5132 = vrot.slane %v4843, %v5131
        %v5133 = vlaneseq
        %v5134 = vshrl.u32 %v5133, 7
        %v5135 = vsub.s32 0, %v5134
        %v5136 = vrot.slane %v4857, %v5135
        %v5137 = vlaneseq
        %v5138 = vshrl.u32 %v5137, 7
        %v5139 = vsub.s32 0, %v5138
        %v5140 = vrot.slane %v4865, %v5139
        %v5141 = vlaneseq
        %v5142 = vshrl.u32 %v5141, 7
        %v5143 = vsub.s32 0, %v5142
        %v5144 = vrot.slane %v4867, %v5143
        %v5145 = vlaneseq
        %v5146 = vshrl.u32 %v5145, 7
        %v5147 = vsub.s32 0, %v5146
        %v5148 = vrot.slane %v4850, %v5147
        %v5149 = vlaneseq
        %v5150 = vshrl.u32 %v5149, 7
        %v5151 = vsub.s32 0, %v5150
        %v5152 = vrot.slane %v4864, %v5151
        %v5153 = vlaneseq
        %v5154 = vshrl.u32 %v5153, 7
        %v5155 = vsub.s32 0, %v5154
        %v5156 = vrot.slane %v4866, %v5155
        %v5157 = vlaneseq
        %v5158 = vshrl.u32 %v5157, 7
        %v5159 = vsub.s32 0, %v5158
        %v5160 = vrot.slane %v4868, %v5159
        %v5169 = vlaneseq
        %v5170 = vshrl.u32 %v5169, 7
        %v5171 = vsub.s32 0, %v5170
        %v5172 = vrot.slane %v4893, %v5171
        %v5173 = vlaneseq
        %v5174 = vshrl.u32 %v5173, 7
        %v5175 = vsub.s32 0, %v5174
        %v5176 = vrot.slane %v4907, %v5175
        %v5177 = vlaneseq
        %v5178 = vshrl.u32 %v5177, 7
        %v5179 = vsub.s32 0, %v5178
        %v5180 = vrot.slane %v4915, %v5179
        %v5181 = vlaneseq
        %v5182 = vshrl.u32 %v5181, 7
        %v5183 = vsub.s32 0, %v5182
        %v5184 = vrot.slane %v4917, %v5183
        %v5185 = vlaneseq
        %v5186 = vshrl.u32 %v5185, 7
        %v5187 = vsub.s32 0, %v5186
        %v5188 = vrot.slane %v4900, %v5187
        %v5189 = vlaneseq
        %v5190 = vshrl.u32 %v5189, 7
        %v5191 = vsub.s32 0, %v5190
        %v5192 = vrot.slane %v4914, %v5191
        %v5193 = vlaneseq
        %v5194 = vshrl.u32 %v5193, 7
        %v5195 = vsub.s32 0, %v5194
        %v5196 = vrot.slane %v4916, %v5195
        %v5197 = vlaneseq
        %v5198 = vshrl.u32 %v5197, 7
        %v5199 = vsub.s32 0, %v5198
        %v5200 = vrot.slane %v4918, %v5199
        %v5209 = vlaneseq
        %v5210 = vshrl.u32 %v5209, 7
        %v5211 = vsub.s32 0, %v5210
        %v5212 = vrot.slane %v4943, %v5211
        %v5213 = vlaneseq
        %v5214 = vshrl.u32 %v5213, 7
        %v5215 = vsub.s32 0, %v5214
        %v5216 = vrot.slane %v4957, %v5215
        %v5217 = vlaneseq
        %v5218 = vshrl.u32 %v5217, 7
        %v5219 = vsub.s32 0, %v5218
        %v5220 = vrot.slane %v4965, %v5219
        %v5221 = vlaneseq
        %v5222 = vshrl.u32 %v5221, 7
        %v5223 = vsub.s32 0, %v5222
        %v5224 = vrot.slane %v4967, %v5223
        %v5225 = vlaneseq
        %v5226 = vshrl.u32 %v5225, 7
        %v5227 = vsub.s32 0, %v5226
        %v5228 = vrot.slane %v4950, %v5227
        %v5229 = vlaneseq
        %v5230 = vshrl.u32 %v5229, 7
        %v5231 = vsub.s32 0, %v5230
        %v5232 = vrot.slane %v4964, %v5231
        %v5233 = vlaneseq
        %v5234 = vshrl.u32 %v5233, 7
        %v5235 = vsub.s32 0, %v5234
        %v5236 = vrot.slane %v4966, %v5235
        %v5237 = vlaneseq
        %v5238 = vshrl.u32 %v5237, 7
        %v5239 = vsub.s32 0, %v5238
        %v5240 = vrot.slane %v4968, %v5239
        %vm5249 = vcmask 1040384
        %v5250 = vsel %vm5249, %v4585, %v4972
        %v5251 = vsel %vm5249, %v4599, %v4976
        %v5252 = vsel %vm5249, %v4607, %v4980
        %v5253 = vsel %vm5249, %v4609, %v4984
        %v5254 = vsel %vm5249, %v4592, %v4988
        %v5255 = vsel %vm5249, %v4606, %v4992
        %v5256 = vsel %vm5249, %v4608, %v4996
        %v5257 = vsel %vm5249, %v4610, %v5000
        %vm5258 = vcmask 1041408
        %v5259 = vsel %vm5258, %v5250, %v5012
        %v5260 = vsel %vm5258, %v5251, %v5016
        %v5261 = vsel %vm5258, %v5252, %v5020
        %v5262 = vsel %vm5258, %v5253, %v5024
        %v5263 = vsel %vm5258, %v5254, %v5028
        %v5264 = vsel %vm5258, %v5255, %v5032
        %v5265 = vsel %vm5258, %v5256, %v5036
        %v5266 = vsel %vm5258, %v5257, %v5040
        %vm5267 = vcmask 1042432
        %v5268 = vsel %vm5267, %v5259, %v5052
        %v5269 = vsel %vm5267, %v5260, %v5056
        %v5270 = vsel %vm5267, %v5261, %v5060
        %v5271 = vsel %vm5267, %v5262, %v5064
        %v5272 = vsel %vm5267, %v5263, %v5068
        %v5273 = vsel %vm5267, %v5264, %v5072
        %v5274 = vsel %vm5267, %v5265, %v5076
        %v5275 = vsel %vm5267, %v5266, %v5080
        %vm5276 = vcmask 1043456
        %v5277 = vsel %vm5276, %v5268, %v5092
        %v5278 = vsel %vm5276, %v5269, %v5096
        %v5279 = vsel %vm5276, %v5270, %v5100
        %v5280 = vsel %vm5276, %v5271, %v5104
        %v5281 = vsel %vm5276, %v5272, %v5108
        %v5282 = vsel %vm5276, %v5273, %v5112
        %v5283 = vsel %vm5276, %v5274, %v5116
        %v5284 = vsel %vm5276, %v5275, %v5120
        %vm5285 = vcmask 1044480
        %v5286 = vsel %vm5285, %v5277, %v5132
        %v5287 = vsel %vm5285, %v5278, %v5136
        %v5288 = vsel %vm5285, %v5279, %v5140
        %v5289 = vsel %vm5285, %v5280, %v5144
        %v5290 = vsel %vm5285, %v5281, %v5148
        %v5291 = vsel %vm5285, %v5282, %v5152
        %v5292 = vsel %vm5285, %v5283, %v5156
        %v5293 = vsel %vm5285, %v5284, %v5160
        %vm5294 = vcmask 1045504
        %v5295 = vsel %vm5294, %v5286, %v5172
        %v5296 = vsel %vm5294, %v5287, %v5176
        %v5297 = vsel %vm5294, %v5288, %v5180
        %v5298 = vsel %vm5294, %v5289, %v5184
        %v5299 = vsel %vm5294, %v5290, %v5188
        %v5300 = vsel %vm5294, %v5291, %v5192
        %v5301 = vsel %vm5294, %v5292, %v5196
        %v5302 = vsel %vm5294, %v5293, %v5200
        %vm5303 = vcmask 1046528
        %v5304 = vsel %vm5303, %v5295, %v5212
        %v5305 = vsel %vm5303, %v5296, %v5216
        %v5306 = vsel %vm5303, %v5297, %v5220
        %v5307 = vsel %vm5303, %v5298, %v5224
        %v5308 = vsel %vm5303, %v5299, %v5228
        %v5309 = vsel %vm5303, %v5300, %v5232
        %v5310 = vsel %vm5303, %v5301, %v5236
        %v5311 = vsel %vm5303, %v5302, %v5240
        %5312 = vst [vmem:[%s510] sm:$0xff] %v5304
        %5313 = vst [vmem:[%s510 + $0x8] sm:$0xff] %v5305
        %5314 = vst [vmem:[%s510 + $0x10] sm:$0xff] %v5306
        %5315 = vst [vmem:[%s510 + $0x18] sm:$0xff] %v5307
        %5316 = vst [vmem:[%s510 + $0x20] sm:$0xff] %v5308
        %5317 = vst [vmem:[%s510 + $0x28] sm:$0xff] %v5309
        %5318 = vst [vmem:[%s510 + $0x30] sm:$0xff] %v5310
        %5319 = vst [vmem:[%s510 + $0x38] sm:$0xff] %v5311
        %p5320 = scmp.eq.s32.totalorder %s38, 1
        // Predicated region
        $region89: #{tpu_custom_call.1} parent=63 // pred_check
          %p5321 = pneg %p5320
        $region90: #{tpu_custom_call.1} parent=63 // pred_check_branch
          %5323 = sbr.rel (%p5321) target = $region92
        $region91: #{tpu_custom_call.1} parent=63 // pred_region
          %v5324 = vld [vmem:[#allocation4] sm:$0xff]
          %v5325 = vmul.f32 %v5324, %v5324
          %5326 = vadd.xlane.f32.xlu0 %v5325
          %v5327 = vpop.xlane.xlu0 %5326
          %v5328 = vrsqrt.pop %v5327
          %v5329 = vmul.f32 %v5324, %v5328
          %v5330 = vld [vmem:[#allocation13] sm:$0xff]
          %v5331 = vld [vmem:[#allocation13 + $0x8] sm:$0xff]
          %v5332 = vld [vmem:[#allocation13 + $0x10] sm:$0xff]
          %v5333 = vld [vmem:[#allocation13 + $0x18] sm:$0xff]
          %v5334 = vld [vmem:[#allocation13 + $0x20] sm:$0xff]
          %v5335 = vld [vmem:[#allocation13 + $0x28] sm:$0xff]
          %v5336 = vld [vmem:[#allocation13 + $0x30] sm:$0xff]
          %v5337 = vld [vmem:[#allocation13 + $0x38] sm:$0xff]
          %v5338 = vld [vmem:[#allocation13 + $0x40] sm:$0xff]
          %v5339 = vld [vmem:[#allocation13 + $0x48] sm:$0xff]
          %v5340 = vld [vmem:[#allocation13 + $0x50] sm:$0xff]
          %v5341 = vld [vmem:[#allocation13 + $0x58] sm:$0xff]
          %v5342 = vld [vmem:[#allocation13 + $0x60] sm:$0xff]
          %v5343 = vld [vmem:[#allocation13 + $0x68] sm:$0xff]
          %v5344 = vld [vmem:[#allocation13 + $0x70] sm:$0xff]
          %v5345 = vld [vmem:[#allocation13 + $0x78] sm:$0xff]
          %v5346 = vld [vmem:[%s10] sm:$0x1]
          %v5348 = vlaneseq
          %v5349 = vshrl.u32 %v5348, 7
          %v5350 = vsub.s32 0, %v5349
          %v5351 = vrot.slane %v5346, %v5350
          %5353 = vmatprep.subr.mxu0 0.0
          %5354 = vmatpush1.msra.mxu0 %v5330
          %5355 = vmatprep.subr.mxu0 0.0
          %5356 = vmatpush1.msra.mxu0 %v5331
          %5357 = vmatprep.subr.mxu0 0.0
          %5358 = vmatpush1.msra.mxu0 %v5332
          %5359 = vmatprep.subr.mxu0 0.0
          %5360 = vmatpush1.msra.mxu0 %v5333
          %5361 = vmatprep.subr.mxu0 0.0
          %5362 = vmatpush1.msra.mxu0 %v5334
          %5363 = vmatprep.subr.mxu0 0.0
          %5364 = vmatpush1.msra.mxu0 %v5335
          %5365 = vmatprep.subr.mxu0 0.0
          %5366 = vmatpush1.msra.mxu0 %v5336
          %5367 = vmatprep.subr.mxu0 0.0
          %5368 = vmatpush1.msra.mxu0 %v5337
          %5369 = vmatprep.subr.mxu0 0.0
          %5370 = vmatpush1.msra.mxu0 %v5338
          %5371 = vmatprep.subr.mxu0 0.0
          %5372 = vmatpush1.msra.mxu0 %v5339
          %5373 = vmatprep.subr.mxu0 0.0
          %5374 = vmatpush1.msra.mxu0 %v5340
          %5375 = vmatprep.subr.mxu0 0.0
          %5376 = vmatpush1.msra.mxu0 %v5341
          %5377 = vmatprep.subr.mxu0 0.0
          %5378 = vmatpush1.msra.mxu0 %v5342
          %5379 = vmatprep.subr.mxu0 0.0
          %5380 = vmatpush1.msra.mxu0 %v5343
          %5381 = vmatprep.subr.mxu0 0.0
          %5382 = vmatpush1.msra.mxu0 %v5344
          %5383 = vmatprep.subr.mxu0 0.0
          %5384 = vmatpush1.msra.mxu0 %v5345
          %5385 = vmatprep.subr.mxu0 0.0
          %5386 = vmatpush1.msra.mxu0 0.0
          %5387 = vmatprep.subr.mxu0 0.0
          %5388 = vmatpush1.msra.mxu0 0.0
          %5389 = vmatprep.subr.mxu0 0.0
          %5390 = vmatpush1.msra.mxu0 0.0
          %5391 = vmatprep.subr.mxu0 0.0
          %5392 = vmatpush1.msra.mxu0 0.0
          %5393 = vmatprep.subr.mxu0 0.0
          %5394 = vmatpush1.msra.mxu0 0.0
          %5395 = vmatprep.subr.mxu0 0.0
          %5396 = vmatpush1.msra.mxu0 0.0
          %5397 = vmatprep.subr.mxu0 0.0
          %5398 = vmatpush1.msra.mxu0 0.0
          %5399 = vmatprep.subr.mxu0 0.0
          %5400 = vmatpush1.msra.mxu0 0.0
          %5401 = vmatprep.subr.mxu0 0.0
          %5402 = vmatpush1.msra.mxu0 0.0
          %5403 = vmatprep.subr.mxu0 0.0
          %5404 = vmatpush1.msra.mxu0 0.0
          %5405 = vmatprep.subr.mxu0 0.0
          %5406 = vmatpush1.msra.mxu0 0.0
          %5407 = vmatprep.subr.mxu0 0.0
          %5408 = vmatpush1.msra.mxu0 0.0
          %5409 = vmatprep.subr.mxu0 0.0
          %5410 = vmatpush1.msra.mxu0 0.0
          %5411 = vmatprep.subr.mxu0 0.0
          %5412 = vmatpush1.msra.mxu0 0.0
          %5413 = vmatprep.subr.mxu0 0.0
          %5414 = vmatpush1.msra.mxu0 0.0
          %5415 = vmatprep.subr.mxu0 0.0
          %5416 = vmatpush1.msra.mxu0 0.0
          %5417 = vmatprep.mubr.f32.mxu0 0.0
          %5418 = vmatmul.mubr.f32.gmra.mrb[0].mxu0 %v5329
          %v5419 = vpop.f32.mrb[0].mxu0
          %v5420 = vadd.f32 %v5351, %v5419
          %v5421 = vpop.f32.mrb[0].mxu0
          %5422 = vdwg.mxu0
          %5423 = vst [vmem:[#allocation15] sm:$0xff] %v5420
        $region92: #{tpu_custom_call.1} parent=63 // pred_fallthru
          _
        %s5424 = sand.u32 %s293, 1
        %s5425 = scalar_lea.sflag [#allocation7], %s5424
        %s5426 = sand.u32 %s293, 1
        %s5427 = smul.addr %s5426, 64
        %s5428 = scalar_lea.vmem [#allocation14], %s5427
        // Predicated region
        $region93: #{tpu_custom_call.1} parent=63 // pred_check
          %p5429 = pneg %p303
        $region94: #{tpu_custom_call.1} parent=63 // pred_check_branch
          %5431 = sbr.rel (%p5429) target = $region96
        $region95: #{tpu_custom_call.1} parent=63 // pred_region
          %s5432 = smul.u32 8, %s37
          %s5434 = ssub.s32 1024, 1024
          %5435 = vsyncadd %s5425, %s5434
          %s5436 = smul.addr %s5432, 2
          %s5437 = sadd.s32 %s38, %s5436
          %s5438 = smul.addr %s5437, 128
          %s5439 = scalar_lea.hbm %s11, %s5438
          %s5440 = sshll.u32 %s5428, 4
          %s5441 = int_to_ptr.vmem [resolvable:$true] %s5440
          %5446 = dma.vmem_to_hbm [thread:$0]  %s5441, 1024, %s5439, %s5425, 128, 256, 8
        $region96: #{tpu_custom_call.1} parent=63 // pred_fallthru
          _
        // Predicated region
        $region97: #{tpu_custom_call.1} parent=63 // pred_check
          %p5447 = pneg %p329
        $region98: #{tpu_custom_call.1} parent=63 // pred_check_branch
          %5449 = sbr.rel (%p5447) target = $region100
        $region99: #{tpu_custom_call.1} parent=63 // pred_region
          %s5451 = ssub.s32 128, 128
          %5452 = vsyncadd [#allocation16], %s5451
          %s5453 = smul.addr %s37, 128
          %s5454 = scalar_lea.hbm %s12, %s5453
          %s5456 = sshll.u32 [#allocation15], 4
          %s5457 = int_to_ptr.vmem [resolvable:$true] %s5456
          %5459 = dma.vmem_to_hbm [thread:$0]  %s5457, 128, %s5454, [#allocation16]
        $region100: #{tpu_custom_call.1} parent=63 // pred_fallthru
          _
        // Predicated region
        $region101: #{tpu_custom_call.1} parent=63 // pred_check
          %p5460 = pneg %p329
        $region102: #{tpu_custom_call.1} parent=63 // pred_check_branch
          %5462 = sbr.rel (%p5460) target = $region104
        $region103: #{tpu_custom_call.1} parent=63 // pred_region
          %5463 = dma.done [#allocation16], 128
        $region104: #{tpu_custom_call.1} parent=63 // pred_fallthru
          _
      $region64: #{tpu_custom_call.1} parent=5 // pred_fallthru
        _
      %p5464 = scmp.le.s32.totalorder 2, %s28
      // Predicated region
      $region105: #{tpu_custom_call.1} parent=5 // pred_check
        %p5465 = pneg %p5464
      $region106: #{tpu_custom_call.1} parent=5 // pred_check_branch
        %5467 = sbr.rel (%p5465) target = $region108
      $region107: #{tpu_custom_call.1} parent=5 // pred_region
        %s5468 = ssub.s32 %s28, 2
        // Predicated region
        $region109: #{tpu_custom_call.1} parent=107 // pred_check
          %p5469 = pneg %p309
        $region110: #{tpu_custom_call.1} parent=107 // pred_check_branch
          %5471 = sbr.rel (%p5469) target = $region112
        $region111: #{tpu_custom_call.1} parent=107 // pred_region
          %s5472 = sand.u32 %s294, 1
          %s5473 = scalar_lea.sflag [#allocation7], %s5472
          %s5474 = sand.u32 %s294, 1
          %s5475 = smul.addr %s5474, 64
          %s5476 = scalar_lea.vmem [#allocation14], %s5475
          %5477 = dma.done %s5473, 1024
        $region112: #{tpu_custom_call.1} parent=107 // pred_fallthru
          _
      $region108: #{tpu_custom_call.1} parent=5 // pred_fallthru
        _
    $region6: #{tpu_custom_call.1} parent=1 // loop_footer
      %s32 = sadd.s32 1, %s28
    $region7: #{tpu_custom_call.1} parent=1 // loop_footer_branch
      %27 = sbr.rel target = $region3
    $region8: #{tpu_custom_call.1} parent=1 // loop_exit
      _
    %5478 = vsyncpa [#allocation6], 1
    %s5479 = scalar_lea.sflag [#allocation6], 1
    %5480 = vsyncpa %s5479, 1
    %5481 = vsyncpa [#allocation9], 1
    %5482 = vsyncpa [#allocation12], 1
    %5483 = vsyncpa [#allocation7], 1
    %s5484 = scalar_lea.sflag [#allocation7], 1
    %5485 = vsyncpa %s5484, 1
    %5486 = vsyncpa [#allocation16], 1

</llo_original>
